<compile_context>
chip_gen: v5e
topology: v5e:2x2
jax: 0.10.0
libtpu: 0.0.40
codegen_flags: <defaults>
</compile_context>

<pallas_src>
import functools

import jax
import jax.numpy as jnp
from jax.experimental import pallas as pl
from jax.experimental.pallas import tpu as pltpu

LANE = 128


def _round_up(x, m):
    return ((x + m - 1) // m) * m


def _vmem_limit_bytes():
    try:
        cap = int(pltpu.get_tpu_info().vmem_capacity_bytes)
    except Exception:
        cap = 64 * 1024 * 1024
    return max(32 * 1024 * 1024, min(int(cap * 3 // 4), 96 * 1024 * 1024))


def _pick_depth_tile(Do, rpd, cout_p, budget_bytes):
    """Largest divisor of Do whose f32 accumulator + double-buffered bf16 out block fits."""
    valid = [d for d in range(Do, 0, -1)
             if Do % d == 0 and (d == Do or (d * rpd) % 8 == 0)]
    for td in valid:
        m = td * rpd
        if m * cout_p * 4 + 2 * m * cout_p * 2 <= budget_bytes:
            return td
    return valid[-1]


# ----------------------------------------------------------------------------
# Pallas kernel: one whole Conv3d layer (all taps) per (batch, depth-tile) cell
# ----------------------------------------------------------------------------
def _conv_shift_matmul_kernel(x_ref, w_ref, b_ref, o_ref, acc_ref, *,
                              taps, tiled, neg_slope):
    """x_ref:  (P, R_pad, K)   bf16 phase-split, row-flattened input (resident per batch)
       w_ref:  (T, K, Cout_p)  bf16 per-tap weight slabs (resident for the whole grid)
       b_ref:  (1, Cout_p)     f32
       o_ref:  (M, Cout_p)     bf16 output rows for this depth tile (full-plane row stride)
       acc_ref:(M, Cout_p)     f32  accumulator
    Each tap is one MXU matmul of a row-shifted (M, K) slice of x against its weight slab."""
    m = acc_ref.shape[0]
    base = pl.program_id(1) * m if tiled else 0
    for t, (p, off) in enumerate(taps):
        a = x_ref[p, pl.ds(base + off, m), :]
        contrib = jnp.dot(a, w_ref[t], preferred_element_type=jnp.float32)
        if t == 0:
            acc_ref[...] = contrib
        else:
            acc_ref[...] += contrib
    y = acc_ref[...] + b_ref[...]
    y = jnp.where(y >= 0.0, y, neg_slope * y)
    o_ref[...] = y.astype(o_ref.dtype)


def conv3d_leaky_pallas(x, w, b, stride, padding, neg_slope=0.1):
    """x: (N, D, H, W, Cp) bf16 channels-last, lane-padded (padded channels are zero).
    w: (Co, Ci, kd, kh, kw) f32; b: (Co,) f32.
    Returns ((N, Do, Ho, Wo, Cout_p) bf16 lane-padded, Co)."""
    N, D, H, W, Cp = x.shape
    Co, Ci, kd, kh, kw = w.shape
    sd, sh, sw = stride
    pd, ph, pw = padding
    assert Ci <= Cp
    Cout_p = max(LANE, _round_up(Co, LANE))

    Do = (D + 2 * pd - kd) // sd + 1
    Ho = (H + 2 * ph - kh) // sh + 1
    Wo = (W + 2 * pw - kw) // sw + 1
    Dp = _round_up(D + 2 * pd, sd)

    packed = (kh * kw * Ci <= LANE)
    if packed:
        # ---- small-Cin path: pack the kh*kw in-plane taps into the K dimension ----
        K = LANE
        xr = x[..., :Ci]
        xp = jnp.pad(xr, ((0, 0), (pd, Dp - D - pd), (ph, ph), (pw, pw), (0, 0)))
        planes = []
        for zh in range(kh):
            for zw in range(kw):
                planes.append(xp[:, :, zh:zh + (Ho - 1) * sh + 1:sh,
                                 zw:zw + (Wo - 1) * sw + 1:sw, :])
        xpk = jnp.concatenate(planes, axis=-1)              # (N, Dp, Ho, Wo, kh*kw*Ci)
        xpk = jnp.pad(xpk, ((0, 0), (0, 0), (0, 0), (0, 0), (0, K - kh * kw * Ci)))
        Dq = Dp // sd
        P = sd
        rpd = Ho * Wo
        xq = xpk.reshape(N, Dq, sd, Ho, Wo, K).transpose(0, 2, 1, 3, 4, 5)
        xf = xq.reshape(N, P, Dq * rpd, K).astype(jnp.bfloat16)
        taps = [(zd % sd, (zd // sd) * rpd) for zd in range(kd)]   # only kd taps left
        wt = jnp.transpose(w, (2, 3, 4, 1, 0)).reshape(kd, kh * kw * Ci, Co)
        wt = jnp.pad(wt, ((0, 0), (0, K - kh * kw * Ci), (0, Cout_p - Co)))
        wt = wt.astype(jnp.bfloat16)
        hq_out, wq_out = Ho, Wo
    else:
        # ---- generic path: phase-split (space-to-depth) + row-flatten --------------
        K = Cp
        Hp = _round_up(H + 2 * ph, sh)
        Wp = _round_up(W + 2 * pw, sw)
        xp = jnp.pad(x, ((0, 0), (pd, Dp - D - pd), (ph, Hp - H - ph),
                         (pw, Wp - W - pw), (0, 0)))
        Dq, Hq, Wq = Dp // sd, Hp // sh, Wp // sw
        P = sd * sh * sw
        xs = xp.reshape(N, Dq, sd, Hq, sh, Wq, sw, K).transpose(0, 2, 4, 6, 1, 3, 5, 7)
        rpd = Hq * Wq
        xs = xs.reshape(N, P, Dq * rpd, K)
        extra = ((kh - 1) // sh) * Wq + (kw - 1) // sw      # keep shifted slices in-bounds
        xf = jnp.pad(xs, ((0, 0), (0, 0), (0, extra), (0, 0))).astype(jnp.bfloat16)
        taps = []
        for zd in range(kd):
            for zh in range(kh):
                for zw in range(kw):
                    p = (zd % sd) * sh * sw + (zh % sh) * sw + (zw % sw)
                    off = (zd // sd) * rpd + (zh // sh) * Wq + (zw // sw)
                    taps.append((p, off))
        wt = jnp.transpose(w, (2, 3, 4, 1, 0))              # (kd, kh, kw, Ci, Co)
        wt = jnp.pad(wt, ((0, 0), (0, 0), (0, 0), (0, K - Ci), (0, Cout_p - Co)))
        wt = wt.reshape(kd * kh * kw, K, Cout_p).astype(jnp.bfloat16)
        hq_out, wq_out = Hq, Wq

    bias = jnp.pad(b, (0, Cout_p - Co)).reshape(1, Cout_p).astype(jnp.float32)

    vmem_limit = _vmem_limit_bytes()
    td = _pick_depth_tile(Do, rpd, Cout_p, budget_bytes=vmem_limit // 4)
    dt_steps = Do // td
    m_block = td * rpd
    T = len(taps)
    r_pad = xf.shape[2]

    # TODO(synk): at production sizes on v7x (64 MiB VMEM/TC) the resident per-batch input
    # block should become a windowed manual-DMA ring instead of the full flattened volume.
    kernel = functools.partial(_conv_shift_matmul_kernel, taps=taps,
                               tiled=(dt_steps > 1), neg_slope=neg_slope)

    out = pl.pallas_call(
        kernel,
        out_shape=jax.ShapeDtypeStruct((N, Do * rpd, Cout_p), jnp.bfloat16),
        grid_spec=pltpu.PrefetchScalarGridSpec(
            num_scalar_prefetch=0,
            grid=(N, dt_steps),
            in_specs=[
                # whole flattened (phase, rows, K) volume for this batch element; block
                # index depends only on n -> DMA'd once per n, resident across depth tiles.
                pl.BlockSpec((None, P, r_pad, K), lambda n, dt: (n, 0, 0, 0)),
                # all tap weight slabs, constant index -> fetched once, resident.
                pl.BlockSpec((T, K, Cout_p), lambda n, dt: (0, 0, 0)),
                # bias, resident.
                pl.BlockSpec((1, Cout_p), lambda n, dt: (0, 0)),
            ],
            out_specs=pl.BlockSpec((None, m_block, Cout_p), lambda n, dt: (n, dt, 0)),
            scratch_shapes=[pltpu.VMEM((m_block, Cout_p), jnp.float32)],
        ),
        compiler_params=pltpu.CompilerParams(
            dimension_semantics=("parallel", "parallel"),
            vmem_limit_bytes=vmem_limit),
    )(xf, wt, bias)

    y = out.reshape(N, Do, hq_out, wq_out, Cout_p)
    if (hq_out, wq_out) != (Ho, Wo):
        y = y[:, :, :Ho, :Wo, :]          # drop the full-plane "slack" rows/cols
    return y, Co


# ----------------------------------------------------------------------------
# Parameter setup (deterministic) + spectral norm (one power iteration)
# ----------------------------------------------------------------------------
def spectral_normalize(w, key, n_iter=1, eps=1e-12):
    w_mat = w.reshape(w.shape[0], -1)
    u = jax.random.normal(key, (w_mat.shape[0],), dtype=jnp.float32)
    u = u / (jnp.linalg.norm(u) + eps)
    v = None
    for _ in range(n_iter):
        v = w_mat.T @ u
        v = v / (jnp.linalg.norm(v) + eps)
        u = w_mat @ v
        u = u / (jnp.linalg.norm(u) + eps)
    sigma = u @ (w_mat @ v)
    return w / sigma


def init_conv_params(key, c_in, c_out, k):
    kw_key, kb_key, sn_key = jax.random.split(key, 3)
    fan_in = c_in * k * k * k
    bound = 1.0 / jnp.sqrt(fan_in)
    w = jax.random.uniform(kw_key, (c_out, c_in, k, k, k),
                           minval=-bound, maxval=bound, dtype=jnp.float32)
    b = jax.random.uniform(kb_key, (c_out,),
                           minval=-bound, maxval=bound, dtype=jnp.float32)
    w = spectral_normalize(w, sn_key)
    return w, b


def init_dense_params(key, in_features, out_features=1):
    kw_key, kb_key, sn_key = jax.random.split(key, 3)
    bound = 1.0 / jnp.sqrt(in_features)
    w = jax.random.uniform(kw_key, (out_features, in_features),
                           minval=-bound, maxval=bound, dtype=jnp.float32)
    b = jax.random.uniform(kb_key, (out_features,),
                           minval=-bound, maxval=bound, dtype=jnp.float32)
    w = spectral_normalize(w, sn_key)
    return w, b


def build_video_discriminator_params(key, in_channels, ndf):
    layer_cfg = [
        (in_channels, ndf,     3, (1, 1, 1), (1, 1, 1)),
        (ndf,         ndf * 2, 4, (1, 2, 2), (1, 1, 1)),
        (ndf * 2,     ndf * 2, 3, (1, 1, 1), (1, 1, 1)),
        (ndf * 2,     ndf * 4, 4, (1, 2, 2), (1, 1, 1)),
        (ndf * 4,     ndf * 4, 3, (1, 1, 1), (1, 1, 1)),
        (ndf * 4,     ndf * 8, 4, (2, 2, 2), (1, 1, 1)),
        (ndf * 8,     ndf * 8, 3, (1, 1, 1), (1, 1, 1)),
    ]
    keys = jax.random.split(key, len(layer_cfg))
    params = []
    for kk, (ci, co, k, stride, pad) in zip(keys, layer_cfg):
        w, b = init_conv_params(kk, ci, co, k)
        params.append((w, b, stride, pad))
    return params, layer_cfg


# ----------------------------------------------------------------------------
# VideoDiscriminator forward
# ----------------------------------------------------------------------------
def video_discriminator_forward(x_ncdhw, conv_params, dense_params, neg_slope=0.1):
    """x_ncdhw: (N, C, D, H, W) f32.  Returns (outputs, internals): outputs is the list of
    8 tensors the PyTorch module returns (7 NCDHW conv maps, kept bf16, + (N, 1) logit)."""
    N, C = x_ncdhw.shape[0], x_ncdhw.shape[1]
    Cp = max(LANE, _round_up(C, LANE))
    # one boundary transpose to channels-last + lane-pad channels + bf16
    x = jnp.transpose(x_ncdhw, (0, 2, 3, 4, 1))
    x = jnp.pad(x, ((0, 0), (0, 0), (0, 0), (0, 0), (0, Cp - C))).astype(jnp.bfloat16)

    outputs = []
    internals = [x]
    for (w, b, stride, pad) in conv_params:
        x, co = conv3d_leaky_pallas(x, w, b, stride, pad, neg_slope=neg_slope)
        internals.append(x)
        # returned NCDHW feature map stays bf16 (cheaper boundary copy, per perf review)
        outputs.append(jnp.transpose(x[..., :co], (0, 4, 1, 2, 3)))

    # flatten in NCDHW order (matches PyTorch output.reshape([N, -1]))
    flat = outputs[-1].reshape(N, -1).astype(jnp.float32)
    dw, db = dense_params
    # tiny (N, F) @ (F, 1) head: plain jnp dot, no Pallas padding to 128 lanes
    dense_out = flat @ dw.T + db
    outputs.append(dense_out)
    return outputs, internals


# ----------------------------------------------------------------------------
# Pure-XLA reference for per-layer numerical verification
# ----------------------------------------------------------------------------
def reference_conv3d_leaky(x_pad_cl, w, b, stride, padding, neg_slope=0.1):
    Ci = w.shape[1]
    xin = x_pad_cl[..., :Ci].astype(jnp.bfloat16)
    wt = jnp.transpose(w, (2, 3, 4, 1, 0)).astype(jnp.bfloat16)  # DHWIO
    y = jax.lax.conv_general_dilated(
        xin, wt, window_strides=tuple(stride),
        padding=[(p, p) for p in padding],
        dimension_numbers=("NDHWC", "DHWIO", "NDHWC"),
        preferred_element_type=jnp.float32)
    y = y + b.reshape((1, 1, 1, 1, -1)).astype(jnp.float32)
    return jnp.where(y >= 0.0, y, neg_slope * y)


# ----------------------------------------------------------------------------
if __name__ == "__main__":
    key = jax.random.PRNGKey(0)
    k_x, k_params, k_dense = jax.random.split(key, 3)

    # Small shapes: batch=2, channels=4, depth(time)=8, spatial=16x16, ndf=8
    N, C, D, H, W = 2, 4, 8, 16, 16
    ndf = 8
    x = jax.random.normal(k_x, (N, C, D, H, W), dtype=jnp.float32)

    conv_params, layer_cfg = build_video_discriminator_params(k_params, C, ndf)

    # shape inference for the lazily-built dense head (hoisted out of the forward)
    dd, hh, ww = D, H, W
    c_last = C
    for (ci, co, k, stride, pad) in layer_cfg:
        dd = (dd + 2 * pad[0] - k) // stride[0] + 1
        hh = (hh + 2 * pad[1] - k) // stride[1] + 1
        ww = (ww + 2 * pad[2] - k) // stride[2] + 1
        c_last = co
    in_features = c_last * dd * hh * ww
    dense_params = init_dense_params(k_dense, in_features, 1)

    outputs, internals = video_discriminator_forward(x, conv_params, dense_params)
    for o in outputs:
        jax.block_until_ready(o)

    # sanity: expected shapes of the intermediate feature maps and final logit
    expected = [
        (N, ndf,     8, 16, 16),
        (N, ndf * 2, 7, 8, 8),
        (N, ndf * 2, 7, 8, 8),
        (N, ndf * 4, 6, 4, 4),
        (N, ndf * 4, 6, 4, 4),
        (N, ndf * 8, 3, 2, 2),
        (N, ndf * 8, 3, 2, 2),
        (N, 1),
    ]
    assert [tuple(o.shape) for o in outputs] == expected, \
        f"shape mismatch: {[o.shape for o in outputs]}"

    # numerical check of each Pallas conv layer against lax.conv_general_dilated
    for i, (w, b, stride, pad) in enumerate(conv_params):
        ref = reference_conv3d_leaky(internals[i], w, b, stride, pad)
        got = internals[i + 1][..., :w.shape[0]].astype(jnp.float32)
        scale = float(jnp.maximum(1.0, jnp.max(jnp.abs(ref))))
        err = float(jnp.max(jnp.abs(got - ref)))
        assert err <= 2e-2 * scale, f"conv layer {i}: max err {err} (scale {scale})"

    print("KERNEL_OK")
</pallas_src>

<mosaic_0001>
module attributes {stable_mosaic.version = 11 : i64} {
  func.func @_conv_shift_matmul_kernel(%arg0: i32, %arg1: i32, %arg2: memref<1x1x2560x128xbf16, #tpu.memory_space<vmem>>, %arg3: memref<3x128x128xbf16, #tpu.memory_space<vmem>>, %arg4: memref<1x128xf32, #tpu.memory_space<vmem>>, %arg5: memref<1x2048x128xbf16, #tpu.memory_space<vmem>>, %arg6: memref<2048x128xf32, #tpu.memory_space<vmem>>) attributes {dimension_semantics = [#tpu.dimension_semantics<parallel>, #tpu.dimension_semantics<parallel>], iteration_bounds = array<i64: 2, 1>, scalar_prefetch = 0 : i64, scratch_operands = 1 : i64, tpu.core_type = #tpu.core_type<tc>, window_params = [{transform_indices = @transform_0, window_bounds = array<i64: 1, 1, 2560, 128>}, {pipeline_mode = #tpu.pipeline_mode<synchronous>, transform_indices = @transform_1, window_bounds = array<i64: 3, 128, 128>}, {pipeline_mode = #tpu.pipeline_mode<synchronous>, transform_indices = @transform_2, window_bounds = array<i64: 1, 128>}, {transform_indices = @transform_3, window_bounds = array<i64: 1, 2048, 128>}]} {
    %c0 = arith.constant 0 : index
    %c0_0 = arith.constant 0 : index
    %c0_1 = arith.constant 0 : index
    %c0_2 = arith.constant 0 : index
    %0 = vector.load %arg2[%c0, %c0_0, %c0_1, %c0_2] : memref<1x1x2560x128xbf16, #tpu.memory_space<vmem>>, vector<1x1x2048x128xbf16>
    %1 = vector.shape_cast %0 : vector<1x1x2048x128xbf16> to vector<2048x128xbf16>
    %c0_3 = arith.constant 0 : index
    %c0_4 = arith.constant 0 : index
    %c0_5 = arith.constant 0 : index
    %2 = vector.load %arg3[%c0_3, %c0_4, %c0_5] : memref<3x128x128xbf16, #tpu.memory_space<vmem>>, vector<1x128x128xbf16>
    %3 = vector.shape_cast %2 : vector<1x128x128xbf16> to vector<128x128xbf16>
    %cst = arith.constant dense<0.000000e+00> : vector<2048x128xf32>
    %4 = tpu.matmul %1, %3, %cst {dimension_numbers = #tpu.dot_dimension_numbers<[1], [0], [0], [1], [0, 0, 1, 1], [], []>} : vector<2048x128xbf16>, vector<128x128xbf16>, vector<2048x128xf32> -> vector<2048x128xf32>
    %c0_6 = arith.constant 0 : index
    %c0_7 = arith.constant 0 : index
    %5 = vector.load %arg6[%c0_6, %c0_7] : memref<2048x128xf32, #tpu.memory_space<vmem>>, vector<2048x128xf32>
    tpu.vector_store %arg6[%c0_6, %c0_7], %4 {strides = array<i32>} : memref<2048x128xf32, #tpu.memory_space<vmem>>, vector<2048x128xf32>,
    %c0_8 = arith.constant 0 : index
    %c0_9 = arith.constant 0 : index
    %c256 = arith.constant 256 : index
    %c0_10 = arith.constant 0 : index
    %6 = vector.load %arg2[%c0_8, %c0_9, %c256, %c0_10] : memref<1x1x2560x128xbf16, #tpu.memory_space<vmem>>, vector<1x1x2048x128xbf16>
    %7 = vector.shape_cast %6 : vector<1x1x2048x128xbf16> to vector<2048x128xbf16>
    %c1 = arith.constant 1 : index
    %c0_11 = arith.constant 0 : index
    %c0_12 = arith.constant 0 : index
    %8 = vector.load %arg3[%c1, %c0_11, %c0_12] : memref<3x128x128xbf16, #tpu.memory_space<vmem>>, vector<1x128x128xbf16>
    %9 = vector.shape_cast %8 : vector<1x128x128xbf16> to vector<128x128xbf16>
    %cst_13 = arith.constant dense<0.000000e+00> : vector<2048x128xf32>
    %10 = tpu.matmul %7, %9, %cst_13 {dimension_numbers = #tpu.dot_dimension_numbers<[1], [0], [0], [1], [0, 0, 1, 1], [], []>} : vector<2048x128xbf16>, vector<128x128xbf16>, vector<2048x128xf32> -> vector<2048x128xf32>
    %c0_14 = arith.constant 0 : index
    %c0_15 = arith.constant 0 : index
    %11 = vector.load %arg6[%c0_14, %c0_15] : memref<2048x128xf32, #tpu.memory_space<vmem>>, vector<2048x128xf32>
    %12 = arith.addf %11, %10 : vector<2048x128xf32>
    %c0_16 = arith.constant 0 : index
    %c0_17 = arith.constant 0 : index
    %13 = vector.load %arg6[%c0_16, %c0_17] : memref<2048x128xf32, #tpu.memory_space<vmem>>, vector<2048x128xf32>
    tpu.vector_store %arg6[%c0_16, %c0_17], %12 {strides = array<i32>} : memref<2048x128xf32, #tpu.memory_space<vmem>>, vector<2048x128xf32>,
    %c0_18 = arith.constant 0 : index
    %c0_19 = arith.constant 0 : index
    %c512 = arith.constant 512 : index
    %c0_20 = arith.constant 0 : index
    %14 = vector.load %arg2[%c0_18, %c0_19, %c512, %c0_20] : memref<1x1x2560x128xbf16, #tpu.memory_space<vmem>>, vector<1x1x2048x128xbf16>
    %15 = vector.shape_cast %14 : vector<1x1x2048x128xbf16> to vector<2048x128xbf16>
    %c2 = arith.constant 2 : index
    %c0_21 = arith.constant 0 : index
    %c0_22 = arith.constant 0 : index
    %16 = vector.load %arg3[%c2, %c0_21, %c0_22] : memref<3x128x128xbf16, #tpu.memory_space<vmem>>, vector<1x128x128xbf16>
    %17 = vector.shape_cast %16 : vector<1x128x128xbf16> to vector<128x128xbf16>
    %cst_23 = arith.constant dense<0.000000e+00> : vector<2048x128xf32>
    %18 = tpu.matmul %15, %17, %cst_23 {dimension_numbers = #tpu.dot_dimension_numbers<[1], [0], [0], [1], [0, 0, 1, 1], [], []>} : vector<2048x128xbf16>, vector<128x128xbf16>, vector<2048x128xf32> -> vector<2048x128xf32>
    %c0_24 = arith.constant 0 : index
    %c0_25 = arith.constant 0 : index
    %19 = vector.load %arg6[%c0_24, %c0_25] : memref<2048x128xf32, #tpu.memory_space<vmem>>, vector<2048x128xf32>
    %20 = arith.addf %19, %18 : vector<2048x128xf32>
    %c0_26 = arith.constant 0 : index
    %c0_27 = arith.constant 0 : index
    %21 = vector.load %arg6[%c0_26, %c0_27] : memref<2048x128xf32, #tpu.memory_space<vmem>>, vector<2048x128xf32>
    tpu.vector_store %arg6[%c0_26, %c0_27], %20 {strides = array<i32>} : memref<2048x128xf32, #tpu.memory_space<vmem>>, vector<2048x128xf32>,
    %c0_28 = arith.constant 0 : index
    %c0_29 = arith.constant 0 : index
    %22 = vector.load %arg6[%c0_28, %c0_29] : memref<2048x128xf32, #tpu.memory_space<vmem>>, vector<2048x128xf32>
    %c0_30 = arith.constant 0 : index
    %c0_31 = arith.constant 0 : index
    %23 = vector.load %arg4[%c0_30, %c0_31] : memref<1x128xf32, #tpu.memory_space<vmem>>, vector<1x128xf32>
    %24 = vector.broadcast %23 : vector<1x128xf32> to vector<2048x128xf32>
    %25 = arith.addf %22, %24 : vector<2048x128xf32>
    %cst_32 = arith.constant 0.000000e+00 : f32
    %26 = vector.broadcast %cst_32 : f32 to vector<2048x128xf32>
    %27 = arith.cmpf oge, %25, %26 : vector<2048x128xf32>
    %cst_33 = arith.constant 1.000000e-01 : f32
    %28 = vector.broadcast %cst_33 : f32 to vector<2048x128xf32>
    %29 = arith.mulf %28, %25 : vector<2048x128xf32>
    %30 = arith.select %27, %25, %29 : vector<2048x128xi1>, vector<2048x128xf32>
    %31 = arith.truncf %30 : vector<2048x128xf32> to vector<2048x128xbf16>
    %c0_34 = arith.constant 0 : index
    %c0_35 = arith.constant 0 : index
    %c0_36 = arith.constant 0 : index
    %32 = vector.load %arg5[%c0_34, %c0_35, %c0_36] : memref<1x2048x128xbf16, #tpu.memory_space<vmem>>, vector<1x2048x128xbf16>
    %33 = vector.shape_cast %32 : vector<1x2048x128xbf16> to vector<2048x128xbf16>
    %34 = vector.shape_cast %31 : vector<2048x128xbf16> to vector<1x2048x128xbf16>
    tpu.vector_store %arg5[%c0_34, %c0_35, %c0_36], %34 {strides = array<i32>} : memref<1x2048x128xbf16, #tpu.memory_space<vmem>>, vector<1x2048x128xbf16>,
    return
  }
  func.func @transform_0(%arg0: i32, %arg1: i32) -> (i32, i32, i32, i32) {
    %c0_i32 = arith.constant 0 : i32
    %c0_i32_0 = arith.constant 0 : i32
    %c0_i32_1 = arith.constant 0 : i32
    %c0_i32_2 = arith.constant 0 : i32
    return %arg0, %c0_i32, %c0_i32_0, %c0_i32_1 : i32, i32, i32, i32
  }
  func.func @transform_1(%arg0: i32, %arg1: i32) -> (i32, i32, i32) {
    %c0_i32 = arith.constant 0 : i32
    %c0_i32_0 = arith.constant 0 : i32
    %c0_i32_1 = arith.constant 0 : i32
    %c0_i32_2 = arith.constant 0 : i32
    return %c0_i32, %c0_i32_0, %c0_i32_1 : i32, i32, i32
  }
  func.func @transform_2(%arg0: i32, %arg1: i32) -> (i32, i32) {
    %c0_i32 = arith.constant 0 : i32
    %c0_i32_0 = arith.constant 0 : i32
    %c0_i32_1 = arith.constant 0 : i32
    return %c0_i32, %c0_i32_0 : i32, i32
  }
  func.func @transform_3(%arg0: i32, %arg1: i32) -> (i32, i32, i32) {
    %c0_i32 = arith.constant 0 : i32
    %c0_i32_0 = arith.constant 0 : i32
    return %arg0, %arg1, %c0_i32 : i32, i32, i32
  }
}

</mosaic_0001>

<llo_original>
// kernel: tpu_custom_call.1
$region0: #{tpu_custom_call.1}
  #allocation0 [shape = 'u32[]', space=smem, size = 0x4, offset = 0x4, fixed_abs, tag = 'smem constant byte address 0x4 - core index']
  #allocation1 [shape = 'u32[72,128]{1,0:T(1,128)}', space=vmem, size = 0x9000, scoped, tag = 'internal scratch']
  #allocation2 [shape = 'f32[2048,128]{1,0:T(8,128)}', space=vmem, size = 0x100000, scoped, tag = 'scratch operand']
  %s0 = inlined_call_operand.hbm [shape: bf16[2,1,2560,128], index: 0, kind: input, shape index: {}]
  %s1 = inlined_call_operand.hbm [shape: bf16[3,128,128], index: 1, kind: input, shape index: {}]
  %s2 = inlined_call_operand.hbm [shape: f32[1,128], index: 2, kind: input, shape index: {}]
  %s3 = inlined_call_operand.hbm [shape: bf16[2,2048,128], index: 3, kind: output, shape index: {}]
  %s4 = sld [smem:[#allocation0]]
  $region57: #{tpu_custom_call.1} parent=0
    _
  %s6 = ssub.s32 1, %s4
  %s7 = scalar_select 0, %s6, %s4
  $region1: #{tpu_custom_call.1} parent=0
    #allocation3 [shape = 'u8[1310720]{0}', space=vmem, size = 0x140000, scoped, tag = 'input window, operand 0']
    #allocation4 [shape = 's32[2]{0}', space=sflag, size = 0x8, scoped, tag = 'scoped memory for tpu_custom_call.1']
    #allocation5 [shape = 's32[2]{0}', space=sflag, size = 0x8, scoped, tag = 'scoped memory for tpu_custom_call.1']
    #allocation6 [shape = 'u8[98304]{0}', space=vmem, size = 0x18000, scoped, tag = 'input window, operand 1, single buffered']
    #allocation7 [shape = 's32[1]{0}', space=sflag, size = 0x4, scoped, tag = 'scoped memory for tpu_custom_call.1']
    #allocation8 [shape = 'u8[512]{0}', space=vmem, size = 0x400, scoped, tag = 'input window, operand 2, single buffered']
    #allocation9 [shape = 'u8[1048576]{0}', space=vmem, size = 0x100000, scoped, tag = 'output window, operand 0']
    %8 = vsyncpa [#allocation4], 0
    %s9 = scalar_lea.sflag [#allocation4], 1
    %10 = vsyncpa %s9, 0
    %11 = vsyncpa [#allocation7], 0
    %12 = vsyncpa [#allocation5], 0
    %s13 = scalar_lea.sflag [#allocation5], 1
    %14 = vsyncpa %s13, 0
    loop: start=0, step=1, limit=4
    $region2: #{tpu_custom_call.1} parent=1 // loop_pre_header
      _
    $region3: #{tpu_custom_call.1} parent=1 // loop_header
      %s16 = sphi 0, %s20
      %p17 = scmp.ge.s32.totalorder %s16, 4
      %s23 = sphi 0, %s35
      %s24 = sphi 0, %s31
      %s25 = sphi 0, %s23
      %s26 = sphi 0, %s24
      %s27 = sphi 0, %s25
      %s28 = sphi 0, %s26
      %s38 = sphi 0, %s40
      %s41 = sphi 0, %s38
      %s42 = sphi 0, %s41
      %s58 = sphi 0, %s42
      %s62 = sphi 0, %s62
      %s64 = sphi 0, %s62
      %s65 = sphi 0, %s64
      %s79 = sphi 0, %s65
      %s83 = sphi 0, %s83
      %s85 = sphi 0, %s83
      %s86 = sphi 0, %s85
      %s100 = sphi 0, %s86
      %s108 = sphi 0, %s110
      %s111 = sphi 0, %s108
      %s112 = sphi 0, %s111
      %s128 = sphi 0, %s112
    $region4: #{tpu_custom_call.1} parent=1 // loop_header_branch
      %19 = sbr.rel (%p17) target = $region8
    $region5: #{tpu_custom_call.1} parent=1 // loop_body
      %s21 = ssub.s32 %s16, 1
      %s22 = ssub.s32 %s16, 2
      %s29 = sadd.s32 1, %s24
      %p30 = scmp.ge.s32.totalorder %s29, 1
      %s31 = scalar_select %p30, 0, %s29
      %s32 = sadd.s32 1, %s23
      %s33 = scalar_select %p30, %s32, %s23
      %p34 = scmp.ge.s32.totalorder %s33, 2
      %s35 = scalar_select %p34, 0, %s33
      %s36 = ssub.s32 %s23, %s35
      %p37 = scmp.eq.s32.totalorder %s36, 0
      %s39 = sadd.s32 %s38, 1
      %s40 = scalar_select %p37, %s38, %s39
      %p43 = pneg %p37
      %p44 = scmp.eq.s32.totalorder %s16, 1
      %p45 = por %p43, %p44
      %p46 = scmp.ne.s32.totalorder %s38, %s41
      %p47 = scmp.eq.s32.totalorder %s16, 0
      %p48 = por %p46, %p47
      %p49 = scmp.ne.s32.totalorder %s38, %s41
      %p50 = scmp.eq.s32.totalorder %s21, 1
      %p51 = por %p49, %p50
      %p52 = scmp.ne.s32.totalorder %s41, %s42
      %p53 = scmp.eq.s32.totalorder %s21, 0
      %p54 = por %p52, %p53
      %p55 = scmp.ne.s32.totalorder %s41, %s42
      %p56 = scmp.eq.s32.totalorder %s22, 1
      %p57 = por %p55, %p56
      %p59 = scmp.ne.s32.totalorder %s42, %s58
      %p60 = scmp.eq.s32.totalorder %s22, 0
      %p61 = por %p59, %p60
      %s63 = sadd.s32 %s62, 1
      %p66 = scmp.eq.s32.totalorder %s16, 1
      %p67 = scmp.ne.s32.totalorder %s62, %s64
      %p68 = scmp.eq.s32.totalorder %s16, 0
      %p69 = por %p67, %p68
      %p70 = scmp.ne.s32.totalorder %s62, %s64
      %p71 = scmp.eq.s32.totalorder %s21, 1
      %p72 = por %p70, %p71
      %p73 = scmp.ne.s32.totalorder %s64, %s65
      %p74 = scmp.eq.s32.totalorder %s21, 0
      %p75 = por %p73, %p74
      %p76 = scmp.ne.s32.totalorder %s64, %s65
      %p77 = scmp.eq.s32.totalorder %s22, 1
      %p78 = por %p76, %p77
      %p80 = scmp.ne.s32.totalorder %s65, %s79
      %p81 = scmp.eq.s32.totalorder %s22, 0
      %p82 = por %p80, %p81
      %s84 = sadd.s32 %s83, 1
      %p87 = scmp.eq.s32.totalorder %s16, 1
      %p88 = scmp.ne.s32.totalorder %s83, %s85
      %p89 = scmp.eq.s32.totalorder %s16, 0
      %p90 = por %p88, %p89
      %p91 = scmp.ne.s32.totalorder %s83, %s85
      %p92 = scmp.eq.s32.totalorder %s21, 1
      %p93 = por %p91, %p92
      %p94 = scmp.ne.s32.totalorder %s85, %s86
      %p95 = scmp.eq.s32.totalorder %s21, 0
      %p96 = por %p94, %p95
      %p97 = scmp.ne.s32.totalorder %s85, %s86
      %p98 = scmp.eq.s32.totalorder %s22, 1
      %p99 = por %p97, %p98
      %p101 = scmp.ne.s32.totalorder %s86, %s100
      %p102 = scmp.eq.s32.totalorder %s22, 0
      %p103 = por %p101, %p102
      %s104 = ssub.s32 %s23, %s35
      %s105 = ssub.s32 %s24, %s31
      %s106 = sor.u32 %s104, %s105
      %p107 = scmp.eq.s32.totalorder %s106, 0
      %s109 = sadd.s32 %s108, 1
      %s110 = scalar_select %p107, %s108, %s109
      %p113 = pneg %p107
      %p114 = scmp.eq.s32.totalorder %s16, 1
      %p115 = por %p113, %p114
      %p116 = scmp.ne.s32.totalorder %s108, %s111
      %p117 = scmp.eq.s32.totalorder %s16, 0
      %p118 = por %p116, %p117
      %p119 = scmp.ne.s32.totalorder %s108, %s111
      %p120 = scmp.eq.s32.totalorder %s21, 1
      %p121 = por %p119, %p120
      %p122 = scmp.ne.s32.totalorder %s111, %s112
      %p123 = scmp.eq.s32.totalorder %s21, 0
      %p124 = por %p122, %p123
      %p125 = scmp.ne.s32.totalorder %s111, %s112
      %p126 = scmp.eq.s32.totalorder %s22, 1
      %p127 = por %p125, %p126
      %p129 = scmp.ne.s32.totalorder %s112, %s128
      %p130 = scmp.eq.s32.totalorder %s22, 0
      %p131 = por %p129, %p130
      %p132 = scmp.le.s32.totalorder 1, %s16
      %p133 = scmp.lt.s32.totalorder %s16, 3
      %p134 = pnand %p132, %p133
      %p135 = pneg %p134
      // Predicated region
      $region9: #{tpu_custom_call.1} parent=5 // pred_check
        _
      $region10: #{tpu_custom_call.1} parent=5 // pred_check_branch
        %137 = sbr.rel (%p134) target = $region12
      $region11: #{tpu_custom_call.1} parent=5 // pred_region
        %s138 = ssub.s32 %s16, 1
        // Predicated region
        $region13: #{tpu_custom_call.1} parent=11 // pred_check
          %p139 = pneg %p75
        $region14: #{tpu_custom_call.1} parent=11 // pred_check_branch
          %141 = sbr.rel (%p139) target = $region16
        $region15: #{tpu_custom_call.1} parent=11 // pred_region
          %143 = vsyncadd [#allocation7], 0
          %s144 = sshll.u32 %s1, 4
          %s145 = int_to_ptr.hbm [resolvable:$true] %s144
          %s146 = sshll.u32 [#allocation6], 4
          %s147 = int_to_ptr.vmem [resolvable:$true] %s146
          %152 = dma.hbm_to_vmem [thread:$0]  %s145, 3072, %s147, [#allocation7], 64, 64, 4
        $region16: #{tpu_custom_call.1} parent=11 // pred_fallthru
          _
        // Predicated region
        $region17: #{tpu_custom_call.1} parent=11 // pred_check
          %p153 = pneg %p96
        $region18: #{tpu_custom_call.1} parent=11 // pred_check_branch
          %155 = sbr.rel (%p153) target = $region20
        $region19: #{tpu_custom_call.1} parent=11 // pred_region
          %157 = vsyncadd [#allocation7], 0
          %s159 = sshll.u32 %s2, 4
          %s160 = int_to_ptr.hbm [resolvable:$true] %s159
          %s161 = sshll.u32 [#allocation8], 4
          %s162 = int_to_ptr.vmem [resolvable:$true] %s161
          %164 = dma.hbm_to_vmem [thread:$0]  %s160, 16, %s162, [#allocation7]
        $region20: #{tpu_custom_call.1} parent=11 // pred_fallthru
          _
      $region12: #{tpu_custom_call.1} parent=5 // pred_fallthru
        _
      %p165 = scmp.lt.s32.totalorder %s16, 2
      // Predicated region
      $region21: #{tpu_custom_call.1} parent=5 // pred_check
        %p166 = pneg %p165
      $region22: #{tpu_custom_call.1} parent=5 // pred_check_branch
        %168 = sbr.rel (%p166) target = $region24
      $region23: #{tpu_custom_call.1} parent=5 // pred_region
        // Predicated region
        $region25: #{tpu_custom_call.1} parent=23 // pred_check
          %p169 = pneg %p48
        $region26: #{tpu_custom_call.1} parent=23 // pred_check_branch
          %171 = sbr.rel (%p169) target = $region28
        $region27: #{tpu_custom_call.1} parent=23 // pred_region
          %s172 = sand.u32 %s38, 1
          %s173 = scalar_lea.sflag [#allocation4], %s172
          %s174 = sand.u32 %s38, 1
          %s175 = smul.addr %s174, 1280
          %s176 = scalar_lea.vmem [#allocation3], %s175
          %178 = vsyncadd %s173, 0
          %s179 = smul.addr %s23, 320
          %s180 = smul.addr %s179, 4
          %s181 = scalar_lea.hbm %s0, %s180
          %s182 = sshll.u32 %s181, 4
          %s183 = int_to_ptr.hbm [resolvable:$true] %s182
          %s184 = sshll.u32 %s176, 4
          %s185 = int_to_ptr.vmem [resolvable:$true] %s184
          %190 = dma.hbm_to_vmem [thread:$0]  %s183, 20480, %s185, %s173, 64, 64, 4
        $region28: #{tpu_custom_call.1} parent=23 // pred_fallthru
          _
      $region24: #{tpu_custom_call.1} parent=5 // pred_fallthru
        _
      %p191 = scmp.le.s32.totalorder 1, %s16
      %p192 = scmp.lt.s32.totalorder %s16, 3
      %p193 = pnand %p191, %p192
      %p194 = pneg %p193
      // Predicated region
      $region29: #{tpu_custom_call.1} parent=5 // pred_check
        _
      $region30: #{tpu_custom_call.1} parent=5 // pred_check_branch
        %196 = sbr.rel (%p193) target = $region32
      $region31: #{tpu_custom_call.1} parent=5 // pred_region
        %s197 = ssub.s32 %s16, 1
        %s198 = sand.u32 %s41, 1
        %s199 = scalar_lea.sflag [#allocation4], %s198
        %s200 = sand.u32 %s41, 1
        %s201 = smul.addr %s200, 1280
        %s202 = scalar_lea.vmem [#allocation3], %s201
        // Predicated region
        $region33: #{tpu_custom_call.1} parent=31 // pred_check
          %p203 = pneg %p54
        $region34: #{tpu_custom_call.1} parent=31 // pred_check_branch
          %205 = sbr.rel (%p203) target = $region36
        $region35: #{tpu_custom_call.1} parent=31 // pred_region
          %207 = dma.done %s199, 20480
        $region36: #{tpu_custom_call.1} parent=31 // pred_fallthru
          _
        // Predicated region
        $region37: #{tpu_custom_call.1} parent=31 // pred_check
          %p208 = pneg %p75
        $region38: #{tpu_custom_call.1} parent=31 // pred_check_branch
          %210 = sbr.rel (%p208) target = $region40
        $region39: #{tpu_custom_call.1} parent=31 // pred_region
          %212 = dma.done [#allocation7], 3072
        $region40: #{tpu_custom_call.1} parent=31 // pred_fallthru
          _
        // Predicated region
        $region41: #{tpu_custom_call.1} parent=31 // pred_check
          %p213 = pneg %p96
        $region42: #{tpu_custom_call.1} parent=31 // pred_check_branch
          %215 = sbr.rel (%p213) target = $region44
        $region43: #{tpu_custom_call.1} parent=31 // pred_region
          %217 = dma.done [#allocation7], 16
        $region44: #{tpu_custom_call.1} parent=31 // pred_fallthru
          _
        %s218 = sand.u32 %s41, 1
        %s219 = scalar_lea.sflag [#allocation4], %s218
        %s220 = sand.u32 %s41, 1
        %s221 = smul.addr %s220, 1280
        %s222 = scalar_lea.vmem [#allocation3], %s221
        %p223 = pneg %p54
        %p224 = pneg %p51
        %p225 = pneg %p75
        %p226 = pneg %p72
        %p227 = pneg %p96
        %p228 = pneg %p93
        %p229 = pneg %p124
        %p230 = pneg %p121
        %s231 = sand.u32 %s111, 1
        %s232 = scalar_lea.sflag [#allocation5], %s231
        %s233 = sand.u32 %s111, 1
        %s234 = smul.addr %s233, 1024
        %s235 = scalar_lea.vmem [#allocation9], %s234
        %s236 = smul.u32 256, %s26
        %v237 = vld [vmem:[%s202] sm:$0xf]
        %v238 = vld [vmem:[%s202 + $0x4] sm:$0xf]
        %v239 = vld [vmem:[%s202 + $0x8] sm:$0xf]
        %v240 = vld [vmem:[%s202 + $0xc] sm:$0xf]
        %v241 = vld [vmem:[%s202 + $0x10] sm:$0xf]
        %v242 = vld [vmem:[%s202 + $0x14] sm:$0xf]
        %v243 = vld [vmem:[%s202 + $0x18] sm:$0xf]
        %v244 = vld [vmem:[%s202 + $0x1c] sm:$0xf]
        %v245 = vld [vmem:[%s202 + $0x20] sm:$0xf]
        %v246 = vld [vmem:[%s202 + $0x24] sm:$0xf]
        %v247 = vld [vmem:[%s202 + $0x28] sm:$0xf]
        %v248 = vld [vmem:[%s202 + $0x2c] sm:$0xf]
        %v249 = vld [vmem:[%s202 + $0x30] sm:$0xf]
        %v250 = vld [vmem:[%s202 + $0x34] sm:$0xf]
        %v251 = vld [vmem:[%s202 + $0x38] sm:$0xf]
        %v252 = vld [vmem:[%s202 + $0x3c] sm:$0xf]
        %v253 = vld [vmem:[%s202 + $0x40] sm:$0xf]
        %v254 = vld [vmem:[%s202 + $0x44] sm:$0xf]
        %v255 = vld [vmem:[%s202 + $0x48] sm:$0xf]
        %v256 = vld [vmem:[%s202 + $0x4c] sm:$0xf]
        %v257 = vld [vmem:[%s202 + $0x50] sm:$0xf]
        %v258 = vld [vmem:[%s202 + $0x54] sm:$0xf]
        %v259 = vld [vmem:[%s202 + $0x58] sm:$0xf]
        %v260 = vld [vmem:[%s202 + $0x5c] sm:$0xf]
        %v261 = vld [vmem:[%s202 + $0x60] sm:$0xf]
        %v262 = vld [vmem:[%s202 + $0x64] sm:$0xf]
        %v263 = vld [vmem:[%s202 + $0x68] sm:$0xf]
        %v264 = vld [vmem:[%s202 + $0x6c] sm:$0xf]
        %v265 = vld [vmem:[%s202 + $0x70] sm:$0xf]
        %v266 = vld [vmem:[%s202 + $0x74] sm:$0xf]
        %v267 = vld [vmem:[%s202 + $0x78] sm:$0xf]
        %v268 = vld [vmem:[%s202 + $0x7c] sm:$0xf]
        %v269 = vld [vmem:[%s202 + $0x80] sm:$0xf]
        %v270 = vld [vmem:[%s202 + $0x84] sm:$0xf]
        %v271 = vld [vmem:[%s202 + $0x88] sm:$0xf]
        %v272 = vld [vmem:[%s202 + $0x8c] sm:$0xf]
        %v273 = vld [vmem:[%s202 + $0x90] sm:$0xf]
        %v274 = vld [vmem:[%s202 + $0x94] sm:$0xf]
        %v275 = vld [vmem:[%s202 + $0x98] sm:$0xf]
        %v276 = vld [vmem:[%s202 + $0x9c] sm:$0xf]
        %v277 = vld [vmem:[%s202 + $0xa0] sm:$0xf]
        %v278 = vld [vmem:[%s202 + $0xa4] sm:$0xf]
        %v279 = vld [vmem:[%s202 + $0xa8] sm:$0xf]
        %v280 = vld [vmem:[%s202 + $0xac] sm:$0xf]
        %v281 = vld [vmem:[%s202 + $0xb0] sm:$0xf]
        %v282 = vld [vmem:[%s202 + $0xb4] sm:$0xf]
        %v283 = vld [vmem:[%s202 + $0xb8] sm:$0xf]
        %v284 = vld [vmem:[%s202 + $0xbc] sm:$0xf]
        %v285 = vld [vmem:[%s202 + $0xc0] sm:$0xf]
        %v286 = vld [vmem:[%s202 + $0xc4] sm:$0xf]
        %v287 = vld [vmem:[%s202 + $0xc8] sm:$0xf]
        %v288 = vld [vmem:[%s202 + $0xcc] sm:$0xf]
        %v289 = vld [vmem:[%s202 + $0xd0] sm:$0xf]
        %v290 = vld [vmem:[%s202 + $0xd4] sm:$0xf]
        %v291 = vld [vmem:[%s202 + $0xd8] sm:$0xf]
        %v292 = vld [vmem:[%s202 + $0xdc] sm:$0xf]
        %v293 = vld [vmem:[%s202 + $0xe0] sm:$0xf]
        %v294 = vld [vmem:[%s202 + $0xe4] sm:$0xf]
        %v295 = vld [vmem:[%s202 + $0xe8] sm:$0xf]
        %v296 = vld [vmem:[%s202 + $0xec] sm:$0xf]
        %v297 = vld [vmem:[%s202 + $0xf0] sm:$0xf]
        %v298 = vld [vmem:[%s202 + $0xf4] sm:$0xf]
        %v299 = vld [vmem:[%s202 + $0xf8] sm:$0xf]
        %v300 = vld [vmem:[%s202 + $0xfc] sm:$0xf]
        %v301 = vld [vmem:[%s202 + $0x100] sm:$0xf]
        %v302 = vld [vmem:[%s202 + $0x104] sm:$0xf]
        %v303 = vld [vmem:[%s202 + $0x108] sm:$0xf]
        %v304 = vld [vmem:[%s202 + $0x10c] sm:$0xf]
        %v305 = vld [vmem:[%s202 + $0x110] sm:$0xf]
        %v306 = vld [vmem:[%s202 + $0x114] sm:$0xf]
        %v307 = vld [vmem:[%s202 + $0x118] sm:$0xf]
        %v308 = vld [vmem:[%s202 + $0x11c] sm:$0xf]
        %v309 = vld [vmem:[%s202 + $0x120] sm:$0xf]
        %v310 = vld [vmem:[%s202 + $0x124] sm:$0xf]
        %v311 = vld [vmem:[%s202 + $0x128] sm:$0xf]
        %v312 = vld [vmem:[%s202 + $0x12c] sm:$0xf]
        %v313 = vld [vmem:[%s202 + $0x130] sm:$0xf]
        %v314 = vld [vmem:[%s202 + $0x134] sm:$0xf]
        %v315 = vld [vmem:[%s202 + $0x138] sm:$0xf]
        %v316 = vld [vmem:[%s202 + $0x13c] sm:$0xf]
        %v317 = vld [vmem:[%s202 + $0x140] sm:$0xf]
        %v318 = vld [vmem:[%s202 + $0x144] sm:$0xf]
        %v319 = vld [vmem:[%s202 + $0x148] sm:$0xf]
        %v320 = vld [vmem:[%s202 + $0x14c] sm:$0xf]
        %v321 = vld [vmem:[%s202 + $0x150] sm:$0xf]
        %v322 = vld [vmem:[%s202 + $0x154] sm:$0xf]
        %v323 = vld [vmem:[%s202 + $0x158] sm:$0xf]
        %v324 = vld [vmem:[%s202 + $0x15c] sm:$0xf]
        %v325 = vld [vmem:[%s202 + $0x160] sm:$0xf]
        %v326 = vld [vmem:[%s202 + $0x164] sm:$0xf]
        %v327 = vld [vmem:[%s202 + $0x168] sm:$0xf]
        %v328 = vld [vmem:[%s202 + $0x16c] sm:$0xf]
        %v329 = vld [vmem:[%s202 + $0x170] sm:$0xf]
        %v330 = vld [vmem:[%s202 + $0x174] sm:$0xf]
        %v331 = vld [vmem:[%s202 + $0x178] sm:$0xf]
        %v332 = vld [vmem:[%s202 + $0x17c] sm:$0xf]
        %v333 = vld [vmem:[%s202 + $0x180] sm:$0xf]
        %v334 = vld [vmem:[%s202 + $0x184] sm:$0xf]
        %v335 = vld [vmem:[%s202 + $0x188] sm:$0xf]
        %v336 = vld [vmem:[%s202 + $0x18c] sm:$0xf]
        %v337 = vld [vmem:[%s202 + $0x190] sm:$0xf]
        %v338 = vld [vmem:[%s202 + $0x194] sm:$0xf]
        %v339 = vld [vmem:[%s202 + $0x198] sm:$0xf]
        %v340 = vld [vmem:[%s202 + $0x19c] sm:$0xf]
        %v341 = vld [vmem:[%s202 + $0x1a0] sm:$0xf]
        %v342 = vld [vmem:[%s202 + $0x1a4] sm:$0xf]
        %v343 = vld [vmem:[%s202 + $0x1a8] sm:$0xf]
        %v344 = vld [vmem:[%s202 + $0x1ac] sm:$0xf]
        %v345 = vld [vmem:[%s202 + $0x1b0] sm:$0xf]
        %v346 = vld [vmem:[%s202 + $0x1b4] sm:$0xf]
        %v347 = vld [vmem:[%s202 + $0x1b8] sm:$0xf]
        %v348 = vld [vmem:[%s202 + $0x1bc] sm:$0xf]
        %v349 = vld [vmem:[%s202 + $0x1c0] sm:$0xf]
        %v350 = vld [vmem:[%s202 + $0x1c4] sm:$0xf]
        %v351 = vld [vmem:[%s202 + $0x1c8] sm:$0xf]
        %v352 = vld [vmem:[%s202 + $0x1cc] sm:$0xf]
        %v353 = vld [vmem:[%s202 + $0x1d0] sm:$0xf]
        %v354 = vld [vmem:[%s202 + $0x1d4] sm:$0xf]
        %v355 = vld [vmem:[%s202 + $0x1d8] sm:$0xf]
        %v356 = vld [vmem:[%s202 + $0x1dc] sm:$0xf]
        %v357 = vld [vmem:[%s202 + $0x1e0] sm:$0xf]
        %v358 = vld [vmem:[%s202 + $0x1e4] sm:$0xf]
        %v359 = vld [vmem:[%s202 + $0x1e8] sm:$0xf]
        %v360 = vld [vmem:[%s202 + $0x1ec] sm:$0xf]
        %v361 = vld [vmem:[%s202 + $0x1f0] sm:$0xf]
        %v362 = vld [vmem:[%s202 + $0x1f4] sm:$0xf]
        %v363 = vld [vmem:[%s202 + $0x1f8] sm:$0xf]
        %v364 = vld [vmem:[%s202 + $0x1fc] sm:$0xf]
        %v365 = vld [vmem:[%s202 + $0x200] sm:$0xf]
        %v366 = vld [vmem:[%s202 + $0x204] sm:$0xf]
        %v367 = vld [vmem:[%s202 + $0x208] sm:$0xf]
        %v368 = vld [vmem:[%s202 + $0x20c] sm:$0xf]
        %v369 = vld [vmem:[%s202 + $0x210] sm:$0xf]
        %v370 = vld [vmem:[%s202 + $0x214] sm:$0xf]
        %v371 = vld [vmem:[%s202 + $0x218] sm:$0xf]
        %v372 = vld [vmem:[%s202 + $0x21c] sm:$0xf]
        %v373 = vld [vmem:[%s202 + $0x220] sm:$0xf]
        %v374 = vld [vmem:[%s202 + $0x224] sm:$0xf]
        %v375 = vld [vmem:[%s202 + $0x228] sm:$0xf]
        %v376 = vld [vmem:[%s202 + $0x22c] sm:$0xf]
        %v377 = vld [vmem:[%s202 + $0x230] sm:$0xf]
        %v378 = vld [vmem:[%s202 + $0x234] sm:$0xf]
        %v379 = vld [vmem:[%s202 + $0x238] sm:$0xf]
        %v380 = vld [vmem:[%s202 + $0x23c] sm:$0xf]
        %v381 = vld [vmem:[%s202 + $0x240] sm:$0xf]
        %v382 = vld [vmem:[%s202 + $0x244] sm:$0xf]
        %v383 = vld [vmem:[%s202 + $0x248] sm:$0xf]
        %v384 = vld [vmem:[%s202 + $0x24c] sm:$0xf]
        %v385 = vld [vmem:[%s202 + $0x250] sm:$0xf]
        %v386 = vld [vmem:[%s202 + $0x254] sm:$0xf]
        %v387 = vld [vmem:[%s202 + $0x258] sm:$0xf]
        %v388 = vld [vmem:[%s202 + $0x25c] sm:$0xf]
        %v389 = vld [vmem:[%s202 + $0x260] sm:$0xf]
        %v390 = vld [vmem:[%s202 + $0x264] sm:$0xf]
        %v391 = vld [vmem:[%s202 + $0x268] sm:$0xf]
        %v392 = vld [vmem:[%s202 + $0x26c] sm:$0xf]
        %v393 = vld [vmem:[%s202 + $0x270] sm:$0xf]
        %v394 = vld [vmem:[%s202 + $0x274] sm:$0xf]
        %v395 = vld [vmem:[%s202 + $0x278] sm:$0xf]
        %v396 = vld [vmem:[%s202 + $0x27c] sm:$0xf]
        %v397 = vld [vmem:[%s202 + $0x280] sm:$0xf]
        %v398 = vld [vmem:[%s202 + $0x284] sm:$0xf]
        %v399 = vld [vmem:[%s202 + $0x288] sm:$0xf]
        %v400 = vld [vmem:[%s202 + $0x28c] sm:$0xf]
        %v401 = vld [vmem:[%s202 + $0x290] sm:$0xf]
        %v402 = vld [vmem:[%s202 + $0x294] sm:$0xf]
        %v403 = vld [vmem:[%s202 + $0x298] sm:$0xf]
        %v404 = vld [vmem:[%s202 + $0x29c] sm:$0xf]
        %v405 = vld [vmem:[%s202 + $0x2a0] sm:$0xf]
        %v406 = vld [vmem:[%s202 + $0x2a4] sm:$0xf]
        %v407 = vld [vmem:[%s202 + $0x2a8] sm:$0xf]
        %v408 = vld [vmem:[%s202 + $0x2ac] sm:$0xf]
        %v409 = vld [vmem:[%s202 + $0x2b0] sm:$0xf]
        %v410 = vld [vmem:[%s202 + $0x2b4] sm:$0xf]
        %v411 = vld [vmem:[%s202 + $0x2b8] sm:$0xf]
        %v412 = vld [vmem:[%s202 + $0x2bc] sm:$0xf]
        %v413 = vld [vmem:[%s202 + $0x2c0] sm:$0xf]
        %v414 = vld [vmem:[%s202 + $0x2c4] sm:$0xf]
        %v415 = vld [vmem:[%s202 + $0x2c8] sm:$0xf]
        %v416 = vld [vmem:[%s202 + $0x2cc] sm:$0xf]
        %v417 = vld [vmem:[%s202 + $0x2d0] sm:$0xf]
        %v418 = vld [vmem:[%s202 + $0x2d4] sm:$0xf]
        %v419 = vld [vmem:[%s202 + $0x2d8] sm:$0xf]
        %v420 = vld [vmem:[%s202 + $0x2dc] sm:$0xf]
        %v421 = vld [vmem:[%s202 + $0x2e0] sm:$0xf]
        %v422 = vld [vmem:[%s202 + $0x2e4] sm:$0xf]
        %v423 = vld [vmem:[%s202 + $0x2e8] sm:$0xf]
        %v424 = vld [vmem:[%s202 + $0x2ec] sm:$0xf]
        %v425 = vld [vmem:[%s202 + $0x2f0] sm:$0xf]
        %v426 = vld [vmem:[%s202 + $0x2f4] sm:$0xf]
        %v427 = vld [vmem:[%s202 + $0x2f8] sm:$0xf]
        %v428 = vld [vmem:[%s202 + $0x2fc] sm:$0xf]
        %v429 = vld [vmem:[%s202 + $0x300] sm:$0xf]
        %v430 = vld [vmem:[%s202 + $0x304] sm:$0xf]
        %v431 = vld [vmem:[%s202 + $0x308] sm:$0xf]
        %v432 = vld [vmem:[%s202 + $0x30c] sm:$0xf]
        %v433 = vld [vmem:[%s202 + $0x310] sm:$0xf]
        %v434 = vld [vmem:[%s202 + $0x314] sm:$0xf]
        %v435 = vld [vmem:[%s202 + $0x318] sm:$0xf]
        %v436 = vld [vmem:[%s202 + $0x31c] sm:$0xf]
        %v437 = vld [vmem:[%s202 + $0x320] sm:$0xf]
        %v438 = vld [vmem:[%s202 + $0x324] sm:$0xf]
        %v439 = vld [vmem:[%s202 + $0x328] sm:$0xf]
        %v440 = vld [vmem:[%s202 + $0x32c] sm:$0xf]
        %v441 = vld [vmem:[%s202 + $0x330] sm:$0xf]
        %v442 = vld [vmem:[%s202 + $0x334] sm:$0xf]
        %v443 = vld [vmem:[%s202 + $0x338] sm:$0xf]
        %v444 = vld [vmem:[%s202 + $0x33c] sm:$0xf]
        %v445 = vld [vmem:[%s202 + $0x340] sm:$0xf]
        %v446 = vld [vmem:[%s202 + $0x344] sm:$0xf]
        %v447 = vld [vmem:[%s202 + $0x348] sm:$0xf]
        %v448 = vld [vmem:[%s202 + $0x34c] sm:$0xf]
        %v449 = vld [vmem:[%s202 + $0x350] sm:$0xf]
        %v450 = vld [vmem:[%s202 + $0x354] sm:$0xf]
        %v451 = vld [vmem:[%s202 + $0x358] sm:$0xf]
        %v452 = vld [vmem:[%s202 + $0x35c] sm:$0xf]
        %v453 = vld [vmem:[%s202 + $0x360] sm:$0xf]
        %v454 = vld [vmem:[%s202 + $0x364] sm:$0xf]
        %v455 = vld [vmem:[%s202 + $0x368] sm:$0xf]
        %v456 = vld [vmem:[%s202 + $0x36c] sm:$0xf]
        %v457 = vld [vmem:[%s202 + $0x370] sm:$0xf]
        %v458 = vld [vmem:[%s202 + $0x374] sm:$0xf]
        %v459 = vld [vmem:[%s202 + $0x378] sm:$0xf]
        %v460 = vld [vmem:[%s202 + $0x37c] sm:$0xf]
        %v461 = vld [vmem:[%s202 + $0x380] sm:$0xf]
        %v462 = vld [vmem:[%s202 + $0x384] sm:$0xf]
        %v463 = vld [vmem:[%s202 + $0x388] sm:$0xf]
        %v464 = vld [vmem:[%s202 + $0x38c] sm:$0xf]
        %v465 = vld [vmem:[%s202 + $0x390] sm:$0xf]
        %v466 = vld [vmem:[%s202 + $0x394] sm:$0xf]
        %v467 = vld [vmem:[%s202 + $0x398] sm:$0xf]
        %v468 = vld [vmem:[%s202 + $0x39c] sm:$0xf]
        %v469 = vld [vmem:[%s202 + $0x3a0] sm:$0xf]
        %v470 = vld [vmem:[%s202 + $0x3a4] sm:$0xf]
        %v471 = vld [vmem:[%s202 + $0x3a8] sm:$0xf]
        %v472 = vld [vmem:[%s202 + $0x3ac] sm:$0xf]
        %v473 = vld [vmem:[%s202 + $0x3b0] sm:$0xf]
        %v474 = vld [vmem:[%s202 + $0x3b4] sm:$0xf]
        %v475 = vld [vmem:[%s202 + $0x3b8] sm:$0xf]
        %v476 = vld [vmem:[%s202 + $0x3bc] sm:$0xf]
        %v477 = vld [vmem:[%s202 + $0x3c0] sm:$0xf]
        %v478 = vld [vmem:[%s202 + $0x3c4] sm:$0xf]
        %v479 = vld [vmem:[%s202 + $0x3c8] sm:$0xf]
        %v480 = vld [vmem:[%s202 + $0x3cc] sm:$0xf]
        %v481 = vld [vmem:[%s202 + $0x3d0] sm:$0xf]
        %v482 = vld [vmem:[%s202 + $0x3d4] sm:$0xf]
        %v483 = vld [vmem:[%s202 + $0x3d8] sm:$0xf]
        %v484 = vld [vmem:[%s202 + $0x3dc] sm:$0xf]
        %v485 = vld [vmem:[%s202 + $0x3e0] sm:$0xf]
        %v486 = vld [vmem:[%s202 + $0x3e4] sm:$0xf]
        %v487 = vld [vmem:[%s202 + $0x3e8] sm:$0xf]
        %v488 = vld [vmem:[%s202 + $0x3ec] sm:$0xf]
        %v489 = vld [vmem:[%s202 + $0x3f0] sm:$0xf]
        %v490 = vld [vmem:[%s202 + $0x3f4] sm:$0xf]
        %v491 = vld [vmem:[%s202 + $0x3f8] sm:$0xf]
        %v492 = vld [vmem:[%s202 + $0x3fc] sm:$0xf]
        %v493 = vld [vmem:[#allocation6] sm:$0xf]
        %v494 = vld [vmem:[#allocation6 + $0x4] sm:$0xf]
        %v495 = vld [vmem:[#allocation6 + $0x8] sm:$0xf]
        %v496 = vld [vmem:[#allocation6 + $0xc] sm:$0xf]
        %v497 = vld [vmem:[#allocation6 + $0x10] sm:$0xf]
        %v498 = vld [vmem:[#allocation6 + $0x14] sm:$0xf]
        %v499 = vld [vmem:[#allocation6 + $0x18] sm:$0xf]
        %v500 = vld [vmem:[#allocation6 + $0x1c] sm:$0xf]
        %v501 = vld [vmem:[#allocation6 + $0x20] sm:$0xf]
        %v502 = vld [vmem:[#allocation6 + $0x24] sm:$0xf]
        %v503 = vld [vmem:[#allocation6 + $0x28] sm:$0xf]
        %v504 = vld [vmem:[#allocation6 + $0x2c] sm:$0xf]
        %v505 = vld [vmem:[#allocation6 + $0x30] sm:$0xf]
        %v506 = vld [vmem:[#allocation6 + $0x34] sm:$0xf]
        %v507 = vld [vmem:[#allocation6 + $0x38] sm:$0xf]
        %v508 = vld [vmem:[#allocation6 + $0x3c] sm:$0xf]
        %v765 = vunpack.c.l.b16 %v237
        %v766 = vunpack.c.l.b16 %v238
        %v767 = vunpack.c.l.b16 %v239
        %v768 = vunpack.c.l.b16 %v240
        %v769 = vunpack.c.l.b16 %v241
        %v770 = vunpack.c.l.b16 %v242
        %v771 = vunpack.c.l.b16 %v243
        %v772 = vunpack.c.l.b16 %v244
        %v773 = vunpack.c.l.b16 %v245
        %v774 = vunpack.c.l.b16 %v246
        %v775 = vunpack.c.l.b16 %v247
        %v776 = vunpack.c.l.b16 %v248
        %v777 = vunpack.c.l.b16 %v249
        %v778 = vunpack.c.l.b16 %v250
        %v779 = vunpack.c.l.b16 %v251
        %v780 = vunpack.c.l.b16 %v252
        %v781 = vunpack.c.l.b16 %v253
        %v782 = vunpack.c.l.b16 %v254
        %v783 = vunpack.c.l.b16 %v255
        %v784 = vunpack.c.l.b16 %v256
        %v785 = vunpack.c.l.b16 %v257
        %v786 = vunpack.c.l.b16 %v258
        %v787 = vunpack.c.l.b16 %v259
        %v788 = vunpack.c.l.b16 %v260
        %v789 = vunpack.c.l.b16 %v261
        %v790 = vunpack.c.l.b16 %v262
        %v791 = vunpack.c.l.b16 %v263
        %v792 = vunpack.c.l.b16 %v264
        %v793 = vunpack.c.l.b16 %v265
        %v794 = vunpack.c.l.b16 %v266
        %v795 = vunpack.c.l.b16 %v267
        %v796 = vunpack.c.l.b16 %v268
        %v797 = vunpack.c.l.b16 %v269
        %v798 = vunpack.c.l.b16 %v270
        %v799 = vunpack.c.l.b16 %v271
        %v800 = vunpack.c.l.b16 %v272
        %v801 = vunpack.c.l.b16 %v273
        %v802 = vunpack.c.l.b16 %v274
        %v803 = vunpack.c.l.b16 %v275
        %v804 = vunpack.c.l.b16 %v276
        %v805 = vunpack.c.l.b16 %v277
        %v806 = vunpack.c.l.b16 %v278
        %v807 = vunpack.c.l.b16 %v279
        %v808 = vunpack.c.l.b16 %v280
        %v809 = vunpack.c.l.b16 %v281
        %v810 = vunpack.c.l.b16 %v282
        %v811 = vunpack.c.l.b16 %v283
        %v812 = vunpack.c.l.b16 %v284
        %v813 = vunpack.c.l.b16 %v285
        %v814 = vunpack.c.l.b16 %v286
        %v815 = vunpack.c.l.b16 %v287
        %v816 = vunpack.c.l.b16 %v288
        %v817 = vunpack.c.l.b16 %v289
        %v818 = vunpack.c.l.b16 %v290
        %v819 = vunpack.c.l.b16 %v291
        %v820 = vunpack.c.l.b16 %v292
        %v821 = vunpack.c.l.b16 %v293
        %v822 = vunpack.c.l.b16 %v294
        %v823 = vunpack.c.l.b16 %v295
        %v824 = vunpack.c.l.b16 %v296
        %v825 = vunpack.c.l.b16 %v297
        %v826 = vunpack.c.l.b16 %v298
        %v827 = vunpack.c.l.b16 %v299
        %v828 = vunpack.c.l.b16 %v300
        %v829 = vunpack.c.l.b16 %v301
        %v830 = vunpack.c.l.b16 %v302
        %v831 = vunpack.c.l.b16 %v303
        %v832 = vunpack.c.l.b16 %v304
        %v833 = vunpack.c.l.b16 %v305
        %v834 = vunpack.c.l.b16 %v306
        %v835 = vunpack.c.l.b16 %v307
        %v836 = vunpack.c.l.b16 %v308
        %v837 = vunpack.c.l.b16 %v309
        %v838 = vunpack.c.l.b16 %v310
        %v839 = vunpack.c.l.b16 %v311
        %v840 = vunpack.c.l.b16 %v312
        %v841 = vunpack.c.l.b16 %v313
        %v842 = vunpack.c.l.b16 %v314
        %v843 = vunpack.c.l.b16 %v315
        %v844 = vunpack.c.l.b16 %v316
        %v845 = vunpack.c.l.b16 %v317
        %v846 = vunpack.c.l.b16 %v318
        %v847 = vunpack.c.l.b16 %v319
        %v848 = vunpack.c.l.b16 %v320
        %v849 = vunpack.c.l.b16 %v321
        %v850 = vunpack.c.l.b16 %v322
        %v851 = vunpack.c.l.b16 %v323
        %v852 = vunpack.c.l.b16 %v324
        %v853 = vunpack.c.l.b16 %v325
        %v854 = vunpack.c.l.b16 %v326
        %v855 = vunpack.c.l.b16 %v327
        %v856 = vunpack.c.l.b16 %v328
        %v857 = vunpack.c.l.b16 %v329
        %v858 = vunpack.c.l.b16 %v330
        %v859 = vunpack.c.l.b16 %v331
        %v860 = vunpack.c.l.b16 %v332
        %v861 = vunpack.c.l.b16 %v333
        %v862 = vunpack.c.l.b16 %v334
        %v863 = vunpack.c.l.b16 %v335
        %v864 = vunpack.c.l.b16 %v336
        %v865 = vunpack.c.l.b16 %v337
        %v866 = vunpack.c.l.b16 %v338
        %v867 = vunpack.c.l.b16 %v339
        %v868 = vunpack.c.l.b16 %v340
        %v869 = vunpack.c.l.b16 %v341
        %v870 = vunpack.c.l.b16 %v342
        %v871 = vunpack.c.l.b16 %v343
        %v872 = vunpack.c.l.b16 %v344
        %v873 = vunpack.c.l.b16 %v345
        %v874 = vunpack.c.l.b16 %v346
        %v875 = vunpack.c.l.b16 %v347
        %v876 = vunpack.c.l.b16 %v348
        %v877 = vunpack.c.l.b16 %v349
        %v878 = vunpack.c.l.b16 %v350
        %v879 = vunpack.c.l.b16 %v351
        %v880 = vunpack.c.l.b16 %v352
        %v881 = vunpack.c.l.b16 %v353
        %v882 = vunpack.c.l.b16 %v354
        %v883 = vunpack.c.l.b16 %v355
        %v884 = vunpack.c.l.b16 %v356
        %v885 = vunpack.c.l.b16 %v357
        %v886 = vunpack.c.l.b16 %v358
        %v887 = vunpack.c.l.b16 %v359
        %v888 = vunpack.c.l.b16 %v360
        %v889 = vunpack.c.l.b16 %v361
        %v890 = vunpack.c.l.b16 %v362
        %v891 = vunpack.c.l.b16 %v363
        %v892 = vunpack.c.l.b16 %v364
        %v893 = vunpack.c.l.b16 %v365
        %v894 = vunpack.c.l.b16 %v366
        %v895 = vunpack.c.l.b16 %v367
        %v896 = vunpack.c.l.b16 %v368
        %v897 = vunpack.c.l.b16 %v369
        %v898 = vunpack.c.l.b16 %v370
        %v899 = vunpack.c.l.b16 %v371
        %v900 = vunpack.c.l.b16 %v372
        %v901 = vunpack.c.l.b16 %v373
        %v902 = vunpack.c.l.b16 %v374
        %v903 = vunpack.c.l.b16 %v375
        %v904 = vunpack.c.l.b16 %v376
        %v905 = vunpack.c.l.b16 %v377
        %v906 = vunpack.c.l.b16 %v378
        %v907 = vunpack.c.l.b16 %v379
        %v908 = vunpack.c.l.b16 %v380
        %v909 = vunpack.c.l.b16 %v381
        %v910 = vunpack.c.l.b16 %v382
        %v911 = vunpack.c.l.b16 %v383
        %v912 = vunpack.c.l.b16 %v384
        %v913 = vunpack.c.l.b16 %v385
        %v914 = vunpack.c.l.b16 %v386
        %v915 = vunpack.c.l.b16 %v387
        %v916 = vunpack.c.l.b16 %v388
        %v917 = vunpack.c.l.b16 %v389
        %v918 = vunpack.c.l.b16 %v390
        %v919 = vunpack.c.l.b16 %v391
        %v920 = vunpack.c.l.b16 %v392
        %v921 = vunpack.c.l.b16 %v393
        %v922 = vunpack.c.l.b16 %v394
        %v923 = vunpack.c.l.b16 %v395
        %v924 = vunpack.c.l.b16 %v396
        %v925 = vunpack.c.l.b16 %v397
        %v926 = vunpack.c.l.b16 %v398
        %v927 = vunpack.c.l.b16 %v399
        %v928 = vunpack.c.l.b16 %v400
        %v929 = vunpack.c.l.b16 %v401
        %v930 = vunpack.c.l.b16 %v402
        %v931 = vunpack.c.l.b16 %v403
        %v932 = vunpack.c.l.b16 %v404
        %v933 = vunpack.c.l.b16 %v405
        %v934 = vunpack.c.l.b16 %v406
        %v935 = vunpack.c.l.b16 %v407
        %v936 = vunpack.c.l.b16 %v408
        %v937 = vunpack.c.l.b16 %v409
        %v938 = vunpack.c.l.b16 %v410
        %v939 = vunpack.c.l.b16 %v411
        %v940 = vunpack.c.l.b16 %v412
        %v941 = vunpack.c.l.b16 %v413
        %v942 = vunpack.c.l.b16 %v414
        %v943 = vunpack.c.l.b16 %v415
        %v944 = vunpack.c.l.b16 %v416
        %v945 = vunpack.c.l.b16 %v417
        %v946 = vunpack.c.l.b16 %v418
        %v947 = vunpack.c.l.b16 %v419
        %v948 = vunpack.c.l.b16 %v420
        %v949 = vunpack.c.l.b16 %v421
        %v950 = vunpack.c.l.b16 %v422
        %v951 = vunpack.c.l.b16 %v423
        %v952 = vunpack.c.l.b16 %v424
        %v953 = vunpack.c.l.b16 %v425
        %v954 = vunpack.c.l.b16 %v426
        %v955 = vunpack.c.l.b16 %v427
        %v956 = vunpack.c.l.b16 %v428
        %v957 = vunpack.c.l.b16 %v429
        %v958 = vunpack.c.l.b16 %v430
        %v959 = vunpack.c.l.b16 %v431
        %v960 = vunpack.c.l.b16 %v432
        %v961 = vunpack.c.l.b16 %v433
        %v962 = vunpack.c.l.b16 %v434
        %v963 = vunpack.c.l.b16 %v435
        %v964 = vunpack.c.l.b16 %v436
        %v965 = vunpack.c.l.b16 %v437
        %v966 = vunpack.c.l.b16 %v438
        %v967 = vunpack.c.l.b16 %v439
        %v968 = vunpack.c.l.b16 %v440
        %v969 = vunpack.c.l.b16 %v441
        %v970 = vunpack.c.l.b16 %v442
        %v971 = vunpack.c.l.b16 %v443
        %v972 = vunpack.c.l.b16 %v444
        %v973 = vunpack.c.l.b16 %v445
        %v974 = vunpack.c.l.b16 %v446
        %v975 = vunpack.c.l.b16 %v447
        %v976 = vunpack.c.l.b16 %v448
        %v977 = vunpack.c.l.b16 %v449
        %v978 = vunpack.c.l.b16 %v450
        %v979 = vunpack.c.l.b16 %v451
        %v980 = vunpack.c.l.b16 %v452
        %v981 = vunpack.c.l.b16 %v453
        %v982 = vunpack.c.l.b16 %v454
        %v983 = vunpack.c.l.b16 %v455
        %v984 = vunpack.c.l.b16 %v456
        %v985 = vunpack.c.l.b16 %v457
        %v986 = vunpack.c.l.b16 %v458
        %v987 = vunpack.c.l.b16 %v459
        %v988 = vunpack.c.l.b16 %v460
        %v989 = vunpack.c.l.b16 %v461
        %v990 = vunpack.c.l.b16 %v462
        %v991 = vunpack.c.l.b16 %v463
        %v992 = vunpack.c.l.b16 %v464
        %v993 = vunpack.c.l.b16 %v465
        %v994 = vunpack.c.l.b16 %v466
        %v995 = vunpack.c.l.b16 %v467
        %v996 = vunpack.c.l.b16 %v468
        %v997 = vunpack.c.l.b16 %v469
        %v998 = vunpack.c.l.b16 %v470
        %v999 = vunpack.c.l.b16 %v471
        %v1000 = vunpack.c.l.b16 %v472
        %v1001 = vunpack.c.l.b16 %v473
        %v1002 = vunpack.c.l.b16 %v474
        %v1003 = vunpack.c.l.b16 %v475
        %v1004 = vunpack.c.l.b16 %v476
        %v1005 = vunpack.c.l.b16 %v477
        %v1006 = vunpack.c.l.b16 %v478
        %v1007 = vunpack.c.l.b16 %v479
        %v1008 = vunpack.c.l.b16 %v480
        %v1009 = vunpack.c.l.b16 %v481
        %v1010 = vunpack.c.l.b16 %v482
        %v1011 = vunpack.c.l.b16 %v483
        %v1012 = vunpack.c.l.b16 %v484
        %v1013 = vunpack.c.l.b16 %v485
        %v1014 = vunpack.c.l.b16 %v486
        %v1015 = vunpack.c.l.b16 %v487
        %v1016 = vunpack.c.l.b16 %v488
        %v1017 = vunpack.c.l.b16 %v489
        %v1018 = vunpack.c.l.b16 %v490
        %v1019 = vunpack.c.l.b16 %v491
        %v1020 = vunpack.c.l.b16 %v492
        %v1021 = vpack.c.b16 %v766, %v765
        %v1022 = vpack.c.b16 %v768, %v767
        %v1023 = vpack.c.b16 %v770, %v769
        %v1024 = vpack.c.b16 %v772, %v771
        %v1025 = vpack.c.b16 %v774, %v773
        %v1026 = vpack.c.b16 %v776, %v775
        %v1027 = vpack.c.b16 %v778, %v777
        %v1028 = vpack.c.b16 %v780, %v779
        %v1029 = vpack.c.b16 %v782, %v781
        %v1030 = vpack.c.b16 %v784, %v783
        %v1031 = vpack.c.b16 %v786, %v785
        %v1032 = vpack.c.b16 %v788, %v787
        %v1033 = vpack.c.b16 %v790, %v789
        %v1034 = vpack.c.b16 %v792, %v791
        %v1035 = vpack.c.b16 %v794, %v793
        %v1036 = vpack.c.b16 %v796, %v795
        %v1037 = vpack.c.b16 %v798, %v797
        %v1038 = vpack.c.b16 %v800, %v799
        %v1039 = vpack.c.b16 %v802, %v801
        %v1040 = vpack.c.b16 %v804, %v803
        %v1041 = vpack.c.b16 %v806, %v805
        %v1042 = vpack.c.b16 %v808, %v807
        %v1043 = vpack.c.b16 %v810, %v809
        %v1044 = vpack.c.b16 %v812, %v811
        %v1045 = vpack.c.b16 %v814, %v813
        %v1046 = vpack.c.b16 %v816, %v815
        %v1047 = vpack.c.b16 %v818, %v817
        %v1048 = vpack.c.b16 %v820, %v819
        %v1049 = vpack.c.b16 %v822, %v821
        %v1050 = vpack.c.b16 %v824, %v823
        %v1051 = vpack.c.b16 %v826, %v825
        %v1052 = vpack.c.b16 %v828, %v827
        %v1053 = vpack.c.b16 %v830, %v829
        %v1054 = vpack.c.b16 %v832, %v831
        %v1055 = vpack.c.b16 %v834, %v833
        %v1056 = vpack.c.b16 %v836, %v835
        %v1057 = vpack.c.b16 %v838, %v837
        %v1058 = vpack.c.b16 %v840, %v839
        %v1059 = vpack.c.b16 %v842, %v841
        %v1060 = vpack.c.b16 %v844, %v843
        %v1061 = vpack.c.b16 %v846, %v845
        %v1062 = vpack.c.b16 %v848, %v847
        %v1063 = vpack.c.b16 %v850, %v849
        %v1064 = vpack.c.b16 %v852, %v851
        %v1065 = vpack.c.b16 %v854, %v853
        %v1066 = vpack.c.b16 %v856, %v855
        %v1067 = vpack.c.b16 %v858, %v857
        %v1068 = vpack.c.b16 %v860, %v859
        %v1069 = vpack.c.b16 %v862, %v861
        %v1070 = vpack.c.b16 %v864, %v863
        %v1071 = vpack.c.b16 %v866, %v865
        %v1072 = vpack.c.b16 %v868, %v867
        %v1073 = vpack.c.b16 %v870, %v869
        %v1074 = vpack.c.b16 %v872, %v871
        %v1075 = vpack.c.b16 %v874, %v873
        %v1076 = vpack.c.b16 %v876, %v875
        %v1077 = vpack.c.b16 %v878, %v877
        %v1078 = vpack.c.b16 %v880, %v879
        %v1079 = vpack.c.b16 %v882, %v881
        %v1080 = vpack.c.b16 %v884, %v883
        %v1081 = vpack.c.b16 %v886, %v885
        %v1082 = vpack.c.b16 %v888, %v887
        %v1083 = vpack.c.b16 %v890, %v889
        %v1084 = vpack.c.b16 %v892, %v891
        %v1085 = vpack.c.b16 %v894, %v893
        %v1086 = vpack.c.b16 %v896, %v895
        %v1087 = vpack.c.b16 %v898, %v897
        %v1088 = vpack.c.b16 %v900, %v899
        %v1089 = vpack.c.b16 %v902, %v901
        %v1090 = vpack.c.b16 %v904, %v903
        %v1091 = vpack.c.b16 %v906, %v905
        %v1092 = vpack.c.b16 %v908, %v907
        %v1093 = vpack.c.b16 %v910, %v909
        %v1094 = vpack.c.b16 %v912, %v911
        %v1095 = vpack.c.b16 %v914, %v913
        %v1096 = vpack.c.b16 %v916, %v915
        %v1097 = vpack.c.b16 %v918, %v917
        %v1098 = vpack.c.b16 %v920, %v919
        %v1099 = vpack.c.b16 %v922, %v921
        %v1100 = vpack.c.b16 %v924, %v923
        %v1101 = vpack.c.b16 %v926, %v925
        %v1102 = vpack.c.b16 %v928, %v927
        %v1103 = vpack.c.b16 %v930, %v929
        %v1104 = vpack.c.b16 %v932, %v931
        %v1105 = vpack.c.b16 %v934, %v933
        %v1106 = vpack.c.b16 %v936, %v935
        %v1107 = vpack.c.b16 %v938, %v937
        %v1108 = vpack.c.b16 %v940, %v939
        %v1109 = vpack.c.b16 %v942, %v941
        %v1110 = vpack.c.b16 %v944, %v943
        %v1111 = vpack.c.b16 %v946, %v945
        %v1112 = vpack.c.b16 %v948, %v947
        %v1113 = vpack.c.b16 %v950, %v949
        %v1114 = vpack.c.b16 %v952, %v951
        %v1115 = vpack.c.b16 %v954, %v953
        %v1116 = vpack.c.b16 %v956, %v955
        %v1117 = vpack.c.b16 %v958, %v957
        %v1118 = vpack.c.b16 %v960, %v959
        %v1119 = vpack.c.b16 %v962, %v961
        %v1120 = vpack.c.b16 %v964, %v963
        %v1121 = vpack.c.b16 %v966, %v965
        %v1122 = vpack.c.b16 %v968, %v967
        %v1123 = vpack.c.b16 %v970, %v969
        %v1124 = vpack.c.b16 %v972, %v971
        %v1125 = vpack.c.b16 %v974, %v973
        %v1126 = vpack.c.b16 %v976, %v975
        %v1127 = vpack.c.b16 %v978, %v977
        %v1128 = vpack.c.b16 %v980, %v979
        %v1129 = vpack.c.b16 %v982, %v981
        %v1130 = vpack.c.b16 %v984, %v983
        %v1131 = vpack.c.b16 %v986, %v985
        %v1132 = vpack.c.b16 %v988, %v987
        %v1133 = vpack.c.b16 %v990, %v989
        %v1134 = vpack.c.b16 %v992, %v991
        %v1135 = vpack.c.b16 %v994, %v993
        %v1136 = vpack.c.b16 %v996, %v995
        %v1137 = vpack.c.b16 %v998, %v997
        %v1138 = vpack.c.b16 %v1000, %v999
        %v1139 = vpack.c.b16 %v1002, %v1001
        %v1140 = vpack.c.b16 %v1004, %v1003
        %v1141 = vpack.c.b16 %v1006, %v1005
        %v1142 = vpack.c.b16 %v1008, %v1007
        %v1143 = vpack.c.b16 %v1010, %v1009
        %v1144 = vpack.c.b16 %v1012, %v1011
        %v1145 = vpack.c.b16 %v1014, %v1013
        %v1146 = vpack.c.b16 %v1016, %v1015
        %v1147 = vpack.c.b16 %v1018, %v1017
        %v1148 = vpack.c.b16 %v1020, %v1019
        %v1293 = vunpack.c.l.b16 %v493
        %v1294 = vunpack.c.l.b16 %v494
        %v1295 = vunpack.c.l.b16 %v495
        %v1296 = vunpack.c.l.b16 %v496
        %v1297 = vunpack.c.l.b16 %v497
        %v1298 = vunpack.c.l.b16 %v498
        %v1299 = vunpack.c.l.b16 %v499
        %v1300 = vunpack.c.l.b16 %v500
        %v1301 = vunpack.c.l.b16 %v501
        %v1302 = vunpack.c.l.b16 %v502
        %v1303 = vunpack.c.l.b16 %v503
        %v1304 = vunpack.c.l.b16 %v504
        %v1305 = vunpack.c.l.b16 %v505
        %v1306 = vunpack.c.l.b16 %v506
        %v1307 = vunpack.c.l.b16 %v507
        %v1308 = vunpack.c.l.b16 %v508
        %v1309 = vpack.c.b16 %v1294, %v1293
        %v1310 = vpack.c.b16 %v1296, %v1295
        %v1311 = vpack.c.b16 %v1298, %v1297
        %v1312 = vpack.c.b16 %v1300, %v1299
        %v1313 = vpack.c.b16 %v1302, %v1301
        %v1314 = vpack.c.b16 %v1304, %v1303
        %v1315 = vpack.c.b16 %v1306, %v1305
        %v1316 = vpack.c.b16 %v1308, %v1307
        %1325 = vmatpush.bf16.msra.mxu0 %v1316
        %1326 = vmatpush.bf16.msra.mxu0 %v1315
        %1327 = vmatpush.bf16.msra.mxu0 %v1314
        %1328 = vmatpush.bf16.msra.mxu0 %v1313
        %1329 = vmatpush.bf16.msra.mxu0 %v1312
        %1330 = vmatpush.bf16.msra.mxu0 %v1311
        %1331 = vmatpush.bf16.msra.mxu0 %v1310
        %1332 = vmatpush.bf16.msra.mxu0 %v1309
        %1333 = vmatmul.bf16.gmra.mxu0 %v1021
        %v1334 = vpop.f32.mrf.mxu0
        %v1335 = vadd.f32 0.0, %v1334
        %v1336 = vpop.f32.mrf.mxu0
        %v1337 = vadd.f32 0.0, %v1336
        %1338 = vmatmul.bf16.gmra.mxu0 %v1022
        %v1339 = vpop.f32.mrf.mxu0
        %v1340 = vadd.f32 0.0, %v1339
        %v1341 = vpop.f32.mrf.mxu0
        %v1342 = vadd.f32 0.0, %v1341
        %1343 = vmatmul.bf16.gmra.mxu0 %v1023
        %v1344 = vpop.f32.mrf.mxu0
        %v1345 = vadd.f32 0.0, %v1344
        %v1346 = vpop.f32.mrf.mxu0
        %v1347 = vadd.f32 0.0, %v1346
        %1348 = vmatmul.bf16.gmra.mxu0 %v1024
        %v1349 = vpop.f32.mrf.mxu0
        %v1350 = vadd.f32 0.0, %v1349
        %v1351 = vpop.f32.mrf.mxu0
        %v1352 = vadd.f32 0.0, %v1351
        %1353 = vmatmul.bf16.gmra.mxu0 %v1025
        %v1354 = vpop.f32.mrf.mxu0
        %v1355 = vadd.f32 0.0, %v1354
        %v1356 = vpop.f32.mrf.mxu0
        %v1357 = vadd.f32 0.0, %v1356
        %1358 = vmatmul.bf16.gmra.mxu0 %v1026
        %v1359 = vpop.f32.mrf.mxu0
        %v1360 = vadd.f32 0.0, %v1359
        %v1361 = vpop.f32.mrf.mxu0
        %v1362 = vadd.f32 0.0, %v1361
        %1363 = vmatmul.bf16.gmra.mxu0 %v1027
        %v1364 = vpop.f32.mrf.mxu0
        %v1365 = vadd.f32 0.0, %v1364
        %v1366 = vpop.f32.mrf.mxu0
        %v1367 = vadd.f32 0.0, %v1366
        %1368 = vmatmul.bf16.gmra.mxu0 %v1028
        %v1369 = vpop.f32.mrf.mxu0
        %v1370 = vadd.f32 0.0, %v1369
        %v1371 = vpop.f32.mrf.mxu0
        %v1372 = vadd.f32 0.0, %v1371
        %1373 = vmatmul.bf16.gmra.mxu0 %v1029
        %v1374 = vpop.f32.mrf.mxu0
        %v1375 = vadd.f32 0.0, %v1374
        %v1376 = vpop.f32.mrf.mxu0
        %v1377 = vadd.f32 0.0, %v1376
        %1378 = vmatmul.bf16.gmra.mxu0 %v1030
        %v1379 = vpop.f32.mrf.mxu0
        %v1380 = vadd.f32 0.0, %v1379
        %v1381 = vpop.f32.mrf.mxu0
        %v1382 = vadd.f32 0.0, %v1381
        %1383 = vmatmul.bf16.gmra.mxu0 %v1031
        %v1384 = vpop.f32.mrf.mxu0
        %v1385 = vadd.f32 0.0, %v1384
        %v1386 = vpop.f32.mrf.mxu0
        %v1387 = vadd.f32 0.0, %v1386
        %1388 = vmatmul.bf16.gmra.mxu0 %v1032
        %v1389 = vpop.f32.mrf.mxu0
        %v1390 = vadd.f32 0.0, %v1389
        %v1391 = vpop.f32.mrf.mxu0
        %v1392 = vadd.f32 0.0, %v1391
        %1393 = vmatmul.bf16.gmra.mxu0 %v1033
        %v1394 = vpop.f32.mrf.mxu0
        %v1395 = vadd.f32 0.0, %v1394
        %v1396 = vpop.f32.mrf.mxu0
        %v1397 = vadd.f32 0.0, %v1396
        %1398 = vmatmul.bf16.gmra.mxu0 %v1034
        %v1399 = vpop.f32.mrf.mxu0
        %v1400 = vadd.f32 0.0, %v1399
        %v1401 = vpop.f32.mrf.mxu0
        %v1402 = vadd.f32 0.0, %v1401
        %1403 = vmatmul.bf16.gmra.mxu0 %v1035
        %v1404 = vpop.f32.mrf.mxu0
        %v1405 = vadd.f32 0.0, %v1404
        %v1406 = vpop.f32.mrf.mxu0
        %v1407 = vadd.f32 0.0, %v1406
        %1408 = vmatmul.bf16.gmra.mxu0 %v1036
        %v1409 = vpop.f32.mrf.mxu0
        %v1410 = vadd.f32 0.0, %v1409
        %v1411 = vpop.f32.mrf.mxu0
        %v1412 = vadd.f32 0.0, %v1411
        %1413 = vmatmul.bf16.gmra.mxu0 %v1037
        %v1414 = vpop.f32.mrf.mxu0
        %v1415 = vadd.f32 0.0, %v1414
        %v1416 = vpop.f32.mrf.mxu0
        %v1417 = vadd.f32 0.0, %v1416
        %1418 = vmatmul.bf16.gmra.mxu0 %v1038
        %v1419 = vpop.f32.mrf.mxu0
        %v1420 = vadd.f32 0.0, %v1419
        %v1421 = vpop.f32.mrf.mxu0
        %v1422 = vadd.f32 0.0, %v1421
        %1423 = vmatmul.bf16.gmra.mxu0 %v1039
        %v1424 = vpop.f32.mrf.mxu0
        %v1425 = vadd.f32 0.0, %v1424
        %v1426 = vpop.f32.mrf.mxu0
        %v1427 = vadd.f32 0.0, %v1426
        %1428 = vmatmul.bf16.gmra.mxu0 %v1040
        %v1429 = vpop.f32.mrf.mxu0
        %v1430 = vadd.f32 0.0, %v1429
        %v1431 = vpop.f32.mrf.mxu0
        %v1432 = vadd.f32 0.0, %v1431
        %1433 = vmatmul.bf16.gmra.mxu0 %v1041
        %v1434 = vpop.f32.mrf.mxu0
        %v1435 = vadd.f32 0.0, %v1434
        %v1436 = vpop.f32.mrf.mxu0
        %v1437 = vadd.f32 0.0, %v1436
        %1438 = vmatmul.bf16.gmra.mxu0 %v1042
        %v1439 = vpop.f32.mrf.mxu0
        %v1440 = vadd.f32 0.0, %v1439
        %v1441 = vpop.f32.mrf.mxu0
        %v1442 = vadd.f32 0.0, %v1441
        %1443 = vmatmul.bf16.gmra.mxu0 %v1043
        %v1444 = vpop.f32.mrf.mxu0
        %v1445 = vadd.f32 0.0, %v1444
        %v1446 = vpop.f32.mrf.mxu0
        %v1447 = vadd.f32 0.0, %v1446
        %1448 = vmatmul.bf16.gmra.mxu0 %v1044
        %v1449 = vpop.f32.mrf.mxu0
        %v1450 = vadd.f32 0.0, %v1449
        %v1451 = vpop.f32.mrf.mxu0
        %v1452 = vadd.f32 0.0, %v1451
        %1453 = vmatmul.bf16.gmra.mxu0 %v1045
        %v1454 = vpop.f32.mrf.mxu0
        %v1455 = vadd.f32 0.0, %v1454
        %v1456 = vpop.f32.mrf.mxu0
        %v1457 = vadd.f32 0.0, %v1456
        %1458 = vmatmul.bf16.gmra.mxu0 %v1046
        %v1459 = vpop.f32.mrf.mxu0
        %v1460 = vadd.f32 0.0, %v1459
        %v1461 = vpop.f32.mrf.mxu0
        %v1462 = vadd.f32 0.0, %v1461
        %1463 = vmatmul.bf16.gmra.mxu0 %v1047
        %v1464 = vpop.f32.mrf.mxu0
        %v1465 = vadd.f32 0.0, %v1464
        %v1466 = vpop.f32.mrf.mxu0
        %v1467 = vadd.f32 0.0, %v1466
        %1468 = vmatmul.bf16.gmra.mxu0 %v1048
        %v1469 = vpop.f32.mrf.mxu0
        %v1470 = vadd.f32 0.0, %v1469
        %v1471 = vpop.f32.mrf.mxu0
        %v1472 = vadd.f32 0.0, %v1471
        %1473 = vmatmul.bf16.gmra.mxu0 %v1049
        %v1474 = vpop.f32.mrf.mxu0
        %v1475 = vadd.f32 0.0, %v1474
        %v1476 = vpop.f32.mrf.mxu0
        %v1477 = vadd.f32 0.0, %v1476
        %1478 = vmatmul.bf16.gmra.mxu0 %v1050
        %v1479 = vpop.f32.mrf.mxu0
        %v1480 = vadd.f32 0.0, %v1479
        %v1481 = vpop.f32.mrf.mxu0
        %v1482 = vadd.f32 0.0, %v1481
        %1483 = vmatmul.bf16.gmra.mxu0 %v1051
        %v1484 = vpop.f32.mrf.mxu0
        %v1485 = vadd.f32 0.0, %v1484
        %v1486 = vpop.f32.mrf.mxu0
        %v1487 = vadd.f32 0.0, %v1486
        %1488 = vmatmul.bf16.gmra.mxu0 %v1052
        %v1489 = vpop.f32.mrf.mxu0
        %v1490 = vadd.f32 0.0, %v1489
        %v1491 = vpop.f32.mrf.mxu0
        %v1492 = vadd.f32 0.0, %v1491
        %1493 = vmatmul.bf16.gmra.mxu0 %v1053
        %v1494 = vpop.f32.mrf.mxu0
        %v1495 = vadd.f32 0.0, %v1494
        %v1496 = vpop.f32.mrf.mxu0
        %v1497 = vadd.f32 0.0, %v1496
        %1498 = vmatmul.bf16.gmra.mxu0 %v1054
        %v1499 = vpop.f32.mrf.mxu0
        %v1500 = vadd.f32 0.0, %v1499
        %v1501 = vpop.f32.mrf.mxu0
        %v1502 = vadd.f32 0.0, %v1501
        %1503 = vmatmul.bf16.gmra.mxu0 %v1055
        %v1504 = vpop.f32.mrf.mxu0
        %v1505 = vadd.f32 0.0, %v1504
        %v1506 = vpop.f32.mrf.mxu0
        %v1507 = vadd.f32 0.0, %v1506
        %1508 = vmatmul.bf16.gmra.mxu0 %v1056
        %v1509 = vpop.f32.mrf.mxu0
        %v1510 = vadd.f32 0.0, %v1509
        %v1511 = vpop.f32.mrf.mxu0
        %v1512 = vadd.f32 0.0, %v1511
        %1513 = vmatmul.bf16.gmra.mxu0 %v1057
        %v1514 = vpop.f32.mrf.mxu0
        %v1515 = vadd.f32 0.0, %v1514
        %v1516 = vpop.f32.mrf.mxu0
        %v1517 = vadd.f32 0.0, %v1516
        %1518 = vmatmul.bf16.gmra.mxu0 %v1058
        %v1519 = vpop.f32.mrf.mxu0
        %v1520 = vadd.f32 0.0, %v1519
        %v1521 = vpop.f32.mrf.mxu0
        %v1522 = vadd.f32 0.0, %v1521
        %1523 = vmatmul.bf16.gmra.mxu0 %v1059
        %v1524 = vpop.f32.mrf.mxu0
        %v1525 = vadd.f32 0.0, %v1524
        %v1526 = vpop.f32.mrf.mxu0
        %v1527 = vadd.f32 0.0, %v1526
        %1528 = vmatmul.bf16.gmra.mxu0 %v1060
        %v1529 = vpop.f32.mrf.mxu0
        %v1530 = vadd.f32 0.0, %v1529
        %v1531 = vpop.f32.mrf.mxu0
        %v1532 = vadd.f32 0.0, %v1531
        %1533 = vmatmul.bf16.gmra.mxu0 %v1061
        %v1534 = vpop.f32.mrf.mxu0
        %v1535 = vadd.f32 0.0, %v1534
        %v1536 = vpop.f32.mrf.mxu0
        %v1537 = vadd.f32 0.0, %v1536
        %1538 = vmatmul.bf16.gmra.mxu0 %v1062
        %v1539 = vpop.f32.mrf.mxu0
        %v1540 = vadd.f32 0.0, %v1539
        %v1541 = vpop.f32.mrf.mxu0
        %v1542 = vadd.f32 0.0, %v1541
        %1543 = vmatmul.bf16.gmra.mxu0 %v1063
        %v1544 = vpop.f32.mrf.mxu0
        %v1545 = vadd.f32 0.0, %v1544
        %v1546 = vpop.f32.mrf.mxu0
        %v1547 = vadd.f32 0.0, %v1546
        %1548 = vmatmul.bf16.gmra.mxu0 %v1064
        %v1549 = vpop.f32.mrf.mxu0
        %v1550 = vadd.f32 0.0, %v1549
        %v1551 = vpop.f32.mrf.mxu0
        %v1552 = vadd.f32 0.0, %v1551
        %1553 = vmatmul.bf16.gmra.mxu0 %v1065
        %v1554 = vpop.f32.mrf.mxu0
        %v1555 = vadd.f32 0.0, %v1554
        %v1556 = vpop.f32.mrf.mxu0
        %v1557 = vadd.f32 0.0, %v1556
        %1558 = vmatmul.bf16.gmra.mxu0 %v1066
        %v1559 = vpop.f32.mrf.mxu0
        %v1560 = vadd.f32 0.0, %v1559
        %v1561 = vpop.f32.mrf.mxu0
        %v1562 = vadd.f32 0.0, %v1561
        %1563 = vmatmul.bf16.gmra.mxu0 %v1067
        %v1564 = vpop.f32.mrf.mxu0
        %v1565 = vadd.f32 0.0, %v1564
        %v1566 = vpop.f32.mrf.mxu0
        %v1567 = vadd.f32 0.0, %v1566
        %1568 = vmatmul.bf16.gmra.mxu0 %v1068
        %v1569 = vpop.f32.mrf.mxu0
        %v1570 = vadd.f32 0.0, %v1569
        %v1571 = vpop.f32.mrf.mxu0
        %v1572 = vadd.f32 0.0, %v1571
        %1573 = vmatmul.bf16.gmra.mxu0 %v1069
        %v1574 = vpop.f32.mrf.mxu0
        %v1575 = vadd.f32 0.0, %v1574
        %v1576 = vpop.f32.mrf.mxu0
        %v1577 = vadd.f32 0.0, %v1576
        %1578 = vmatmul.bf16.gmra.mxu0 %v1070
        %v1579 = vpop.f32.mrf.mxu0
        %v1580 = vadd.f32 0.0, %v1579
        %v1581 = vpop.f32.mrf.mxu0
        %v1582 = vadd.f32 0.0, %v1581
        %1583 = vmatmul.bf16.gmra.mxu0 %v1071
        %v1584 = vpop.f32.mrf.mxu0
        %v1585 = vadd.f32 0.0, %v1584
        %v1586 = vpop.f32.mrf.mxu0
        %v1587 = vadd.f32 0.0, %v1586
        %1588 = vmatmul.bf16.gmra.mxu0 %v1072
        %v1589 = vpop.f32.mrf.mxu0
        %v1590 = vadd.f32 0.0, %v1589
        %v1591 = vpop.f32.mrf.mxu0
        %v1592 = vadd.f32 0.0, %v1591
        %1593 = vmatmul.bf16.gmra.mxu0 %v1073
        %v1594 = vpop.f32.mrf.mxu0
        %v1595 = vadd.f32 0.0, %v1594
        %v1596 = vpop.f32.mrf.mxu0
        %v1597 = vadd.f32 0.0, %v1596
        %1598 = vmatmul.bf16.gmra.mxu0 %v1074
        %v1599 = vpop.f32.mrf.mxu0
        %v1600 = vadd.f32 0.0, %v1599
        %v1601 = vpop.f32.mrf.mxu0
        %v1602 = vadd.f32 0.0, %v1601
        %1603 = vmatmul.bf16.gmra.mxu0 %v1075
        %v1604 = vpop.f32.mrf.mxu0
        %v1605 = vadd.f32 0.0, %v1604
        %v1606 = vpop.f32.mrf.mxu0
        %v1607 = vadd.f32 0.0, %v1606
        %1608 = vmatmul.bf16.gmra.mxu0 %v1076
        %v1609 = vpop.f32.mrf.mxu0
        %v1610 = vadd.f32 0.0, %v1609
        %v1611 = vpop.f32.mrf.mxu0
        %v1612 = vadd.f32 0.0, %v1611
        %1613 = vmatmul.bf16.gmra.mxu0 %v1077
        %v1614 = vpop.f32.mrf.mxu0
        %v1615 = vadd.f32 0.0, %v1614
        %v1616 = vpop.f32.mrf.mxu0
        %v1617 = vadd.f32 0.0, %v1616
        %1618 = vmatmul.bf16.gmra.mxu0 %v1078
        %v1619 = vpop.f32.mrf.mxu0
        %v1620 = vadd.f32 0.0, %v1619
        %v1621 = vpop.f32.mrf.mxu0
        %v1622 = vadd.f32 0.0, %v1621
        %1623 = vmatmul.bf16.gmra.mxu0 %v1079
        %v1624 = vpop.f32.mrf.mxu0
        %v1625 = vadd.f32 0.0, %v1624
        %v1626 = vpop.f32.mrf.mxu0
        %v1627 = vadd.f32 0.0, %v1626
        %1628 = vmatmul.bf16.gmra.mxu0 %v1080
        %v1629 = vpop.f32.mrf.mxu0
        %v1630 = vadd.f32 0.0, %v1629
        %v1631 = vpop.f32.mrf.mxu0
        %v1632 = vadd.f32 0.0, %v1631
        %1633 = vmatmul.bf16.gmra.mxu0 %v1081
        %v1634 = vpop.f32.mrf.mxu0
        %v1635 = vadd.f32 0.0, %v1634
        %v1636 = vpop.f32.mrf.mxu0
        %v1637 = vadd.f32 0.0, %v1636
        %1638 = vmatmul.bf16.gmra.mxu0 %v1082
        %v1639 = vpop.f32.mrf.mxu0
        %v1640 = vadd.f32 0.0, %v1639
        %v1641 = vpop.f32.mrf.mxu0
        %v1642 = vadd.f32 0.0, %v1641
        %1643 = vmatmul.bf16.gmra.mxu0 %v1083
        %v1644 = vpop.f32.mrf.mxu0
        %v1645 = vadd.f32 0.0, %v1644
        %v1646 = vpop.f32.mrf.mxu0
        %v1647 = vadd.f32 0.0, %v1646
        %1648 = vmatmul.bf16.gmra.mxu0 %v1084
        %v1649 = vpop.f32.mrf.mxu0
        %v1650 = vadd.f32 0.0, %v1649
        %v1651 = vpop.f32.mrf.mxu0
        %v1652 = vadd.f32 0.0, %v1651
        %1653 = vmatmul.bf16.gmra.mxu0 %v1085
        %v1654 = vpop.f32.mrf.mxu0
        %v1655 = vadd.f32 0.0, %v1654
        %v1656 = vpop.f32.mrf.mxu0
        %v1657 = vadd.f32 0.0, %v1656
        %1658 = vmatmul.bf16.gmra.mxu0 %v1086
        %v1659 = vpop.f32.mrf.mxu0
        %v1660 = vadd.f32 0.0, %v1659
        %v1661 = vpop.f32.mrf.mxu0
        %v1662 = vadd.f32 0.0, %v1661
        %1663 = vmatmul.bf16.gmra.mxu0 %v1087
        %v1664 = vpop.f32.mrf.mxu0
        %v1665 = vadd.f32 0.0, %v1664
        %v1666 = vpop.f32.mrf.mxu0
        %v1667 = vadd.f32 0.0, %v1666
        %1668 = vmatmul.bf16.gmra.mxu0 %v1088
        %v1669 = vpop.f32.mrf.mxu0
        %v1670 = vadd.f32 0.0, %v1669
        %v1671 = vpop.f32.mrf.mxu0
        %v1672 = vadd.f32 0.0, %v1671
        %1673 = vmatmul.bf16.gmra.mxu0 %v1089
        %v1674 = vpop.f32.mrf.mxu0
        %v1675 = vadd.f32 0.0, %v1674
        %v1676 = vpop.f32.mrf.mxu0
        %v1677 = vadd.f32 0.0, %v1676
        %1678 = vmatmul.bf16.gmra.mxu0 %v1090
        %v1679 = vpop.f32.mrf.mxu0
        %v1680 = vadd.f32 0.0, %v1679
        %v1681 = vpop.f32.mrf.mxu0
        %v1682 = vadd.f32 0.0, %v1681
        %1683 = vmatmul.bf16.gmra.mxu0 %v1091
        %v1684 = vpop.f32.mrf.mxu0
        %v1685 = vadd.f32 0.0, %v1684
        %v1686 = vpop.f32.mrf.mxu0
        %v1687 = vadd.f32 0.0, %v1686
        %1688 = vmatmul.bf16.gmra.mxu0 %v1092
        %v1689 = vpop.f32.mrf.mxu0
        %v1690 = vadd.f32 0.0, %v1689
        %v1691 = vpop.f32.mrf.mxu0
        %v1692 = vadd.f32 0.0, %v1691
        %1693 = vmatmul.bf16.gmra.mxu0 %v1093
        %v1694 = vpop.f32.mrf.mxu0
        %v1695 = vadd.f32 0.0, %v1694
        %v1696 = vpop.f32.mrf.mxu0
        %v1697 = vadd.f32 0.0, %v1696
        %1698 = vmatmul.bf16.gmra.mxu0 %v1094
        %v1699 = vpop.f32.mrf.mxu0
        %v1700 = vadd.f32 0.0, %v1699
        %v1701 = vpop.f32.mrf.mxu0
        %v1702 = vadd.f32 0.0, %v1701
        %1703 = vmatmul.bf16.gmra.mxu0 %v1095
        %v1704 = vpop.f32.mrf.mxu0
        %v1705 = vadd.f32 0.0, %v1704
        %v1706 = vpop.f32.mrf.mxu0
        %v1707 = vadd.f32 0.0, %v1706
        %1708 = vmatmul.bf16.gmra.mxu0 %v1096
        %v1709 = vpop.f32.mrf.mxu0
        %v1710 = vadd.f32 0.0, %v1709
        %v1711 = vpop.f32.mrf.mxu0
        %v1712 = vadd.f32 0.0, %v1711
        %1713 = vmatmul.bf16.gmra.mxu0 %v1097
        %v1714 = vpop.f32.mrf.mxu0
        %v1715 = vadd.f32 0.0, %v1714
        %v1716 = vpop.f32.mrf.mxu0
        %v1717 = vadd.f32 0.0, %v1716
        %1718 = vmatmul.bf16.gmra.mxu0 %v1098
        %v1719 = vpop.f32.mrf.mxu0
        %v1720 = vadd.f32 0.0, %v1719
        %v1721 = vpop.f32.mrf.mxu0
        %v1722 = vadd.f32 0.0, %v1721
        %1723 = vmatmul.bf16.gmra.mxu0 %v1099
        %v1724 = vpop.f32.mrf.mxu0
        %v1725 = vadd.f32 0.0, %v1724
        %v1726 = vpop.f32.mrf.mxu0
        %v1727 = vadd.f32 0.0, %v1726
        %1728 = vmatmul.bf16.gmra.mxu0 %v1100
        %v1729 = vpop.f32.mrf.mxu0
        %v1730 = vadd.f32 0.0, %v1729
        %v1731 = vpop.f32.mrf.mxu0
        %v1732 = vadd.f32 0.0, %v1731
        %1733 = vmatmul.bf16.gmra.mxu0 %v1101
        %v1734 = vpop.f32.mrf.mxu0
        %v1735 = vadd.f32 0.0, %v1734
        %v1736 = vpop.f32.mrf.mxu0
        %v1737 = vadd.f32 0.0, %v1736
        %1738 = vmatmul.bf16.gmra.mxu0 %v1102
        %v1739 = vpop.f32.mrf.mxu0
        %v1740 = vadd.f32 0.0, %v1739
        %v1741 = vpop.f32.mrf.mxu0
        %v1742 = vadd.f32 0.0, %v1741
        %1743 = vmatmul.bf16.gmra.mxu0 %v1103
        %v1744 = vpop.f32.mrf.mxu0
        %v1745 = vadd.f32 0.0, %v1744
        %v1746 = vpop.f32.mrf.mxu0
        %v1747 = vadd.f32 0.0, %v1746
        %1748 = vmatmul.bf16.gmra.mxu0 %v1104
        %v1749 = vpop.f32.mrf.mxu0
        %v1750 = vadd.f32 0.0, %v1749
        %v1751 = vpop.f32.mrf.mxu0
        %v1752 = vadd.f32 0.0, %v1751
        %1753 = vmatmul.bf16.gmra.mxu0 %v1105
        %v1754 = vpop.f32.mrf.mxu0
        %v1755 = vadd.f32 0.0, %v1754
        %v1756 = vpop.f32.mrf.mxu0
        %v1757 = vadd.f32 0.0, %v1756
        %1758 = vmatmul.bf16.gmra.mxu0 %v1106
        %v1759 = vpop.f32.mrf.mxu0
        %v1760 = vadd.f32 0.0, %v1759
        %v1761 = vpop.f32.mrf.mxu0
        %v1762 = vadd.f32 0.0, %v1761
        %1763 = vmatmul.bf16.gmra.mxu0 %v1107
        %v1764 = vpop.f32.mrf.mxu0
        %v1765 = vadd.f32 0.0, %v1764
        %v1766 = vpop.f32.mrf.mxu0
        %v1767 = vadd.f32 0.0, %v1766
        %1768 = vmatmul.bf16.gmra.mxu0 %v1108
        %v1769 = vpop.f32.mrf.mxu0
        %v1770 = vadd.f32 0.0, %v1769
        %v1771 = vpop.f32.mrf.mxu0
        %v1772 = vadd.f32 0.0, %v1771
        %1773 = vmatmul.bf16.gmra.mxu0 %v1109
        %v1774 = vpop.f32.mrf.mxu0
        %v1775 = vadd.f32 0.0, %v1774
        %v1776 = vpop.f32.mrf.mxu0
        %v1777 = vadd.f32 0.0, %v1776
        %1778 = vmatmul.bf16.gmra.mxu0 %v1110
        %v1779 = vpop.f32.mrf.mxu0
        %v1780 = vadd.f32 0.0, %v1779
        %v1781 = vpop.f32.mrf.mxu0
        %v1782 = vadd.f32 0.0, %v1781
        %1783 = vmatmul.bf16.gmra.mxu0 %v1111
        %v1784 = vpop.f32.mrf.mxu0
        %v1785 = vadd.f32 0.0, %v1784
        %v1786 = vpop.f32.mrf.mxu0
        %v1787 = vadd.f32 0.0, %v1786
        %1788 = vmatmul.bf16.gmra.mxu0 %v1112
        %v1789 = vpop.f32.mrf.mxu0
        %v1790 = vadd.f32 0.0, %v1789
        %v1791 = vpop.f32.mrf.mxu0
        %v1792 = vadd.f32 0.0, %v1791
        %1793 = vmatmul.bf16.gmra.mxu0 %v1113
        %v1794 = vpop.f32.mrf.mxu0
        %v1795 = vadd.f32 0.0, %v1794
        %v1796 = vpop.f32.mrf.mxu0
        %v1797 = vadd.f32 0.0, %v1796
        %1798 = vmatmul.bf16.gmra.mxu0 %v1114
        %v1799 = vpop.f32.mrf.mxu0
        %v1800 = vadd.f32 0.0, %v1799
        %v1801 = vpop.f32.mrf.mxu0
        %v1802 = vadd.f32 0.0, %v1801
        %1803 = vmatmul.bf16.gmra.mxu0 %v1115
        %v1804 = vpop.f32.mrf.mxu0
        %v1805 = vadd.f32 0.0, %v1804
        %v1806 = vpop.f32.mrf.mxu0
        %v1807 = vadd.f32 0.0, %v1806
        %1808 = vmatmul.bf16.gmra.mxu0 %v1116
        %v1809 = vpop.f32.mrf.mxu0
        %v1810 = vadd.f32 0.0, %v1809
        %v1811 = vpop.f32.mrf.mxu0
        %v1812 = vadd.f32 0.0, %v1811
        %1813 = vmatmul.bf16.gmra.mxu0 %v1117
        %v1814 = vpop.f32.mrf.mxu0
        %v1815 = vadd.f32 0.0, %v1814
        %v1816 = vpop.f32.mrf.mxu0
        %v1817 = vadd.f32 0.0, %v1816
        %1818 = vmatmul.bf16.gmra.mxu0 %v1118
        %v1819 = vpop.f32.mrf.mxu0
        %v1820 = vadd.f32 0.0, %v1819
        %v1821 = vpop.f32.mrf.mxu0
        %v1822 = vadd.f32 0.0, %v1821
        %1823 = vmatmul.bf16.gmra.mxu0 %v1119
        %v1824 = vpop.f32.mrf.mxu0
        %v1825 = vadd.f32 0.0, %v1824
        %v1826 = vpop.f32.mrf.mxu0
        %v1827 = vadd.f32 0.0, %v1826
        %1828 = vmatmul.bf16.gmra.mxu0 %v1120
        %v1829 = vpop.f32.mrf.mxu0
        %v1830 = vadd.f32 0.0, %v1829
        %v1831 = vpop.f32.mrf.mxu0
        %v1832 = vadd.f32 0.0, %v1831
        %1833 = vmatmul.bf16.gmra.mxu0 %v1121
        %v1834 = vpop.f32.mrf.mxu0
        %v1835 = vadd.f32 0.0, %v1834
        %v1836 = vpop.f32.mrf.mxu0
        %v1837 = vadd.f32 0.0, %v1836
        %1838 = vmatmul.bf16.gmra.mxu0 %v1122
        %v1839 = vpop.f32.mrf.mxu0
        %v1840 = vadd.f32 0.0, %v1839
        %v1841 = vpop.f32.mrf.mxu0
        %v1842 = vadd.f32 0.0, %v1841
        %1843 = vmatmul.bf16.gmra.mxu0 %v1123
        %v1844 = vpop.f32.mrf.mxu0
        %v1845 = vadd.f32 0.0, %v1844
        %v1846 = vpop.f32.mrf.mxu0
        %v1847 = vadd.f32 0.0, %v1846
        %1848 = vmatmul.bf16.gmra.mxu0 %v1124
        %v1849 = vpop.f32.mrf.mxu0
        %v1850 = vadd.f32 0.0, %v1849
        %v1851 = vpop.f32.mrf.mxu0
        %v1852 = vadd.f32 0.0, %v1851
        %1853 = vmatmul.bf16.gmra.mxu0 %v1125
        %v1854 = vpop.f32.mrf.mxu0
        %v1855 = vadd.f32 0.0, %v1854
        %v1856 = vpop.f32.mrf.mxu0
        %v1857 = vadd.f32 0.0, %v1856
        %1858 = vmatmul.bf16.gmra.mxu0 %v1126
        %v1859 = vpop.f32.mrf.mxu0
        %v1860 = vadd.f32 0.0, %v1859
        %v1861 = vpop.f32.mrf.mxu0
        %v1862 = vadd.f32 0.0, %v1861
        %1863 = vmatmul.bf16.gmra.mxu0 %v1127
        %v1864 = vpop.f32.mrf.mxu0
        %v1865 = vadd.f32 0.0, %v1864
        %v1866 = vpop.f32.mrf.mxu0
        %v1867 = vadd.f32 0.0, %v1866
        %1868 = vmatmul.bf16.gmra.mxu0 %v1128
        %v1869 = vpop.f32.mrf.mxu0
        %v1870 = vadd.f32 0.0, %v1869
        %v1871 = vpop.f32.mrf.mxu0
        %v1872 = vadd.f32 0.0, %v1871
        %1873 = vmatmul.bf16.gmra.mxu0 %v1129
        %v1874 = vpop.f32.mrf.mxu0
        %v1875 = vadd.f32 0.0, %v1874
        %v1876 = vpop.f32.mrf.mxu0
        %v1877 = vadd.f32 0.0, %v1876
        %1878 = vmatmul.bf16.gmra.mxu0 %v1130
        %v1879 = vpop.f32.mrf.mxu0
        %v1880 = vadd.f32 0.0, %v1879
        %v1881 = vpop.f32.mrf.mxu0
        %v1882 = vadd.f32 0.0, %v1881
        %1883 = vmatmul.bf16.gmra.mxu0 %v1131
        %v1884 = vpop.f32.mrf.mxu0
        %v1885 = vadd.f32 0.0, %v1884
        %v1886 = vpop.f32.mrf.mxu0
        %v1887 = vadd.f32 0.0, %v1886
        %1888 = vmatmul.bf16.gmra.mxu0 %v1132
        %v1889 = vpop.f32.mrf.mxu0
        %v1890 = vadd.f32 0.0, %v1889
        %v1891 = vpop.f32.mrf.mxu0
        %v1892 = vadd.f32 0.0, %v1891
        %1893 = vmatmul.bf16.gmra.mxu0 %v1133
        %v1894 = vpop.f32.mrf.mxu0
        %v1895 = vadd.f32 0.0, %v1894
        %v1896 = vpop.f32.mrf.mxu0
        %v1897 = vadd.f32 0.0, %v1896
        %1898 = vmatmul.bf16.gmra.mxu0 %v1134
        %v1899 = vpop.f32.mrf.mxu0
        %v1900 = vadd.f32 0.0, %v1899
        %v1901 = vpop.f32.mrf.mxu0
        %v1902 = vadd.f32 0.0, %v1901
        %1903 = vmatmul.bf16.gmra.mxu0 %v1135
        %v1904 = vpop.f32.mrf.mxu0
        %v1905 = vadd.f32 0.0, %v1904
        %v1906 = vpop.f32.mrf.mxu0
        %v1907 = vadd.f32 0.0, %v1906
        %1908 = vmatmul.bf16.gmra.mxu0 %v1136
        %v1909 = vpop.f32.mrf.mxu0
        %v1910 = vadd.f32 0.0, %v1909
        %v1911 = vpop.f32.mrf.mxu0
        %v1912 = vadd.f32 0.0, %v1911
        %1913 = vmatmul.bf16.gmra.mxu0 %v1137
        %v1914 = vpop.f32.mrf.mxu0
        %v1915 = vadd.f32 0.0, %v1914
        %v1916 = vpop.f32.mrf.mxu0
        %v1917 = vadd.f32 0.0, %v1916
        %1918 = vmatmul.bf16.gmra.mxu0 %v1138
        %v1919 = vpop.f32.mrf.mxu0
        %v1920 = vadd.f32 0.0, %v1919
        %v1921 = vpop.f32.mrf.mxu0
        %v1922 = vadd.f32 0.0, %v1921
        %1923 = vmatmul.bf16.gmra.mxu0 %v1139
        %v1924 = vpop.f32.mrf.mxu0
        %v1925 = vadd.f32 0.0, %v1924
        %v1926 = vpop.f32.mrf.mxu0
        %v1927 = vadd.f32 0.0, %v1926
        %1928 = vmatmul.bf16.gmra.mxu0 %v1140
        %v1929 = vpop.f32.mrf.mxu0
        %v1930 = vadd.f32 0.0, %v1929
        %v1931 = vpop.f32.mrf.mxu0
        %v1932 = vadd.f32 0.0, %v1931
        %1933 = vmatmul.bf16.gmra.mxu0 %v1141
        %v1934 = vpop.f32.mrf.mxu0
        %v1935 = vadd.f32 0.0, %v1934
        %v1936 = vpop.f32.mrf.mxu0
        %v1937 = vadd.f32 0.0, %v1936
        %1938 = vmatmul.bf16.gmra.mxu0 %v1142
        %v1939 = vpop.f32.mrf.mxu0
        %v1940 = vadd.f32 0.0, %v1939
        %v1941 = vpop.f32.mrf.mxu0
        %v1942 = vadd.f32 0.0, %v1941
        %1943 = vmatmul.bf16.gmra.mxu0 %v1143
        %v1944 = vpop.f32.mrf.mxu0
        %v1945 = vadd.f32 0.0, %v1944
        %v1946 = vpop.f32.mrf.mxu0
        %v1947 = vadd.f32 0.0, %v1946
        %1948 = vmatmul.bf16.gmra.mxu0 %v1144
        %v1949 = vpop.f32.mrf.mxu0
        %v1950 = vadd.f32 0.0, %v1949
        %v1951 = vpop.f32.mrf.mxu0
        %v1952 = vadd.f32 0.0, %v1951
        %1953 = vmatmul.bf16.gmra.mxu0 %v1145
        %v1954 = vpop.f32.mrf.mxu0
        %v1955 = vadd.f32 0.0, %v1954
        %v1956 = vpop.f32.mrf.mxu0
        %v1957 = vadd.f32 0.0, %v1956
        %1958 = vmatmul.bf16.gmra.mxu0 %v1146
        %v1959 = vpop.f32.mrf.mxu0
        %v1960 = vadd.f32 0.0, %v1959
        %v1961 = vpop.f32.mrf.mxu0
        %v1962 = vadd.f32 0.0, %v1961
        %1963 = vmatmul.bf16.gmra.mxu0 %v1147
        %v1964 = vpop.f32.mrf.mxu0
        %v1965 = vadd.f32 0.0, %v1964
        %v1966 = vpop.f32.mrf.mxu0
        %v1967 = vadd.f32 0.0, %v1966
        %1968 = vmatmul.bf16.gmra.mxu0 %v1148
        %v1969 = vpop.f32.mrf.mxu0
        %v1970 = vadd.f32 0.0, %v1969
        %v1971 = vpop.f32.mrf.mxu0
        %v1972 = vadd.f32 0.0, %v1971
        %1973 = vdwg.mxu0
        %1974 = vst [vmem:[#allocation2] sm:$0xff] %v1335
        %1975 = vst [vmem:[#allocation2 + $0x8] sm:$0xff] %v1337
        %1976 = vst [vmem:[#allocation2 + $0x10] sm:$0xff] %v1340
        %1977 = vst [vmem:[#allocation2 + $0x18] sm:$0xff] %v1342
        %1978 = vst [vmem:[#allocation2 + $0x20] sm:$0xff] %v1345
        %1979 = vst [vmem:[#allocation2 + $0x28] sm:$0xff] %v1347
        %1980 = vst [vmem:[#allocation2 + $0x30] sm:$0xff] %v1350
        %1981 = vst [vmem:[#allocation2 + $0x38] sm:$0xff] %v1352
        %1982 = vst [vmem:[#allocation2 + $0x40] sm:$0xff] %v1355
        %1983 = vst [vmem:[#allocation2 + $0x48] sm:$0xff] %v1357
        %1984 = vst [vmem:[#allocation2 + $0x50] sm:$0xff] %v1360
        %1985 = vst [vmem:[#allocation2 + $0x58] sm:$0xff] %v1362
        %1986 = vst [vmem:[#allocation2 + $0x60] sm:$0xff] %v1365
        %1987 = vst [vmem:[#allocation2 + $0x68] sm:$0xff] %v1367
        %1988 = vst [vmem:[#allocation2 + $0x70] sm:$0xff] %v1370
        %1989 = vst [vmem:[#allocation2 + $0x78] sm:$0xff] %v1372
        %1990 = vst [vmem:[#allocation2 + $0x80] sm:$0xff] %v1375
        %1991 = vst [vmem:[#allocation2 + $0x88] sm:$0xff] %v1377
        %1992 = vst [vmem:[#allocation2 + $0x90] sm:$0xff] %v1380
        %1993 = vst [vmem:[#allocation2 + $0x98] sm:$0xff] %v1382
        %1994 = vst [vmem:[#allocation2 + $0xa0] sm:$0xff] %v1385
        %1995 = vst [vmem:[#allocation2 + $0xa8] sm:$0xff] %v1387
        %1996 = vst [vmem:[#allocation2 + $0xb0] sm:$0xff] %v1390
        %1997 = vst [vmem:[#allocation2 + $0xb8] sm:$0xff] %v1392
        %1998 = vst [vmem:[#allocation2 + $0xc0] sm:$0xff] %v1395
        %1999 = vst [vmem:[#allocation2 + $0xc8] sm:$0xff] %v1397
        %2000 = vst [vmem:[#allocation2 + $0xd0] sm:$0xff] %v1400
        %2001 = vst [vmem:[#allocation2 + $0xd8] sm:$0xff] %v1402
        %2002 = vst [vmem:[#allocation2 + $0xe0] sm:$0xff] %v1405
        %2003 = vst [vmem:[#allocation2 + $0xe8] sm:$0xff] %v1407
        %2004 = vst [vmem:[#allocation2 + $0xf0] sm:$0xff] %v1410
        %2005 = vst [vmem:[#allocation2 + $0xf8] sm:$0xff] %v1412
        %2006 = vst [vmem:[#allocation2 + $0x100] sm:$0xff] %v1415
        %2007 = vst [vmem:[#allocation2 + $0x108] sm:$0xff] %v1417
        %2008 = vst [vmem:[#allocation2 + $0x110] sm:$0xff] %v1420
        %2009 = vst [vmem:[#allocation2 + $0x118] sm:$0xff] %v1422
        %2010 = vst [vmem:[#allocation2 + $0x120] sm:$0xff] %v1425
        %2011 = vst [vmem:[#allocation2 + $0x128] sm:$0xff] %v1427
        %2012 = vst [vmem:[#allocation2 + $0x130] sm:$0xff] %v1430
        %2013 = vst [vmem:[#allocation2 + $0x138] sm:$0xff] %v1432
        %2014 = vst [vmem:[#allocation2 + $0x140] sm:$0xff] %v1435
        %2015 = vst [vmem:[#allocation2 + $0x148] sm:$0xff] %v1437
        %2016 = vst [vmem:[#allocation2 + $0x150] sm:$0xff] %v1440
        %2017 = vst [vmem:[#allocation2 + $0x158] sm:$0xff] %v1442
        %2018 = vst [vmem:[#allocation2 + $0x160] sm:$0xff] %v1445
        %2019 = vst [vmem:[#allocation2 + $0x168] sm:$0xff] %v1447
        %2020 = vst [vmem:[#allocation2 + $0x170] sm:$0xff] %v1450
        %2021 = vst [vmem:[#allocation2 + $0x178] sm:$0xff] %v1452
        %2022 = vst [vmem:[#allocation2 + $0x180] sm:$0xff] %v1455
        %2023 = vst [vmem:[#allocation2 + $0x188] sm:$0xff] %v1457
        %2024 = vst [vmem:[#allocation2 + $0x190] sm:$0xff] %v1460
        %2025 = vst [vmem:[#allocation2 + $0x198] sm:$0xff] %v1462
        %2026 = vst [vmem:[#allocation2 + $0x1a0] sm:$0xff] %v1465
        %2027 = vst [vmem:[#allocation2 + $0x1a8] sm:$0xff] %v1467
        %2028 = vst [vmem:[#allocation2 + $0x1b0] sm:$0xff] %v1470
        %2029 = vst [vmem:[#allocation2 + $0x1b8] sm:$0xff] %v1472
        %2030 = vst [vmem:[#allocation2 + $0x1c0] sm:$0xff] %v1475
        %2031 = vst [vmem:[#allocation2 + $0x1c8] sm:$0xff] %v1477
        %2032 = vst [vmem:[#allocation2 + $0x1d0] sm:$0xff] %v1480
        %2033 = vst [vmem:[#allocation2 + $0x1d8] sm:$0xff] %v1482
        %2034 = vst [vmem:[#allocation2 + $0x1e0] sm:$0xff] %v1485
        %2035 = vst [vmem:[#allocation2 + $0x1e8] sm:$0xff] %v1487
        %2036 = vst [vmem:[#allocation2 + $0x1f0] sm:$0xff] %v1490
        %2037 = vst [vmem:[#allocation2 + $0x1f8] sm:$0xff] %v1492
        %2038 = vst [vmem:[#allocation2 + $0x200] sm:$0xff] %v1495
        %2039 = vst [vmem:[#allocation2 + $0x208] sm:$0xff] %v1497
        %2040 = vst [vmem:[#allocation2 + $0x210] sm:$0xff] %v1500
        %2041 = vst [vmem:[#allocation2 + $0x218] sm:$0xff] %v1502
        %2042 = vst [vmem:[#allocation2 + $0x220] sm:$0xff] %v1505
        %2043 = vst [vmem:[#allocation2 + $0x228] sm:$0xff] %v1507
        %2044 = vst [vmem:[#allocation2 + $0x230] sm:$0xff] %v1510
        %2045 = vst [vmem:[#allocation2 + $0x238] sm:$0xff] %v1512
        %2046 = vst [vmem:[#allocation2 + $0x240] sm:$0xff] %v1515
        %2047 = vst [vmem:[#allocation2 + $0x248] sm:$0xff] %v1517
        %2048 = vst [vmem:[#allocation2 + $0x250] sm:$0xff] %v1520
        %2049 = vst [vmem:[#allocation2 + $0x258] sm:$0xff] %v1522
        %2050 = vst [vmem:[#allocation2 + $0x260] sm:$0xff] %v1525
        %2051 = vst [vmem:[#allocation2 + $0x268] sm:$0xff] %v1527
        %2052 = vst [vmem:[#allocation2 + $0x270] sm:$0xff] %v1530
        %2053 = vst [vmem:[#allocation2 + $0x278] sm:$0xff] %v1532
        %2054 = vst [vmem:[#allocation2 + $0x280] sm:$0xff] %v1535
        %2055 = vst [vmem:[#allocation2 + $0x288] sm:$0xff] %v1537
        %2056 = vst [vmem:[#allocation2 + $0x290] sm:$0xff] %v1540
        %2057 = vst [vmem:[#allocation2 + $0x298] sm:$0xff] %v1542
        %2058 = vst [vmem:[#allocation2 + $0x2a0] sm:$0xff] %v1545
        %2059 = vst [vmem:[#allocation2 + $0x2a8] sm:$0xff] %v1547
        %2060 = vst [vmem:[#allocation2 + $0x2b0] sm:$0xff] %v1550
        %2061 = vst [vmem:[#allocation2 + $0x2b8] sm:$0xff] %v1552
        %2062 = vst [vmem:[#allocation2 + $0x2c0] sm:$0xff] %v1555
        %2063 = vst [vmem:[#allocation2 + $0x2c8] sm:$0xff] %v1557
        %2064 = vst [vmem:[#allocation2 + $0x2d0] sm:$0xff] %v1560
        %2065 = vst [vmem:[#allocation2 + $0x2d8] sm:$0xff] %v1562
        %2066 = vst [vmem:[#allocation2 + $0x2e0] sm:$0xff] %v1565
        %2067 = vst [vmem:[#allocation2 + $0x2e8] sm:$0xff] %v1567
        %2068 = vst [vmem:[#allocation2 + $0x2f0] sm:$0xff] %v1570
        %2069 = vst [vmem:[#allocation2 + $0x2f8] sm:$0xff] %v1572
        %2070 = vst [vmem:[#allocation2 + $0x300] sm:$0xff] %v1575
        %2071 = vst [vmem:[#allocation2 + $0x308] sm:$0xff] %v1577
        %2072 = vst [vmem:[#allocation2 + $0x310] sm:$0xff] %v1580
        %2073 = vst [vmem:[#allocation2 + $0x318] sm:$0xff] %v1582
        %2074 = vst [vmem:[#allocation2 + $0x320] sm:$0xff] %v1585
        %2075 = vst [vmem:[#allocation2 + $0x328] sm:$0xff] %v1587
        %2076 = vst [vmem:[#allocation2 + $0x330] sm:$0xff] %v1590
        %2077 = vst [vmem:[#allocation2 + $0x338] sm:$0xff] %v1592
        %2078 = vst [vmem:[#allocation2 + $0x340] sm:$0xff] %v1595
        %2079 = vst [vmem:[#allocation2 + $0x348] sm:$0xff] %v1597
        %2080 = vst [vmem:[#allocation2 + $0x350] sm:$0xff] %v1600
        %2081 = vst [vmem:[#allocation2 + $0x358] sm:$0xff] %v1602
        %2082 = vst [vmem:[#allocation2 + $0x360] sm:$0xff] %v1605
        %2083 = vst [vmem:[#allocation2 + $0x368] sm:$0xff] %v1607
        %2084 = vst [vmem:[#allocation2 + $0x370] sm:$0xff] %v1610
        %2085 = vst [vmem:[#allocation2 + $0x378] sm:$0xff] %v1612
        %2086 = vst [vmem:[#allocation2 + $0x380] sm:$0xff] %v1615
        %2087 = vst [vmem:[#allocation2 + $0x388] sm:$0xff] %v1617
        %2088 = vst [vmem:[#allocation2 + $0x390] sm:$0xff] %v1620
        %2089 = vst [vmem:[#allocation2 + $0x398] sm:$0xff] %v1622
        %2090 = vst [vmem:[#allocation2 + $0x3a0] sm:$0xff] %v1625
        %2091 = vst [vmem:[#allocation2 + $0x3a8] sm:$0xff] %v1627
        %2092 = vst [vmem:[#allocation2 + $0x3b0] sm:$0xff] %v1630
        %2093 = vst [vmem:[#allocation2 + $0x3b8] sm:$0xff] %v1632
        %2094 = vst [vmem:[#allocation2 + $0x3c0] sm:$0xff] %v1635
        %2095 = vst [vmem:[#allocation2 + $0x3c8] sm:$0xff] %v1637
        %2096 = vst [vmem:[#allocation2 + $0x3d0] sm:$0xff] %v1640
        %2097 = vst [vmem:[#allocation2 + $0x3d8] sm:$0xff] %v1642
        %2098 = vst [vmem:[#allocation2 + $0x3e0] sm:$0xff] %v1645
        %2099 = vst [vmem:[#allocation2 + $0x3e8] sm:$0xff] %v1647
        %2100 = vst [vmem:[#allocation2 + $0x3f0] sm:$0xff] %v1650
        %2101 = vst [vmem:[#allocation2 + $0x3f8] sm:$0xff] %v1652
        %2102 = vst [vmem:[#allocation2 + $0x400] sm:$0xff] %v1655
        %2103 = vst [vmem:[#allocation2 + $0x408] sm:$0xff] %v1657
        %2104 = vst [vmem:[#allocation2 + $0x410] sm:$0xff] %v1660
        %2105 = vst [vmem:[#allocation2 + $0x418] sm:$0xff] %v1662
        %2106 = vst [vmem:[#allocation2 + $0x420] sm:$0xff] %v1665
        %2107 = vst [vmem:[#allocation2 + $0x428] sm:$0xff] %v1667
        %2108 = vst [vmem:[#allocation2 + $0x430] sm:$0xff] %v1670
        %2109 = vst [vmem:[#allocation2 + $0x438] sm:$0xff] %v1672
        %2110 = vst [vmem:[#allocation2 + $0x440] sm:$0xff] %v1675
        %2111 = vst [vmem:[#allocation2 + $0x448] sm:$0xff] %v1677
        %2112 = vst [vmem:[#allocation2 + $0x450] sm:$0xff] %v1680
        %2113 = vst [vmem:[#allocation2 + $0x458] sm:$0xff] %v1682
        %2114 = vst [vmem:[#allocation2 + $0x460] sm:$0xff] %v1685
        %2115 = vst [vmem:[#allocation2 + $0x468] sm:$0xff] %v1687
        %2116 = vst [vmem:[#allocation2 + $0x470] sm:$0xff] %v1690
        %2117 = vst [vmem:[#allocation2 + $0x478] sm:$0xff] %v1692
        %2118 = vst [vmem:[#allocation2 + $0x480] sm:$0xff] %v1695
        %2119 = vst [vmem:[#allocation2 + $0x488] sm:$0xff] %v1697
        %2120 = vst [vmem:[#allocation2 + $0x490] sm:$0xff] %v1700
        %2121 = vst [vmem:[#allocation2 + $0x498] sm:$0xff] %v1702
        %2122 = vst [vmem:[#allocation2 + $0x4a0] sm:$0xff] %v1705
        %2123 = vst [vmem:[#allocation2 + $0x4a8] sm:$0xff] %v1707
        %2124 = vst [vmem:[#allocation2 + $0x4b0] sm:$0xff] %v1710
        %2125 = vst [vmem:[#allocation2 + $0x4b8] sm:$0xff] %v1712
        %2126 = vst [vmem:[#allocation2 + $0x4c0] sm:$0xff] %v1715
        %2127 = vst [vmem:[#allocation2 + $0x4c8] sm:$0xff] %v1717
        %2128 = vst [vmem:[#allocation2 + $0x4d0] sm:$0xff] %v1720
        %2129 = vst [vmem:[#allocation2 + $0x4d8] sm:$0xff] %v1722
        %2130 = vst [vmem:[#allocation2 + $0x4e0] sm:$0xff] %v1725
        %2131 = vst [vmem:[#allocation2 + $0x4e8] sm:$0xff] %v1727
        %2132 = vst [vmem:[#allocation2 + $0x4f0] sm:$0xff] %v1730
        %2133 = vst [vmem:[#allocation2 + $0x4f8] sm:$0xff] %v1732
        %2134 = vst [vmem:[#allocation2 + $0x500] sm:$0xff] %v1735
        %2135 = vst [vmem:[#allocation2 + $0x508] sm:$0xff] %v1737
        %2136 = vst [vmem:[#allocation2 + $0x510] sm:$0xff] %v1740
        %2137 = vst [vmem:[#allocation2 + $0x518] sm:$0xff] %v1742
        %2138 = vst [vmem:[#allocation2 + $0x520] sm:$0xff] %v1745
        %2139 = vst [vmem:[#allocation2 + $0x528] sm:$0xff] %v1747
        %2140 = vst [vmem:[#allocation2 + $0x530] sm:$0xff] %v1750
        %2141 = vst [vmem:[#allocation2 + $0x538] sm:$0xff] %v1752
        %2142 = vst [vmem:[#allocation2 + $0x540] sm:$0xff] %v1755
        %2143 = vst [vmem:[#allocation2 + $0x548] sm:$0xff] %v1757
        %2144 = vst [vmem:[#allocation2 + $0x550] sm:$0xff] %v1760
        %2145 = vst [vmem:[#allocation2 + $0x558] sm:$0xff] %v1762
        %2146 = vst [vmem:[#allocation2 + $0x560] sm:$0xff] %v1765
        %2147 = vst [vmem:[#allocation2 + $0x568] sm:$0xff] %v1767
        %2148 = vst [vmem:[#allocation2 + $0x570] sm:$0xff] %v1770
        %2149 = vst [vmem:[#allocation2 + $0x578] sm:$0xff] %v1772
        %2150 = vst [vmem:[#allocation2 + $0x580] sm:$0xff] %v1775
        %2151 = vst [vmem:[#allocation2 + $0x588] sm:$0xff] %v1777
        %2152 = vst [vmem:[#allocation2 + $0x590] sm:$0xff] %v1780
        %2153 = vst [vmem:[#allocation2 + $0x598] sm:$0xff] %v1782
        %2154 = vst [vmem:[#allocation2 + $0x5a0] sm:$0xff] %v1785
        %2155 = vst [vmem:[#allocation2 + $0x5a8] sm:$0xff] %v1787
        %2156 = vst [vmem:[#allocation2 + $0x5b0] sm:$0xff] %v1790
        %2157 = vst [vmem:[#allocation2 + $0x5b8] sm:$0xff] %v1792
        %2158 = vst [vmem:[#allocation2 + $0x5c0] sm:$0xff] %v1795
        %2159 = vst [vmem:[#allocation2 + $0x5c8] sm:$0xff] %v1797
        %2160 = vst [vmem:[#allocation2 + $0x5d0] sm:$0xff] %v1800
        %2161 = vst [vmem:[#allocation2 + $0x5d8] sm:$0xff] %v1802
        %2162 = vst [vmem:[#allocation2 + $0x5e0] sm:$0xff] %v1805
        %2163 = vst [vmem:[#allocation2 + $0x5e8] sm:$0xff] %v1807
        %2164 = vst [vmem:[#allocation2 + $0x5f0] sm:$0xff] %v1810
        %2165 = vst [vmem:[#allocation2 + $0x5f8] sm:$0xff] %v1812
        %2166 = vst [vmem:[#allocation2 + $0x600] sm:$0xff] %v1815
        %2167 = vst [vmem:[#allocation2 + $0x608] sm:$0xff] %v1817
        %2168 = vst [vmem:[#allocation2 + $0x610] sm:$0xff] %v1820
        %2169 = vst [vmem:[#allocation2 + $0x618] sm:$0xff] %v1822
        %2170 = vst [vmem:[#allocation2 + $0x620] sm:$0xff] %v1825
        %2171 = vst [vmem:[#allocation2 + $0x628] sm:$0xff] %v1827
        %2172 = vst [vmem:[#allocation2 + $0x630] sm:$0xff] %v1830
        %2173 = vst [vmem:[#allocation2 + $0x638] sm:$0xff] %v1832
        %2174 = vst [vmem:[#allocation2 + $0x640] sm:$0xff] %v1835
        %2175 = vst [vmem:[#allocation2 + $0x648] sm:$0xff] %v1837
        %2176 = vst [vmem:[#allocation2 + $0x650] sm:$0xff] %v1840
        %2177 = vst [vmem:[#allocation2 + $0x658] sm:$0xff] %v1842
        %2178 = vst [vmem:[#allocation2 + $0x660] sm:$0xff] %v1845
        %2179 = vst [vmem:[#allocation2 + $0x668] sm:$0xff] %v1847
        %2180 = vst [vmem:[#allocation2 + $0x670] sm:$0xff] %v1850
        %2181 = vst [vmem:[#allocation2 + $0x678] sm:$0xff] %v1852
        %2182 = vst [vmem:[#allocation2 + $0x680] sm:$0xff] %v1855
        %2183 = vst [vmem:[#allocation2 + $0x688] sm:$0xff] %v1857
        %2184 = vst [vmem:[#allocation2 + $0x690] sm:$0xff] %v1860
        %2185 = vst [vmem:[#allocation2 + $0x698] sm:$0xff] %v1862
        %2186 = vst [vmem:[#allocation2 + $0x6a0] sm:$0xff] %v1865
        %2187 = vst [vmem:[#allocation2 + $0x6a8] sm:$0xff] %v1867
        %2188 = vst [vmem:[#allocation2 + $0x6b0] sm:$0xff] %v1870
        %2189 = vst [vmem:[#allocation2 + $0x6b8] sm:$0xff] %v1872
        %2190 = vst [vmem:[#allocation2 + $0x6c0] sm:$0xff] %v1875
        %2191 = vst [vmem:[#allocation2 + $0x6c8] sm:$0xff] %v1877
        %2192 = vst [vmem:[#allocation2 + $0x6d0] sm:$0xff] %v1880
        %2193 = vst [vmem:[#allocation2 + $0x6d8] sm:$0xff] %v1882
        %2194 = vst [vmem:[#allocation2 + $0x6e0] sm:$0xff] %v1885
        %2195 = vst [vmem:[#allocation2 + $0x6e8] sm:$0xff] %v1887
        %2196 = vst [vmem:[#allocation2 + $0x6f0] sm:$0xff] %v1890
        %2197 = vst [vmem:[#allocation2 + $0x6f8] sm:$0xff] %v1892
        %2198 = vst [vmem:[#allocation2 + $0x700] sm:$0xff] %v1895
        %2199 = vst [vmem:[#allocation2 + $0x708] sm:$0xff] %v1897
        %2200 = vst [vmem:[#allocation2 + $0x710] sm:$0xff] %v1900
        %2201 = vst [vmem:[#allocation2 + $0x718] sm:$0xff] %v1902
        %2202 = vst [vmem:[#allocation2 + $0x720] sm:$0xff] %v1905
        %2203 = vst [vmem:[#allocation2 + $0x728] sm:$0xff] %v1907
        %2204 = vst [vmem:[#allocation2 + $0x730] sm:$0xff] %v1910
        %2205 = vst [vmem:[#allocation2 + $0x738] sm:$0xff] %v1912
        %2206 = vst [vmem:[#allocation2 + $0x740] sm:$0xff] %v1915
        %2207 = vst [vmem:[#allocation2 + $0x748] sm:$0xff] %v1917
        %2208 = vst [vmem:[#allocation2 + $0x750] sm:$0xff] %v1920
        %2209 = vst [vmem:[#allocation2 + $0x758] sm:$0xff] %v1922
        %2210 = vst [vmem:[#allocation2 + $0x760] sm:$0xff] %v1925
        %2211 = vst [vmem:[#allocation2 + $0x768] sm:$0xff] %v1927
        %2212 = vst [vmem:[#allocation2 + $0x770] sm:$0xff] %v1930
        %2213 = vst [vmem:[#allocation2 + $0x778] sm:$0xff] %v1932
        %2214 = vst [vmem:[#allocation2 + $0x780] sm:$0xff] %v1935
        %2215 = vst [vmem:[#allocation2 + $0x788] sm:$0xff] %v1937
        %2216 = vst [vmem:[#allocation2 + $0x790] sm:$0xff] %v1940
        %2217 = vst [vmem:[#allocation2 + $0x798] sm:$0xff] %v1942
        %2218 = vst [vmem:[#allocation2 + $0x7a0] sm:$0xff] %v1945
        %2219 = vst [vmem:[#allocation2 + $0x7a8] sm:$0xff] %v1947
        %2220 = vst [vmem:[#allocation2 + $0x7b0] sm:$0xff] %v1950
        %2221 = vst [vmem:[#allocation2 + $0x7b8] sm:$0xff] %v1952
        %2222 = vst [vmem:[#allocation2 + $0x7c0] sm:$0xff] %v1955
        %2223 = vst [vmem:[#allocation2 + $0x7c8] sm:$0xff] %v1957
        %2224 = vst [vmem:[#allocation2 + $0x7d0] sm:$0xff] %v1960
        %2225 = vst [vmem:[#allocation2 + $0x7d8] sm:$0xff] %v1962
        %2226 = vst [vmem:[#allocation2 + $0x7e0] sm:$0xff] %v1965
        %2227 = vst [vmem:[#allocation2 + $0x7e8] sm:$0xff] %v1967
        %2228 = vst [vmem:[#allocation2 + $0x7f0] sm:$0xff] %v1970
        %2229 = vst [vmem:[#allocation2 + $0x7f8] sm:$0xff] %v1972
        %v2230 = vld [vmem:[%s202 + $0x80] sm:$0xf]
        %v2231 = vld [vmem:[%s202 + $0x84] sm:$0xf]
        %v2232 = vld [vmem:[%s202 + $0x88] sm:$0xf]
        %v2233 = vld [vmem:[%s202 + $0x8c] sm:$0xf]
        %v2234 = vld [vmem:[%s202 + $0x90] sm:$0xf]
        %v2235 = vld [vmem:[%s202 + $0x94] sm:$0xf]
        %v2236 = vld [vmem:[%s202 + $0x98] sm:$0xf]
        %v2237 = vld [vmem:[%s202 + $0x9c] sm:$0xf]
        %v2238 = vld [vmem:[%s202 + $0xa0] sm:$0xf]
        %v2239 = vld [vmem:[%s202 + $0xa4] sm:$0xf]
        %v2240 = vld [vmem:[%s202 + $0xa8] sm:$0xf]
        %v2241 = vld [vmem:[%s202 + $0xac] sm:$0xf]
        %v2242 = vld [vmem:[%s202 + $0xb0] sm:$0xf]
        %v2243 = vld [vmem:[%s202 + $0xb4] sm:$0xf]
        %v2244 = vld [vmem:[%s202 + $0xb8] sm:$0xf]
        %v2245 = vld [vmem:[%s202 + $0xbc] sm:$0xf]
        %v2246 = vld [vmem:[%s202 + $0xc0] sm:$0xf]
        %v2247 = vld [vmem:[%s202 + $0xc4] sm:$0xf]
        %v2248 = vld [vmem:[%s202 + $0xc8] sm:$0xf]
        %v2249 = vld [vmem:[%s202 + $0xcc] sm:$0xf]
        %v2250 = vld [vmem:[%s202 + $0xd0] sm:$0xf]
        %v2251 = vld [vmem:[%s202 + $0xd4] sm:$0xf]
        %v2252 = vld [vmem:[%s202 + $0xd8] sm:$0xf]
        %v2253 = vld [vmem:[%s202 + $0xdc] sm:$0xf]
        %v2254 = vld [vmem:[%s202 + $0xe0] sm:$0xf]
        %v2255 = vld [vmem:[%s202 + $0xe4] sm:$0xf]
        %v2256 = vld [vmem:[%s202 + $0xe8] sm:$0xf]
        %v2257 = vld [vmem:[%s202 + $0xec] sm:$0xf]
        %v2258 = vld [vmem:[%s202 + $0xf0] sm:$0xf]
        %v2259 = vld [vmem:[%s202 + $0xf4] sm:$0xf]
        %v2260 = vld [vmem:[%s202 + $0xf8] sm:$0xf]
        %v2261 = vld [vmem:[%s202 + $0xfc] sm:$0xf]
        %v2262 = vld [vmem:[%s202 + $0x100] sm:$0xf]
        %v2263 = vld [vmem:[%s202 + $0x104] sm:$0xf]
        %v2264 = vld [vmem:[%s202 + $0x108] sm:$0xf]
        %v2265 = vld [vmem:[%s202 + $0x10c] sm:$0xf]
        %v2266 = vld [vmem:[%s202 + $0x110] sm:$0xf]
        %v2267 = vld [vmem:[%s202 + $0x114] sm:$0xf]
        %v2268 = vld [vmem:[%s202 + $0x118] sm:$0xf]
        %v2269 = vld [vmem:[%s202 + $0x11c] sm:$0xf]
        %v2270 = vld [vmem:[%s202 + $0x120] sm:$0xf]
        %v2271 = vld [vmem:[%s202 + $0x124] sm:$0xf]
        %v2272 = vld [vmem:[%s202 + $0x128] sm:$0xf]
        %v2273 = vld [vmem:[%s202 + $0x12c] sm:$0xf]
        %v2274 = vld [vmem:[%s202 + $0x130] sm:$0xf]
        %v2275 = vld [vmem:[%s202 + $0x134] sm:$0xf]
        %v2276 = vld [vmem:[%s202 + $0x138] sm:$0xf]
        %v2277 = vld [vmem:[%s202 + $0x13c] sm:$0xf]
        %v2278 = vld [vmem:[%s202 + $0x140] sm:$0xf]
        %v2279 = vld [vmem:[%s202 + $0x144] sm:$0xf]
        %v2280 = vld [vmem:[%s202 + $0x148] sm:$0xf]
        %v2281 = vld [vmem:[%s202 + $0x14c] sm:$0xf]
        %v2282 = vld [vmem:[%s202 + $0x150] sm:$0xf]
        %v2283 = vld [vmem:[%s202 + $0x154] sm:$0xf]
        %v2284 = vld [vmem:[%s202 + $0x158] sm:$0xf]
        %v2285 = vld [vmem:[%s202 + $0x15c] sm:$0xf]
        %v2286 = vld [vmem:[%s202 + $0x160] sm:$0xf]
        %v2287 = vld [vmem:[%s202 + $0x164] sm:$0xf]
        %v2288 = vld [vmem:[%s202 + $0x168] sm:$0xf]
        %v2289 = vld [vmem:[%s202 + $0x16c] sm:$0xf]
        %v2290 = vld [vmem:[%s202 + $0x170] sm:$0xf]
        %v2291 = vld [vmem:[%s202 + $0x174] sm:$0xf]
        %v2292 = vld [vmem:[%s202 + $0x178] sm:$0xf]
        %v2293 = vld [vmem:[%s202 + $0x17c] sm:$0xf]
        %v2294 = vld [vmem:[%s202 + $0x180] sm:$0xf]
        %v2295 = vld [vmem:[%s202 + $0x184] sm:$0xf]
        %v2296 = vld [vmem:[%s202 + $0x188] sm:$0xf]
        %v2297 = vld [vmem:[%s202 + $0x18c] sm:$0xf]
        %v2298 = vld [vmem:[%s202 + $0x190] sm:$0xf]
        %v2299 = vld [vmem:[%s202 + $0x194] sm:$0xf]
        %v2300 = vld [vmem:[%s202 + $0x198] sm:$0xf]
        %v2301 = vld [vmem:[%s202 + $0x19c] sm:$0xf]
        %v2302 = vld [vmem:[%s202 + $0x1a0] sm:$0xf]
        %v2303 = vld [vmem:[%s202 + $0x1a4] sm:$0xf]
        %v2304 = vld [vmem:[%s202 + $0x1a8] sm:$0xf]
        %v2305 = vld [vmem:[%s202 + $0x1ac] sm:$0xf]
        %v2306 = vld [vmem:[%s202 + $0x1b0] sm:$0xf]
        %v2307 = vld [vmem:[%s202 + $0x1b4] sm:$0xf]
        %v2308 = vld [vmem:[%s202 + $0x1b8] sm:$0xf]
        %v2309 = vld [vmem:[%s202 + $0x1bc] sm:$0xf]
        %v2310 = vld [vmem:[%s202 + $0x1c0] sm:$0xf]
        %v2311 = vld [vmem:[%s202 + $0x1c4] sm:$0xf]
        %v2312 = vld [vmem:[%s202 + $0x1c8] sm:$0xf]
        %v2313 = vld [vmem:[%s202 + $0x1cc] sm:$0xf]
        %v2314 = vld [vmem:[%s202 + $0x1d0] sm:$0xf]
        %v2315 = vld [vmem:[%s202 + $0x1d4] sm:$0xf]
        %v2316 = vld [vmem:[%s202 + $0x1d8] sm:$0xf]
        %v2317 = vld [vmem:[%s202 + $0x1dc] sm:$0xf]
        %v2318 = vld [vmem:[%s202 + $0x1e0] sm:$0xf]
        %v2319 = vld [vmem:[%s202 + $0x1e4] sm:$0xf]
        %v2320 = vld [vmem:[%s202 + $0x1e8] sm:$0xf]
        %v2321 = vld [vmem:[%s202 + $0x1ec] sm:$0xf]
        %v2322 = vld [vmem:[%s202 + $0x1f0] sm:$0xf]
        %v2323 = vld [vmem:[%s202 + $0x1f4] sm:$0xf]
        %v2324 = vld [vmem:[%s202 + $0x1f8] sm:$0xf]
        %v2325 = vld [vmem:[%s202 + $0x1fc] sm:$0xf]
        %v2326 = vld [vmem:[%s202 + $0x200] sm:$0xf]
        %v2327 = vld [vmem:[%s202 + $0x204] sm:$0xf]
        %v2328 = vld [vmem:[%s202 + $0x208] sm:$0xf]
        %v2329 = vld [vmem:[%s202 + $0x20c] sm:$0xf]
        %v2330 = vld [vmem:[%s202 + $0x210] sm:$0xf]
        %v2331 = vld [vmem:[%s202 + $0x214] sm:$0xf]
        %v2332 = vld [vmem:[%s202 + $0x218] sm:$0xf]
        %v2333 = vld [vmem:[%s202 + $0x21c] sm:$0xf]
        %v2334 = vld [vmem:[%s202 + $0x220] sm:$0xf]
        %v2335 = vld [vmem:[%s202 + $0x224] sm:$0xf]
        %v2336 = vld [vmem:[%s202 + $0x228] sm:$0xf]
        %v2337 = vld [vmem:[%s202 + $0x22c] sm:$0xf]
        %v2338 = vld [vmem:[%s202 + $0x230] sm:$0xf]
        %v2339 = vld [vmem:[%s202 + $0x234] sm:$0xf]
        %v2340 = vld [vmem:[%s202 + $0x238] sm:$0xf]
        %v2341 = vld [vmem:[%s202 + $0x23c] sm:$0xf]
        %v2342 = vld [vmem:[%s202 + $0x240] sm:$0xf]
        %v2343 = vld [vmem:[%s202 + $0x244] sm:$0xf]
        %v2344 = vld [vmem:[%s202 + $0x248] sm:$0xf]
        %v2345 = vld [vmem:[%s202 + $0x24c] sm:$0xf]
        %v2346 = vld [vmem:[%s202 + $0x250] sm:$0xf]
        %v2347 = vld [vmem:[%s202 + $0x254] sm:$0xf]
        %v2348 = vld [vmem:[%s202 + $0x258] sm:$0xf]
        %v2349 = vld [vmem:[%s202 + $0x25c] sm:$0xf]
        %v2350 = vld [vmem:[%s202 + $0x260] sm:$0xf]
        %v2351 = vld [vmem:[%s202 + $0x264] sm:$0xf]
        %v2352 = vld [vmem:[%s202 + $0x268] sm:$0xf]
        %v2353 = vld [vmem:[%s202 + $0x26c] sm:$0xf]
        %v2354 = vld [vmem:[%s202 + $0x270] sm:$0xf]
        %v2355 = vld [vmem:[%s202 + $0x274] sm:$0xf]
        %v2356 = vld [vmem:[%s202 + $0x278] sm:$0xf]
        %v2357 = vld [vmem:[%s202 + $0x27c] sm:$0xf]
        %v2358 = vld [vmem:[%s202 + $0x280] sm:$0xf]
        %v2359 = vld [vmem:[%s202 + $0x284] sm:$0xf]
        %v2360 = vld [vmem:[%s202 + $0x288] sm:$0xf]
        %v2361 = vld [vmem:[%s202 + $0x28c] sm:$0xf]
        %v2362 = vld [vmem:[%s202 + $0x290] sm:$0xf]
        %v2363 = vld [vmem:[%s202 + $0x294] sm:$0xf]
        %v2364 = vld [vmem:[%s202 + $0x298] sm:$0xf]
        %v2365 = vld [vmem:[%s202 + $0x29c] sm:$0xf]
        %v2366 = vld [vmem:[%s202 + $0x2a0] sm:$0xf]
        %v2367 = vld [vmem:[%s202 + $0x2a4] sm:$0xf]
        %v2368 = vld [vmem:[%s202 + $0x2a8] sm:$0xf]
        %v2369 = vld [vmem:[%s202 + $0x2ac] sm:$0xf]
        %v2370 = vld [vmem:[%s202 + $0x2b0] sm:$0xf]
        %v2371 = vld [vmem:[%s202 + $0x2b4] sm:$0xf]
        %v2372 = vld [vmem:[%s202 + $0x2b8] sm:$0xf]
        %v2373 = vld [vmem:[%s202 + $0x2bc] sm:$0xf]
        %v2374 = vld [vmem:[%s202 + $0x2c0] sm:$0xf]
        %v2375 = vld [vmem:[%s202 + $0x2c4] sm:$0xf]
        %v2376 = vld [vmem:[%s202 + $0x2c8] sm:$0xf]
        %v2377 = vld [vmem:[%s202 + $0x2cc] sm:$0xf]
        %v2378 = vld [vmem:[%s202 + $0x2d0] sm:$0xf]
        %v2379 = vld [vmem:[%s202 + $0x2d4] sm:$0xf]
        %v2380 = vld [vmem:[%s202 + $0x2d8] sm:$0xf]
        %v2381 = vld [vmem:[%s202 + $0x2dc] sm:$0xf]
        %v2382 = vld [vmem:[%s202 + $0x2e0] sm:$0xf]
        %v2383 = vld [vmem:[%s202 + $0x2e4] sm:$0xf]
        %v2384 = vld [vmem:[%s202 + $0x2e8] sm:$0xf]
        %v2385 = vld [vmem:[%s202 + $0x2ec] sm:$0xf]
        %v2386 = vld [vmem:[%s202 + $0x2f0] sm:$0xf]
        %v2387 = vld [vmem:[%s202 + $0x2f4] sm:$0xf]
        %v2388 = vld [vmem:[%s202 + $0x2f8] sm:$0xf]
        %v2389 = vld [vmem:[%s202 + $0x2fc] sm:$0xf]
        %v2390 = vld [vmem:[%s202 + $0x300] sm:$0xf]
        %v2391 = vld [vmem:[%s202 + $0x304] sm:$0xf]
        %v2392 = vld [vmem:[%s202 + $0x308] sm:$0xf]
        %v2393 = vld [vmem:[%s202 + $0x30c] sm:$0xf]
        %v2394 = vld [vmem:[%s202 + $0x310] sm:$0xf]
        %v2395 = vld [vmem:[%s202 + $0x314] sm:$0xf]
        %v2396 = vld [vmem:[%s202 + $0x318] sm:$0xf]
        %v2397 = vld [vmem:[%s202 + $0x31c] sm:$0xf]
        %v2398 = vld [vmem:[%s202 + $0x320] sm:$0xf]
        %v2399 = vld [vmem:[%s202 + $0x324] sm:$0xf]
        %v2400 = vld [vmem:[%s202 + $0x328] sm:$0xf]
        %v2401 = vld [vmem:[%s202 + $0x32c] sm:$0xf]
        %v2402 = vld [vmem:[%s202 + $0x330] sm:$0xf]
        %v2403 = vld [vmem:[%s202 + $0x334] sm:$0xf]
        %v2404 = vld [vmem:[%s202 + $0x338] sm:$0xf]
        %v2405 = vld [vmem:[%s202 + $0x33c] sm:$0xf]
        %v2406 = vld [vmem:[%s202 + $0x340] sm:$0xf]
        %v2407 = vld [vmem:[%s202 + $0x344] sm:$0xf]
        %v2408 = vld [vmem:[%s202 + $0x348] sm:$0xf]
        %v2409 = vld [vmem:[%s202 + $0x34c] sm:$0xf]
        %v2410 = vld [vmem:[%s202 + $0x350] sm:$0xf]
        %v2411 = vld [vmem:[%s202 + $0x354] sm:$0xf]
        %v2412 = vld [vmem:[%s202 + $0x358] sm:$0xf]
        %v2413 = vld [vmem:[%s202 + $0x35c] sm:$0xf]
        %v2414 = vld [vmem:[%s202 + $0x360] sm:$0xf]
        %v2415 = vld [vmem:[%s202 + $0x364] sm:$0xf]
        %v2416 = vld [vmem:[%s202 + $0x368] sm:$0xf]
        %v2417 = vld [vmem:[%s202 + $0x36c] sm:$0xf]
        %v2418 = vld [vmem:[%s202 + $0x370] sm:$0xf]
        %v2419 = vld [vmem:[%s202 + $0x374] sm:$0xf]
        %v2420 = vld [vmem:[%s202 + $0x378] sm:$0xf]
        %v2421 = vld [vmem:[%s202 + $0x37c] sm:$0xf]
        %v2422 = vld [vmem:[%s202 + $0x380] sm:$0xf]
        %v2423 = vld [vmem:[%s202 + $0x384] sm:$0xf]
        %v2424 = vld [vmem:[%s202 + $0x388] sm:$0xf]
        %v2425 = vld [vmem:[%s202 + $0x38c] sm:$0xf]
        %v2426 = vld [vmem:[%s202 + $0x390] sm:$0xf]
        %v2427 = vld [vmem:[%s202 + $0x394] sm:$0xf]
        %v2428 = vld [vmem:[%s202 + $0x398] sm:$0xf]
        %v2429 = vld [vmem:[%s202 + $0x39c] sm:$0xf]
        %v2430 = vld [vmem:[%s202 + $0x3a0] sm:$0xf]
        %v2431 = vld [vmem:[%s202 + $0x3a4] sm:$0xf]
        %v2432 = vld [vmem:[%s202 + $0x3a8] sm:$0xf]
        %v2433 = vld [vmem:[%s202 + $0x3ac] sm:$0xf]
        %v2434 = vld [vmem:[%s202 + $0x3b0] sm:$0xf]
        %v2435 = vld [vmem:[%s202 + $0x3b4] sm:$0xf]
        %v2436 = vld [vmem:[%s202 + $0x3b8] sm:$0xf]
        %v2437 = vld [vmem:[%s202 + $0x3bc] sm:$0xf]
        %v2438 = vld [vmem:[%s202 + $0x3c0] sm:$0xf]
        %v2439 = vld [vmem:[%s202 + $0x3c4] sm:$0xf]
        %v2440 = vld [vmem:[%s202 + $0x3c8] sm:$0xf]
        %v2441 = vld [vmem:[%s202 + $0x3cc] sm:$0xf]
        %v2442 = vld [vmem:[%s202 + $0x3d0] sm:$0xf]
        %v2443 = vld [vmem:[%s202 + $0x3d4] sm:$0xf]
        %v2444 = vld [vmem:[%s202 + $0x3d8] sm:$0xf]
        %v2445 = vld [vmem:[%s202 + $0x3dc] sm:$0xf]
        %v2446 = vld [vmem:[%s202 + $0x3e0] sm:$0xf]
        %v2447 = vld [vmem:[%s202 + $0x3e4] sm:$0xf]
        %v2448 = vld [vmem:[%s202 + $0x3e8] sm:$0xf]
        %v2449 = vld [vmem:[%s202 + $0x3ec] sm:$0xf]
        %v2450 = vld [vmem:[%s202 + $0x3f0] sm:$0xf]
        %v2451 = vld [vmem:[%s202 + $0x3f4] sm:$0xf]
        %v2452 = vld [vmem:[%s202 + $0x3f8] sm:$0xf]
        %v2453 = vld [vmem:[%s202 + $0x3fc] sm:$0xf]
        %v2454 = vld [vmem:[%s202 + $0x400] sm:$0xf]
        %v2455 = vld [vmem:[%s202 + $0x404] sm:$0xf]
        %v2456 = vld [vmem:[%s202 + $0x408] sm:$0xf]
        %v2457 = vld [vmem:[%s202 + $0x40c] sm:$0xf]
        %v2458 = vld [vmem:[%s202 + $0x410] sm:$0xf]
        %v2459 = vld [vmem:[%s202 + $0x414] sm:$0xf]
        %v2460 = vld [vmem:[%s202 + $0x418] sm:$0xf]
        %v2461 = vld [vmem:[%s202 + $0x41c] sm:$0xf]
        %v2462 = vld [vmem:[%s202 + $0x420] sm:$0xf]
        %v2463 = vld [vmem:[%s202 + $0x424] sm:$0xf]
        %v2464 = vld [vmem:[%s202 + $0x428] sm:$0xf]
        %v2465 = vld [vmem:[%s202 + $0x42c] sm:$0xf]
        %v2466 = vld [vmem:[%s202 + $0x430] sm:$0xf]
        %v2467 = vld [vmem:[%s202 + $0x434] sm:$0xf]
        %v2468 = vld [vmem:[%s202 + $0x438] sm:$0xf]
        %v2469 = vld [vmem:[%s202 + $0x43c] sm:$0xf]
        %v2470 = vld [vmem:[%s202 + $0x440] sm:$0xf]
        %v2471 = vld [vmem:[%s202 + $0x444] sm:$0xf]
        %v2472 = vld [vmem:[%s202 + $0x448] sm:$0xf]
        %v2473 = vld [vmem:[%s202 + $0x44c] sm:$0xf]
        %v2474 = vld [vmem:[%s202 + $0x450] sm:$0xf]
        %v2475 = vld [vmem:[%s202 + $0x454] sm:$0xf]
        %v2476 = vld [vmem:[%s202 + $0x458] sm:$0xf]
        %v2477 = vld [vmem:[%s202 + $0x45c] sm:$0xf]
        %v2478 = vld [vmem:[%s202 + $0x460] sm:$0xf]
        %v2479 = vld [vmem:[%s202 + $0x464] sm:$0xf]
        %v2480 = vld [vmem:[%s202 + $0x468] sm:$0xf]
        %v2481 = vld [vmem:[%s202 + $0x46c] sm:$0xf]
        %v2482 = vld [vmem:[%s202 + $0x470] sm:$0xf]
        %v2483 = vld [vmem:[%s202 + $0x474] sm:$0xf]
        %v2484 = vld [vmem:[%s202 + $0x478] sm:$0xf]
        %v2485 = vld [vmem:[%s202 + $0x47c] sm:$0xf]
        %s2486 = scalar_lea.vmem [#allocation6], 64
        %v2487 = vld [vmem:[%s2486] sm:$0xf]
        %v2488 = vld [vmem:[%s2486 + $0x4] sm:$0xf]
        %v2489 = vld [vmem:[%s2486 + $0x8] sm:$0xf]
        %v2490 = vld [vmem:[%s2486 + $0xc] sm:$0xf]
        %v2491 = vld [vmem:[%s2486 + $0x10] sm:$0xf]
        %v2492 = vld [vmem:[%s2486 + $0x14] sm:$0xf]
        %v2493 = vld [vmem:[%s2486 + $0x18] sm:$0xf]
        %v2494 = vld [vmem:[%s2486 + $0x1c] sm:$0xf]
        %v2495 = vld [vmem:[%s2486 + $0x20] sm:$0xf]
        %v2496 = vld [vmem:[%s2486 + $0x24] sm:$0xf]
        %v2497 = vld [vmem:[%s2486 + $0x28] sm:$0xf]
        %v2498 = vld [vmem:[%s2486 + $0x2c] sm:$0xf]
        %v2499 = vld [vmem:[%s2486 + $0x30] sm:$0xf]
        %v2500 = vld [vmem:[%s2486 + $0x34] sm:$0xf]
        %v2501 = vld [vmem:[%s2486 + $0x38] sm:$0xf]
        %v2502 = vld [vmem:[%s2486 + $0x3c] sm:$0xf]
        %v2759 = vunpack.c.l.b16 %v2230
        %v2760 = vunpack.c.l.b16 %v2231
        %v2761 = vunpack.c.l.b16 %v2232
        %v2762 = vunpack.c.l.b16 %v2233
        %v2763 = vunpack.c.l.b16 %v2234
        %v2764 = vunpack.c.l.b16 %v2235
        %v2765 = vunpack.c.l.b16 %v2236
        %v2766 = vunpack.c.l.b16 %v2237
        %v2767 = vunpack.c.l.b16 %v2238
        %v2768 = vunpack.c.l.b16 %v2239
        %v2769 = vunpack.c.l.b16 %v2240
        %v2770 = vunpack.c.l.b16 %v2241
        %v2771 = vunpack.c.l.b16 %v2242
        %v2772 = vunpack.c.l.b16 %v2243
        %v2773 = vunpack.c.l.b16 %v2244
        %v2774 = vunpack.c.l.b16 %v2245
        %v2775 = vunpack.c.l.b16 %v2246
        %v2776 = vunpack.c.l.b16 %v2247
        %v2777 = vunpack.c.l.b16 %v2248
        %v2778 = vunpack.c.l.b16 %v2249
        %v2779 = vunpack.c.l.b16 %v2250
        %v2780 = vunpack.c.l.b16 %v2251
        %v2781 = vunpack.c.l.b16 %v2252
        %v2782 = vunpack.c.l.b16 %v2253
        %v2783 = vunpack.c.l.b16 %v2254
        %v2784 = vunpack.c.l.b16 %v2255
        %v2785 = vunpack.c.l.b16 %v2256
        %v2786 = vunpack.c.l.b16 %v2257
        %v2787 = vunpack.c.l.b16 %v2258
        %v2788 = vunpack.c.l.b16 %v2259
        %v2789 = vunpack.c.l.b16 %v2260
        %v2790 = vunpack.c.l.b16 %v2261
        %v2791 = vunpack.c.l.b16 %v2262
        %v2792 = vunpack.c.l.b16 %v2263
        %v2793 = vunpack.c.l.b16 %v2264
        %v2794 = vunpack.c.l.b16 %v2265
        %v2795 = vunpack.c.l.b16 %v2266
        %v2796 = vunpack.c.l.b16 %v2267
        %v2797 = vunpack.c.l.b16 %v2268
        %v2798 = vunpack.c.l.b16 %v2269
        %v2799 = vunpack.c.l.b16 %v2270
        %v2800 = vunpack.c.l.b16 %v2271
        %v2801 = vunpack.c.l.b16 %v2272
        %v2802 = vunpack.c.l.b16 %v2273
        %v2803 = vunpack.c.l.b16 %v2274
        %v2804 = vunpack.c.l.b16 %v2275
        %v2805 = vunpack.c.l.b16 %v2276
        %v2806 = vunpack.c.l.b16 %v2277
        %v2807 = vunpack.c.l.b16 %v2278
        %v2808 = vunpack.c.l.b16 %v2279
        %v2809 = vunpack.c.l.b16 %v2280
        %v2810 = vunpack.c.l.b16 %v2281
        %v2811 = vunpack.c.l.b16 %v2282
        %v2812 = vunpack.c.l.b16 %v2283
        %v2813 = vunpack.c.l.b16 %v2284
        %v2814 = vunpack.c.l.b16 %v2285
        %v2815 = vunpack.c.l.b16 %v2286
        %v2816 = vunpack.c.l.b16 %v2287
        %v2817 = vunpack.c.l.b16 %v2288
        %v2818 = vunpack.c.l.b16 %v2289
        %v2819 = vunpack.c.l.b16 %v2290
        %v2820 = vunpack.c.l.b16 %v2291
        %v2821 = vunpack.c.l.b16 %v2292
        %v2822 = vunpack.c.l.b16 %v2293
        %v2823 = vunpack.c.l.b16 %v2294
        %v2824 = vunpack.c.l.b16 %v2295
        %v2825 = vunpack.c.l.b16 %v2296
        %v2826 = vunpack.c.l.b16 %v2297
        %v2827 = vunpack.c.l.b16 %v2298
        %v2828 = vunpack.c.l.b16 %v2299
        %v2829 = vunpack.c.l.b16 %v2300
        %v2830 = vunpack.c.l.b16 %v2301
        %v2831 = vunpack.c.l.b16 %v2302
        %v2832 = vunpack.c.l.b16 %v2303
        %v2833 = vunpack.c.l.b16 %v2304
        %v2834 = vunpack.c.l.b16 %v2305
        %v2835 = vunpack.c.l.b16 %v2306
        %v2836 = vunpack.c.l.b16 %v2307
        %v2837 = vunpack.c.l.b16 %v2308
        %v2838 = vunpack.c.l.b16 %v2309
        %v2839 = vunpack.c.l.b16 %v2310
        %v2840 = vunpack.c.l.b16 %v2311
        %v2841 = vunpack.c.l.b16 %v2312
        %v2842 = vunpack.c.l.b16 %v2313
        %v2843 = vunpack.c.l.b16 %v2314
        %v2844 = vunpack.c.l.b16 %v2315
        %v2845 = vunpack.c.l.b16 %v2316
        %v2846 = vunpack.c.l.b16 %v2317
        %v2847 = vunpack.c.l.b16 %v2318
        %v2848 = vunpack.c.l.b16 %v2319
        %v2849 = vunpack.c.l.b16 %v2320
        %v2850 = vunpack.c.l.b16 %v2321
        %v2851 = vunpack.c.l.b16 %v2322
        %v2852 = vunpack.c.l.b16 %v2323
        %v2853 = vunpack.c.l.b16 %v2324
        %v2854 = vunpack.c.l.b16 %v2325
        %v2855 = vunpack.c.l.b16 %v2326
        %v2856 = vunpack.c.l.b16 %v2327
        %v2857 = vunpack.c.l.b16 %v2328
        %v2858 = vunpack.c.l.b16 %v2329
        %v2859 = vunpack.c.l.b16 %v2330
        %v2860 = vunpack.c.l.b16 %v2331
        %v2861 = vunpack.c.l.b16 %v2332
        %v2862 = vunpack.c.l.b16 %v2333
        %v2863 = vunpack.c.l.b16 %v2334
        %v2864 = vunpack.c.l.b16 %v2335
        %v2865 = vunpack.c.l.b16 %v2336
        %v2866 = vunpack.c.l.b16 %v2337
        %v2867 = vunpack.c.l.b16 %v2338
        %v2868 = vunpack.c.l.b16 %v2339
        %v2869 = vunpack.c.l.b16 %v2340
        %v2870 = vunpack.c.l.b16 %v2341
        %v2871 = vunpack.c.l.b16 %v2342
        %v2872 = vunpack.c.l.b16 %v2343
        %v2873 = vunpack.c.l.b16 %v2344
        %v2874 = vunpack.c.l.b16 %v2345
        %v2875 = vunpack.c.l.b16 %v2346
        %v2876 = vunpack.c.l.b16 %v2347
        %v2877 = vunpack.c.l.b16 %v2348
        %v2878 = vunpack.c.l.b16 %v2349
        %v2879 = vunpack.c.l.b16 %v2350
        %v2880 = vunpack.c.l.b16 %v2351
        %v2881 = vunpack.c.l.b16 %v2352
        %v2882 = vunpack.c.l.b16 %v2353
        %v2883 = vunpack.c.l.b16 %v2354
        %v2884 = vunpack.c.l.b16 %v2355
        %v2885 = vunpack.c.l.b16 %v2356
        %v2886 = vunpack.c.l.b16 %v2357
        %v2887 = vunpack.c.l.b16 %v2358
        %v2888 = vunpack.c.l.b16 %v2359
        %v2889 = vunpack.c.l.b16 %v2360
        %v2890 = vunpack.c.l.b16 %v2361
        %v2891 = vunpack.c.l.b16 %v2362
        %v2892 = vunpack.c.l.b16 %v2363
        %v2893 = vunpack.c.l.b16 %v2364
        %v2894 = vunpack.c.l.b16 %v2365
        %v2895 = vunpack.c.l.b16 %v2366
        %v2896 = vunpack.c.l.b16 %v2367
        %v2897 = vunpack.c.l.b16 %v2368
        %v2898 = vunpack.c.l.b16 %v2369
        %v2899 = vunpack.c.l.b16 %v2370
        %v2900 = vunpack.c.l.b16 %v2371
        %v2901 = vunpack.c.l.b16 %v2372
        %v2902 = vunpack.c.l.b16 %v2373
        %v2903 = vunpack.c.l.b16 %v2374
        %v2904 = vunpack.c.l.b16 %v2375
        %v2905 = vunpack.c.l.b16 %v2376
        %v2906 = vunpack.c.l.b16 %v2377
        %v2907 = vunpack.c.l.b16 %v2378
        %v2908 = vunpack.c.l.b16 %v2379
        %v2909 = vunpack.c.l.b16 %v2380
        %v2910 = vunpack.c.l.b16 %v2381
        %v2911 = vunpack.c.l.b16 %v2382
        %v2912 = vunpack.c.l.b16 %v2383
        %v2913 = vunpack.c.l.b16 %v2384
        %v2914 = vunpack.c.l.b16 %v2385
        %v2915 = vunpack.c.l.b16 %v2386
        %v2916 = vunpack.c.l.b16 %v2387
        %v2917 = vunpack.c.l.b16 %v2388
        %v2918 = vunpack.c.l.b16 %v2389
        %v2919 = vunpack.c.l.b16 %v2390
        %v2920 = vunpack.c.l.b16 %v2391
        %v2921 = vunpack.c.l.b16 %v2392
        %v2922 = vunpack.c.l.b16 %v2393
        %v2923 = vunpack.c.l.b16 %v2394
        %v2924 = vunpack.c.l.b16 %v2395
        %v2925 = vunpack.c.l.b16 %v2396
        %v2926 = vunpack.c.l.b16 %v2397
        %v2927 = vunpack.c.l.b16 %v2398
        %v2928 = vunpack.c.l.b16 %v2399
        %v2929 = vunpack.c.l.b16 %v2400
        %v2930 = vunpack.c.l.b16 %v2401
        %v2931 = vunpack.c.l.b16 %v2402
        %v2932 = vunpack.c.l.b16 %v2403
        %v2933 = vunpack.c.l.b16 %v2404
        %v2934 = vunpack.c.l.b16 %v2405
        %v2935 = vunpack.c.l.b16 %v2406
        %v2936 = vunpack.c.l.b16 %v2407
        %v2937 = vunpack.c.l.b16 %v2408
        %v2938 = vunpack.c.l.b16 %v2409
        %v2939 = vunpack.c.l.b16 %v2410
        %v2940 = vunpack.c.l.b16 %v2411
        %v2941 = vunpack.c.l.b16 %v2412
        %v2942 = vunpack.c.l.b16 %v2413
        %v2943 = vunpack.c.l.b16 %v2414
        %v2944 = vunpack.c.l.b16 %v2415
        %v2945 = vunpack.c.l.b16 %v2416
        %v2946 = vunpack.c.l.b16 %v2417
        %v2947 = vunpack.c.l.b16 %v2418
        %v2948 = vunpack.c.l.b16 %v2419
        %v2949 = vunpack.c.l.b16 %v2420
        %v2950 = vunpack.c.l.b16 %v2421
        %v2951 = vunpack.c.l.b16 %v2422
        %v2952 = vunpack.c.l.b16 %v2423
        %v2953 = vunpack.c.l.b16 %v2424
        %v2954 = vunpack.c.l.b16 %v2425
        %v2955 = vunpack.c.l.b16 %v2426
        %v2956 = vunpack.c.l.b16 %v2427
        %v2957 = vunpack.c.l.b16 %v2428
        %v2958 = vunpack.c.l.b16 %v2429
        %v2959 = vunpack.c.l.b16 %v2430
        %v2960 = vunpack.c.l.b16 %v2431
        %v2961 = vunpack.c.l.b16 %v2432
        %v2962 = vunpack.c.l.b16 %v2433
        %v2963 = vunpack.c.l.b16 %v2434
        %v2964 = vunpack.c.l.b16 %v2435
        %v2965 = vunpack.c.l.b16 %v2436
        %v2966 = vunpack.c.l.b16 %v2437
        %v2967 = vunpack.c.l.b16 %v2438
        %v2968 = vunpack.c.l.b16 %v2439
        %v2969 = vunpack.c.l.b16 %v2440
        %v2970 = vunpack.c.l.b16 %v2441
        %v2971 = vunpack.c.l.b16 %v2442
        %v2972 = vunpack.c.l.b16 %v2443
        %v2973 = vunpack.c.l.b16 %v2444
        %v2974 = vunpack.c.l.b16 %v2445
        %v2975 = vunpack.c.l.b16 %v2446
        %v2976 = vunpack.c.l.b16 %v2447
        %v2977 = vunpack.c.l.b16 %v2448
        %v2978 = vunpack.c.l.b16 %v2449
        %v2979 = vunpack.c.l.b16 %v2450
        %v2980 = vunpack.c.l.b16 %v2451
        %v2981 = vunpack.c.l.b16 %v2452
        %v2982 = vunpack.c.l.b16 %v2453
        %v2983 = vunpack.c.l.b16 %v2454
        %v2984 = vunpack.c.l.b16 %v2455
        %v2985 = vunpack.c.l.b16 %v2456
        %v2986 = vunpack.c.l.b16 %v2457
        %v2987 = vunpack.c.l.b16 %v2458
        %v2988 = vunpack.c.l.b16 %v2459
        %v2989 = vunpack.c.l.b16 %v2460
        %v2990 = vunpack.c.l.b16 %v2461
        %v2991 = vunpack.c.l.b16 %v2462
        %v2992 = vunpack.c.l.b16 %v2463
        %v2993 = vunpack.c.l.b16 %v2464
        %v2994 = vunpack.c.l.b16 %v2465
        %v2995 = vunpack.c.l.b16 %v2466
        %v2996 = vunpack.c.l.b16 %v2467
        %v2997 = vunpack.c.l.b16 %v2468
        %v2998 = vunpack.c.l.b16 %v2469
        %v2999 = vunpack.c.l.b16 %v2470
        %v3000 = vunpack.c.l.b16 %v2471
        %v3001 = vunpack.c.l.b16 %v2472
        %v3002 = vunpack.c.l.b16 %v2473
        %v3003 = vunpack.c.l.b16 %v2474
        %v3004 = vunpack.c.l.b16 %v2475
        %v3005 = vunpack.c.l.b16 %v2476
        %v3006 = vunpack.c.l.b16 %v2477
        %v3007 = vunpack.c.l.b16 %v2478
        %v3008 = vunpack.c.l.b16 %v2479
        %v3009 = vunpack.c.l.b16 %v2480
        %v3010 = vunpack.c.l.b16 %v2481
        %v3011 = vunpack.c.l.b16 %v2482
        %v3012 = vunpack.c.l.b16 %v2483
        %v3013 = vunpack.c.l.b16 %v2484
        %v3014 = vunpack.c.l.b16 %v2485
        %v3015 = vpack.c.b16 %v2760, %v2759
        %v3016 = vpack.c.b16 %v2762, %v2761
        %v3017 = vpack.c.b16 %v2764, %v2763
        %v3018 = vpack.c.b16 %v2766, %v2765
        %v3019 = vpack.c.b16 %v2768, %v2767
        %v3020 = vpack.c.b16 %v2770, %v2769
        %v3021 = vpack.c.b16 %v2772, %v2771
        %v3022 = vpack.c.b16 %v2774, %v2773
        %v3023 = vpack.c.b16 %v2776, %v2775
        %v3024 = vpack.c.b16 %v2778, %v2777
        %v3025 = vpack.c.b16 %v2780, %v2779
        %v3026 = vpack.c.b16 %v2782, %v2781
        %v3027 = vpack.c.b16 %v2784, %v2783
        %v3028 = vpack.c.b16 %v2786, %v2785
        %v3029 = vpack.c.b16 %v2788, %v2787
        %v3030 = vpack.c.b16 %v2790, %v2789
        %v3031 = vpack.c.b16 %v2792, %v2791
        %v3032 = vpack.c.b16 %v2794, %v2793
        %v3033 = vpack.c.b16 %v2796, %v2795
        %v3034 = vpack.c.b16 %v2798, %v2797
        %v3035 = vpack.c.b16 %v2800, %v2799
        %v3036 = vpack.c.b16 %v2802, %v2801
        %v3037 = vpack.c.b16 %v2804, %v2803
        %v3038 = vpack.c.b16 %v2806, %v2805
        %v3039 = vpack.c.b16 %v2808, %v2807
        %v3040 = vpack.c.b16 %v2810, %v2809
        %v3041 = vpack.c.b16 %v2812, %v2811
        %v3042 = vpack.c.b16 %v2814, %v2813
        %v3043 = vpack.c.b16 %v2816, %v2815
        %v3044 = vpack.c.b16 %v2818, %v2817
        %v3045 = vpack.c.b16 %v2820, %v2819
        %v3046 = vpack.c.b16 %v2822, %v2821
        %v3047 = vpack.c.b16 %v2824, %v2823
        %v3048 = vpack.c.b16 %v2826, %v2825
        %v3049 = vpack.c.b16 %v2828, %v2827
        %v3050 = vpack.c.b16 %v2830, %v2829
        %v3051 = vpack.c.b16 %v2832, %v2831
        %v3052 = vpack.c.b16 %v2834, %v2833
        %v3053 = vpack.c.b16 %v2836, %v2835
        %v3054 = vpack.c.b16 %v2838, %v2837
        %v3055 = vpack.c.b16 %v2840, %v2839
        %v3056 = vpack.c.b16 %v2842, %v2841
        %v3057 = vpack.c.b16 %v2844, %v2843
        %v3058 = vpack.c.b16 %v2846, %v2845
        %v3059 = vpack.c.b16 %v2848, %v2847
        %v3060 = vpack.c.b16 %v2850, %v2849
        %v3061 = vpack.c.b16 %v2852, %v2851
        %v3062 = vpack.c.b16 %v2854, %v2853
        %v3063 = vpack.c.b16 %v2856, %v2855
        %v3064 = vpack.c.b16 %v2858, %v2857
        %v3065 = vpack.c.b16 %v2860, %v2859
        %v3066 = vpack.c.b16 %v2862, %v2861
        %v3067 = vpack.c.b16 %v2864, %v2863
        %v3068 = vpack.c.b16 %v2866, %v2865
        %v3069 = vpack.c.b16 %v2868, %v2867
        %v3070 = vpack.c.b16 %v2870, %v2869
        %v3071 = vpack.c.b16 %v2872, %v2871
        %v3072 = vpack.c.b16 %v2874, %v2873
        %v3073 = vpack.c.b16 %v2876, %v2875
        %v3074 = vpack.c.b16 %v2878, %v2877
        %v3075 = vpack.c.b16 %v2880, %v2879
        %v3076 = vpack.c.b16 %v2882, %v2881
        %v3077 = vpack.c.b16 %v2884, %v2883
        %v3078 = vpack.c.b16 %v2886, %v2885
        %v3079 = vpack.c.b16 %v2888, %v2887
        %v3080 = vpack.c.b16 %v2890, %v2889
        %v3081 = vpack.c.b16 %v2892, %v2891
        %v3082 = vpack.c.b16 %v2894, %v2893
        %v3083 = vpack.c.b16 %v2896, %v2895
        %v3084 = vpack.c.b16 %v2898, %v2897
        %v3085 = vpack.c.b16 %v2900, %v2899
        %v3086 = vpack.c.b16 %v2902, %v2901
        %v3087 = vpack.c.b16 %v2904, %v2903
        %v3088 = vpack.c.b16 %v2906, %v2905
        %v3089 = vpack.c.b16 %v2908, %v2907
        %v3090 = vpack.c.b16 %v2910, %v2909
        %v3091 = vpack.c.b16 %v2912, %v2911
        %v3092 = vpack.c.b16 %v2914, %v2913
        %v3093 = vpack.c.b16 %v2916, %v2915
        %v3094 = vpack.c.b16 %v2918, %v2917
        %v3095 = vpack.c.b16 %v2920, %v2919
        %v3096 = vpack.c.b16 %v2922, %v2921
        %v3097 = vpack.c.b16 %v2924, %v2923
        %v3098 = vpack.c.b16 %v2926, %v2925
        %v3099 = vpack.c.b16 %v2928, %v2927
        %v3100 = vpack.c.b16 %v2930, %v2929
        %v3101 = vpack.c.b16 %v2932, %v2931
        %v3102 = vpack.c.b16 %v2934, %v2933
        %v3103 = vpack.c.b16 %v2936, %v2935
        %v3104 = vpack.c.b16 %v2938, %v2937
        %v3105 = vpack.c.b16 %v2940, %v2939
        %v3106 = vpack.c.b16 %v2942, %v2941
        %v3107 = vpack.c.b16 %v2944, %v2943
        %v3108 = vpack.c.b16 %v2946, %v2945
        %v3109 = vpack.c.b16 %v2948, %v2947
        %v3110 = vpack.c.b16 %v2950, %v2949
        %v3111 = vpack.c.b16 %v2952, %v2951
        %v3112 = vpack.c.b16 %v2954, %v2953
        %v3113 = vpack.c.b16 %v2956, %v2955
        %v3114 = vpack.c.b16 %v2958, %v2957
        %v3115 = vpack.c.b16 %v2960, %v2959
        %v3116 = vpack.c.b16 %v2962, %v2961
        %v3117 = vpack.c.b16 %v2964, %v2963
        %v3118 = vpack.c.b16 %v2966, %v2965
        %v3119 = vpack.c.b16 %v2968, %v2967
        %v3120 = vpack.c.b16 %v2970, %v2969
        %v3121 = vpack.c.b16 %v2972, %v2971
        %v3122 = vpack.c.b16 %v2974, %v2973
        %v3123 = vpack.c.b16 %v2976, %v2975
        %v3124 = vpack.c.b16 %v2978, %v2977
        %v3125 = vpack.c.b16 %v2980, %v2979
        %v3126 = vpack.c.b16 %v2982, %v2981
        %v3127 = vpack.c.b16 %v2984, %v2983
        %v3128 = vpack.c.b16 %v2986, %v2985
        %v3129 = vpack.c.b16 %v2988, %v2987
        %v3130 = vpack.c.b16 %v2990, %v2989
        %v3131 = vpack.c.b16 %v2992, %v2991
        %v3132 = vpack.c.b16 %v2994, %v2993
        %v3133 = vpack.c.b16 %v2996, %v2995
        %v3134 = vpack.c.b16 %v2998, %v2997
        %v3135 = vpack.c.b16 %v3000, %v2999
        %v3136 = vpack.c.b16 %v3002, %v3001
        %v3137 = vpack.c.b16 %v3004, %v3003
        %v3138 = vpack.c.b16 %v3006, %v3005
        %v3139 = vpack.c.b16 %v3008, %v3007
        %v3140 = vpack.c.b16 %v3010, %v3009
        %v3141 = vpack.c.b16 %v3012, %v3011
        %v3142 = vpack.c.b16 %v3014, %v3013
        %v3287 = vunpack.c.l.b16 %v2487
        %v3288 = vunpack.c.l.b16 %v2488
        %v3289 = vunpack.c.l.b16 %v2489
        %v3290 = vunpack.c.l.b16 %v2490
        %v3291 = vunpack.c.l.b16 %v2491
        %v3292 = vunpack.c.l.b16 %v2492
        %v3293 = vunpack.c.l.b16 %v2493
        %v3294 = vunpack.c.l.b16 %v2494
        %v3295 = vunpack.c.l.b16 %v2495
        %v3296 = vunpack.c.l.b16 %v2496
        %v3297 = vunpack.c.l.b16 %v2497
        %v3298 = vunpack.c.l.b16 %v2498
        %v3299 = vunpack.c.l.b16 %v2499
        %v3300 = vunpack.c.l.b16 %v2500
        %v3301 = vunpack.c.l.b16 %v2501
        %v3302 = vunpack.c.l.b16 %v2502
        %v3303 = vpack.c.b16 %v3288, %v3287
        %v3304 = vpack.c.b16 %v3290, %v3289
        %v3305 = vpack.c.b16 %v3292, %v3291
        %v3306 = vpack.c.b16 %v3294, %v3293
        %v3307 = vpack.c.b16 %v3296, %v3295
        %v3308 = vpack.c.b16 %v3298, %v3297
        %v3309 = vpack.c.b16 %v3300, %v3299
        %v3310 = vpack.c.b16 %v3302, %v3301
        %3319 = vmatpush.bf16.msra.mxu0 %v3310
        %3320 = vmatpush.bf16.msra.mxu0 %v3309
        %3321 = vmatpush.bf16.msra.mxu0 %v3308
        %3322 = vmatpush.bf16.msra.mxu0 %v3307
        %3323 = vmatpush.bf16.msra.mxu0 %v3306
        %3324 = vmatpush.bf16.msra.mxu0 %v3305
        %3325 = vmatpush.bf16.msra.mxu0 %v3304
        %3326 = vmatpush.bf16.msra.mxu0 %v3303
        %3327 = vmatmul.bf16.gmra.mxu0 %v3015
        %v3328 = vpop.f32.mrf.mxu0
        %v3329 = vadd.f32 0.0, %v3328
        %v3330 = vpop.f32.mrf.mxu0
        %v3331 = vadd.f32 0.0, %v3330
        %3332 = vmatmul.bf16.gmra.mxu0 %v3016
        %v3333 = vpop.f32.mrf.mxu0
        %v3334 = vadd.f32 0.0, %v3333
        %v3335 = vpop.f32.mrf.mxu0
        %v3336 = vadd.f32 0.0, %v3335
        %3337 = vmatmul.bf16.gmra.mxu0 %v3017
        %v3338 = vpop.f32.mrf.mxu0
        %v3339 = vadd.f32 0.0, %v3338
        %v3340 = vpop.f32.mrf.mxu0
        %v3341 = vadd.f32 0.0, %v3340
        %3342 = vmatmul.bf16.gmra.mxu0 %v3018
        %v3343 = vpop.f32.mrf.mxu0
        %v3344 = vadd.f32 0.0, %v3343
        %v3345 = vpop.f32.mrf.mxu0
        %v3346 = vadd.f32 0.0, %v3345
        %3347 = vmatmul.bf16.gmra.mxu0 %v3019
        %v3348 = vpop.f32.mrf.mxu0
        %v3349 = vadd.f32 0.0, %v3348
        %v3350 = vpop.f32.mrf.mxu0
        %v3351 = vadd.f32 0.0, %v3350
        %3352 = vmatmul.bf16.gmra.mxu0 %v3020
        %v3353 = vpop.f32.mrf.mxu0
        %v3354 = vadd.f32 0.0, %v3353
        %v3355 = vpop.f32.mrf.mxu0
        %v3356 = vadd.f32 0.0, %v3355
        %3357 = vmatmul.bf16.gmra.mxu0 %v3021
        %v3358 = vpop.f32.mrf.mxu0
        %v3359 = vadd.f32 0.0, %v3358
        %v3360 = vpop.f32.mrf.mxu0
        %v3361 = vadd.f32 0.0, %v3360
        %3362 = vmatmul.bf16.gmra.mxu0 %v3022
        %v3363 = vpop.f32.mrf.mxu0
        %v3364 = vadd.f32 0.0, %v3363
        %v3365 = vpop.f32.mrf.mxu0
        %v3366 = vadd.f32 0.0, %v3365
        %3367 = vmatmul.bf16.gmra.mxu0 %v3023
        %v3368 = vpop.f32.mrf.mxu0
        %v3369 = vadd.f32 0.0, %v3368
        %v3370 = vpop.f32.mrf.mxu0
        %v3371 = vadd.f32 0.0, %v3370
        %3372 = vmatmul.bf16.gmra.mxu0 %v3024
        %v3373 = vpop.f32.mrf.mxu0
        %v3374 = vadd.f32 0.0, %v3373
        %v3375 = vpop.f32.mrf.mxu0
        %v3376 = vadd.f32 0.0, %v3375
        %3377 = vmatmul.bf16.gmra.mxu0 %v3025
        %v3378 = vpop.f32.mrf.mxu0
        %v3379 = vadd.f32 0.0, %v3378
        %v3380 = vpop.f32.mrf.mxu0
        %v3381 = vadd.f32 0.0, %v3380
        %3382 = vmatmul.bf16.gmra.mxu0 %v3026
        %v3383 = vpop.f32.mrf.mxu0
        %v3384 = vadd.f32 0.0, %v3383
        %v3385 = vpop.f32.mrf.mxu0
        %v3386 = vadd.f32 0.0, %v3385
        %3387 = vmatmul.bf16.gmra.mxu0 %v3027
        %v3388 = vpop.f32.mrf.mxu0
        %v3389 = vadd.f32 0.0, %v3388
        %v3390 = vpop.f32.mrf.mxu0
        %v3391 = vadd.f32 0.0, %v3390
        %3392 = vmatmul.bf16.gmra.mxu0 %v3028
        %v3393 = vpop.f32.mrf.mxu0
        %v3394 = vadd.f32 0.0, %v3393
        %v3395 = vpop.f32.mrf.mxu0
        %v3396 = vadd.f32 0.0, %v3395
        %3397 = vmatmul.bf16.gmra.mxu0 %v3029
        %v3398 = vpop.f32.mrf.mxu0
        %v3399 = vadd.f32 0.0, %v3398
        %v3400 = vpop.f32.mrf.mxu0
        %v3401 = vadd.f32 0.0, %v3400
        %3402 = vmatmul.bf16.gmra.mxu0 %v3030
        %v3403 = vpop.f32.mrf.mxu0
        %v3404 = vadd.f32 0.0, %v3403
        %v3405 = vpop.f32.mrf.mxu0
        %v3406 = vadd.f32 0.0, %v3405
        %3407 = vmatmul.bf16.gmra.mxu0 %v3031
        %v3408 = vpop.f32.mrf.mxu0
        %v3409 = vadd.f32 0.0, %v3408
        %v3410 = vpop.f32.mrf.mxu0
        %v3411 = vadd.f32 0.0, %v3410
        %3412 = vmatmul.bf16.gmra.mxu0 %v3032
        %v3413 = vpop.f32.mrf.mxu0
        %v3414 = vadd.f32 0.0, %v3413
        %v3415 = vpop.f32.mrf.mxu0
        %v3416 = vadd.f32 0.0, %v3415
        %3417 = vmatmul.bf16.gmra.mxu0 %v3033
        %v3418 = vpop.f32.mrf.mxu0
        %v3419 = vadd.f32 0.0, %v3418
        %v3420 = vpop.f32.mrf.mxu0
        %v3421 = vadd.f32 0.0, %v3420
        %3422 = vmatmul.bf16.gmra.mxu0 %v3034
        %v3423 = vpop.f32.mrf.mxu0
        %v3424 = vadd.f32 0.0, %v3423
        %v3425 = vpop.f32.mrf.mxu0
        %v3426 = vadd.f32 0.0, %v3425
        %3427 = vmatmul.bf16.gmra.mxu0 %v3035
        %v3428 = vpop.f32.mrf.mxu0
        %v3429 = vadd.f32 0.0, %v3428
        %v3430 = vpop.f32.mrf.mxu0
        %v3431 = vadd.f32 0.0, %v3430
        %3432 = vmatmul.bf16.gmra.mxu0 %v3036
        %v3433 = vpop.f32.mrf.mxu0
        %v3434 = vadd.f32 0.0, %v3433
        %v3435 = vpop.f32.mrf.mxu0
        %v3436 = vadd.f32 0.0, %v3435
        %3437 = vmatmul.bf16.gmra.mxu0 %v3037
        %v3438 = vpop.f32.mrf.mxu0
        %v3439 = vadd.f32 0.0, %v3438
        %v3440 = vpop.f32.mrf.mxu0
        %v3441 = vadd.f32 0.0, %v3440
        %3442 = vmatmul.bf16.gmra.mxu0 %v3038
        %v3443 = vpop.f32.mrf.mxu0
        %v3444 = vadd.f32 0.0, %v3443
        %v3445 = vpop.f32.mrf.mxu0
        %v3446 = vadd.f32 0.0, %v3445
        %3447 = vmatmul.bf16.gmra.mxu0 %v3039
        %v3448 = vpop.f32.mrf.mxu0
        %v3449 = vadd.f32 0.0, %v3448
        %v3450 = vpop.f32.mrf.mxu0
        %v3451 = vadd.f32 0.0, %v3450
        %3452 = vmatmul.bf16.gmra.mxu0 %v3040
        %v3453 = vpop.f32.mrf.mxu0
        %v3454 = vadd.f32 0.0, %v3453
        %v3455 = vpop.f32.mrf.mxu0
        %v3456 = vadd.f32 0.0, %v3455
        %3457 = vmatmul.bf16.gmra.mxu0 %v3041
        %v3458 = vpop.f32.mrf.mxu0
        %v3459 = vadd.f32 0.0, %v3458
        %v3460 = vpop.f32.mrf.mxu0
        %v3461 = vadd.f32 0.0, %v3460
        %3462 = vmatmul.bf16.gmra.mxu0 %v3042
        %v3463 = vpop.f32.mrf.mxu0
        %v3464 = vadd.f32 0.0, %v3463
        %v3465 = vpop.f32.mrf.mxu0
        %v3466 = vadd.f32 0.0, %v3465
        %3467 = vmatmul.bf16.gmra.mxu0 %v3043
        %v3468 = vpop.f32.mrf.mxu0
        %v3469 = vadd.f32 0.0, %v3468
        %v3470 = vpop.f32.mrf.mxu0
        %v3471 = vadd.f32 0.0, %v3470
        %3472 = vmatmul.bf16.gmra.mxu0 %v3044
        %v3473 = vpop.f32.mrf.mxu0
        %v3474 = vadd.f32 0.0, %v3473
        %v3475 = vpop.f32.mrf.mxu0
        %v3476 = vadd.f32 0.0, %v3475
        %3477 = vmatmul.bf16.gmra.mxu0 %v3045
        %v3478 = vpop.f32.mrf.mxu0
        %v3479 = vadd.f32 0.0, %v3478
        %v3480 = vpop.f32.mrf.mxu0
        %v3481 = vadd.f32 0.0, %v3480
        %3482 = vmatmul.bf16.gmra.mxu0 %v3046
        %v3483 = vpop.f32.mrf.mxu0
        %v3484 = vadd.f32 0.0, %v3483
        %v3485 = vpop.f32.mrf.mxu0
        %v3486 = vadd.f32 0.0, %v3485
        %3487 = vmatmul.bf16.gmra.mxu0 %v3047
        %v3488 = vpop.f32.mrf.mxu0
        %v3489 = vadd.f32 0.0, %v3488
        %v3490 = vpop.f32.mrf.mxu0
        %v3491 = vadd.f32 0.0, %v3490
        %3492 = vmatmul.bf16.gmra.mxu0 %v3048
        %v3493 = vpop.f32.mrf.mxu0
        %v3494 = vadd.f32 0.0, %v3493
        %v3495 = vpop.f32.mrf.mxu0
        %v3496 = vadd.f32 0.0, %v3495
        %3497 = vmatmul.bf16.gmra.mxu0 %v3049
        %v3498 = vpop.f32.mrf.mxu0
        %v3499 = vadd.f32 0.0, %v3498
        %v3500 = vpop.f32.mrf.mxu0
        %v3501 = vadd.f32 0.0, %v3500
        %3502 = vmatmul.bf16.gmra.mxu0 %v3050
        %v3503 = vpop.f32.mrf.mxu0
        %v3504 = vadd.f32 0.0, %v3503
        %v3505 = vpop.f32.mrf.mxu0
        %v3506 = vadd.f32 0.0, %v3505
        %3507 = vmatmul.bf16.gmra.mxu0 %v3051
        %v3508 = vpop.f32.mrf.mxu0
        %v3509 = vadd.f32 0.0, %v3508
        %v3510 = vpop.f32.mrf.mxu0
        %v3511 = vadd.f32 0.0, %v3510
        %3512 = vmatmul.bf16.gmra.mxu0 %v3052
        %v3513 = vpop.f32.mrf.mxu0
        %v3514 = vadd.f32 0.0, %v3513
        %v3515 = vpop.f32.mrf.mxu0
        %v3516 = vadd.f32 0.0, %v3515
        %3517 = vmatmul.bf16.gmra.mxu0 %v3053
        %v3518 = vpop.f32.mrf.mxu0
        %v3519 = vadd.f32 0.0, %v3518
        %v3520 = vpop.f32.mrf.mxu0
        %v3521 = vadd.f32 0.0, %v3520
        %3522 = vmatmul.bf16.gmra.mxu0 %v3054
        %v3523 = vpop.f32.mrf.mxu0
        %v3524 = vadd.f32 0.0, %v3523
        %v3525 = vpop.f32.mrf.mxu0
        %v3526 = vadd.f32 0.0, %v3525
        %3527 = vmatmul.bf16.gmra.mxu0 %v3055
        %v3528 = vpop.f32.mrf.mxu0
        %v3529 = vadd.f32 0.0, %v3528
        %v3530 = vpop.f32.mrf.mxu0
        %v3531 = vadd.f32 0.0, %v3530
        %3532 = vmatmul.bf16.gmra.mxu0 %v3056
        %v3533 = vpop.f32.mrf.mxu0
        %v3534 = vadd.f32 0.0, %v3533
        %v3535 = vpop.f32.mrf.mxu0
        %v3536 = vadd.f32 0.0, %v3535
        %3537 = vmatmul.bf16.gmra.mxu0 %v3057
        %v3538 = vpop.f32.mrf.mxu0
        %v3539 = vadd.f32 0.0, %v3538
        %v3540 = vpop.f32.mrf.mxu0
        %v3541 = vadd.f32 0.0, %v3540
        %3542 = vmatmul.bf16.gmra.mxu0 %v3058
        %v3543 = vpop.f32.mrf.mxu0
        %v3544 = vadd.f32 0.0, %v3543
        %v3545 = vpop.f32.mrf.mxu0
        %v3546 = vadd.f32 0.0, %v3545
        %3547 = vmatmul.bf16.gmra.mxu0 %v3059
        %v3548 = vpop.f32.mrf.mxu0
        %v3549 = vadd.f32 0.0, %v3548
        %v3550 = vpop.f32.mrf.mxu0
        %v3551 = vadd.f32 0.0, %v3550
        %3552 = vmatmul.bf16.gmra.mxu0 %v3060
        %v3553 = vpop.f32.mrf.mxu0
        %v3554 = vadd.f32 0.0, %v3553
        %v3555 = vpop.f32.mrf.mxu0
        %v3556 = vadd.f32 0.0, %v3555
        %3557 = vmatmul.bf16.gmra.mxu0 %v3061
        %v3558 = vpop.f32.mrf.mxu0
        %v3559 = vadd.f32 0.0, %v3558
        %v3560 = vpop.f32.mrf.mxu0
        %v3561 = vadd.f32 0.0, %v3560
        %3562 = vmatmul.bf16.gmra.mxu0 %v3062
        %v3563 = vpop.f32.mrf.mxu0
        %v3564 = vadd.f32 0.0, %v3563
        %v3565 = vpop.f32.mrf.mxu0
        %v3566 = vadd.f32 0.0, %v3565
        %3567 = vmatmul.bf16.gmra.mxu0 %v3063
        %v3568 = vpop.f32.mrf.mxu0
        %v3569 = vadd.f32 0.0, %v3568
        %v3570 = vpop.f32.mrf.mxu0
        %v3571 = vadd.f32 0.0, %v3570
        %3572 = vmatmul.bf16.gmra.mxu0 %v3064
        %v3573 = vpop.f32.mrf.mxu0
        %v3574 = vadd.f32 0.0, %v3573
        %v3575 = vpop.f32.mrf.mxu0
        %v3576 = vadd.f32 0.0, %v3575
        %3577 = vmatmul.bf16.gmra.mxu0 %v3065
        %v3578 = vpop.f32.mrf.mxu0
        %v3579 = vadd.f32 0.0, %v3578
        %v3580 = vpop.f32.mrf.mxu0
        %v3581 = vadd.f32 0.0, %v3580
        %3582 = vmatmul.bf16.gmra.mxu0 %v3066
        %v3583 = vpop.f32.mrf.mxu0
        %v3584 = vadd.f32 0.0, %v3583
        %v3585 = vpop.f32.mrf.mxu0
        %v3586 = vadd.f32 0.0, %v3585
        %3587 = vmatmul.bf16.gmra.mxu0 %v3067
        %v3588 = vpop.f32.mrf.mxu0
        %v3589 = vadd.f32 0.0, %v3588
        %v3590 = vpop.f32.mrf.mxu0
        %v3591 = vadd.f32 0.0, %v3590
        %3592 = vmatmul.bf16.gmra.mxu0 %v3068
        %v3593 = vpop.f32.mrf.mxu0
        %v3594 = vadd.f32 0.0, %v3593
        %v3595 = vpop.f32.mrf.mxu0
        %v3596 = vadd.f32 0.0, %v3595
        %3597 = vmatmul.bf16.gmra.mxu0 %v3069
        %v3598 = vpop.f32.mrf.mxu0
        %v3599 = vadd.f32 0.0, %v3598
        %v3600 = vpop.f32.mrf.mxu0
        %v3601 = vadd.f32 0.0, %v3600
        %3602 = vmatmul.bf16.gmra.mxu0 %v3070
        %v3603 = vpop.f32.mrf.mxu0
        %v3604 = vadd.f32 0.0, %v3603
        %v3605 = vpop.f32.mrf.mxu0
        %v3606 = vadd.f32 0.0, %v3605
        %3607 = vmatmul.bf16.gmra.mxu0 %v3071
        %v3608 = vpop.f32.mrf.mxu0
        %v3609 = vadd.f32 0.0, %v3608
        %v3610 = vpop.f32.mrf.mxu0
        %v3611 = vadd.f32 0.0, %v3610
        %3612 = vmatmul.bf16.gmra.mxu0 %v3072
        %v3613 = vpop.f32.mrf.mxu0
        %v3614 = vadd.f32 0.0, %v3613
        %v3615 = vpop.f32.mrf.mxu0
        %v3616 = vadd.f32 0.0, %v3615
        %3617 = vmatmul.bf16.gmra.mxu0 %v3073
        %v3618 = vpop.f32.mrf.mxu0
        %v3619 = vadd.f32 0.0, %v3618
        %v3620 = vpop.f32.mrf.mxu0
        %v3621 = vadd.f32 0.0, %v3620
        %3622 = vmatmul.bf16.gmra.mxu0 %v3074
        %v3623 = vpop.f32.mrf.mxu0
        %v3624 = vadd.f32 0.0, %v3623
        %v3625 = vpop.f32.mrf.mxu0
        %v3626 = vadd.f32 0.0, %v3625
        %3627 = vmatmul.bf16.gmra.mxu0 %v3075
        %v3628 = vpop.f32.mrf.mxu0
        %v3629 = vadd.f32 0.0, %v3628
        %v3630 = vpop.f32.mrf.mxu0
        %v3631 = vadd.f32 0.0, %v3630
        %3632 = vmatmul.bf16.gmra.mxu0 %v3076
        %v3633 = vpop.f32.mrf.mxu0
        %v3634 = vadd.f32 0.0, %v3633
        %v3635 = vpop.f32.mrf.mxu0
        %v3636 = vadd.f32 0.0, %v3635
        %3637 = vmatmul.bf16.gmra.mxu0 %v3077
        %v3638 = vpop.f32.mrf.mxu0
        %v3639 = vadd.f32 0.0, %v3638
        %v3640 = vpop.f32.mrf.mxu0
        %v3641 = vadd.f32 0.0, %v3640
        %3642 = vmatmul.bf16.gmra.mxu0 %v3078
        %v3643 = vpop.f32.mrf.mxu0
        %v3644 = vadd.f32 0.0, %v3643
        %v3645 = vpop.f32.mrf.mxu0
        %v3646 = vadd.f32 0.0, %v3645
        %3647 = vmatmul.bf16.gmra.mxu0 %v3079
        %v3648 = vpop.f32.mrf.mxu0
        %v3649 = vadd.f32 0.0, %v3648
        %v3650 = vpop.f32.mrf.mxu0
        %v3651 = vadd.f32 0.0, %v3650
        %3652 = vmatmul.bf16.gmra.mxu0 %v3080
        %v3653 = vpop.f32.mrf.mxu0
        %v3654 = vadd.f32 0.0, %v3653
        %v3655 = vpop.f32.mrf.mxu0
        %v3656 = vadd.f32 0.0, %v3655
        %3657 = vmatmul.bf16.gmra.mxu0 %v3081
        %v3658 = vpop.f32.mrf.mxu0
        %v3659 = vadd.f32 0.0, %v3658
        %v3660 = vpop.f32.mrf.mxu0
        %v3661 = vadd.f32 0.0, %v3660
        %3662 = vmatmul.bf16.gmra.mxu0 %v3082
        %v3663 = vpop.f32.mrf.mxu0
        %v3664 = vadd.f32 0.0, %v3663
        %v3665 = vpop.f32.mrf.mxu0
        %v3666 = vadd.f32 0.0, %v3665
        %3667 = vmatmul.bf16.gmra.mxu0 %v3083
        %v3668 = vpop.f32.mrf.mxu0
        %v3669 = vadd.f32 0.0, %v3668
        %v3670 = vpop.f32.mrf.mxu0
        %v3671 = vadd.f32 0.0, %v3670
        %3672 = vmatmul.bf16.gmra.mxu0 %v3084
        %v3673 = vpop.f32.mrf.mxu0
        %v3674 = vadd.f32 0.0, %v3673
        %v3675 = vpop.f32.mrf.mxu0
        %v3676 = vadd.f32 0.0, %v3675
        %3677 = vmatmul.bf16.gmra.mxu0 %v3085
        %v3678 = vpop.f32.mrf.mxu0
        %v3679 = vadd.f32 0.0, %v3678
        %v3680 = vpop.f32.mrf.mxu0
        %v3681 = vadd.f32 0.0, %v3680
        %3682 = vmatmul.bf16.gmra.mxu0 %v3086
        %v3683 = vpop.f32.mrf.mxu0
        %v3684 = vadd.f32 0.0, %v3683
        %v3685 = vpop.f32.mrf.mxu0
        %v3686 = vadd.f32 0.0, %v3685
        %3687 = vmatmul.bf16.gmra.mxu0 %v3087
        %v3688 = vpop.f32.mrf.mxu0
        %v3689 = vadd.f32 0.0, %v3688
        %v3690 = vpop.f32.mrf.mxu0
        %v3691 = vadd.f32 0.0, %v3690
        %3692 = vmatmul.bf16.gmra.mxu0 %v3088
        %v3693 = vpop.f32.mrf.mxu0
        %v3694 = vadd.f32 0.0, %v3693
        %v3695 = vpop.f32.mrf.mxu0
        %v3696 = vadd.f32 0.0, %v3695
        %3697 = vmatmul.bf16.gmra.mxu0 %v3089
        %v3698 = vpop.f32.mrf.mxu0
        %v3699 = vadd.f32 0.0, %v3698
        %v3700 = vpop.f32.mrf.mxu0
        %v3701 = vadd.f32 0.0, %v3700
        %3702 = vmatmul.bf16.gmra.mxu0 %v3090
        %v3703 = vpop.f32.mrf.mxu0
        %v3704 = vadd.f32 0.0, %v3703
        %v3705 = vpop.f32.mrf.mxu0
        %v3706 = vadd.f32 0.0, %v3705
        %3707 = vmatmul.bf16.gmra.mxu0 %v3091
        %v3708 = vpop.f32.mrf.mxu0
        %v3709 = vadd.f32 0.0, %v3708
        %v3710 = vpop.f32.mrf.mxu0
        %v3711 = vadd.f32 0.0, %v3710
        %3712 = vmatmul.bf16.gmra.mxu0 %v3092
        %v3713 = vpop.f32.mrf.mxu0
        %v3714 = vadd.f32 0.0, %v3713
        %v3715 = vpop.f32.mrf.mxu0
        %v3716 = vadd.f32 0.0, %v3715
        %3717 = vmatmul.bf16.gmra.mxu0 %v3093
        %v3718 = vpop.f32.mrf.mxu0
        %v3719 = vadd.f32 0.0, %v3718
        %v3720 = vpop.f32.mrf.mxu0
        %v3721 = vadd.f32 0.0, %v3720
        %3722 = vmatmul.bf16.gmra.mxu0 %v3094
        %v3723 = vpop.f32.mrf.mxu0
        %v3724 = vadd.f32 0.0, %v3723
        %v3725 = vpop.f32.mrf.mxu0
        %v3726 = vadd.f32 0.0, %v3725
        %3727 = vmatmul.bf16.gmra.mxu0 %v3095
        %v3728 = vpop.f32.mrf.mxu0
        %v3729 = vadd.f32 0.0, %v3728
        %v3730 = vpop.f32.mrf.mxu0
        %v3731 = vadd.f32 0.0, %v3730
        %3732 = vmatmul.bf16.gmra.mxu0 %v3096
        %v3733 = vpop.f32.mrf.mxu0
        %v3734 = vadd.f32 0.0, %v3733
        %v3735 = vpop.f32.mrf.mxu0
        %v3736 = vadd.f32 0.0, %v3735
        %3737 = vmatmul.bf16.gmra.mxu0 %v3097
        %v3738 = vpop.f32.mrf.mxu0
        %v3739 = vadd.f32 0.0, %v3738
        %v3740 = vpop.f32.mrf.mxu0
        %v3741 = vadd.f32 0.0, %v3740
        %3742 = vmatmul.bf16.gmra.mxu0 %v3098
        %v3743 = vpop.f32.mrf.mxu0
        %v3744 = vadd.f32 0.0, %v3743
        %v3745 = vpop.f32.mrf.mxu0
        %v3746 = vadd.f32 0.0, %v3745
        %3747 = vmatmul.bf16.gmra.mxu0 %v3099
        %v3748 = vpop.f32.mrf.mxu0
        %v3749 = vadd.f32 0.0, %v3748
        %v3750 = vpop.f32.mrf.mxu0
        %v3751 = vadd.f32 0.0, %v3750
        %3752 = vmatmul.bf16.gmra.mxu0 %v3100
        %v3753 = vpop.f32.mrf.mxu0
        %v3754 = vadd.f32 0.0, %v3753
        %v3755 = vpop.f32.mrf.mxu0
        %v3756 = vadd.f32 0.0, %v3755
        %3757 = vmatmul.bf16.gmra.mxu0 %v3101
        %v3758 = vpop.f32.mrf.mxu0
        %v3759 = vadd.f32 0.0, %v3758
        %v3760 = vpop.f32.mrf.mxu0
        %v3761 = vadd.f32 0.0, %v3760
        %3762 = vmatmul.bf16.gmra.mxu0 %v3102
        %v3763 = vpop.f32.mrf.mxu0
        %v3764 = vadd.f32 0.0, %v3763
        %v3765 = vpop.f32.mrf.mxu0
        %v3766 = vadd.f32 0.0, %v3765
        %3767 = vmatmul.bf16.gmra.mxu0 %v3103
        %v3768 = vpop.f32.mrf.mxu0
        %v3769 = vadd.f32 0.0, %v3768
        %v3770 = vpop.f32.mrf.mxu0
        %v3771 = vadd.f32 0.0, %v3770
        %3772 = vmatmul.bf16.gmra.mxu0 %v3104
        %v3773 = vpop.f32.mrf.mxu0
        %v3774 = vadd.f32 0.0, %v3773
        %v3775 = vpop.f32.mrf.mxu0
        %v3776 = vadd.f32 0.0, %v3775
        %3777 = vmatmul.bf16.gmra.mxu0 %v3105
        %v3778 = vpop.f32.mrf.mxu0
        %v3779 = vadd.f32 0.0, %v3778
        %v3780 = vpop.f32.mrf.mxu0
        %v3781 = vadd.f32 0.0, %v3780
        %3782 = vmatmul.bf16.gmra.mxu0 %v3106
        %v3783 = vpop.f32.mrf.mxu0
        %v3784 = vadd.f32 0.0, %v3783
        %v3785 = vpop.f32.mrf.mxu0
        %v3786 = vadd.f32 0.0, %v3785
        %3787 = vmatmul.bf16.gmra.mxu0 %v3107
        %v3788 = vpop.f32.mrf.mxu0
        %v3789 = vadd.f32 0.0, %v3788
        %v3790 = vpop.f32.mrf.mxu0
        %v3791 = vadd.f32 0.0, %v3790
        %3792 = vmatmul.bf16.gmra.mxu0 %v3108
        %v3793 = vpop.f32.mrf.mxu0
        %v3794 = vadd.f32 0.0, %v3793
        %v3795 = vpop.f32.mrf.mxu0
        %v3796 = vadd.f32 0.0, %v3795
        %3797 = vmatmul.bf16.gmra.mxu0 %v3109
        %v3798 = vpop.f32.mrf.mxu0
        %v3799 = vadd.f32 0.0, %v3798
        %v3800 = vpop.f32.mrf.mxu0
        %v3801 = vadd.f32 0.0, %v3800
        %3802 = vmatmul.bf16.gmra.mxu0 %v3110
        %v3803 = vpop.f32.mrf.mxu0
        %v3804 = vadd.f32 0.0, %v3803
        %v3805 = vpop.f32.mrf.mxu0
        %v3806 = vadd.f32 0.0, %v3805
        %3807 = vmatmul.bf16.gmra.mxu0 %v3111
        %v3808 = vpop.f32.mrf.mxu0
        %v3809 = vadd.f32 0.0, %v3808
        %v3810 = vpop.f32.mrf.mxu0
        %v3811 = vadd.f32 0.0, %v3810
        %3812 = vmatmul.bf16.gmra.mxu0 %v3112
        %v3813 = vpop.f32.mrf.mxu0
        %v3814 = vadd.f32 0.0, %v3813
        %v3815 = vpop.f32.mrf.mxu0
        %v3816 = vadd.f32 0.0, %v3815
        %3817 = vmatmul.bf16.gmra.mxu0 %v3113
        %v3818 = vpop.f32.mrf.mxu0
        %v3819 = vadd.f32 0.0, %v3818
        %v3820 = vpop.f32.mrf.mxu0
        %v3821 = vadd.f32 0.0, %v3820
        %3822 = vmatmul.bf16.gmra.mxu0 %v3114
        %v3823 = vpop.f32.mrf.mxu0
        %v3824 = vadd.f32 0.0, %v3823
        %v3825 = vpop.f32.mrf.mxu0
        %v3826 = vadd.f32 0.0, %v3825
        %3827 = vmatmul.bf16.gmra.mxu0 %v3115
        %v3828 = vpop.f32.mrf.mxu0
        %v3829 = vadd.f32 0.0, %v3828
        %v3830 = vpop.f32.mrf.mxu0
        %v3831 = vadd.f32 0.0, %v3830
        %3832 = vmatmul.bf16.gmra.mxu0 %v3116
        %v3833 = vpop.f32.mrf.mxu0
        %v3834 = vadd.f32 0.0, %v3833
        %v3835 = vpop.f32.mrf.mxu0
        %v3836 = vadd.f32 0.0, %v3835
        %3837 = vmatmul.bf16.gmra.mxu0 %v3117
        %v3838 = vpop.f32.mrf.mxu0
        %v3839 = vadd.f32 0.0, %v3838
        %v3840 = vpop.f32.mrf.mxu0
        %v3841 = vadd.f32 0.0, %v3840
        %3842 = vmatmul.bf16.gmra.mxu0 %v3118
        %v3843 = vpop.f32.mrf.mxu0
        %v3844 = vadd.f32 0.0, %v3843
        %v3845 = vpop.f32.mrf.mxu0
        %v3846 = vadd.f32 0.0, %v3845
        %3847 = vmatmul.bf16.gmra.mxu0 %v3119
        %v3848 = vpop.f32.mrf.mxu0
        %v3849 = vadd.f32 0.0, %v3848
        %v3850 = vpop.f32.mrf.mxu0
        %v3851 = vadd.f32 0.0, %v3850
        %3852 = vmatmul.bf16.gmra.mxu0 %v3120
        %v3853 = vpop.f32.mrf.mxu0
        %v3854 = vadd.f32 0.0, %v3853
        %v3855 = vpop.f32.mrf.mxu0
        %v3856 = vadd.f32 0.0, %v3855
        %3857 = vmatmul.bf16.gmra.mxu0 %v3121
        %v3858 = vpop.f32.mrf.mxu0
        %v3859 = vadd.f32 0.0, %v3858
        %v3860 = vpop.f32.mrf.mxu0
        %v3861 = vadd.f32 0.0, %v3860
        %3862 = vmatmul.bf16.gmra.mxu0 %v3122
        %v3863 = vpop.f32.mrf.mxu0
        %v3864 = vadd.f32 0.0, %v3863
        %v3865 = vpop.f32.mrf.mxu0
        %v3866 = vadd.f32 0.0, %v3865
        %3867 = vmatmul.bf16.gmra.mxu0 %v3123
        %v3868 = vpop.f32.mrf.mxu0
        %v3869 = vadd.f32 0.0, %v3868
        %v3870 = vpop.f32.mrf.mxu0
        %v3871 = vadd.f32 0.0, %v3870
        %3872 = vmatmul.bf16.gmra.mxu0 %v3124
        %v3873 = vpop.f32.mrf.mxu0
        %v3874 = vadd.f32 0.0, %v3873
        %v3875 = vpop.f32.mrf.mxu0
        %v3876 = vadd.f32 0.0, %v3875
        %3877 = vmatmul.bf16.gmra.mxu0 %v3125
        %v3878 = vpop.f32.mrf.mxu0
        %v3879 = vadd.f32 0.0, %v3878
        %v3880 = vpop.f32.mrf.mxu0
        %v3881 = vadd.f32 0.0, %v3880
        %3882 = vmatmul.bf16.gmra.mxu0 %v3126
        %v3883 = vpop.f32.mrf.mxu0
        %v3884 = vadd.f32 0.0, %v3883
        %v3885 = vpop.f32.mrf.mxu0
        %v3886 = vadd.f32 0.0, %v3885
        %3887 = vmatmul.bf16.gmra.mxu0 %v3127
        %v3888 = vpop.f32.mrf.mxu0
        %v3889 = vadd.f32 0.0, %v3888
        %v3890 = vpop.f32.mrf.mxu0
        %v3891 = vadd.f32 0.0, %v3890
        %3892 = vmatmul.bf16.gmra.mxu0 %v3128
        %v3893 = vpop.f32.mrf.mxu0
        %v3894 = vadd.f32 0.0, %v3893
        %v3895 = vpop.f32.mrf.mxu0
        %v3896 = vadd.f32 0.0, %v3895
        %3897 = vmatmul.bf16.gmra.mxu0 %v3129
        %v3898 = vpop.f32.mrf.mxu0
        %v3899 = vadd.f32 0.0, %v3898
        %v3900 = vpop.f32.mrf.mxu0
        %v3901 = vadd.f32 0.0, %v3900
        %3902 = vmatmul.bf16.gmra.mxu0 %v3130
        %v3903 = vpop.f32.mrf.mxu0
        %v3904 = vadd.f32 0.0, %v3903
        %v3905 = vpop.f32.mrf.mxu0
        %v3906 = vadd.f32 0.0, %v3905
        %3907 = vmatmul.bf16.gmra.mxu0 %v3131
        %v3908 = vpop.f32.mrf.mxu0
        %v3909 = vadd.f32 0.0, %v3908
        %v3910 = vpop.f32.mrf.mxu0
        %v3911 = vadd.f32 0.0, %v3910
        %3912 = vmatmul.bf16.gmra.mxu0 %v3132
        %v3913 = vpop.f32.mrf.mxu0
        %v3914 = vadd.f32 0.0, %v3913
        %v3915 = vpop.f32.mrf.mxu0
        %v3916 = vadd.f32 0.0, %v3915
        %3917 = vmatmul.bf16.gmra.mxu0 %v3133
        %v3918 = vpop.f32.mrf.mxu0
        %v3919 = vadd.f32 0.0, %v3918
        %v3920 = vpop.f32.mrf.mxu0
        %v3921 = vadd.f32 0.0, %v3920
        %3922 = vmatmul.bf16.gmra.mxu0 %v3134
        %v3923 = vpop.f32.mrf.mxu0
        %v3924 = vadd.f32 0.0, %v3923
        %v3925 = vpop.f32.mrf.mxu0
        %v3926 = vadd.f32 0.0, %v3925
        %3927 = vmatmul.bf16.gmra.mxu0 %v3135
        %v3928 = vpop.f32.mrf.mxu0
        %v3929 = vadd.f32 0.0, %v3928
        %v3930 = vpop.f32.mrf.mxu0
        %v3931 = vadd.f32 0.0, %v3930
        %3932 = vmatmul.bf16.gmra.mxu0 %v3136
        %v3933 = vpop.f32.mrf.mxu0
        %v3934 = vadd.f32 0.0, %v3933
        %v3935 = vpop.f32.mrf.mxu0
        %v3936 = vadd.f32 0.0, %v3935
        %3937 = vmatmul.bf16.gmra.mxu0 %v3137
        %v3938 = vpop.f32.mrf.mxu0
        %v3939 = vadd.f32 0.0, %v3938
        %v3940 = vpop.f32.mrf.mxu0
        %v3941 = vadd.f32 0.0, %v3940
        %3942 = vmatmul.bf16.gmra.mxu0 %v3138
        %v3943 = vpop.f32.mrf.mxu0
        %v3944 = vadd.f32 0.0, %v3943
        %v3945 = vpop.f32.mrf.mxu0
        %v3946 = vadd.f32 0.0, %v3945
        %3947 = vmatmul.bf16.gmra.mxu0 %v3139
        %v3948 = vpop.f32.mrf.mxu0
        %v3949 = vadd.f32 0.0, %v3948
        %v3950 = vpop.f32.mrf.mxu0
        %v3951 = vadd.f32 0.0, %v3950
        %3952 = vmatmul.bf16.gmra.mxu0 %v3140
        %v3953 = vpop.f32.mrf.mxu0
        %v3954 = vadd.f32 0.0, %v3953
        %v3955 = vpop.f32.mrf.mxu0
        %v3956 = vadd.f32 0.0, %v3955
        %3957 = vmatmul.bf16.gmra.mxu0 %v3141
        %v3958 = vpop.f32.mrf.mxu0
        %v3959 = vadd.f32 0.0, %v3958
        %v3960 = vpop.f32.mrf.mxu0
        %v3961 = vadd.f32 0.0, %v3960
        %3962 = vmatmul.bf16.gmra.mxu0 %v3142
        %v3963 = vpop.f32.mrf.mxu0
        %v3964 = vadd.f32 0.0, %v3963
        %v3965 = vpop.f32.mrf.mxu0
        %v3966 = vadd.f32 0.0, %v3965
        %3967 = vdwg.mxu0
        %v3968 = vld [vmem:[#allocation2] sm:$0xff]
        %v3969 = vld [vmem:[#allocation2 + $0x8] sm:$0xff]
        %v3970 = vld [vmem:[#allocation2 + $0x10] sm:$0xff]
        %v3971 = vld [vmem:[#allocation2 + $0x18] sm:$0xff]
        %v3972 = vld [vmem:[#allocation2 + $0x20] sm:$0xff]
        %v3973 = vld [vmem:[#allocation2 + $0x28] sm:$0xff]
        %v3974 = vld [vmem:[#allocation2 + $0x30] sm:$0xff]
        %v3975 = vld [vmem:[#allocation2 + $0x38] sm:$0xff]
        %v3976 = vld [vmem:[#allocation2 + $0x40] sm:$0xff]
        %v3977 = vld [vmem:[#allocation2 + $0x48] sm:$0xff]
        %v3978 = vld [vmem:[#allocation2 + $0x50] sm:$0xff]
        %v3979 = vld [vmem:[#allocation2 + $0x58] sm:$0xff]
        %v3980 = vld [vmem:[#allocation2 + $0x60] sm:$0xff]
        %v3981 = vld [vmem:[#allocation2 + $0x68] sm:$0xff]
        %v3982 = vld [vmem:[#allocation2 + $0x70] sm:$0xff]
        %v3983 = vld [vmem:[#allocation2 + $0x78] sm:$0xff]
        %v3984 = vld [vmem:[#allocation2 + $0x80] sm:$0xff]
        %v3985 = vld [vmem:[#allocation2 + $0x88] sm:$0xff]
        %v3986 = vld [vmem:[#allocation2 + $0x90] sm:$0xff]
        %v3987 = vld [vmem:[#allocation2 + $0x98] sm:$0xff]
        %v3988 = vld [vmem:[#allocation2 + $0xa0] sm:$0xff]
        %v3989 = vld [vmem:[#allocation2 + $0xa8] sm:$0xff]
        %v3990 = vld [vmem:[#allocation2 + $0xb0] sm:$0xff]
        %v3991 = vld [vmem:[#allocation2 + $0xb8] sm:$0xff]
        %v3992 = vld [vmem:[#allocation2 + $0xc0] sm:$0xff]
        %v3993 = vld [vmem:[#allocation2 + $0xc8] sm:$0xff]
        %v3994 = vld [vmem:[#allocation2 + $0xd0] sm:$0xff]
        %v3995 = vld [vmem:[#allocation2 + $0xd8] sm:$0xff]
        %v3996 = vld [vmem:[#allocation2 + $0xe0] sm:$0xff]
        %v3997 = vld [vmem:[#allocation2 + $0xe8] sm:$0xff]
        %v3998 = vld [vmem:[#allocation2 + $0xf0] sm:$0xff]
        %v3999 = vld [vmem:[#allocation2 + $0xf8] sm:$0xff]
        %v4000 = vld [vmem:[#allocation2 + $0x100] sm:$0xff]
        %v4001 = vld [vmem:[#allocation2 + $0x108] sm:$0xff]
        %v4002 = vld [vmem:[#allocation2 + $0x110] sm:$0xff]
        %v4003 = vld [vmem:[#allocation2 + $0x118] sm:$0xff]
        %v4004 = vld [vmem:[#allocation2 + $0x120] sm:$0xff]
        %v4005 = vld [vmem:[#allocation2 + $0x128] sm:$0xff]
        %v4006 = vld [vmem:[#allocation2 + $0x130] sm:$0xff]
        %v4007 = vld [vmem:[#allocation2 + $0x138] sm:$0xff]
        %v4008 = vld [vmem:[#allocation2 + $0x140] sm:$0xff]
        %v4009 = vld [vmem:[#allocation2 + $0x148] sm:$0xff]
        %v4010 = vld [vmem:[#allocation2 + $0x150] sm:$0xff]
        %v4011 = vld [vmem:[#allocation2 + $0x158] sm:$0xff]
        %v4012 = vld [vmem:[#allocation2 + $0x160] sm:$0xff]
        %v4013 = vld [vmem:[#allocation2 + $0x168] sm:$0xff]
        %v4014 = vld [vmem:[#allocation2 + $0x170] sm:$0xff]
        %v4015 = vld [vmem:[#allocation2 + $0x178] sm:$0xff]
        %v4016 = vld [vmem:[#allocation2 + $0x180] sm:$0xff]
        %v4017 = vld [vmem:[#allocation2 + $0x188] sm:$0xff]
        %v4018 = vld [vmem:[#allocation2 + $0x190] sm:$0xff]
        %v4019 = vld [vmem:[#allocation2 + $0x198] sm:$0xff]
        %v4020 = vld [vmem:[#allocation2 + $0x1a0] sm:$0xff]
        %v4021 = vld [vmem:[#allocation2 + $0x1a8] sm:$0xff]
        %v4022 = vld [vmem:[#allocation2 + $0x1b0] sm:$0xff]
        %v4023 = vld [vmem:[#allocation2 + $0x1b8] sm:$0xff]
        %v4024 = vld [vmem:[#allocation2 + $0x1c0] sm:$0xff]
        %v4025 = vld [vmem:[#allocation2 + $0x1c8] sm:$0xff]
        %v4026 = vld [vmem:[#allocation2 + $0x1d0] sm:$0xff]
        %v4027 = vld [vmem:[#allocation2 + $0x1d8] sm:$0xff]
        %v4028 = vld [vmem:[#allocation2 + $0x1e0] sm:$0xff]
        %v4029 = vld [vmem:[#allocation2 + $0x1e8] sm:$0xff]
        %v4030 = vld [vmem:[#allocation2 + $0x1f0] sm:$0xff]
        %v4031 = vld [vmem:[#allocation2 + $0x1f8] sm:$0xff]
        %v4032 = vld [vmem:[#allocation2 + $0x200] sm:$0xff]
        %v4033 = vld [vmem:[#allocation2 + $0x208] sm:$0xff]
        %v4034 = vld [vmem:[#allocation2 + $0x210] sm:$0xff]
        %v4035 = vld [vmem:[#allocation2 + $0x218] sm:$0xff]
        %v4036 = vld [vmem:[#allocation2 + $0x220] sm:$0xff]
        %v4037 = vld [vmem:[#allocation2 + $0x228] sm:$0xff]
        %v4038 = vld [vmem:[#allocation2 + $0x230] sm:$0xff]
        %v4039 = vld [vmem:[#allocation2 + $0x238] sm:$0xff]
        %v4040 = vld [vmem:[#allocation2 + $0x240] sm:$0xff]
        %v4041 = vld [vmem:[#allocation2 + $0x248] sm:$0xff]
        %v4042 = vld [vmem:[#allocation2 + $0x250] sm:$0xff]
        %v4043 = vld [vmem:[#allocation2 + $0x258] sm:$0xff]
        %v4044 = vld [vmem:[#allocation2 + $0x260] sm:$0xff]
        %v4045 = vld [vmem:[#allocation2 + $0x268] sm:$0xff]
        %v4046 = vld [vmem:[#allocation2 + $0x270] sm:$0xff]
        %v4047 = vld [vmem:[#allocation2 + $0x278] sm:$0xff]
        %v4048 = vld [vmem:[#allocation2 + $0x280] sm:$0xff]
        %v4049 = vld [vmem:[#allocation2 + $0x288] sm:$0xff]
        %v4050 = vld [vmem:[#allocation2 + $0x290] sm:$0xff]
        %v4051 = vld [vmem:[#allocation2 + $0x298] sm:$0xff]
        %v4052 = vld [vmem:[#allocation2 + $0x2a0] sm:$0xff]
        %v4053 = vld [vmem:[#allocation2 + $0x2a8] sm:$0xff]
        %v4054 = vld [vmem:[#allocation2 + $0x2b0] sm:$0xff]
        %v4055 = vld [vmem:[#allocation2 + $0x2b8] sm:$0xff]
        %v4056 = vld [vmem:[#allocation2 + $0x2c0] sm:$0xff]
        %v4057 = vld [vmem:[#allocation2 + $0x2c8] sm:$0xff]
        %v4058 = vld [vmem:[#allocation2 + $0x2d0] sm:$0xff]
        %v4059 = vld [vmem:[#allocation2 + $0x2d8] sm:$0xff]
        %v4060 = vld [vmem:[#allocation2 + $0x2e0] sm:$0xff]
        %v4061 = vld [vmem:[#allocation2 + $0x2e8] sm:$0xff]
        %v4062 = vld [vmem:[#allocation2 + $0x2f0] sm:$0xff]
        %v4063 = vld [vmem:[#allocation2 + $0x2f8] sm:$0xff]
        %v4064 = vld [vmem:[#allocation2 + $0x300] sm:$0xff]
        %v4065 = vld [vmem:[#allocation2 + $0x308] sm:$0xff]
        %v4066 = vld [vmem:[#allocation2 + $0x310] sm:$0xff]
        %v4067 = vld [vmem:[#allocation2 + $0x318] sm:$0xff]
        %v4068 = vld [vmem:[#allocation2 + $0x320] sm:$0xff]
        %v4069 = vld [vmem:[#allocation2 + $0x328] sm:$0xff]
        %v4070 = vld [vmem:[#allocation2 + $0x330] sm:$0xff]
        %v4071 = vld [vmem:[#allocation2 + $0x338] sm:$0xff]
        %v4072 = vld [vmem:[#allocation2 + $0x340] sm:$0xff]
        %v4073 = vld [vmem:[#allocation2 + $0x348] sm:$0xff]
        %v4074 = vld [vmem:[#allocation2 + $0x350] sm:$0xff]
        %v4075 = vld [vmem:[#allocation2 + $0x358] sm:$0xff]
        %v4076 = vld [vmem:[#allocation2 + $0x360] sm:$0xff]
        %v4077 = vld [vmem:[#allocation2 + $0x368] sm:$0xff]
        %v4078 = vld [vmem:[#allocation2 + $0x370] sm:$0xff]
        %v4079 = vld [vmem:[#allocation2 + $0x378] sm:$0xff]
        %v4080 = vld [vmem:[#allocation2 + $0x380] sm:$0xff]
        %v4081 = vld [vmem:[#allocation2 + $0x388] sm:$0xff]
        %v4082 = vld [vmem:[#allocation2 + $0x390] sm:$0xff]
        %v4083 = vld [vmem:[#allocation2 + $0x398] sm:$0xff]
        %v4084 = vld [vmem:[#allocation2 + $0x3a0] sm:$0xff]
        %v4085 = vld [vmem:[#allocation2 + $0x3a8] sm:$0xff]
        %v4086 = vld [vmem:[#allocation2 + $0x3b0] sm:$0xff]
        %v4087 = vld [vmem:[#allocation2 + $0x3b8] sm:$0xff]
        %v4088 = vld [vmem:[#allocation2 + $0x3c0] sm:$0xff]
        %v4089 = vld [vmem:[#allocation2 + $0x3c8] sm:$0xff]
        %v4090 = vld [vmem:[#allocation2 + $0x3d0] sm:$0xff]
        %v4091 = vld [vmem:[#allocation2 + $0x3d8] sm:$0xff]
        %v4092 = vld [vmem:[#allocation2 + $0x3e0] sm:$0xff]
        %v4093 = vld [vmem:[#allocation2 + $0x3e8] sm:$0xff]
        %v4094 = vld [vmem:[#allocation2 + $0x3f0] sm:$0xff]
        %v4095 = vld [vmem:[#allocation2 + $0x3f8] sm:$0xff]
        %v4096 = vld [vmem:[#allocation2 + $0x400] sm:$0xff]
        %v4097 = vld [vmem:[#allocation2 + $0x408] sm:$0xff]
        %v4098 = vld [vmem:[#allocation2 + $0x410] sm:$0xff]
        %v4099 = vld [vmem:[#allocation2 + $0x418] sm:$0xff]
        %v4100 = vld [vmem:[#allocation2 + $0x420] sm:$0xff]
        %v4101 = vld [vmem:[#allocation2 + $0x428] sm:$0xff]
        %v4102 = vld [vmem:[#allocation2 + $0x430] sm:$0xff]
        %v4103 = vld [vmem:[#allocation2 + $0x438] sm:$0xff]
        %v4104 = vld [vmem:[#allocation2 + $0x440] sm:$0xff]
        %v4105 = vld [vmem:[#allocation2 + $0x448] sm:$0xff]
        %v4106 = vld [vmem:[#allocation2 + $0x450] sm:$0xff]
        %v4107 = vld [vmem:[#allocation2 + $0x458] sm:$0xff]
        %v4108 = vld [vmem:[#allocation2 + $0x460] sm:$0xff]
        %v4109 = vld [vmem:[#allocation2 + $0x468] sm:$0xff]
        %v4110 = vld [vmem:[#allocation2 + $0x470] sm:$0xff]
        %v4111 = vld [vmem:[#allocation2 + $0x478] sm:$0xff]
        %v4112 = vld [vmem:[#allocation2 + $0x480] sm:$0xff]
        %v4113 = vld [vmem:[#allocation2 + $0x488] sm:$0xff]
        %v4114 = vld [vmem:[#allocation2 + $0x490] sm:$0xff]
        %v4115 = vld [vmem:[#allocation2 + $0x498] sm:$0xff]
        %v4116 = vld [vmem:[#allocation2 + $0x4a0] sm:$0xff]
        %v4117 = vld [vmem:[#allocation2 + $0x4a8] sm:$0xff]
        %v4118 = vld [vmem:[#allocation2 + $0x4b0] sm:$0xff]
        %v4119 = vld [vmem:[#allocation2 + $0x4b8] sm:$0xff]
        %v4120 = vld [vmem:[#allocation2 + $0x4c0] sm:$0xff]
        %v4121 = vld [vmem:[#allocation2 + $0x4c8] sm:$0xff]
        %v4122 = vld [vmem:[#allocation2 + $0x4d0] sm:$0xff]
        %v4123 = vld [vmem:[#allocation2 + $0x4d8] sm:$0xff]
        %v4124 = vld [vmem:[#allocation2 + $0x4e0] sm:$0xff]
        %v4125 = vld [vmem:[#allocation2 + $0x4e8] sm:$0xff]
        %v4126 = vld [vmem:[#allocation2 + $0x4f0] sm:$0xff]
        %v4127 = vld [vmem:[#allocation2 + $0x4f8] sm:$0xff]
        %v4128 = vld [vmem:[#allocation2 + $0x500] sm:$0xff]
        %v4129 = vld [vmem:[#allocation2 + $0x508] sm:$0xff]
        %v4130 = vld [vmem:[#allocation2 + $0x510] sm:$0xff]
        %v4131 = vld [vmem:[#allocation2 + $0x518] sm:$0xff]
        %v4132 = vld [vmem:[#allocation2 + $0x520] sm:$0xff]
        %v4133 = vld [vmem:[#allocation2 + $0x528] sm:$0xff]
        %v4134 = vld [vmem:[#allocation2 + $0x530] sm:$0xff]
        %v4135 = vld [vmem:[#allocation2 + $0x538] sm:$0xff]
        %v4136 = vld [vmem:[#allocation2 + $0x540] sm:$0xff]
        %v4137 = vld [vmem:[#allocation2 + $0x548] sm:$0xff]
        %v4138 = vld [vmem:[#allocation2 + $0x550] sm:$0xff]
        %v4139 = vld [vmem:[#allocation2 + $0x558] sm:$0xff]
        %v4140 = vld [vmem:[#allocation2 + $0x560] sm:$0xff]
        %v4141 = vld [vmem:[#allocation2 + $0x568] sm:$0xff]
        %v4142 = vld [vmem:[#allocation2 + $0x570] sm:$0xff]
        %v4143 = vld [vmem:[#allocation2 + $0x578] sm:$0xff]
        %v4144 = vld [vmem:[#allocation2 + $0x580] sm:$0xff]
        %v4145 = vld [vmem:[#allocation2 + $0x588] sm:$0xff]
        %v4146 = vld [vmem:[#allocation2 + $0x590] sm:$0xff]
        %v4147 = vld [vmem:[#allocation2 + $0x598] sm:$0xff]
        %v4148 = vld [vmem:[#allocation2 + $0x5a0] sm:$0xff]
        %v4149 = vld [vmem:[#allocation2 + $0x5a8] sm:$0xff]
        %v4150 = vld [vmem:[#allocation2 + $0x5b0] sm:$0xff]
        %v4151 = vld [vmem:[#allocation2 + $0x5b8] sm:$0xff]
        %v4152 = vld [vmem:[#allocation2 + $0x5c0] sm:$0xff]
        %v4153 = vld [vmem:[#allocation2 + $0x5c8] sm:$0xff]
        %v4154 = vld [vmem:[#allocation2 + $0x5d0] sm:$0xff]
        %v4155 = vld [vmem:[#allocation2 + $0x5d8] sm:$0xff]
        %v4156 = vld [vmem:[#allocation2 + $0x5e0] sm:$0xff]
        %v4157 = vld [vmem:[#allocation2 + $0x5e8] sm:$0xff]
        %v4158 = vld [vmem:[#allocation2 + $0x5f0] sm:$0xff]
        %v4159 = vld [vmem:[#allocation2 + $0x5f8] sm:$0xff]
        %v4160 = vld [vmem:[#allocation2 + $0x600] sm:$0xff]
        %v4161 = vld [vmem:[#allocation2 + $0x608] sm:$0xff]
        %v4162 = vld [vmem:[#allocation2 + $0x610] sm:$0xff]
        %v4163 = vld [vmem:[#allocation2 + $0x618] sm:$0xff]
        %v4164 = vld [vmem:[#allocation2 + $0x620] sm:$0xff]
        %v4165 = vld [vmem:[#allocation2 + $0x628] sm:$0xff]
        %v4166 = vld [vmem:[#allocation2 + $0x630] sm:$0xff]
        %v4167 = vld [vmem:[#allocation2 + $0x638] sm:$0xff]
        %v4168 = vld [vmem:[#allocation2 + $0x640] sm:$0xff]
        %v4169 = vld [vmem:[#allocation2 + $0x648] sm:$0xff]
        %v4170 = vld [vmem:[#allocation2 + $0x650] sm:$0xff]
        %v4171 = vld [vmem:[#allocation2 + $0x658] sm:$0xff]
        %v4172 = vld [vmem:[#allocation2 + $0x660] sm:$0xff]
        %v4173 = vld [vmem:[#allocation2 + $0x668] sm:$0xff]
        %v4174 = vld [vmem:[#allocation2 + $0x670] sm:$0xff]
        %v4175 = vld [vmem:[#allocation2 + $0x678] sm:$0xff]
        %v4176 = vld [vmem:[#allocation2 + $0x680] sm:$0xff]
        %v4177 = vld [vmem:[#allocation2 + $0x688] sm:$0xff]
        %v4178 = vld [vmem:[#allocation2 + $0x690] sm:$0xff]
        %v4179 = vld [vmem:[#allocation2 + $0x698] sm:$0xff]
        %v4180 = vld [vmem:[#allocation2 + $0x6a0] sm:$0xff]
        %v4181 = vld [vmem:[#allocation2 + $0x6a8] sm:$0xff]
        %v4182 = vld [vmem:[#allocation2 + $0x6b0] sm:$0xff]
        %v4183 = vld [vmem:[#allocation2 + $0x6b8] sm:$0xff]
        %v4184 = vld [vmem:[#allocation2 + $0x6c0] sm:$0xff]
        %v4185 = vld [vmem:[#allocation2 + $0x6c8] sm:$0xff]
        %v4186 = vld [vmem:[#allocation2 + $0x6d0] sm:$0xff]
        %v4187 = vld [vmem:[#allocation2 + $0x6d8] sm:$0xff]
        %v4188 = vld [vmem:[#allocation2 + $0x6e0] sm:$0xff]
        %v4189 = vld [vmem:[#allocation2 + $0x6e8] sm:$0xff]
        %v4190 = vld [vmem:[#allocation2 + $0x6f0] sm:$0xff]
        %v4191 = vld [vmem:[#allocation2 + $0x6f8] sm:$0xff]
        %v4192 = vld [vmem:[#allocation2 + $0x700] sm:$0xff]
        %v4193 = vld [vmem:[#allocation2 + $0x708] sm:$0xff]
        %v4194 = vld [vmem:[#allocation2 + $0x710] sm:$0xff]
        %v4195 = vld [vmem:[#allocation2 + $0x718] sm:$0xff]
        %v4196 = vld [vmem:[#allocation2 + $0x720] sm:$0xff]
        %v4197 = vld [vmem:[#allocation2 + $0x728] sm:$0xff]
        %v4198 = vld [vmem:[#allocation2 + $0x730] sm:$0xff]
        %v4199 = vld [vmem:[#allocation2 + $0x738] sm:$0xff]
        %v4200 = vld [vmem:[#allocation2 + $0x740] sm:$0xff]
        %v4201 = vld [vmem:[#allocation2 + $0x748] sm:$0xff]
        %v4202 = vld [vmem:[#allocation2 + $0x750] sm:$0xff]
        %v4203 = vld [vmem:[#allocation2 + $0x758] sm:$0xff]
        %v4204 = vld [vmem:[#allocation2 + $0x760] sm:$0xff]
        %v4205 = vld [vmem:[#allocation2 + $0x768] sm:$0xff]
        %v4206 = vld [vmem:[#allocation2 + $0x770] sm:$0xff]
        %v4207 = vld [vmem:[#allocation2 + $0x778] sm:$0xff]
        %v4208 = vld [vmem:[#allocation2 + $0x780] sm:$0xff]
        %v4209 = vld [vmem:[#allocation2 + $0x788] sm:$0xff]
        %v4210 = vld [vmem:[#allocation2 + $0x790] sm:$0xff]
        %v4211 = vld [vmem:[#allocation2 + $0x798] sm:$0xff]
        %v4212 = vld [vmem:[#allocation2 + $0x7a0] sm:$0xff]
        %v4213 = vld [vmem:[#allocation2 + $0x7a8] sm:$0xff]
        %v4214 = vld [vmem:[#allocation2 + $0x7b0] sm:$0xff]
        %v4215 = vld [vmem:[#allocation2 + $0x7b8] sm:$0xff]
        %v4216 = vld [vmem:[#allocation2 + $0x7c0] sm:$0xff]
        %v4217 = vld [vmem:[#allocation2 + $0x7c8] sm:$0xff]
        %v4218 = vld [vmem:[#allocation2 + $0x7d0] sm:$0xff]
        %v4219 = vld [vmem:[#allocation2 + $0x7d8] sm:$0xff]
        %v4220 = vld [vmem:[#allocation2 + $0x7e0] sm:$0xff]
        %v4221 = vld [vmem:[#allocation2 + $0x7e8] sm:$0xff]
        %v4222 = vld [vmem:[#allocation2 + $0x7f0] sm:$0xff]
        %v4223 = vld [vmem:[#allocation2 + $0x7f8] sm:$0xff]
        %v4224 = vadd.f32 %v3968, %v3329
        %v4225 = vadd.f32 %v3969, %v3331
        %v4226 = vadd.f32 %v3970, %v3334
        %v4227 = vadd.f32 %v3971, %v3336
        %v4228 = vadd.f32 %v3972, %v3339
        %v4229 = vadd.f32 %v3973, %v3341
        %v4230 = vadd.f32 %v3974, %v3344
        %v4231 = vadd.f32 %v3975, %v3346
        %v4232 = vadd.f32 %v3976, %v3349
        %v4233 = vadd.f32 %v3977, %v3351
        %v4234 = vadd.f32 %v3978, %v3354
        %v4235 = vadd.f32 %v3979, %v3356
        %v4236 = vadd.f32 %v3980, %v3359
        %v4237 = vadd.f32 %v3981, %v3361
        %v4238 = vadd.f32 %v3982, %v3364
        %v4239 = vadd.f32 %v3983, %v3366
        %v4240 = vadd.f32 %v3984, %v3369
        %v4241 = vadd.f32 %v3985, %v3371
        %v4242 = vadd.f32 %v3986, %v3374
        %v4243 = vadd.f32 %v3987, %v3376
        %v4244 = vadd.f32 %v3988, %v3379
        %v4245 = vadd.f32 %v3989, %v3381
        %v4246 = vadd.f32 %v3990, %v3384
        %v4247 = vadd.f32 %v3991, %v3386
        %v4248 = vadd.f32 %v3992, %v3389
        %v4249 = vadd.f32 %v3993, %v3391
        %v4250 = vadd.f32 %v3994, %v3394
        %v4251 = vadd.f32 %v3995, %v3396
        %v4252 = vadd.f32 %v3996, %v3399
        %v4253 = vadd.f32 %v3997, %v3401
        %v4254 = vadd.f32 %v3998, %v3404
        %v4255 = vadd.f32 %v3999, %v3406
        %v4256 = vadd.f32 %v4000, %v3409
        %v4257 = vadd.f32 %v4001, %v3411
        %v4258 = vadd.f32 %v4002, %v3414
        %v4259 = vadd.f32 %v4003, %v3416
        %v4260 = vadd.f32 %v4004, %v3419
        %v4261 = vadd.f32 %v4005, %v3421
        %v4262 = vadd.f32 %v4006, %v3424
        %v4263 = vadd.f32 %v4007, %v3426
        %v4264 = vadd.f32 %v4008, %v3429
        %v4265 = vadd.f32 %v4009, %v3431
        %v4266 = vadd.f32 %v4010, %v3434
        %v4267 = vadd.f32 %v4011, %v3436
        %v4268 = vadd.f32 %v4012, %v3439
        %v4269 = vadd.f32 %v4013, %v3441
        %v4270 = vadd.f32 %v4014, %v3444
        %v4271 = vadd.f32 %v4015, %v3446
        %v4272 = vadd.f32 %v4016, %v3449
        %v4273 = vadd.f32 %v4017, %v3451
        %v4274 = vadd.f32 %v4018, %v3454
        %v4275 = vadd.f32 %v4019, %v3456
        %v4276 = vadd.f32 %v4020, %v3459
        %v4277 = vadd.f32 %v4021, %v3461
        %v4278 = vadd.f32 %v4022, %v3464
        %v4279 = vadd.f32 %v4023, %v3466
        %v4280 = vadd.f32 %v4024, %v3469
        %v4281 = vadd.f32 %v4025, %v3471
        %v4282 = vadd.f32 %v4026, %v3474
        %v4283 = vadd.f32 %v4027, %v3476
        %v4284 = vadd.f32 %v4028, %v3479
        %v4285 = vadd.f32 %v4029, %v3481
        %v4286 = vadd.f32 %v4030, %v3484
        %v4287 = vadd.f32 %v4031, %v3486
        %v4288 = vadd.f32 %v4032, %v3489
        %v4289 = vadd.f32 %v4033, %v3491
        %v4290 = vadd.f32 %v4034, %v3494
        %v4291 = vadd.f32 %v4035, %v3496
        %v4292 = vadd.f32 %v4036, %v3499
        %v4293 = vadd.f32 %v4037, %v3501
        %v4294 = vadd.f32 %v4038, %v3504
        %v4295 = vadd.f32 %v4039, %v3506
        %v4296 = vadd.f32 %v4040, %v3509
        %v4297 = vadd.f32 %v4041, %v3511
        %v4298 = vadd.f32 %v4042, %v3514
        %v4299 = vadd.f32 %v4043, %v3516
        %v4300 = vadd.f32 %v4044, %v3519
        %v4301 = vadd.f32 %v4045, %v3521
        %v4302 = vadd.f32 %v4046, %v3524
        %v4303 = vadd.f32 %v4047, %v3526
        %v4304 = vadd.f32 %v4048, %v3529
        %v4305 = vadd.f32 %v4049, %v3531
        %v4306 = vadd.f32 %v4050, %v3534
        %v4307 = vadd.f32 %v4051, %v3536
        %v4308 = vadd.f32 %v4052, %v3539
        %v4309 = vadd.f32 %v4053, %v3541
        %v4310 = vadd.f32 %v4054, %v3544
        %v4311 = vadd.f32 %v4055, %v3546
        %v4312 = vadd.f32 %v4056, %v3549
        %v4313 = vadd.f32 %v4057, %v3551
        %v4314 = vadd.f32 %v4058, %v3554
        %v4315 = vadd.f32 %v4059, %v3556
        %v4316 = vadd.f32 %v4060, %v3559
        %v4317 = vadd.f32 %v4061, %v3561
        %v4318 = vadd.f32 %v4062, %v3564
        %v4319 = vadd.f32 %v4063, %v3566
        %v4320 = vadd.f32 %v4064, %v3569
        %v4321 = vadd.f32 %v4065, %v3571
        %v4322 = vadd.f32 %v4066, %v3574
        %v4323 = vadd.f32 %v4067, %v3576
        %v4324 = vadd.f32 %v4068, %v3579
        %v4325 = vadd.f32 %v4069, %v3581
        %v4326 = vadd.f32 %v4070, %v3584
        %v4327 = vadd.f32 %v4071, %v3586
        %v4328 = vadd.f32 %v4072, %v3589
        %v4329 = vadd.f32 %v4073, %v3591
        %v4330 = vadd.f32 %v4074, %v3594
        %v4331 = vadd.f32 %v4075, %v3596
        %v4332 = vadd.f32 %v4076, %v3599
        %v4333 = vadd.f32 %v4077, %v3601
        %v4334 = vadd.f32 %v4078, %v3604
        %v4335 = vadd.f32 %v4079, %v3606
        %v4336 = vadd.f32 %v4080, %v3609
        %v4337 = vadd.f32 %v4081, %v3611
        %v4338 = vadd.f32 %v4082, %v3614
        %v4339 = vadd.f32 %v4083, %v3616
        %v4340 = vadd.f32 %v4084, %v3619
        %v4341 = vadd.f32 %v4085, %v3621
        %v4342 = vadd.f32 %v4086, %v3624
        %v4343 = vadd.f32 %v4087, %v3626
        %v4344 = vadd.f32 %v4088, %v3629
        %v4345 = vadd.f32 %v4089, %v3631
        %v4346 = vadd.f32 %v4090, %v3634
        %v4347 = vadd.f32 %v4091, %v3636
        %v4348 = vadd.f32 %v4092, %v3639
        %v4349 = vadd.f32 %v4093, %v3641
        %v4350 = vadd.f32 %v4094, %v3644
        %v4351 = vadd.f32 %v4095, %v3646
        %v4352 = vadd.f32 %v4096, %v3649
        %v4353 = vadd.f32 %v4097, %v3651
        %v4354 = vadd.f32 %v4098, %v3654
        %v4355 = vadd.f32 %v4099, %v3656
        %v4356 = vadd.f32 %v4100, %v3659
        %v4357 = vadd.f32 %v4101, %v3661
        %v4358 = vadd.f32 %v4102, %v3664
        %v4359 = vadd.f32 %v4103, %v3666
        %v4360 = vadd.f32 %v4104, %v3669
        %v4361 = vadd.f32 %v4105, %v3671
        %v4362 = vadd.f32 %v4106, %v3674
        %v4363 = vadd.f32 %v4107, %v3676
        %v4364 = vadd.f32 %v4108, %v3679
        %v4365 = vadd.f32 %v4109, %v3681
        %v4366 = vadd.f32 %v4110, %v3684
        %v4367 = vadd.f32 %v4111, %v3686
        %v4368 = vadd.f32 %v4112, %v3689
        %v4369 = vadd.f32 %v4113, %v3691
        %v4370 = vadd.f32 %v4114, %v3694
        %v4371 = vadd.f32 %v4115, %v3696
        %v4372 = vadd.f32 %v4116, %v3699
        %v4373 = vadd.f32 %v4117, %v3701
        %v4374 = vadd.f32 %v4118, %v3704
        %v4375 = vadd.f32 %v4119, %v3706
        %v4376 = vadd.f32 %v4120, %v3709
        %v4377 = vadd.f32 %v4121, %v3711
        %v4378 = vadd.f32 %v4122, %v3714
        %v4379 = vadd.f32 %v4123, %v3716
        %v4380 = vadd.f32 %v4124, %v3719
        %v4381 = vadd.f32 %v4125, %v3721
        %v4382 = vadd.f32 %v4126, %v3724
        %v4383 = vadd.f32 %v4127, %v3726
        %v4384 = vadd.f32 %v4128, %v3729
        %v4385 = vadd.f32 %v4129, %v3731
        %v4386 = vadd.f32 %v4130, %v3734
        %v4387 = vadd.f32 %v4131, %v3736
        %v4388 = vadd.f32 %v4132, %v3739
        %v4389 = vadd.f32 %v4133, %v3741
        %v4390 = vadd.f32 %v4134, %v3744
        %v4391 = vadd.f32 %v4135, %v3746
        %v4392 = vadd.f32 %v4136, %v3749
        %v4393 = vadd.f32 %v4137, %v3751
        %v4394 = vadd.f32 %v4138, %v3754
        %v4395 = vadd.f32 %v4139, %v3756
        %v4396 = vadd.f32 %v4140, %v3759
        %v4397 = vadd.f32 %v4141, %v3761
        %v4398 = vadd.f32 %v4142, %v3764
        %v4399 = vadd.f32 %v4143, %v3766
        %v4400 = vadd.f32 %v4144, %v3769
        %v4401 = vadd.f32 %v4145, %v3771
        %v4402 = vadd.f32 %v4146, %v3774
        %v4403 = vadd.f32 %v4147, %v3776
        %v4404 = vadd.f32 %v4148, %v3779
        %v4405 = vadd.f32 %v4149, %v3781
        %v4406 = vadd.f32 %v4150, %v3784
        %v4407 = vadd.f32 %v4151, %v3786
        %v4408 = vadd.f32 %v4152, %v3789
        %v4409 = vadd.f32 %v4153, %v3791
        %v4410 = vadd.f32 %v4154, %v3794
        %v4411 = vadd.f32 %v4155, %v3796
        %v4412 = vadd.f32 %v4156, %v3799
        %v4413 = vadd.f32 %v4157, %v3801
        %v4414 = vadd.f32 %v4158, %v3804
        %v4415 = vadd.f32 %v4159, %v3806
        %v4416 = vadd.f32 %v4160, %v3809
        %v4417 = vadd.f32 %v4161, %v3811
        %v4418 = vadd.f32 %v4162, %v3814
        %v4419 = vadd.f32 %v4163, %v3816
        %v4420 = vadd.f32 %v4164, %v3819
        %v4421 = vadd.f32 %v4165, %v3821
        %v4422 = vadd.f32 %v4166, %v3824
        %v4423 = vadd.f32 %v4167, %v3826
        %v4424 = vadd.f32 %v4168, %v3829
        %v4425 = vadd.f32 %v4169, %v3831
        %v4426 = vadd.f32 %v4170, %v3834
        %v4427 = vadd.f32 %v4171, %v3836
        %v4428 = vadd.f32 %v4172, %v3839
        %v4429 = vadd.f32 %v4173, %v3841
        %v4430 = vadd.f32 %v4174, %v3844
        %v4431 = vadd.f32 %v4175, %v3846
        %v4432 = vadd.f32 %v4176, %v3849
        %v4433 = vadd.f32 %v4177, %v3851
        %v4434 = vadd.f32 %v4178, %v3854
        %v4435 = vadd.f32 %v4179, %v3856
        %v4436 = vadd.f32 %v4180, %v3859
        %v4437 = vadd.f32 %v4181, %v3861
        %v4438 = vadd.f32 %v4182, %v3864
        %v4439 = vadd.f32 %v4183, %v3866
        %v4440 = vadd.f32 %v4184, %v3869
        %v4441 = vadd.f32 %v4185, %v3871
        %v4442 = vadd.f32 %v4186, %v3874
        %v4443 = vadd.f32 %v4187, %v3876
        %v4444 = vadd.f32 %v4188, %v3879
        %v4445 = vadd.f32 %v4189, %v3881
        %v4446 = vadd.f32 %v4190, %v3884
        %v4447 = vadd.f32 %v4191, %v3886
        %v4448 = vadd.f32 %v4192, %v3889
        %v4449 = vadd.f32 %v4193, %v3891
        %v4450 = vadd.f32 %v4194, %v3894
        %v4451 = vadd.f32 %v4195, %v3896
        %v4452 = vadd.f32 %v4196, %v3899
        %v4453 = vadd.f32 %v4197, %v3901
        %v4454 = vadd.f32 %v4198, %v3904
        %v4455 = vadd.f32 %v4199, %v3906
        %v4456 = vadd.f32 %v4200, %v3909
        %v4457 = vadd.f32 %v4201, %v3911
        %v4458 = vadd.f32 %v4202, %v3914
        %v4459 = vadd.f32 %v4203, %v3916
        %v4460 = vadd.f32 %v4204, %v3919
        %v4461 = vadd.f32 %v4205, %v3921
        %v4462 = vadd.f32 %v4206, %v3924
        %v4463 = vadd.f32 %v4207, %v3926
        %v4464 = vadd.f32 %v4208, %v3929
        %v4465 = vadd.f32 %v4209, %v3931
        %v4466 = vadd.f32 %v4210, %v3934
        %v4467 = vadd.f32 %v4211, %v3936
        %v4468 = vadd.f32 %v4212, %v3939
        %v4469 = vadd.f32 %v4213, %v3941
        %v4470 = vadd.f32 %v4214, %v3944
        %v4471 = vadd.f32 %v4215, %v3946
        %v4472 = vadd.f32 %v4216, %v3949
        %v4473 = vadd.f32 %v4217, %v3951
        %v4474 = vadd.f32 %v4218, %v3954
        %v4475 = vadd.f32 %v4219, %v3956
        %v4476 = vadd.f32 %v4220, %v3959
        %v4477 = vadd.f32 %v4221, %v3961
        %v4478 = vadd.f32 %v4222, %v3964
        %v4479 = vadd.f32 %v4223, %v3966
        %4480 = vst [vmem:[#allocation2] sm:$0xff] %v4224
        %4481 = vst [vmem:[#allocation2 + $0x8] sm:$0xff] %v4225
        %4482 = vst [vmem:[#allocation2 + $0x10] sm:$0xff] %v4226
        %4483 = vst [vmem:[#allocation2 + $0x18] sm:$0xff] %v4227
        %4484 = vst [vmem:[#allocation2 + $0x20] sm:$0xff] %v4228
        %4485 = vst [vmem:[#allocation2 + $0x28] sm:$0xff] %v4229
        %4486 = vst [vmem:[#allocation2 + $0x30] sm:$0xff] %v4230
        %4487 = vst [vmem:[#allocation2 + $0x38] sm:$0xff] %v4231
        %4488 = vst [vmem:[#allocation2 + $0x40] sm:$0xff] %v4232
        %4489 = vst [vmem:[#allocation2 + $0x48] sm:$0xff] %v4233
        %4490 = vst [vmem:[#allocation2 + $0x50] sm:$0xff] %v4234
        %4491 = vst [vmem:[#allocation2 + $0x58] sm:$0xff] %v4235
        %4492 = vst [vmem:[#allocation2 + $0x60] sm:$0xff] %v4236
        %4493 = vst [vmem:[#allocation2 + $0x68] sm:$0xff] %v4237
        %4494 = vst [vmem:[#allocation2 + $0x70] sm:$0xff] %v4238
        %4495 = vst [vmem:[#allocation2 + $0x78] sm:$0xff] %v4239
        %4496 = vst [vmem:[#allocation2 + $0x80] sm:$0xff] %v4240
        %4497 = vst [vmem:[#allocation2 + $0x88] sm:$0xff] %v4241
        %4498 = vst [vmem:[#allocation2 + $0x90] sm:$0xff] %v4242
        %4499 = vst [vmem:[#allocation2 + $0x98] sm:$0xff] %v4243
        %4500 = vst [vmem:[#allocation2 + $0xa0] sm:$0xff] %v4244
        %4501 = vst [vmem:[#allocation2 + $0xa8] sm:$0xff] %v4245
        %4502 = vst [vmem:[#allocation2 + $0xb0] sm:$0xff] %v4246
        %4503 = vst [vmem:[#allocation2 + $0xb8] sm:$0xff] %v4247
        %4504 = vst [vmem:[#allocation2 + $0xc0] sm:$0xff] %v4248
        %4505 = vst [vmem:[#allocation2 + $0xc8] sm:$0xff] %v4249
        %4506 = vst [vmem:[#allocation2 + $0xd0] sm:$0xff] %v4250
        %4507 = vst [vmem:[#allocation2 + $0xd8] sm:$0xff] %v4251
        %4508 = vst [vmem:[#allocation2 + $0xe0] sm:$0xff] %v4252
        %4509 = vst [vmem:[#allocation2 + $0xe8] sm:$0xff] %v4253
        %4510 = vst [vmem:[#allocation2 + $0xf0] sm:$0xff] %v4254
        %4511 = vst [vmem:[#allocation2 + $0xf8] sm:$0xff] %v4255
        %4512 = vst [vmem:[#allocation2 + $0x100] sm:$0xff] %v4256
        %4513 = vst [vmem:[#allocation2 + $0x108] sm:$0xff] %v4257
        %4514 = vst [vmem:[#allocation2 + $0x110] sm:$0xff] %v4258
        %4515 = vst [vmem:[#allocation2 + $0x118] sm:$0xff] %v4259
        %4516 = vst [vmem:[#allocation2 + $0x120] sm:$0xff] %v4260
        %4517 = vst [vmem:[#allocation2 + $0x128] sm:$0xff] %v4261
        %4518 = vst [vmem:[#allocation2 + $0x130] sm:$0xff] %v4262
        %4519 = vst [vmem:[#allocation2 + $0x138] sm:$0xff] %v4263
        %4520 = vst [vmem:[#allocation2 + $0x140] sm:$0xff] %v4264
        %4521 = vst [vmem:[#allocation2 + $0x148] sm:$0xff] %v4265
        %4522 = vst [vmem:[#allocation2 + $0x150] sm:$0xff] %v4266
        %4523 = vst [vmem:[#allocation2 + $0x158] sm:$0xff] %v4267
        %4524 = vst [vmem:[#allocation2 + $0x160] sm:$0xff] %v4268
        %4525 = vst [vmem:[#allocation2 + $0x168] sm:$0xff] %v4269
        %4526 = vst [vmem:[#allocation2 + $0x170] sm:$0xff] %v4270
        %4527 = vst [vmem:[#allocation2 + $0x178] sm:$0xff] %v4271
        %4528 = vst [vmem:[#allocation2 + $0x180] sm:$0xff] %v4272
        %4529 = vst [vmem:[#allocation2 + $0x188] sm:$0xff] %v4273
        %4530 = vst [vmem:[#allocation2 + $0x190] sm:$0xff] %v4274
        %4531 = vst [vmem:[#allocation2 + $0x198] sm:$0xff] %v4275
        %4532 = vst [vmem:[#allocation2 + $0x1a0] sm:$0xff] %v4276
        %4533 = vst [vmem:[#allocation2 + $0x1a8] sm:$0xff] %v4277
        %4534 = vst [vmem:[#allocation2 + $0x1b0] sm:$0xff] %v4278
        %4535 = vst [vmem:[#allocation2 + $0x1b8] sm:$0xff] %v4279
        %4536 = vst [vmem:[#allocation2 + $0x1c0] sm:$0xff] %v4280
        %4537 = vst [vmem:[#allocation2 + $0x1c8] sm:$0xff] %v4281
        %4538 = vst [vmem:[#allocation2 + $0x1d0] sm:$0xff] %v4282
        %4539 = vst [vmem:[#allocation2 + $0x1d8] sm:$0xff] %v4283
        %4540 = vst [vmem:[#allocation2 + $0x1e0] sm:$0xff] %v4284
        %4541 = vst [vmem:[#allocation2 + $0x1e8] sm:$0xff] %v4285
        %4542 = vst [vmem:[#allocation2 + $0x1f0] sm:$0xff] %v4286
        %4543 = vst [vmem:[#allocation2 + $0x1f8] sm:$0xff] %v4287
        %4544 = vst [vmem:[#allocation2 + $0x200] sm:$0xff] %v4288
        %4545 = vst [vmem:[#allocation2 + $0x208] sm:$0xff] %v4289
        %4546 = vst [vmem:[#allocation2 + $0x210] sm:$0xff] %v4290
        %4547 = vst [vmem:[#allocation2 + $0x218] sm:$0xff] %v4291
        %4548 = vst [vmem:[#allocation2 + $0x220] sm:$0xff] %v4292
        %4549 = vst [vmem:[#allocation2 + $0x228] sm:$0xff] %v4293
        %4550 = vst [vmem:[#allocation2 + $0x230] sm:$0xff] %v4294
        %4551 = vst [vmem:[#allocation2 + $0x238] sm:$0xff] %v4295
        %4552 = vst [vmem:[#allocation2 + $0x240] sm:$0xff] %v4296
        %4553 = vst [vmem:[#allocation2 + $0x248] sm:$0xff] %v4297
        %4554 = vst [vmem:[#allocation2 + $0x250] sm:$0xff] %v4298
        %4555 = vst [vmem:[#allocation2 + $0x258] sm:$0xff] %v4299
        %4556 = vst [vmem:[#allocation2 + $0x260] sm:$0xff] %v4300
        %4557 = vst [vmem:[#allocation2 + $0x268] sm:$0xff] %v4301
        %4558 = vst [vmem:[#allocation2 + $0x270] sm:$0xff] %v4302
        %4559 = vst [vmem:[#allocation2 + $0x278] sm:$0xff] %v4303
        %4560 = vst [vmem:[#allocation2 + $0x280] sm:$0xff] %v4304
        %4561 = vst [vmem:[#allocation2 + $0x288] sm:$0xff] %v4305
        %4562 = vst [vmem:[#allocation2 + $0x290] sm:$0xff] %v4306
        %4563 = vst [vmem:[#allocation2 + $0x298] sm:$0xff] %v4307
        %4564 = vst [vmem:[#allocation2 + $0x2a0] sm:$0xff] %v4308
        %4565 = vst [vmem:[#allocation2 + $0x2a8] sm:$0xff] %v4309
        %4566 = vst [vmem:[#allocation2 + $0x2b0] sm:$0xff] %v4310
        %4567 = vst [vmem:[#allocation2 + $0x2b8] sm:$0xff] %v4311
        %4568 = vst [vmem:[#allocation2 + $0x2c0] sm:$0xff] %v4312
        %4569 = vst [vmem:[#allocation2 + $0x2c8] sm:$0xff] %v4313
        %4570 = vst [vmem:[#allocation2 + $0x2d0] sm:$0xff] %v4314
        %4571 = vst [vmem:[#allocation2 + $0x2d8] sm:$0xff] %v4315
        %4572 = vst [vmem:[#allocation2 + $0x2e0] sm:$0xff] %v4316
        %4573 = vst [vmem:[#allocation2 + $0x2e8] sm:$0xff] %v4317
        %4574 = vst [vmem:[#allocation2 + $0x2f0] sm:$0xff] %v4318
        %4575 = vst [vmem:[#allocation2 + $0x2f8] sm:$0xff] %v4319
        %4576 = vst [vmem:[#allocation2 + $0x300] sm:$0xff] %v4320
        %4577 = vst [vmem:[#allocation2 + $0x308] sm:$0xff] %v4321
        %4578 = vst [vmem:[#allocation2 + $0x310] sm:$0xff] %v4322
        %4579 = vst [vmem:[#allocation2 + $0x318] sm:$0xff] %v4323
        %4580 = vst [vmem:[#allocation2 + $0x320] sm:$0xff] %v4324
        %4581 = vst [vmem:[#allocation2 + $0x328] sm:$0xff] %v4325
        %4582 = vst [vmem:[#allocation2 + $0x330] sm:$0xff] %v4326
        %4583 = vst [vmem:[#allocation2 + $0x338] sm:$0xff] %v4327
        %4584 = vst [vmem:[#allocation2 + $0x340] sm:$0xff] %v4328
        %4585 = vst [vmem:[#allocation2 + $0x348] sm:$0xff] %v4329
        %4586 = vst [vmem:[#allocation2 + $0x350] sm:$0xff] %v4330
        %4587 = vst [vmem:[#allocation2 + $0x358] sm:$0xff] %v4331
        %4588 = vst [vmem:[#allocation2 + $0x360] sm:$0xff] %v4332
        %4589 = vst [vmem:[#allocation2 + $0x368] sm:$0xff] %v4333
        %4590 = vst [vmem:[#allocation2 + $0x370] sm:$0xff] %v4334
        %4591 = vst [vmem:[#allocation2 + $0x378] sm:$0xff] %v4335
        %4592 = vst [vmem:[#allocation2 + $0x380] sm:$0xff] %v4336
        %4593 = vst [vmem:[#allocation2 + $0x388] sm:$0xff] %v4337
        %4594 = vst [vmem:[#allocation2 + $0x390] sm:$0xff] %v4338
        %4595 = vst [vmem:[#allocation2 + $0x398] sm:$0xff] %v4339
        %4596 = vst [vmem:[#allocation2 + $0x3a0] sm:$0xff] %v4340
        %4597 = vst [vmem:[#allocation2 + $0x3a8] sm:$0xff] %v4341
        %4598 = vst [vmem:[#allocation2 + $0x3b0] sm:$0xff] %v4342
        %4599 = vst [vmem:[#allocation2 + $0x3b8] sm:$0xff] %v4343
        %4600 = vst [vmem:[#allocation2 + $0x3c0] sm:$0xff] %v4344
        %4601 = vst [vmem:[#allocation2 + $0x3c8] sm:$0xff] %v4345
        %4602 = vst [vmem:[#allocation2 + $0x3d0] sm:$0xff] %v4346
        %4603 = vst [vmem:[#allocation2 + $0x3d8] sm:$0xff] %v4347
        %4604 = vst [vmem:[#allocation2 + $0x3e0] sm:$0xff] %v4348
        %4605 = vst [vmem:[#allocation2 + $0x3e8] sm:$0xff] %v4349
        %4606 = vst [vmem:[#allocation2 + $0x3f0] sm:$0xff] %v4350
        %4607 = vst [vmem:[#allocation2 + $0x3f8] sm:$0xff] %v4351
        %4608 = vst [vmem:[#allocation2 + $0x400] sm:$0xff] %v4352
        %4609 = vst [vmem:[#allocation2 + $0x408] sm:$0xff] %v4353
        %4610 = vst [vmem:[#allocation2 + $0x410] sm:$0xff] %v4354
        %4611 = vst [vmem:[#allocation2 + $0x418] sm:$0xff] %v4355
        %4612 = vst [vmem:[#allocation2 + $0x420] sm:$0xff] %v4356
        %4613 = vst [vmem:[#allocation2 + $0x428] sm:$0xff] %v4357
        %4614 = vst [vmem:[#allocation2 + $0x430] sm:$0xff] %v4358
        %4615 = vst [vmem:[#allocation2 + $0x438] sm:$0xff] %v4359
        %4616 = vst [vmem:[#allocation2 + $0x440] sm:$0xff] %v4360
        %4617 = vst [vmem:[#allocation2 + $0x448] sm:$0xff] %v4361
        %4618 = vst [vmem:[#allocation2 + $0x450] sm:$0xff] %v4362
        %4619 = vst [vmem:[#allocation2 + $0x458] sm:$0xff] %v4363
        %4620 = vst [vmem:[#allocation2 + $0x460] sm:$0xff] %v4364
        %4621 = vst [vmem:[#allocation2 + $0x468] sm:$0xff] %v4365
        %4622 = vst [vmem:[#allocation2 + $0x470] sm:$0xff] %v4366
        %4623 = vst [vmem:[#allocation2 + $0x478] sm:$0xff] %v4367
        %4624 = vst [vmem:[#allocation2 + $0x480] sm:$0xff] %v4368
        %4625 = vst [vmem:[#allocation2 + $0x488] sm:$0xff] %v4369
        %4626 = vst [vmem:[#allocation2 + $0x490] sm:$0xff] %v4370
        %4627 = vst [vmem:[#allocation2 + $0x498] sm:$0xff] %v4371
        %4628 = vst [vmem:[#allocation2 + $0x4a0] sm:$0xff] %v4372
        %4629 = vst [vmem:[#allocation2 + $0x4a8] sm:$0xff] %v4373
        %4630 = vst [vmem:[#allocation2 + $0x4b0] sm:$0xff] %v4374
        %4631 = vst [vmem:[#allocation2 + $0x4b8] sm:$0xff] %v4375
        %4632 = vst [vmem:[#allocation2 + $0x4c0] sm:$0xff] %v4376
        %4633 = vst [vmem:[#allocation2 + $0x4c8] sm:$0xff] %v4377
        %4634 = vst [vmem:[#allocation2 + $0x4d0] sm:$0xff] %v4378
        %4635 = vst [vmem:[#allocation2 + $0x4d8] sm:$0xff] %v4379
        %4636 = vst [vmem:[#allocation2 + $0x4e0] sm:$0xff] %v4380
        %4637 = vst [vmem:[#allocation2 + $0x4e8] sm:$0xff] %v4381
        %4638 = vst [vmem:[#allocation2 + $0x4f0] sm:$0xff] %v4382
        %4639 = vst [vmem:[#allocation2 + $0x4f8] sm:$0xff] %v4383
        %4640 = vst [vmem:[#allocation2 + $0x500] sm:$0xff] %v4384
        %4641 = vst [vmem:[#allocation2 + $0x508] sm:$0xff] %v4385
        %4642 = vst [vmem:[#allocation2 + $0x510] sm:$0xff] %v4386
        %4643 = vst [vmem:[#allocation2 + $0x518] sm:$0xff] %v4387
        %4644 = vst [vmem:[#allocation2 + $0x520] sm:$0xff] %v4388
        %4645 = vst [vmem:[#allocation2 + $0x528] sm:$0xff] %v4389
        %4646 = vst [vmem:[#allocation2 + $0x530] sm:$0xff] %v4390
        %4647 = vst [vmem:[#allocation2 + $0x538] sm:$0xff] %v4391
        %4648 = vst [vmem:[#allocation2 + $0x540] sm:$0xff] %v4392
        %4649 = vst [vmem:[#allocation2 + $0x548] sm:$0xff] %v4393
        %4650 = vst [vmem:[#allocation2 + $0x550] sm:$0xff] %v4394
        %4651 = vst [vmem:[#allocation2 + $0x558] sm:$0xff] %v4395
        %4652 = vst [vmem:[#allocation2 + $0x560] sm:$0xff] %v4396
        %4653 = vst [vmem:[#allocation2 + $0x568] sm:$0xff] %v4397
        %4654 = vst [vmem:[#allocation2 + $0x570] sm:$0xff] %v4398
        %4655 = vst [vmem:[#allocation2 + $0x578] sm:$0xff] %v4399
        %4656 = vst [vmem:[#allocation2 + $0x580] sm:$0xff] %v4400
        %4657 = vst [vmem:[#allocation2 + $0x588] sm:$0xff] %v4401
        %4658 = vst [vmem:[#allocation2 + $0x590] sm:$0xff] %v4402
        %4659 = vst [vmem:[#allocation2 + $0x598] sm:$0xff] %v4403
        %4660 = vst [vmem:[#allocation2 + $0x5a0] sm:$0xff] %v4404
        %4661 = vst [vmem:[#allocation2 + $0x5a8] sm:$0xff] %v4405
        %4662 = vst [vmem:[#allocation2 + $0x5b0] sm:$0xff] %v4406
        %4663 = vst [vmem:[#allocation2 + $0x5b8] sm:$0xff] %v4407
        %4664 = vst [vmem:[#allocation2 + $0x5c0] sm:$0xff] %v4408
        %4665 = vst [vmem:[#allocation2 + $0x5c8] sm:$0xff] %v4409
        %4666 = vst [vmem:[#allocation2 + $0x5d0] sm:$0xff] %v4410
        %4667 = vst [vmem:[#allocation2 + $0x5d8] sm:$0xff] %v4411
        %4668 = vst [vmem:[#allocation2 + $0x5e0] sm:$0xff] %v4412
        %4669 = vst [vmem:[#allocation2 + $0x5e8] sm:$0xff] %v4413
        %4670 = vst [vmem:[#allocation2 + $0x5f0] sm:$0xff] %v4414
        %4671 = vst [vmem:[#allocation2 + $0x5f8] sm:$0xff] %v4415
        %4672 = vst [vmem:[#allocation2 + $0x600] sm:$0xff] %v4416
        %4673 = vst [vmem:[#allocation2 + $0x608] sm:$0xff] %v4417
        %4674 = vst [vmem:[#allocation2 + $0x610] sm:$0xff] %v4418
        %4675 = vst [vmem:[#allocation2 + $0x618] sm:$0xff] %v4419
        %4676 = vst [vmem:[#allocation2 + $0x620] sm:$0xff] %v4420
        %4677 = vst [vmem:[#allocation2 + $0x628] sm:$0xff] %v4421
        %4678 = vst [vmem:[#allocation2 + $0x630] sm:$0xff] %v4422
        %4679 = vst [vmem:[#allocation2 + $0x638] sm:$0xff] %v4423
        %4680 = vst [vmem:[#allocation2 + $0x640] sm:$0xff] %v4424
        %4681 = vst [vmem:[#allocation2 + $0x648] sm:$0xff] %v4425
        %4682 = vst [vmem:[#allocation2 + $0x650] sm:$0xff] %v4426
        %4683 = vst [vmem:[#allocation2 + $0x658] sm:$0xff] %v4427
        %4684 = vst [vmem:[#allocation2 + $0x660] sm:$0xff] %v4428
        %4685 = vst [vmem:[#allocation2 + $0x668] sm:$0xff] %v4429
        %4686 = vst [vmem:[#allocation2 + $0x670] sm:$0xff] %v4430
        %4687 = vst [vmem:[#allocation2 + $0x678] sm:$0xff] %v4431
        %4688 = vst [vmem:[#allocation2 + $0x680] sm:$0xff] %v4432
        %4689 = vst [vmem:[#allocation2 + $0x688] sm:$0xff] %v4433
        %4690 = vst [vmem:[#allocation2 + $0x690] sm:$0xff] %v4434
        %4691 = vst [vmem:[#allocation2 + $0x698] sm:$0xff] %v4435
        %4692 = vst [vmem:[#allocation2 + $0x6a0] sm:$0xff] %v4436
        %4693 = vst [vmem:[#allocation2 + $0x6a8] sm:$0xff] %v4437
        %4694 = vst [vmem:[#allocation2 + $0x6b0] sm:$0xff] %v4438
        %4695 = vst [vmem:[#allocation2 + $0x6b8] sm:$0xff] %v4439
        %4696 = vst [vmem:[#allocation2 + $0x6c0] sm:$0xff] %v4440
        %4697 = vst [vmem:[#allocation2 + $0x6c8] sm:$0xff] %v4441
        %4698 = vst [vmem:[#allocation2 + $0x6d0] sm:$0xff] %v4442
        %4699 = vst [vmem:[#allocation2 + $0x6d8] sm:$0xff] %v4443
        %4700 = vst [vmem:[#allocation2 + $0x6e0] sm:$0xff] %v4444
        %4701 = vst [vmem:[#allocation2 + $0x6e8] sm:$0xff] %v4445
        %4702 = vst [vmem:[#allocation2 + $0x6f0] sm:$0xff] %v4446
        %4703 = vst [vmem:[#allocation2 + $0x6f8] sm:$0xff] %v4447
        %4704 = vst [vmem:[#allocation2 + $0x700] sm:$0xff] %v4448
        %4705 = vst [vmem:[#allocation2 + $0x708] sm:$0xff] %v4449
        %4706 = vst [vmem:[#allocation2 + $0x710] sm:$0xff] %v4450
        %4707 = vst [vmem:[#allocation2 + $0x718] sm:$0xff] %v4451
        %4708 = vst [vmem:[#allocation2 + $0x720] sm:$0xff] %v4452
        %4709 = vst [vmem:[#allocation2 + $0x728] sm:$0xff] %v4453
        %4710 = vst [vmem:[#allocation2 + $0x730] sm:$0xff] %v4454
        %4711 = vst [vmem:[#allocation2 + $0x738] sm:$0xff] %v4455
        %4712 = vst [vmem:[#allocation2 + $0x740] sm:$0xff] %v4456
        %4713 = vst [vmem:[#allocation2 + $0x748] sm:$0xff] %v4457
        %4714 = vst [vmem:[#allocation2 + $0x750] sm:$0xff] %v4458
        %4715 = vst [vmem:[#allocation2 + $0x758] sm:$0xff] %v4459
        %4716 = vst [vmem:[#allocation2 + $0x760] sm:$0xff] %v4460
        %4717 = vst [vmem:[#allocation2 + $0x768] sm:$0xff] %v4461
        %4718 = vst [vmem:[#allocation2 + $0x770] sm:$0xff] %v4462
        %4719 = vst [vmem:[#allocation2 + $0x778] sm:$0xff] %v4463
        %4720 = vst [vmem:[#allocation2 + $0x780] sm:$0xff] %v4464
        %4721 = vst [vmem:[#allocation2 + $0x788] sm:$0xff] %v4465
        %4722 = vst [vmem:[#allocation2 + $0x790] sm:$0xff] %v4466
        %4723 = vst [vmem:[#allocation2 + $0x798] sm:$0xff] %v4467
        %4724 = vst [vmem:[#allocation2 + $0x7a0] sm:$0xff] %v4468
        %4725 = vst [vmem:[#allocation2 + $0x7a8] sm:$0xff] %v4469
        %4726 = vst [vmem:[#allocation2 + $0x7b0] sm:$0xff] %v4470
        %4727 = vst [vmem:[#allocation2 + $0x7b8] sm:$0xff] %v4471
        %4728 = vst [vmem:[#allocation2 + $0x7c0] sm:$0xff] %v4472
        %4729 = vst [vmem:[#allocation2 + $0x7c8] sm:$0xff] %v4473
        %4730 = vst [vmem:[#allocation2 + $0x7d0] sm:$0xff] %v4474
        %4731 = vst [vmem:[#allocation2 + $0x7d8] sm:$0xff] %v4475
        %4732 = vst [vmem:[#allocation2 + $0x7e0] sm:$0xff] %v4476
        %4733 = vst [vmem:[#allocation2 + $0x7e8] sm:$0xff] %v4477
        %4734 = vst [vmem:[#allocation2 + $0x7f0] sm:$0xff] %v4478
        %4735 = vst [vmem:[#allocation2 + $0x7f8] sm:$0xff] %v4479
        %v4736 = vld [vmem:[%s202 + $0x100] sm:$0xf]
        %v4737 = vld [vmem:[%s202 + $0x104] sm:$0xf]
        %v4738 = vld [vmem:[%s202 + $0x108] sm:$0xf]
        %v4739 = vld [vmem:[%s202 + $0x10c] sm:$0xf]
        %v4740 = vld [vmem:[%s202 + $0x110] sm:$0xf]
        %v4741 = vld [vmem:[%s202 + $0x114] sm:$0xf]
        %v4742 = vld [vmem:[%s202 + $0x118] sm:$0xf]
        %v4743 = vld [vmem:[%s202 + $0x11c] sm:$0xf]
        %v4744 = vld [vmem:[%s202 + $0x120] sm:$0xf]
        %v4745 = vld [vmem:[%s202 + $0x124] sm:$0xf]
        %v4746 = vld [vmem:[%s202 + $0x128] sm:$0xf]
        %v4747 = vld [vmem:[%s202 + $0x12c] sm:$0xf]
        %v4748 = vld [vmem:[%s202 + $0x130] sm:$0xf]
        %v4749 = vld [vmem:[%s202 + $0x134] sm:$0xf]
        %v4750 = vld [vmem:[%s202 + $0x138] sm:$0xf]
        %v4751 = vld [vmem:[%s202 + $0x13c] sm:$0xf]
        %v4752 = vld [vmem:[%s202 + $0x140] sm:$0xf]
        %v4753 = vld [vmem:[%s202 + $0x144] sm:$0xf]
        %v4754 = vld [vmem:[%s202 + $0x148] sm:$0xf]
        %v4755 = vld [vmem:[%s202 + $0x14c] sm:$0xf]
        %v4756 = vld [vmem:[%s202 + $0x150] sm:$0xf]
        %v4757 = vld [vmem:[%s202 + $0x154] sm:$0xf]
        %v4758 = vld [vmem:[%s202 + $0x158] sm:$0xf]
        %v4759 = vld [vmem:[%s202 + $0x15c] sm:$0xf]
        %v4760 = vld [vmem:[%s202 + $0x160] sm:$0xf]
        %v4761 = vld [vmem:[%s202 + $0x164] sm:$0xf]
        %v4762 = vld [vmem:[%s202 + $0x168] sm:$0xf]
        %v4763 = vld [vmem:[%s202 + $0x16c] sm:$0xf]
        %v4764 = vld [vmem:[%s202 + $0x170] sm:$0xf]
        %v4765 = vld [vmem:[%s202 + $0x174] sm:$0xf]
        %v4766 = vld [vmem:[%s202 + $0x178] sm:$0xf]
        %v4767 = vld [vmem:[%s202 + $0x17c] sm:$0xf]
        %v4768 = vld [vmem:[%s202 + $0x180] sm:$0xf]
        %v4769 = vld [vmem:[%s202 + $0x184] sm:$0xf]
        %v4770 = vld [vmem:[%s202 + $0x188] sm:$0xf]
        %v4771 = vld [vmem:[%s202 + $0x18c] sm:$0xf]
        %v4772 = vld [vmem:[%s202 + $0x190] sm:$0xf]
        %v4773 = vld [vmem:[%s202 + $0x194] sm:$0xf]
        %v4774 = vld [vmem:[%s202 + $0x198] sm:$0xf]
        %v4775 = vld [vmem:[%s202 + $0x19c] sm:$0xf]
        %v4776 = vld [vmem:[%s202 + $0x1a0] sm:$0xf]
        %v4777 = vld [vmem:[%s202 + $0x1a4] sm:$0xf]
        %v4778 = vld [vmem:[%s202 + $0x1a8] sm:$0xf]
        %v4779 = vld [vmem:[%s202 + $0x1ac] sm:$0xf]
        %v4780 = vld [vmem:[%s202 + $0x1b0] sm:$0xf]
        %v4781 = vld [vmem:[%s202 + $0x1b4] sm:$0xf]
        %v4782 = vld [vmem:[%s202 + $0x1b8] sm:$0xf]
        %v4783 = vld [vmem:[%s202 + $0x1bc] sm:$0xf]
        %v4784 = vld [vmem:[%s202 + $0x1c0] sm:$0xf]
        %v4785 = vld [vmem:[%s202 + $0x1c4] sm:$0xf]
        %v4786 = vld [vmem:[%s202 + $0x1c8] sm:$0xf]
        %v4787 = vld [vmem:[%s202 + $0x1cc] sm:$0xf]
        %v4788 = vld [vmem:[%s202 + $0x1d0] sm:$0xf]
        %v4789 = vld [vmem:[%s202 + $0x1d4] sm:$0xf]
        %v4790 = vld [vmem:[%s202 + $0x1d8] sm:$0xf]
        %v4791 = vld [vmem:[%s202 + $0x1dc] sm:$0xf]
        %v4792 = vld [vmem:[%s202 + $0x1e0] sm:$0xf]
        %v4793 = vld [vmem:[%s202 + $0x1e4] sm:$0xf]
        %v4794 = vld [vmem:[%s202 + $0x1e8] sm:$0xf]
        %v4795 = vld [vmem:[%s202 + $0x1ec] sm:$0xf]
        %v4796 = vld [vmem:[%s202 + $0x1f0] sm:$0xf]
        %v4797 = vld [vmem:[%s202 + $0x1f4] sm:$0xf]
        %v4798 = vld [vmem:[%s202 + $0x1f8] sm:$0xf]
        %v4799 = vld [vmem:[%s202 + $0x1fc] sm:$0xf]
        %v4800 = vld [vmem:[%s202 + $0x200] sm:$0xf]
        %v4801 = vld [vmem:[%s202 + $0x204] sm:$0xf]
        %v4802 = vld [vmem:[%s202 + $0x208] sm:$0xf]
        %v4803 = vld [vmem:[%s202 + $0x20c] sm:$0xf]
        %v4804 = vld [vmem:[%s202 + $0x210] sm:$0xf]
        %v4805 = vld [vmem:[%s202 + $0x214] sm:$0xf]
        %v4806 = vld [vmem:[%s202 + $0x218] sm:$0xf]
        %v4807 = vld [vmem:[%s202 + $0x21c] sm:$0xf]
        %v4808 = vld [vmem:[%s202 + $0x220] sm:$0xf]
        %v4809 = vld [vmem:[%s202 + $0x224] sm:$0xf]
        %v4810 = vld [vmem:[%s202 + $0x228] sm:$0xf]
        %v4811 = vld [vmem:[%s202 + $0x22c] sm:$0xf]
        %v4812 = vld [vmem:[%s202 + $0x230] sm:$0xf]
        %v4813 = vld [vmem:[%s202 + $0x234] sm:$0xf]
        %v4814 = vld [vmem:[%s202 + $0x238] sm:$0xf]
        %v4815 = vld [vmem:[%s202 + $0x23c] sm:$0xf]
        %v4816 = vld [vmem:[%s202 + $0x240] sm:$0xf]
        %v4817 = vld [vmem:[%s202 + $0x244] sm:$0xf]
        %v4818 = vld [vmem:[%s202 + $0x248] sm:$0xf]
        %v4819 = vld [vmem:[%s202 + $0x24c] sm:$0xf]
        %v4820 = vld [vmem:[%s202 + $0x250] sm:$0xf]
        %v4821 = vld [vmem:[%s202 + $0x254] sm:$0xf]
        %v4822 = vld [vmem:[%s202 + $0x258] sm:$0xf]
        %v4823 = vld [vmem:[%s202 + $0x25c] sm:$0xf]
        %v4824 = vld [vmem:[%s202 + $0x260] sm:$0xf]
        %v4825 = vld [vmem:[%s202 + $0x264] sm:$0xf]
        %v4826 = vld [vmem:[%s202 + $0x268] sm:$0xf]
        %v4827 = vld [vmem:[%s202 + $0x26c] sm:$0xf]
        %v4828 = vld [vmem:[%s202 + $0x270] sm:$0xf]
        %v4829 = vld [vmem:[%s202 + $0x274] sm:$0xf]
        %v4830 = vld [vmem:[%s202 + $0x278] sm:$0xf]
        %v4831 = vld [vmem:[%s202 + $0x27c] sm:$0xf]
        %v4832 = vld [vmem:[%s202 + $0x280] sm:$0xf]
        %v4833 = vld [vmem:[%s202 + $0x284] sm:$0xf]
        %v4834 = vld [vmem:[%s202 + $0x288] sm:$0xf]
        %v4835 = vld [vmem:[%s202 + $0x28c] sm:$0xf]
        %v4836 = vld [vmem:[%s202 + $0x290] sm:$0xf]
        %v4837 = vld [vmem:[%s202 + $0x294] sm:$0xf]
        %v4838 = vld [vmem:[%s202 + $0x298] sm:$0xf]
        %v4839 = vld [vmem:[%s202 + $0x29c] sm:$0xf]
        %v4840 = vld [vmem:[%s202 + $0x2a0] sm:$0xf]
        %v4841 = vld [vmem:[%s202 + $0x2a4] sm:$0xf]
        %v4842 = vld [vmem:[%s202 + $0x2a8] sm:$0xf]
        %v4843 = vld [vmem:[%s202 + $0x2ac] sm:$0xf]
        %v4844 = vld [vmem:[%s202 + $0x2b0] sm:$0xf]
        %v4845 = vld [vmem:[%s202 + $0x2b4] sm:$0xf]
        %v4846 = vld [vmem:[%s202 + $0x2b8] sm:$0xf]
        %v4847 = vld [vmem:[%s202 + $0x2bc] sm:$0xf]
        %v4848 = vld [vmem:[%s202 + $0x2c0] sm:$0xf]
        %v4849 = vld [vmem:[%s202 + $0x2c4] sm:$0xf]
        %v4850 = vld [vmem:[%s202 + $0x2c8] sm:$0xf]
        %v4851 = vld [vmem:[%s202 + $0x2cc] sm:$0xf]
        %v4852 = vld [vmem:[%s202 + $0x2d0] sm:$0xf]
        %v4853 = vld [vmem:[%s202 + $0x2d4] sm:$0xf]
        %v4854 = vld [vmem:[%s202 + $0x2d8] sm:$0xf]
        %v4855 = vld [vmem:[%s202 + $0x2dc] sm:$0xf]
        %v4856 = vld [vmem:[%s202 + $0x2e0] sm:$0xf]
        %v4857 = vld [vmem:[%s202 + $0x2e4] sm:$0xf]
        %v4858 = vld [vmem:[%s202 + $0x2e8] sm:$0xf]
        %v4859 = vld [vmem:[%s202 + $0x2ec] sm:$0xf]
        %v4860 = vld [vmem:[%s202 + $0x2f0] sm:$0xf]
        %v4861 = vld [vmem:[%s202 + $0x2f4] sm:$0xf]
        %v4862 = vld [vmem:[%s202 + $0x2f8] sm:$0xf]
        %v4863 = vld [vmem:[%s202 + $0x2fc] sm:$0xf]
        %v4864 = vld [vmem:[%s202 + $0x300] sm:$0xf]
        %v4865 = vld [vmem:[%s202 + $0x304] sm:$0xf]
        %v4866 = vld [vmem:[%s202 + $0x308] sm:$0xf]
        %v4867 = vld [vmem:[%s202 + $0x30c] sm:$0xf]
        %v4868 = vld [vmem:[%s202 + $0x310] sm:$0xf]
        %v4869 = vld [vmem:[%s202 + $0x314] sm:$0xf]
        %v4870 = vld [vmem:[%s202 + $0x318] sm:$0xf]
        %v4871 = vld [vmem:[%s202 + $0x31c] sm:$0xf]
        %v4872 = vld [vmem:[%s202 + $0x320] sm:$0xf]
        %v4873 = vld [vmem:[%s202 + $0x324] sm:$0xf]
        %v4874 = vld [vmem:[%s202 + $0x328] sm:$0xf]
        %v4875 = vld [vmem:[%s202 + $0x32c] sm:$0xf]
        %v4876 = vld [vmem:[%s202 + $0x330] sm:$0xf]
        %v4877 = vld [vmem:[%s202 + $0x334] sm:$0xf]
        %v4878 = vld [vmem:[%s202 + $0x338] sm:$0xf]
        %v4879 = vld [vmem:[%s202 + $0x33c] sm:$0xf]
        %v4880 = vld [vmem:[%s202 + $0x340] sm:$0xf]
        %v4881 = vld [vmem:[%s202 + $0x344] sm:$0xf]
        %v4882 = vld [vmem:[%s202 + $0x348] sm:$0xf]
        %v4883 = vld [vmem:[%s202 + $0x34c] sm:$0xf]
        %v4884 = vld [vmem:[%s202 + $0x350] sm:$0xf]
        %v4885 = vld [vmem:[%s202 + $0x354] sm:$0xf]
        %v4886 = vld [vmem:[%s202 + $0x358] sm:$0xf]
        %v4887 = vld [vmem:[%s202 + $0x35c] sm:$0xf]
        %v4888 = vld [vmem:[%s202 + $0x360] sm:$0xf]
        %v4889 = vld [vmem:[%s202 + $0x364] sm:$0xf]
        %v4890 = vld [vmem:[%s202 + $0x368] sm:$0xf]
        %v4891 = vld [vmem:[%s202 + $0x36c] sm:$0xf]
        %v4892 = vld [vmem:[%s202 + $0x370] sm:$0xf]
        %v4893 = vld [vmem:[%s202 + $0x374] sm:$0xf]
        %v4894 = vld [vmem:[%s202 + $0x378] sm:$0xf]
        %v4895 = vld [vmem:[%s202 + $0x37c] sm:$0xf]
        %v4896 = vld [vmem:[%s202 + $0x380] sm:$0xf]
        %v4897 = vld [vmem:[%s202 + $0x384] sm:$0xf]
        %v4898 = vld [vmem:[%s202 + $0x388] sm:$0xf]
        %v4899 = vld [vmem:[%s202 + $0x38c] sm:$0xf]
        %v4900 = vld [vmem:[%s202 + $0x390] sm:$0xf]
        %v4901 = vld [vmem:[%s202 + $0x394] sm:$0xf]
        %v4902 = vld [vmem:[%s202 + $0x398] sm:$0xf]
        %v4903 = vld [vmem:[%s202 + $0x39c] sm:$0xf]
        %v4904 = vld [vmem:[%s202 + $0x3a0] sm:$0xf]
        %v4905 = vld [vmem:[%s202 + $0x3a4] sm:$0xf]
        %v4906 = vld [vmem:[%s202 + $0x3a8] sm:$0xf]
        %v4907 = vld [vmem:[%s202 + $0x3ac] sm:$0xf]
        %v4908 = vld [vmem:[%s202 + $0x3b0] sm:$0xf]
        %v4909 = vld [vmem:[%s202 + $0x3b4] sm:$0xf]
        %v4910 = vld [vmem:[%s202 + $0x3b8] sm:$0xf]
        %v4911 = vld [vmem:[%s202 + $0x3bc] sm:$0xf]
        %v4912 = vld [vmem:[%s202 + $0x3c0] sm:$0xf]
        %v4913 = vld [vmem:[%s202 + $0x3c4] sm:$0xf]
        %v4914 = vld [vmem:[%s202 + $0x3c8] sm:$0xf]
        %v4915 = vld [vmem:[%s202 + $0x3cc] sm:$0xf]
        %v4916 = vld [vmem:[%s202 + $0x3d0] sm:$0xf]
        %v4917 = vld [vmem:[%s202 + $0x3d4] sm:$0xf]
        %v4918 = vld [vmem:[%s202 + $0x3d8] sm:$0xf]
        %v4919 = vld [vmem:[%s202 + $0x3dc] sm:$0xf]
        %v4920 = vld [vmem:[%s202 + $0x3e0] sm:$0xf]
        %v4921 = vld [vmem:[%s202 + $0x3e4] sm:$0xf]
        %v4922 = vld [vmem:[%s202 + $0x3e8] sm:$0xf]
        %v4923 = vld [vmem:[%s202 + $0x3ec] sm:$0xf]
        %v4924 = vld [vmem:[%s202 + $0x3f0] sm:$0xf]
        %v4925 = vld [vmem:[%s202 + $0x3f4] sm:$0xf]
        %v4926 = vld [vmem:[%s202 + $0x3f8] sm:$0xf]
        %v4927 = vld [vmem:[%s202 + $0x3fc] sm:$0xf]
        %v4928 = vld [vmem:[%s202 + $0x400] sm:$0xf]
        %v4929 = vld [vmem:[%s202 + $0x404] sm:$0xf]
        %v4930 = vld [vmem:[%s202 + $0x408] sm:$0xf]
        %v4931 = vld [vmem:[%s202 + $0x40c] sm:$0xf]
        %v4932 = vld [vmem:[%s202 + $0x410] sm:$0xf]
        %v4933 = vld [vmem:[%s202 + $0x414] sm:$0xf]
        %v4934 = vld [vmem:[%s202 + $0x418] sm:$0xf]
        %v4935 = vld [vmem:[%s202 + $0x41c] sm:$0xf]
        %v4936 = vld [vmem:[%s202 + $0x420] sm:$0xf]
        %v4937 = vld [vmem:[%s202 + $0x424] sm:$0xf]
        %v4938 = vld [vmem:[%s202 + $0x428] sm:$0xf]
        %v4939 = vld [vmem:[%s202 + $0x42c] sm:$0xf]
        %v4940 = vld [vmem:[%s202 + $0x430] sm:$0xf]
        %v4941 = vld [vmem:[%s202 + $0x434] sm:$0xf]
        %v4942 = vld [vmem:[%s202 + $0x438] sm:$0xf]
        %v4943 = vld [vmem:[%s202 + $0x43c] sm:$0xf]
        %v4944 = vld [vmem:[%s202 + $0x440] sm:$0xf]
        %v4945 = vld [vmem:[%s202 + $0x444] sm:$0xf]
        %v4946 = vld [vmem:[%s202 + $0x448] sm:$0xf]
        %v4947 = vld [vmem:[%s202 + $0x44c] sm:$0xf]
        %v4948 = vld [vmem:[%s202 + $0x450] sm:$0xf]
        %v4949 = vld [vmem:[%s202 + $0x454] sm:$0xf]
        %v4950 = vld [vmem:[%s202 + $0x458] sm:$0xf]
        %v4951 = vld [vmem:[%s202 + $0x45c] sm:$0xf]
        %v4952 = vld [vmem:[%s202 + $0x460] sm:$0xf]
        %v4953 = vld [vmem:[%s202 + $0x464] sm:$0xf]
        %v4954 = vld [vmem:[%s202 + $0x468] sm:$0xf]
        %v4955 = vld [vmem:[%s202 + $0x46c] sm:$0xf]
        %v4956 = vld [vmem:[%s202 + $0x470] sm:$0xf]
        %v4957 = vld [vmem:[%s202 + $0x474] sm:$0xf]
        %v4958 = vld [vmem:[%s202 + $0x478] sm:$0xf]
        %v4959 = vld [vmem:[%s202 + $0x47c] sm:$0xf]
        %v4960 = vld [vmem:[%s202 + $0x480] sm:$0xf]
        %v4961 = vld [vmem:[%s202 + $0x484] sm:$0xf]
        %v4962 = vld [vmem:[%s202 + $0x488] sm:$0xf]
        %v4963 = vld [vmem:[%s202 + $0x48c] sm:$0xf]
        %v4964 = vld [vmem:[%s202 + $0x490] sm:$0xf]
        %v4965 = vld [vmem:[%s202 + $0x494] sm:$0xf]
        %v4966 = vld [vmem:[%s202 + $0x498] sm:$0xf]
        %v4967 = vld [vmem:[%s202 + $0x49c] sm:$0xf]
        %v4968 = vld [vmem:[%s202 + $0x4a0] sm:$0xf]
        %v4969 = vld [vmem:[%s202 + $0x4a4] sm:$0xf]
        %v4970 = vld [vmem:[%s202 + $0x4a8] sm:$0xf]
        %v4971 = vld [vmem:[%s202 + $0x4ac] sm:$0xf]
        %v4972 = vld [vmem:[%s202 + $0x4b0] sm:$0xf]
        %v4973 = vld [vmem:[%s202 + $0x4b4] sm:$0xf]
        %v4974 = vld [vmem:[%s202 + $0x4b8] sm:$0xf]
        %v4975 = vld [vmem:[%s202 + $0x4bc] sm:$0xf]
        %v4976 = vld [vmem:[%s202 + $0x4c0] sm:$0xf]
        %v4977 = vld [vmem:[%s202 + $0x4c4] sm:$0xf]
        %v4978 = vld [vmem:[%s202 + $0x4c8] sm:$0xf]
        %v4979 = vld [vmem:[%s202 + $0x4cc] sm:$0xf]
        %v4980 = vld [vmem:[%s202 + $0x4d0] sm:$0xf]
        %v4981 = vld [vmem:[%s202 + $0x4d4] sm:$0xf]
        %v4982 = vld [vmem:[%s202 + $0x4d8] sm:$0xf]
        %v4983 = vld [vmem:[%s202 + $0x4dc] sm:$0xf]
        %v4984 = vld [vmem:[%s202 + $0x4e0] sm:$0xf]
        %v4985 = vld [vmem:[%s202 + $0x4e4] sm:$0xf]
        %v4986 = vld [vmem:[%s202 + $0x4e8] sm:$0xf]
        %v4987 = vld [vmem:[%s202 + $0x4ec] sm:$0xf]
        %v4988 = vld [vmem:[%s202 + $0x4f0] sm:$0xf]
        %v4989 = vld [vmem:[%s202 + $0x4f4] sm:$0xf]
        %v4990 = vld [vmem:[%s202 + $0x4f8] sm:$0xf]
        %v4991 = vld [vmem:[%s202 + $0x4fc] sm:$0xf]
        %s4992 = scalar_lea.vmem [#allocation6], 128
        %v4993 = vld [vmem:[%s4992] sm:$0xf]
        %v4994 = vld [vmem:[%s4992 + $0x4] sm:$0xf]
        %v4995 = vld [vmem:[%s4992 + $0x8] sm:$0xf]
        %v4996 = vld [vmem:[%s4992 + $0xc] sm:$0xf]
        %v4997 = vld [vmem:[%s4992 + $0x10] sm:$0xf]
        %v4998 = vld [vmem:[%s4992 + $0x14] sm:$0xf]
        %v4999 = vld [vmem:[%s4992 + $0x18] sm:$0xf]
        %v5000 = vld [vmem:[%s4992 + $0x1c] sm:$0xf]
        %v5001 = vld [vmem:[%s4992 + $0x20] sm:$0xf]
        %v5002 = vld [vmem:[%s4992 + $0x24] sm:$0xf]
        %v5003 = vld [vmem:[%s4992 + $0x28] sm:$0xf]
        %v5004 = vld [vmem:[%s4992 + $0x2c] sm:$0xf]
        %v5005 = vld [vmem:[%s4992 + $0x30] sm:$0xf]
        %v5006 = vld [vmem:[%s4992 + $0x34] sm:$0xf]
        %v5007 = vld [vmem:[%s4992 + $0x38] sm:$0xf]
        %v5008 = vld [vmem:[%s4992 + $0x3c] sm:$0xf]
        %v5265 = vunpack.c.l.b16 %v4736
        %v5266 = vunpack.c.l.b16 %v4737
        %v5267 = vunpack.c.l.b16 %v4738
        %v5268 = vunpack.c.l.b16 %v4739
        %v5269 = vunpack.c.l.b16 %v4740
        %v5270 = vunpack.c.l.b16 %v4741
        %v5271 = vunpack.c.l.b16 %v4742
        %v5272 = vunpack.c.l.b16 %v4743
        %v5273 = vunpack.c.l.b16 %v4744
        %v5274 = vunpack.c.l.b16 %v4745
        %v5275 = vunpack.c.l.b16 %v4746
        %v5276 = vunpack.c.l.b16 %v4747
        %v5277 = vunpack.c.l.b16 %v4748
        %v5278 = vunpack.c.l.b16 %v4749
        %v5279 = vunpack.c.l.b16 %v4750
        %v5280 = vunpack.c.l.b16 %v4751
        %v5281 = vunpack.c.l.b16 %v4752
        %v5282 = vunpack.c.l.b16 %v4753
        %v5283 = vunpack.c.l.b16 %v4754
        %v5284 = vunpack.c.l.b16 %v4755
        %v5285 = vunpack.c.l.b16 %v4756
        %v5286 = vunpack.c.l.b16 %v4757
        %v5287 = vunpack.c.l.b16 %v4758
        %v5288 = vunpack.c.l.b16 %v4759
        %v5289 = vunpack.c.l.b16 %v4760
        %v5290 = vunpack.c.l.b16 %v4761
        %v5291 = vunpack.c.l.b16 %v4762
        %v5292 = vunpack.c.l.b16 %v4763
        %v5293 = vunpack.c.l.b16 %v4764
        %v5294 = vunpack.c.l.b16 %v4765
        %v5295 = vunpack.c.l.b16 %v4766
        %v5296 = vunpack.c.l.b16 %v4767
        %v5297 = vunpack.c.l.b16 %v4768
        %v5298 = vunpack.c.l.b16 %v4769
        %v5299 = vunpack.c.l.b16 %v4770
        %v5300 = vunpack.c.l.b16 %v4771
        %v5301 = vunpack.c.l.b16 %v4772
        %v5302 = vunpack.c.l.b16 %v4773
        %v5303 = vunpack.c.l.b16 %v4774
        %v5304 = vunpack.c.l.b16 %v4775
        %v5305 = vunpack.c.l.b16 %v4776
        %v5306 = vunpack.c.l.b16 %v4777
        %v5307 = vunpack.c.l.b16 %v4778
        %v5308 = vunpack.c.l.b16 %v4779
        %v5309 = vunpack.c.l.b16 %v4780
        %v5310 = vunpack.c.l.b16 %v4781
        %v5311 = vunpack.c.l.b16 %v4782
        %v5312 = vunpack.c.l.b16 %v4783
        %v5313 = vunpack.c.l.b16 %v4784
        %v5314 = vunpack.c.l.b16 %v4785
        %v5315 = vunpack.c.l.b16 %v4786
        %v5316 = vunpack.c.l.b16 %v4787
        %v5317 = vunpack.c.l.b16 %v4788
        %v5318 = vunpack.c.l.b16 %v4789
        %v5319 = vunpack.c.l.b16 %v4790
        %v5320 = vunpack.c.l.b16 %v4791
        %v5321 = vunpack.c.l.b16 %v4792
        %v5322 = vunpack.c.l.b16 %v4793
        %v5323 = vunpack.c.l.b16 %v4794
        %v5324 = vunpack.c.l.b16 %v4795
        %v5325 = vunpack.c.l.b16 %v4796
        %v5326 = vunpack.c.l.b16 %v4797
        %v5327 = vunpack.c.l.b16 %v4798
        %v5328 = vunpack.c.l.b16 %v4799
        %v5329 = vunpack.c.l.b16 %v4800
        %v5330 = vunpack.c.l.b16 %v4801
        %v5331 = vunpack.c.l.b16 %v4802
        %v5332 = vunpack.c.l.b16 %v4803
        %v5333 = vunpack.c.l.b16 %v4804
        %v5334 = vunpack.c.l.b16 %v4805
        %v5335 = vunpack.c.l.b16 %v4806
        %v5336 = vunpack.c.l.b16 %v4807
        %v5337 = vunpack.c.l.b16 %v4808
        %v5338 = vunpack.c.l.b16 %v4809
        %v5339 = vunpack.c.l.b16 %v4810
        %v5340 = vunpack.c.l.b16 %v4811
        %v5341 = vunpack.c.l.b16 %v4812
        %v5342 = vunpack.c.l.b16 %v4813
        %v5343 = vunpack.c.l.b16 %v4814
        %v5344 = vunpack.c.l.b16 %v4815
        %v5345 = vunpack.c.l.b16 %v4816
        %v5346 = vunpack.c.l.b16 %v4817
        %v5347 = vunpack.c.l.b16 %v4818
        %v5348 = vunpack.c.l.b16 %v4819
        %v5349 = vunpack.c.l.b16 %v4820
        %v5350 = vunpack.c.l.b16 %v4821
        %v5351 = vunpack.c.l.b16 %v4822
        %v5352 = vunpack.c.l.b16 %v4823
        %v5353 = vunpack.c.l.b16 %v4824
        %v5354 = vunpack.c.l.b16 %v4825
        %v5355 = vunpack.c.l.b16 %v4826
        %v5356 = vunpack.c.l.b16 %v4827
        %v5357 = vunpack.c.l.b16 %v4828
        %v5358 = vunpack.c.l.b16 %v4829
        %v5359 = vunpack.c.l.b16 %v4830
        %v5360 = vunpack.c.l.b16 %v4831
        %v5361 = vunpack.c.l.b16 %v4832
        %v5362 = vunpack.c.l.b16 %v4833
        %v5363 = vunpack.c.l.b16 %v4834
        %v5364 = vunpack.c.l.b16 %v4835
        %v5365 = vunpack.c.l.b16 %v4836
        %v5366 = vunpack.c.l.b16 %v4837
        %v5367 = vunpack.c.l.b16 %v4838
        %v5368 = vunpack.c.l.b16 %v4839
        %v5369 = vunpack.c.l.b16 %v4840
        %v5370 = vunpack.c.l.b16 %v4841
        %v5371 = vunpack.c.l.b16 %v4842
        %v5372 = vunpack.c.l.b16 %v4843
        %v5373 = vunpack.c.l.b16 %v4844
        %v5374 = vunpack.c.l.b16 %v4845
        %v5375 = vunpack.c.l.b16 %v4846
        %v5376 = vunpack.c.l.b16 %v4847
        %v5377 = vunpack.c.l.b16 %v4848
        %v5378 = vunpack.c.l.b16 %v4849
        %v5379 = vunpack.c.l.b16 %v4850
        %v5380 = vunpack.c.l.b16 %v4851
        %v5381 = vunpack.c.l.b16 %v4852
        %v5382 = vunpack.c.l.b16 %v4853
        %v5383 = vunpack.c.l.b16 %v4854
        %v5384 = vunpack.c.l.b16 %v4855
        %v5385 = vunpack.c.l.b16 %v4856
        %v5386 = vunpack.c.l.b16 %v4857
        %v5387 = vunpack.c.l.b16 %v4858
        %v5388 = vunpack.c.l.b16 %v4859
        %v5389 = vunpack.c.l.b16 %v4860
        %v5390 = vunpack.c.l.b16 %v4861
        %v5391 = vunpack.c.l.b16 %v4862
        %v5392 = vunpack.c.l.b16 %v4863
        %v5393 = vunpack.c.l.b16 %v4864
        %v5394 = vunpack.c.l.b16 %v4865
        %v5395 = vunpack.c.l.b16 %v4866
        %v5396 = vunpack.c.l.b16 %v4867
        %v5397 = vunpack.c.l.b16 %v4868
        %v5398 = vunpack.c.l.b16 %v4869
        %v5399 = vunpack.c.l.b16 %v4870
        %v5400 = vunpack.c.l.b16 %v4871
        %v5401 = vunpack.c.l.b16 %v4872
        %v5402 = vunpack.c.l.b16 %v4873
        %v5403 = vunpack.c.l.b16 %v4874
        %v5404 = vunpack.c.l.b16 %v4875
        %v5405 = vunpack.c.l.b16 %v4876
        %v5406 = vunpack.c.l.b16 %v4877
        %v5407 = vunpack.c.l.b16 %v4878
        %v5408 = vunpack.c.l.b16 %v4879
        %v5409 = vunpack.c.l.b16 %v4880
        %v5410 = vunpack.c.l.b16 %v4881
        %v5411 = vunpack.c.l.b16 %v4882
        %v5412 = vunpack.c.l.b16 %v4883
        %v5413 = vunpack.c.l.b16 %v4884
        %v5414 = vunpack.c.l.b16 %v4885
        %v5415 = vunpack.c.l.b16 %v4886
        %v5416 = vunpack.c.l.b16 %v4887
        %v5417 = vunpack.c.l.b16 %v4888
        %v5418 = vunpack.c.l.b16 %v4889
        %v5419 = vunpack.c.l.b16 %v4890
        %v5420 = vunpack.c.l.b16 %v4891
        %v5421 = vunpack.c.l.b16 %v4892
        %v5422 = vunpack.c.l.b16 %v4893
        %v5423 = vunpack.c.l.b16 %v4894
        %v5424 = vunpack.c.l.b16 %v4895
        %v5425 = vunpack.c.l.b16 %v4896
        %v5426 = vunpack.c.l.b16 %v4897
        %v5427 = vunpack.c.l.b16 %v4898
        %v5428 = vunpack.c.l.b16 %v4899
        %v5429 = vunpack.c.l.b16 %v4900
        %v5430 = vunpack.c.l.b16 %v4901
        %v5431 = vunpack.c.l.b16 %v4902
        %v5432 = vunpack.c.l.b16 %v4903
        %v5433 = vunpack.c.l.b16 %v4904
        %v5434 = vunpack.c.l.b16 %v4905
        %v5435 = vunpack.c.l.b16 %v4906
        %v5436 = vunpack.c.l.b16 %v4907
        %v5437 = vunpack.c.l.b16 %v4908
        %v5438 = vunpack.c.l.b16 %v4909
        %v5439 = vunpack.c.l.b16 %v4910
        %v5440 = vunpack.c.l.b16 %v4911
        %v5441 = vunpack.c.l.b16 %v4912
        %v5442 = vunpack.c.l.b16 %v4913
        %v5443 = vunpack.c.l.b16 %v4914
        %v5444 = vunpack.c.l.b16 %v4915
        %v5445 = vunpack.c.l.b16 %v4916
        %v5446 = vunpack.c.l.b16 %v4917
        %v5447 = vunpack.c.l.b16 %v4918
        %v5448 = vunpack.c.l.b16 %v4919
        %v5449 = vunpack.c.l.b16 %v4920
        %v5450 = vunpack.c.l.b16 %v4921
        %v5451 = vunpack.c.l.b16 %v4922
        %v5452 = vunpack.c.l.b16 %v4923
        %v5453 = vunpack.c.l.b16 %v4924
        %v5454 = vunpack.c.l.b16 %v4925
        %v5455 = vunpack.c.l.b16 %v4926
        %v5456 = vunpack.c.l.b16 %v4927
        %v5457 = vunpack.c.l.b16 %v4928
        %v5458 = vunpack.c.l.b16 %v4929
        %v5459 = vunpack.c.l.b16 %v4930
        %v5460 = vunpack.c.l.b16 %v4931
        %v5461 = vunpack.c.l.b16 %v4932
        %v5462 = vunpack.c.l.b16 %v4933
        %v5463 = vunpack.c.l.b16 %v4934
        %v5464 = vunpack.c.l.b16 %v4935
        %v5465 = vunpack.c.l.b16 %v4936
        %v5466 = vunpack.c.l.b16 %v4937
        %v5467 = vunpack.c.l.b16 %v4938
        %v5468 = vunpack.c.l.b16 %v4939
        %v5469 = vunpack.c.l.b16 %v4940
        %v5470 = vunpack.c.l.b16 %v4941
        %v5471 = vunpack.c.l.b16 %v4942
        %v5472 = vunpack.c.l.b16 %v4943
        %v5473 = vunpack.c.l.b16 %v4944
        %v5474 = vunpack.c.l.b16 %v4945
        %v5475 = vunpack.c.l.b16 %v4946
        %v5476 = vunpack.c.l.b16 %v4947
        %v5477 = vunpack.c.l.b16 %v4948
        %v5478 = vunpack.c.l.b16 %v4949
        %v5479 = vunpack.c.l.b16 %v4950
        %v5480 = vunpack.c.l.b16 %v4951
        %v5481 = vunpack.c.l.b16 %v4952
        %v5482 = vunpack.c.l.b16 %v4953
        %v5483 = vunpack.c.l.b16 %v4954
        %v5484 = vunpack.c.l.b16 %v4955
        %v5485 = vunpack.c.l.b16 %v4956
        %v5486 = vunpack.c.l.b16 %v4957
        %v5487 = vunpack.c.l.b16 %v4958
        %v5488 = vunpack.c.l.b16 %v4959
        %v5489 = vunpack.c.l.b16 %v4960
        %v5490 = vunpack.c.l.b16 %v4961
        %v5491 = vunpack.c.l.b16 %v4962
        %v5492 = vunpack.c.l.b16 %v4963
        %v5493 = vunpack.c.l.b16 %v4964
        %v5494 = vunpack.c.l.b16 %v4965
        %v5495 = vunpack.c.l.b16 %v4966
        %v5496 = vunpack.c.l.b16 %v4967
        %v5497 = vunpack.c.l.b16 %v4968
        %v5498 = vunpack.c.l.b16 %v4969
        %v5499 = vunpack.c.l.b16 %v4970
        %v5500 = vunpack.c.l.b16 %v4971
        %v5501 = vunpack.c.l.b16 %v4972
        %v5502 = vunpack.c.l.b16 %v4973
        %v5503 = vunpack.c.l.b16 %v4974
        %v5504 = vunpack.c.l.b16 %v4975
        %v5505 = vunpack.c.l.b16 %v4976
        %v5506 = vunpack.c.l.b16 %v4977
        %v5507 = vunpack.c.l.b16 %v4978
        %v5508 = vunpack.c.l.b16 %v4979
        %v5509 = vunpack.c.l.b16 %v4980
        %v5510 = vunpack.c.l.b16 %v4981
        %v5511 = vunpack.c.l.b16 %v4982
        %v5512 = vunpack.c.l.b16 %v4983
        %v5513 = vunpack.c.l.b16 %v4984
        %v5514 = vunpack.c.l.b16 %v4985
        %v5515 = vunpack.c.l.b16 %v4986
        %v5516 = vunpack.c.l.b16 %v4987
        %v5517 = vunpack.c.l.b16 %v4988
        %v5518 = vunpack.c.l.b16 %v4989
        %v5519 = vunpack.c.l.b16 %v4990
        %v5520 = vunpack.c.l.b16 %v4991
        %v5521 = vpack.c.b16 %v5266, %v5265
        %v5522 = vpack.c.b16 %v5268, %v5267
        %v5523 = vpack.c.b16 %v5270, %v5269
        %v5524 = vpack.c.b16 %v5272, %v5271
        %v5525 = vpack.c.b16 %v5274, %v5273
        %v5526 = vpack.c.b16 %v5276, %v5275
        %v5527 = vpack.c.b16 %v5278, %v5277
        %v5528 = vpack.c.b16 %v5280, %v5279
        %v5529 = vpack.c.b16 %v5282, %v5281
        %v5530 = vpack.c.b16 %v5284, %v5283
        %v5531 = vpack.c.b16 %v5286, %v5285
        %v5532 = vpack.c.b16 %v5288, %v5287
        %v5533 = vpack.c.b16 %v5290, %v5289
        %v5534 = vpack.c.b16 %v5292, %v5291
        %v5535 = vpack.c.b16 %v5294, %v5293
        %v5536 = vpack.c.b16 %v5296, %v5295
        %v5537 = vpack.c.b16 %v5298, %v5297
        %v5538 = vpack.c.b16 %v5300, %v5299
        %v5539 = vpack.c.b16 %v5302, %v5301
        %v5540 = vpack.c.b16 %v5304, %v5303
        %v5541 = vpack.c.b16 %v5306, %v5305
        %v5542 = vpack.c.b16 %v5308, %v5307
        %v5543 = vpack.c.b16 %v5310, %v5309
        %v5544 = vpack.c.b16 %v5312, %v5311
        %v5545 = vpack.c.b16 %v5314, %v5313
        %v5546 = vpack.c.b16 %v5316, %v5315
        %v5547 = vpack.c.b16 %v5318, %v5317
        %v5548 = vpack.c.b16 %v5320, %v5319
        %v5549 = vpack.c.b16 %v5322, %v5321
        %v5550 = vpack.c.b16 %v5324, %v5323
        %v5551 = vpack.c.b16 %v5326, %v5325
        %v5552 = vpack.c.b16 %v5328, %v5327
        %v5553 = vpack.c.b16 %v5330, %v5329
        %v5554 = vpack.c.b16 %v5332, %v5331
        %v5555 = vpack.c.b16 %v5334, %v5333
        %v5556 = vpack.c.b16 %v5336, %v5335
        %v5557 = vpack.c.b16 %v5338, %v5337
        %v5558 = vpack.c.b16 %v5340, %v5339
        %v5559 = vpack.c.b16 %v5342, %v5341
        %v5560 = vpack.c.b16 %v5344, %v5343
        %v5561 = vpack.c.b16 %v5346, %v5345
        %v5562 = vpack.c.b16 %v5348, %v5347
        %v5563 = vpack.c.b16 %v5350, %v5349
        %v5564 = vpack.c.b16 %v5352, %v5351
        %v5565 = vpack.c.b16 %v5354, %v5353
        %v5566 = vpack.c.b16 %v5356, %v5355
        %v5567 = vpack.c.b16 %v5358, %v5357
        %v5568 = vpack.c.b16 %v5360, %v5359
        %v5569 = vpack.c.b16 %v5362, %v5361
        %v5570 = vpack.c.b16 %v5364, %v5363
        %v5571 = vpack.c.b16 %v5366, %v5365
        %v5572 = vpack.c.b16 %v5368, %v5367
        %v5573 = vpack.c.b16 %v5370, %v5369
        %v5574 = vpack.c.b16 %v5372, %v5371
        %v5575 = vpack.c.b16 %v5374, %v5373
        %v5576 = vpack.c.b16 %v5376, %v5375
        %v5577 = vpack.c.b16 %v5378, %v5377
        %v5578 = vpack.c.b16 %v5380, %v5379
        %v5579 = vpack.c.b16 %v5382, %v5381
        %v5580 = vpack.c.b16 %v5384, %v5383
        %v5581 = vpack.c.b16 %v5386, %v5385
        %v5582 = vpack.c.b16 %v5388, %v5387
        %v5583 = vpack.c.b16 %v5390, %v5389
        %v5584 = vpack.c.b16 %v5392, %v5391
        %v5585 = vpack.c.b16 %v5394, %v5393
        %v5586 = vpack.c.b16 %v5396, %v5395
        %v5587 = vpack.c.b16 %v5398, %v5397
        %v5588 = vpack.c.b16 %v5400, %v5399
        %v5589 = vpack.c.b16 %v5402, %v5401
        %v5590 = vpack.c.b16 %v5404, %v5403
        %v5591 = vpack.c.b16 %v5406, %v5405
        %v5592 = vpack.c.b16 %v5408, %v5407
        %v5593 = vpack.c.b16 %v5410, %v5409
        %v5594 = vpack.c.b16 %v5412, %v5411
        %v5595 = vpack.c.b16 %v5414, %v5413
        %v5596 = vpack.c.b16 %v5416, %v5415
        %v5597 = vpack.c.b16 %v5418, %v5417
        %v5598 = vpack.c.b16 %v5420, %v5419
        %v5599 = vpack.c.b16 %v5422, %v5421
        %v5600 = vpack.c.b16 %v5424, %v5423
        %v5601 = vpack.c.b16 %v5426, %v5425
        %v5602 = vpack.c.b16 %v5428, %v5427
        %v5603 = vpack.c.b16 %v5430, %v5429
        %v5604 = vpack.c.b16 %v5432, %v5431
        %v5605 = vpack.c.b16 %v5434, %v5433
        %v5606 = vpack.c.b16 %v5436, %v5435
        %v5607 = vpack.c.b16 %v5438, %v5437
        %v5608 = vpack.c.b16 %v5440, %v5439
        %v5609 = vpack.c.b16 %v5442, %v5441
        %v5610 = vpack.c.b16 %v5444, %v5443
        %v5611 = vpack.c.b16 %v5446, %v5445
        %v5612 = vpack.c.b16 %v5448, %v5447
        %v5613 = vpack.c.b16 %v5450, %v5449
        %v5614 = vpack.c.b16 %v5452, %v5451
        %v5615 = vpack.c.b16 %v5454, %v5453
        %v5616 = vpack.c.b16 %v5456, %v5455
        %v5617 = vpack.c.b16 %v5458, %v5457
        %v5618 = vpack.c.b16 %v5460, %v5459
        %v5619 = vpack.c.b16 %v5462, %v5461
        %v5620 = vpack.c.b16 %v5464, %v5463
        %v5621 = vpack.c.b16 %v5466, %v5465
        %v5622 = vpack.c.b16 %v5468, %v5467
        %v5623 = vpack.c.b16 %v5470, %v5469
        %v5624 = vpack.c.b16 %v5472, %v5471
        %v5625 = vpack.c.b16 %v5474, %v5473
        %v5626 = vpack.c.b16 %v5476, %v5475
        %v5627 = vpack.c.b16 %v5478, %v5477
        %v5628 = vpack.c.b16 %v5480, %v5479
        %v5629 = vpack.c.b16 %v5482, %v5481
        %v5630 = vpack.c.b16 %v5484, %v5483
        %v5631 = vpack.c.b16 %v5486, %v5485
        %v5632 = vpack.c.b16 %v5488, %v5487
        %v5633 = vpack.c.b16 %v5490, %v5489
        %v5634 = vpack.c.b16 %v5492, %v5491
        %v5635 = vpack.c.b16 %v5494, %v5493
        %v5636 = vpack.c.b16 %v5496, %v5495
        %v5637 = vpack.c.b16 %v5498, %v5497
        %v5638 = vpack.c.b16 %v5500, %v5499
        %v5639 = vpack.c.b16 %v5502, %v5501
        %v5640 = vpack.c.b16 %v5504, %v5503
        %v5641 = vpack.c.b16 %v5506, %v5505
        %v5642 = vpack.c.b16 %v5508, %v5507
        %v5643 = vpack.c.b16 %v5510, %v5509
        %v5644 = vpack.c.b16 %v5512, %v5511
        %v5645 = vpack.c.b16 %v5514, %v5513
        %v5646 = vpack.c.b16 %v5516, %v5515
        %v5647 = vpack.c.b16 %v5518, %v5517
        %v5648 = vpack.c.b16 %v5520, %v5519
        %v5793 = vunpack.c.l.b16 %v4993
        %v5794 = vunpack.c.l.b16 %v4994
        %v5795 = vunpack.c.l.b16 %v4995
        %v5796 = vunpack.c.l.b16 %v4996
        %v5797 = vunpack.c.l.b16 %v4997
        %v5798 = vunpack.c.l.b16 %v4998
        %v5799 = vunpack.c.l.b16 %v4999
        %v5800 = vunpack.c.l.b16 %v5000
        %v5801 = vunpack.c.l.b16 %v5001
        %v5802 = vunpack.c.l.b16 %v5002
        %v5803 = vunpack.c.l.b16 %v5003
        %v5804 = vunpack.c.l.b16 %v5004
        %v5805 = vunpack.c.l.b16 %v5005
        %v5806 = vunpack.c.l.b16 %v5006
        %v5807 = vunpack.c.l.b16 %v5007
        %v5808 = vunpack.c.l.b16 %v5008
        %v5809 = vpack.c.b16 %v5794, %v5793
        %v5810 = vpack.c.b16 %v5796, %v5795
        %v5811 = vpack.c.b16 %v5798, %v5797
        %v5812 = vpack.c.b16 %v5800, %v5799
        %v5813 = vpack.c.b16 %v5802, %v5801
        %v5814 = vpack.c.b16 %v5804, %v5803
        %v5815 = vpack.c.b16 %v5806, %v5805
        %v5816 = vpack.c.b16 %v5808, %v5807
        %5825 = vmatpush.bf16.msra.mxu0 %v5816
        %5826 = vmatpush.bf16.msra.mxu0 %v5815
        %5827 = vmatpush.bf16.msra.mxu0 %v5814
        %5828 = vmatpush.bf16.msra.mxu0 %v5813
        %5829 = vmatpush.bf16.msra.mxu0 %v5812
        %5830 = vmatpush.bf16.msra.mxu0 %v5811
        %5831 = vmatpush.bf16.msra.mxu0 %v5810
        %5832 = vmatpush.bf16.msra.mxu0 %v5809
        %5833 = vmatmul.bf16.gmra.mxu0 %v5521
        %v5834 = vpop.f32.mrf.mxu0
        %v5835 = vadd.f32 0.0, %v5834
        %v5836 = vpop.f32.mrf.mxu0
        %v5837 = vadd.f32 0.0, %v5836
        %5838 = vmatmul.bf16.gmra.mxu0 %v5522
        %v5839 = vpop.f32.mrf.mxu0
        %v5840 = vadd.f32 0.0, %v5839
        %v5841 = vpop.f32.mrf.mxu0
        %v5842 = vadd.f32 0.0, %v5841
        %5843 = vmatmul.bf16.gmra.mxu0 %v5523
        %v5844 = vpop.f32.mrf.mxu0
        %v5845 = vadd.f32 0.0, %v5844
        %v5846 = vpop.f32.mrf.mxu0
        %v5847 = vadd.f32 0.0, %v5846
        %5848 = vmatmul.bf16.gmra.mxu0 %v5524
        %v5849 = vpop.f32.mrf.mxu0
        %v5850 = vadd.f32 0.0, %v5849
        %v5851 = vpop.f32.mrf.mxu0
        %v5852 = vadd.f32 0.0, %v5851
        %5853 = vmatmul.bf16.gmra.mxu0 %v5525
        %v5854 = vpop.f32.mrf.mxu0
        %v5855 = vadd.f32 0.0, %v5854
        %v5856 = vpop.f32.mrf.mxu0
        %v5857 = vadd.f32 0.0, %v5856
        %5858 = vmatmul.bf16.gmra.mxu0 %v5526
        %v5859 = vpop.f32.mrf.mxu0
        %v5860 = vadd.f32 0.0, %v5859
        %v5861 = vpop.f32.mrf.mxu0
        %v5862 = vadd.f32 0.0, %v5861
        %5863 = vmatmul.bf16.gmra.mxu0 %v5527
        %v5864 = vpop.f32.mrf.mxu0
        %v5865 = vadd.f32 0.0, %v5864
        %v5866 = vpop.f32.mrf.mxu0
        %v5867 = vadd.f32 0.0, %v5866
        %5868 = vmatmul.bf16.gmra.mxu0 %v5528
        %v5869 = vpop.f32.mrf.mxu0
        %v5870 = vadd.f32 0.0, %v5869
        %v5871 = vpop.f32.mrf.mxu0
        %v5872 = vadd.f32 0.0, %v5871
        %5873 = vmatmul.bf16.gmra.mxu0 %v5529
        %v5874 = vpop.f32.mrf.mxu0
        %v5875 = vadd.f32 0.0, %v5874
        %v5876 = vpop.f32.mrf.mxu0
        %v5877 = vadd.f32 0.0, %v5876
        %5878 = vmatmul.bf16.gmra.mxu0 %v5530
        %v5879 = vpop.f32.mrf.mxu0
        %v5880 = vadd.f32 0.0, %v5879
        %v5881 = vpop.f32.mrf.mxu0
        %v5882 = vadd.f32 0.0, %v5881
        %5883 = vmatmul.bf16.gmra.mxu0 %v5531
        %v5884 = vpop.f32.mrf.mxu0
        %v5885 = vadd.f32 0.0, %v5884
        %v5886 = vpop.f32.mrf.mxu0
        %v5887 = vadd.f32 0.0, %v5886
        %5888 = vmatmul.bf16.gmra.mxu0 %v5532
        %v5889 = vpop.f32.mrf.mxu0
        %v5890 = vadd.f32 0.0, %v5889
        %v5891 = vpop.f32.mrf.mxu0
        %v5892 = vadd.f32 0.0, %v5891
        %5893 = vmatmul.bf16.gmra.mxu0 %v5533
        %v5894 = vpop.f32.mrf.mxu0
        %v5895 = vadd.f32 0.0, %v5894
        %v5896 = vpop.f32.mrf.mxu0
        %v5897 = vadd.f32 0.0, %v5896
        %5898 = vmatmul.bf16.gmra.mxu0 %v5534
        %v5899 = vpop.f32.mrf.mxu0
        %v5900 = vadd.f32 0.0, %v5899
        %v5901 = vpop.f32.mrf.mxu0
        %v5902 = vadd.f32 0.0, %v5901
        %5903 = vmatmul.bf16.gmra.mxu0 %v5535
        %v5904 = vpop.f32.mrf.mxu0
        %v5905 = vadd.f32 0.0, %v5904
        %v5906 = vpop.f32.mrf.mxu0
        %v5907 = vadd.f32 0.0, %v5906
        %5908 = vmatmul.bf16.gmra.mxu0 %v5536
        %v5909 = vpop.f32.mrf.mxu0
        %v5910 = vadd.f32 0.0, %v5909
        %v5911 = vpop.f32.mrf.mxu0
        %v5912 = vadd.f32 0.0, %v5911
        %5913 = vmatmul.bf16.gmra.mxu0 %v5537
        %v5914 = vpop.f32.mrf.mxu0
        %v5915 = vadd.f32 0.0, %v5914
        %v5916 = vpop.f32.mrf.mxu0
        %v5917 = vadd.f32 0.0, %v5916
        %5918 = vmatmul.bf16.gmra.mxu0 %v5538
        %v5919 = vpop.f32.mrf.mxu0
        %v5920 = vadd.f32 0.0, %v5919
        %v5921 = vpop.f32.mrf.mxu0
        %v5922 = vadd.f32 0.0, %v5921
        %5923 = vmatmul.bf16.gmra.mxu0 %v5539
        %v5924 = vpop.f32.mrf.mxu0
        %v5925 = vadd.f32 0.0, %v5924
        %v5926 = vpop.f32.mrf.mxu0
        %v5927 = vadd.f32 0.0, %v5926
        %5928 = vmatmul.bf16.gmra.mxu0 %v5540
        %v5929 = vpop.f32.mrf.mxu0
        %v5930 = vadd.f32 0.0, %v5929
        %v5931 = vpop.f32.mrf.mxu0
        %v5932 = vadd.f32 0.0, %v5931
        %5933 = vmatmul.bf16.gmra.mxu0 %v5541
        %v5934 = vpop.f32.mrf.mxu0
        %v5935 = vadd.f32 0.0, %v5934
        %v5936 = vpop.f32.mrf.mxu0
        %v5937 = vadd.f32 0.0, %v5936
        %5938 = vmatmul.bf16.gmra.mxu0 %v5542
        %v5939 = vpop.f32.mrf.mxu0
        %v5940 = vadd.f32 0.0, %v5939
        %v5941 = vpop.f32.mrf.mxu0
        %v5942 = vadd.f32 0.0, %v5941
        %5943 = vmatmul.bf16.gmra.mxu0 %v5543
        %v5944 = vpop.f32.mrf.mxu0
        %v5945 = vadd.f32 0.0, %v5944
        %v5946 = vpop.f32.mrf.mxu0
        %v5947 = vadd.f32 0.0, %v5946
        %5948 = vmatmul.bf16.gmra.mxu0 %v5544
        %v5949 = vpop.f32.mrf.mxu0
        %v5950 = vadd.f32 0.0, %v5949
        %v5951 = vpop.f32.mrf.mxu0
        %v5952 = vadd.f32 0.0, %v5951
        %5953 = vmatmul.bf16.gmra.mxu0 %v5545
        %v5954 = vpop.f32.mrf.mxu0
        %v5955 = vadd.f32 0.0, %v5954
        %v5956 = vpop.f32.mrf.mxu0
        %v5957 = vadd.f32 0.0, %v5956
        %5958 = vmatmul.bf16.gmra.mxu0 %v5546
        %v5959 = vpop.f32.mrf.mxu0
        %v5960 = vadd.f32 0.0, %v5959
        %v5961 = vpop.f32.mrf.mxu0
        %v5962 = vadd.f32 0.0, %v5961
        %5963 = vmatmul.bf16.gmra.mxu0 %v5547
        %v5964 = vpop.f32.mrf.mxu0
        %v5965 = vadd.f32 0.0, %v5964
        %v5966 = vpop.f32.mrf.mxu0
        %v5967 = vadd.f32 0.0, %v5966
        %5968 = vmatmul.bf16.gmra.mxu0 %v5548
        %v5969 = vpop.f32.mrf.mxu0
        %v5970 = vadd.f32 0.0, %v5969
        %v5971 = vpop.f32.mrf.mxu0
        %v5972 = vadd.f32 0.0, %v5971
        %5973 = vmatmul.bf16.gmra.mxu0 %v5549
        %v5974 = vpop.f32.mrf.mxu0
        %v5975 = vadd.f32 0.0, %v5974
        %v5976 = vpop.f32.mrf.mxu0
        %v5977 = vadd.f32 0.0, %v5976
        %5978 = vmatmul.bf16.gmra.mxu0 %v5550
        %v5979 = vpop.f32.mrf.mxu0
        %v5980 = vadd.f32 0.0, %v5979
        %v5981 = vpop.f32.mrf.mxu0
        %v5982 = vadd.f32 0.0, %v5981
        %5983 = vmatmul.bf16.gmra.mxu0 %v5551
        %v5984 = vpop.f32.mrf.mxu0
        %v5985 = vadd.f32 0.0, %v5984
        %v5986 = vpop.f32.mrf.mxu0
        %v5987 = vadd.f32 0.0, %v5986
        %5988 = vmatmul.bf16.gmra.mxu0 %v5552
        %v5989 = vpop.f32.mrf.mxu0
        %v5990 = vadd.f32 0.0, %v5989
        %v5991 = vpop.f32.mrf.mxu0
        %v5992 = vadd.f32 0.0, %v5991
        %5993 = vmatmul.bf16.gmra.mxu0 %v5553
        %v5994 = vpop.f32.mrf.mxu0
        %v5995 = vadd.f32 0.0, %v5994
        %v5996 = vpop.f32.mrf.mxu0
        %v5997 = vadd.f32 0.0, %v5996
        %5998 = vmatmul.bf16.gmra.mxu0 %v5554
        %v5999 = vpop.f32.mrf.mxu0
        %v6000 = vadd.f32 0.0, %v5999
        %v6001 = vpop.f32.mrf.mxu0
        %v6002 = vadd.f32 0.0, %v6001
        %6003 = vmatmul.bf16.gmra.mxu0 %v5555
        %v6004 = vpop.f32.mrf.mxu0
        %v6005 = vadd.f32 0.0, %v6004
        %v6006 = vpop.f32.mrf.mxu0
        %v6007 = vadd.f32 0.0, %v6006
        %6008 = vmatmul.bf16.gmra.mxu0 %v5556
        %v6009 = vpop.f32.mrf.mxu0
        %v6010 = vadd.f32 0.0, %v6009
        %v6011 = vpop.f32.mrf.mxu0
        %v6012 = vadd.f32 0.0, %v6011
        %6013 = vmatmul.bf16.gmra.mxu0 %v5557
        %v6014 = vpop.f32.mrf.mxu0
        %v6015 = vadd.f32 0.0, %v6014
        %v6016 = vpop.f32.mrf.mxu0
        %v6017 = vadd.f32 0.0, %v6016
        %6018 = vmatmul.bf16.gmra.mxu0 %v5558
        %v6019 = vpop.f32.mrf.mxu0
        %v6020 = vadd.f32 0.0, %v6019
        %v6021 = vpop.f32.mrf.mxu0
        %v6022 = vadd.f32 0.0, %v6021
        %6023 = vmatmul.bf16.gmra.mxu0 %v5559
        %v6024 = vpop.f32.mrf.mxu0
        %v6025 = vadd.f32 0.0, %v6024
        %v6026 = vpop.f32.mrf.mxu0
        %v6027 = vadd.f32 0.0, %v6026
        %6028 = vmatmul.bf16.gmra.mxu0 %v5560
        %v6029 = vpop.f32.mrf.mxu0
        %v6030 = vadd.f32 0.0, %v6029
        %v6031 = vpop.f32.mrf.mxu0
        %v6032 = vadd.f32 0.0, %v6031
        %6033 = vmatmul.bf16.gmra.mxu0 %v5561
        %v6034 = vpop.f32.mrf.mxu0
        %v6035 = vadd.f32 0.0, %v6034
        %v6036 = vpop.f32.mrf.mxu0
        %v6037 = vadd.f32 0.0, %v6036
        %6038 = vmatmul.bf16.gmra.mxu0 %v5562
        %v6039 = vpop.f32.mrf.mxu0
        %v6040 = vadd.f32 0.0, %v6039
        %v6041 = vpop.f32.mrf.mxu0
        %v6042 = vadd.f32 0.0, %v6041
        %6043 = vmatmul.bf16.gmra.mxu0 %v5563
        %v6044 = vpop.f32.mrf.mxu0
        %v6045 = vadd.f32 0.0, %v6044
        %v6046 = vpop.f32.mrf.mxu0
        %v6047 = vadd.f32 0.0, %v6046
        %6048 = vmatmul.bf16.gmra.mxu0 %v5564
        %v6049 = vpop.f32.mrf.mxu0
        %v6050 = vadd.f32 0.0, %v6049
        %v6051 = vpop.f32.mrf.mxu0
        %v6052 = vadd.f32 0.0, %v6051
        %6053 = vmatmul.bf16.gmra.mxu0 %v5565
        %v6054 = vpop.f32.mrf.mxu0
        %v6055 = vadd.f32 0.0, %v6054
        %v6056 = vpop.f32.mrf.mxu0
        %v6057 = vadd.f32 0.0, %v6056
        %6058 = vmatmul.bf16.gmra.mxu0 %v5566
        %v6059 = vpop.f32.mrf.mxu0
        %v6060 = vadd.f32 0.0, %v6059
        %v6061 = vpop.f32.mrf.mxu0
        %v6062 = vadd.f32 0.0, %v6061
        %6063 = vmatmul.bf16.gmra.mxu0 %v5567
        %v6064 = vpop.f32.mrf.mxu0
        %v6065 = vadd.f32 0.0, %v6064
        %v6066 = vpop.f32.mrf.mxu0
        %v6067 = vadd.f32 0.0, %v6066
        %6068 = vmatmul.bf16.gmra.mxu0 %v5568
        %v6069 = vpop.f32.mrf.mxu0
        %v6070 = vadd.f32 0.0, %v6069
        %v6071 = vpop.f32.mrf.mxu0
        %v6072 = vadd.f32 0.0, %v6071
        %6073 = vmatmul.bf16.gmra.mxu0 %v5569
        %v6074 = vpop.f32.mrf.mxu0
        %v6075 = vadd.f32 0.0, %v6074
        %v6076 = vpop.f32.mrf.mxu0
        %v6077 = vadd.f32 0.0, %v6076
        %6078 = vmatmul.bf16.gmra.mxu0 %v5570
        %v6079 = vpop.f32.mrf.mxu0
        %v6080 = vadd.f32 0.0, %v6079
        %v6081 = vpop.f32.mrf.mxu0
        %v6082 = vadd.f32 0.0, %v6081
        %6083 = vmatmul.bf16.gmra.mxu0 %v5571
        %v6084 = vpop.f32.mrf.mxu0
        %v6085 = vadd.f32 0.0, %v6084
        %v6086 = vpop.f32.mrf.mxu0
        %v6087 = vadd.f32 0.0, %v6086
        %6088 = vmatmul.bf16.gmra.mxu0 %v5572
        %v6089 = vpop.f32.mrf.mxu0
        %v6090 = vadd.f32 0.0, %v6089
        %v6091 = vpop.f32.mrf.mxu0
        %v6092 = vadd.f32 0.0, %v6091
        %6093 = vmatmul.bf16.gmra.mxu0 %v5573
        %v6094 = vpop.f32.mrf.mxu0
        %v6095 = vadd.f32 0.0, %v6094
        %v6096 = vpop.f32.mrf.mxu0
        %v6097 = vadd.f32 0.0, %v6096
        %6098 = vmatmul.bf16.gmra.mxu0 %v5574
        %v6099 = vpop.f32.mrf.mxu0
        %v6100 = vadd.f32 0.0, %v6099
        %v6101 = vpop.f32.mrf.mxu0
        %v6102 = vadd.f32 0.0, %v6101
        %6103 = vmatmul.bf16.gmra.mxu0 %v5575
        %v6104 = vpop.f32.mrf.mxu0
        %v6105 = vadd.f32 0.0, %v6104
        %v6106 = vpop.f32.mrf.mxu0
        %v6107 = vadd.f32 0.0, %v6106
        %6108 = vmatmul.bf16.gmra.mxu0 %v5576
        %v6109 = vpop.f32.mrf.mxu0
        %v6110 = vadd.f32 0.0, %v6109
        %v6111 = vpop.f32.mrf.mxu0
        %v6112 = vadd.f32 0.0, %v6111
        %6113 = vmatmul.bf16.gmra.mxu0 %v5577
        %v6114 = vpop.f32.mrf.mxu0
        %v6115 = vadd.f32 0.0, %v6114
        %v6116 = vpop.f32.mrf.mxu0
        %v6117 = vadd.f32 0.0, %v6116
        %6118 = vmatmul.bf16.gmra.mxu0 %v5578
        %v6119 = vpop.f32.mrf.mxu0
        %v6120 = vadd.f32 0.0, %v6119
        %v6121 = vpop.f32.mrf.mxu0
        %v6122 = vadd.f32 0.0, %v6121
        %6123 = vmatmul.bf16.gmra.mxu0 %v5579
        %v6124 = vpop.f32.mrf.mxu0
        %v6125 = vadd.f32 0.0, %v6124
        %v6126 = vpop.f32.mrf.mxu0
        %v6127 = vadd.f32 0.0, %v6126
        %6128 = vmatmul.bf16.gmra.mxu0 %v5580
        %v6129 = vpop.f32.mrf.mxu0
        %v6130 = vadd.f32 0.0, %v6129
        %v6131 = vpop.f32.mrf.mxu0
        %v6132 = vadd.f32 0.0, %v6131
        %6133 = vmatmul.bf16.gmra.mxu0 %v5581
        %v6134 = vpop.f32.mrf.mxu0
        %v6135 = vadd.f32 0.0, %v6134
        %v6136 = vpop.f32.mrf.mxu0
        %v6137 = vadd.f32 0.0, %v6136
        %6138 = vmatmul.bf16.gmra.mxu0 %v5582
        %v6139 = vpop.f32.mrf.mxu0
        %v6140 = vadd.f32 0.0, %v6139
        %v6141 = vpop.f32.mrf.mxu0
        %v6142 = vadd.f32 0.0, %v6141
        %6143 = vmatmul.bf16.gmra.mxu0 %v5583
        %v6144 = vpop.f32.mrf.mxu0
        %v6145 = vadd.f32 0.0, %v6144
        %v6146 = vpop.f32.mrf.mxu0
        %v6147 = vadd.f32 0.0, %v6146
        %6148 = vmatmul.bf16.gmra.mxu0 %v5584
        %v6149 = vpop.f32.mrf.mxu0
        %v6150 = vadd.f32 0.0, %v6149
        %v6151 = vpop.f32.mrf.mxu0
        %v6152 = vadd.f32 0.0, %v6151
        %6153 = vmatmul.bf16.gmra.mxu0 %v5585
        %v6154 = vpop.f32.mrf.mxu0
        %v6155 = vadd.f32 0.0, %v6154
        %v6156 = vpop.f32.mrf.mxu0
        %v6157 = vadd.f32 0.0, %v6156
        %6158 = vmatmul.bf16.gmra.mxu0 %v5586
        %v6159 = vpop.f32.mrf.mxu0
        %v6160 = vadd.f32 0.0, %v6159
        %v6161 = vpop.f32.mrf.mxu0
        %v6162 = vadd.f32 0.0, %v6161
        %6163 = vmatmul.bf16.gmra.mxu0 %v5587
        %v6164 = vpop.f32.mrf.mxu0
        %v6165 = vadd.f32 0.0, %v6164
        %v6166 = vpop.f32.mrf.mxu0
        %v6167 = vadd.f32 0.0, %v6166
        %6168 = vmatmul.bf16.gmra.mxu0 %v5588
        %v6169 = vpop.f32.mrf.mxu0
        %v6170 = vadd.f32 0.0, %v6169
        %v6171 = vpop.f32.mrf.mxu0
        %v6172 = vadd.f32 0.0, %v6171
        %6173 = vmatmul.bf16.gmra.mxu0 %v5589
        %v6174 = vpop.f32.mrf.mxu0
        %v6175 = vadd.f32 0.0, %v6174
        %v6176 = vpop.f32.mrf.mxu0
        %v6177 = vadd.f32 0.0, %v6176
        %6178 = vmatmul.bf16.gmra.mxu0 %v5590
        %v6179 = vpop.f32.mrf.mxu0
        %v6180 = vadd.f32 0.0, %v6179
        %v6181 = vpop.f32.mrf.mxu0
        %v6182 = vadd.f32 0.0, %v6181
        %6183 = vmatmul.bf16.gmra.mxu0 %v5591
        %v6184 = vpop.f32.mrf.mxu0
        %v6185 = vadd.f32 0.0, %v6184
        %v6186 = vpop.f32.mrf.mxu0
        %v6187 = vadd.f32 0.0, %v6186
        %6188 = vmatmul.bf16.gmra.mxu0 %v5592
        %v6189 = vpop.f32.mrf.mxu0
        %v6190 = vadd.f32 0.0, %v6189
        %v6191 = vpop.f32.mrf.mxu0
        %v6192 = vadd.f32 0.0, %v6191
        %6193 = vmatmul.bf16.gmra.mxu0 %v5593
        %v6194 = vpop.f32.mrf.mxu0
        %v6195 = vadd.f32 0.0, %v6194
        %v6196 = vpop.f32.mrf.mxu0
        %v6197 = vadd.f32 0.0, %v6196
        %6198 = vmatmul.bf16.gmra.mxu0 %v5594
        %v6199 = vpop.f32.mrf.mxu0
        %v6200 = vadd.f32 0.0, %v6199
        %v6201 = vpop.f32.mrf.mxu0
        %v6202 = vadd.f32 0.0, %v6201
        %6203 = vmatmul.bf16.gmra.mxu0 %v5595
        %v6204 = vpop.f32.mrf.mxu0
        %v6205 = vadd.f32 0.0, %v6204
        %v6206 = vpop.f32.mrf.mxu0
        %v6207 = vadd.f32 0.0, %v6206
        %6208 = vmatmul.bf16.gmra.mxu0 %v5596
        %v6209 = vpop.f32.mrf.mxu0
        %v6210 = vadd.f32 0.0, %v6209
        %v6211 = vpop.f32.mrf.mxu0
        %v6212 = vadd.f32 0.0, %v6211
        %6213 = vmatmul.bf16.gmra.mxu0 %v5597
        %v6214 = vpop.f32.mrf.mxu0
        %v6215 = vadd.f32 0.0, %v6214
        %v6216 = vpop.f32.mrf.mxu0
        %v6217 = vadd.f32 0.0, %v6216
        %6218 = vmatmul.bf16.gmra.mxu0 %v5598
        %v6219 = vpop.f32.mrf.mxu0
        %v6220 = vadd.f32 0.0, %v6219
        %v6221 = vpop.f32.mrf.mxu0
        %v6222 = vadd.f32 0.0, %v6221
        %6223 = vmatmul.bf16.gmra.mxu0 %v5599
        %v6224 = vpop.f32.mrf.mxu0
        %v6225 = vadd.f32 0.0, %v6224
        %v6226 = vpop.f32.mrf.mxu0
        %v6227 = vadd.f32 0.0, %v6226
        %6228 = vmatmul.bf16.gmra.mxu0 %v5600
        %v6229 = vpop.f32.mrf.mxu0
        %v6230 = vadd.f32 0.0, %v6229
        %v6231 = vpop.f32.mrf.mxu0
        %v6232 = vadd.f32 0.0, %v6231
        %6233 = vmatmul.bf16.gmra.mxu0 %v5601
        %v6234 = vpop.f32.mrf.mxu0
        %v6235 = vadd.f32 0.0, %v6234
        %v6236 = vpop.f32.mrf.mxu0
        %v6237 = vadd.f32 0.0, %v6236
        %6238 = vmatmul.bf16.gmra.mxu0 %v5602
        %v6239 = vpop.f32.mrf.mxu0
        %v6240 = vadd.f32 0.0, %v6239
        %v6241 = vpop.f32.mrf.mxu0
        %v6242 = vadd.f32 0.0, %v6241
        %6243 = vmatmul.bf16.gmra.mxu0 %v5603
        %v6244 = vpop.f32.mrf.mxu0
        %v6245 = vadd.f32 0.0, %v6244
        %v6246 = vpop.f32.mrf.mxu0
        %v6247 = vadd.f32 0.0, %v6246
        %6248 = vmatmul.bf16.gmra.mxu0 %v5604
        %v6249 = vpop.f32.mrf.mxu0
        %v6250 = vadd.f32 0.0, %v6249
        %v6251 = vpop.f32.mrf.mxu0
        %v6252 = vadd.f32 0.0, %v6251
        %6253 = vmatmul.bf16.gmra.mxu0 %v5605
        %v6254 = vpop.f32.mrf.mxu0
        %v6255 = vadd.f32 0.0, %v6254
        %v6256 = vpop.f32.mrf.mxu0
        %v6257 = vadd.f32 0.0, %v6256
        %6258 = vmatmul.bf16.gmra.mxu0 %v5606
        %v6259 = vpop.f32.mrf.mxu0
        %v6260 = vadd.f32 0.0, %v6259
        %v6261 = vpop.f32.mrf.mxu0
        %v6262 = vadd.f32 0.0, %v6261
        %6263 = vmatmul.bf16.gmra.mxu0 %v5607
        %v6264 = vpop.f32.mrf.mxu0
        %v6265 = vadd.f32 0.0, %v6264
        %v6266 = vpop.f32.mrf.mxu0
        %v6267 = vadd.f32 0.0, %v6266
        %6268 = vmatmul.bf16.gmra.mxu0 %v5608
        %v6269 = vpop.f32.mrf.mxu0
        %v6270 = vadd.f32 0.0, %v6269
        %v6271 = vpop.f32.mrf.mxu0
        %v6272 = vadd.f32 0.0, %v6271
        %6273 = vmatmul.bf16.gmra.mxu0 %v5609
        %v6274 = vpop.f32.mrf.mxu0
        %v6275 = vadd.f32 0.0, %v6274
        %v6276 = vpop.f32.mrf.mxu0
        %v6277 = vadd.f32 0.0, %v6276
        %6278 = vmatmul.bf16.gmra.mxu0 %v5610
        %v6279 = vpop.f32.mrf.mxu0
        %v6280 = vadd.f32 0.0, %v6279
        %v6281 = vpop.f32.mrf.mxu0
        %v6282 = vadd.f32 0.0, %v6281
        %6283 = vmatmul.bf16.gmra.mxu0 %v5611
        %v6284 = vpop.f32.mrf.mxu0
        %v6285 = vadd.f32 0.0, %v6284
        %v6286 = vpop.f32.mrf.mxu0
        %v6287 = vadd.f32 0.0, %v6286
        %6288 = vmatmul.bf16.gmra.mxu0 %v5612
        %v6289 = vpop.f32.mrf.mxu0
        %v6290 = vadd.f32 0.0, %v6289
        %v6291 = vpop.f32.mrf.mxu0
        %v6292 = vadd.f32 0.0, %v6291
        %6293 = vmatmul.bf16.gmra.mxu0 %v5613
        %v6294 = vpop.f32.mrf.mxu0
        %v6295 = vadd.f32 0.0, %v6294
        %v6296 = vpop.f32.mrf.mxu0
        %v6297 = vadd.f32 0.0, %v6296
        %6298 = vmatmul.bf16.gmra.mxu0 %v5614
        %v6299 = vpop.f32.mrf.mxu0
        %v6300 = vadd.f32 0.0, %v6299
        %v6301 = vpop.f32.mrf.mxu0
        %v6302 = vadd.f32 0.0, %v6301
        %6303 = vmatmul.bf16.gmra.mxu0 %v5615
        %v6304 = vpop.f32.mrf.mxu0
        %v6305 = vadd.f32 0.0, %v6304
        %v6306 = vpop.f32.mrf.mxu0
        %v6307 = vadd.f32 0.0, %v6306
        %6308 = vmatmul.bf16.gmra.mxu0 %v5616
        %v6309 = vpop.f32.mrf.mxu0
        %v6310 = vadd.f32 0.0, %v6309
        %v6311 = vpop.f32.mrf.mxu0
        %v6312 = vadd.f32 0.0, %v6311
        %6313 = vmatmul.bf16.gmra.mxu0 %v5617
        %v6314 = vpop.f32.mrf.mxu0
        %v6315 = vadd.f32 0.0, %v6314
        %v6316 = vpop.f32.mrf.mxu0
        %v6317 = vadd.f32 0.0, %v6316
        %6318 = vmatmul.bf16.gmra.mxu0 %v5618
        %v6319 = vpop.f32.mrf.mxu0
        %v6320 = vadd.f32 0.0, %v6319
        %v6321 = vpop.f32.mrf.mxu0
        %v6322 = vadd.f32 0.0, %v6321
        %6323 = vmatmul.bf16.gmra.mxu0 %v5619
        %v6324 = vpop.f32.mrf.mxu0
        %v6325 = vadd.f32 0.0, %v6324
        %v6326 = vpop.f32.mrf.mxu0
        %v6327 = vadd.f32 0.0, %v6326
        %6328 = vmatmul.bf16.gmra.mxu0 %v5620
        %v6329 = vpop.f32.mrf.mxu0
        %v6330 = vadd.f32 0.0, %v6329
        %v6331 = vpop.f32.mrf.mxu0
        %v6332 = vadd.f32 0.0, %v6331
        %6333 = vmatmul.bf16.gmra.mxu0 %v5621
        %v6334 = vpop.f32.mrf.mxu0
        %v6335 = vadd.f32 0.0, %v6334
        %v6336 = vpop.f32.mrf.mxu0
        %v6337 = vadd.f32 0.0, %v6336
        %6338 = vmatmul.bf16.gmra.mxu0 %v5622
        %v6339 = vpop.f32.mrf.mxu0
        %v6340 = vadd.f32 0.0, %v6339
        %v6341 = vpop.f32.mrf.mxu0
        %v6342 = vadd.f32 0.0, %v6341
        %6343 = vmatmul.bf16.gmra.mxu0 %v5623
        %v6344 = vpop.f32.mrf.mxu0
        %v6345 = vadd.f32 0.0, %v6344
        %v6346 = vpop.f32.mrf.mxu0
        %v6347 = vadd.f32 0.0, %v6346
        %6348 = vmatmul.bf16.gmra.mxu0 %v5624
        %v6349 = vpop.f32.mrf.mxu0
        %v6350 = vadd.f32 0.0, %v6349
        %v6351 = vpop.f32.mrf.mxu0
        %v6352 = vadd.f32 0.0, %v6351
        %6353 = vmatmul.bf16.gmra.mxu0 %v5625
        %v6354 = vpop.f32.mrf.mxu0
        %v6355 = vadd.f32 0.0, %v6354
        %v6356 = vpop.f32.mrf.mxu0
        %v6357 = vadd.f32 0.0, %v6356
        %6358 = vmatmul.bf16.gmra.mxu0 %v5626
        %v6359 = vpop.f32.mrf.mxu0
        %v6360 = vadd.f32 0.0, %v6359
        %v6361 = vpop.f32.mrf.mxu0
        %v6362 = vadd.f32 0.0, %v6361
        %6363 = vmatmul.bf16.gmra.mxu0 %v5627
        %v6364 = vpop.f32.mrf.mxu0
        %v6365 = vadd.f32 0.0, %v6364
        %v6366 = vpop.f32.mrf.mxu0
        %v6367 = vadd.f32 0.0, %v6366
        %6368 = vmatmul.bf16.gmra.mxu0 %v5628
        %v6369 = vpop.f32.mrf.mxu0
        %v6370 = vadd.f32 0.0, %v6369
        %v6371 = vpop.f32.mrf.mxu0
        %v6372 = vadd.f32 0.0, %v6371
        %6373 = vmatmul.bf16.gmra.mxu0 %v5629
        %v6374 = vpop.f32.mrf.mxu0
        %v6375 = vadd.f32 0.0, %v6374
        %v6376 = vpop.f32.mrf.mxu0
        %v6377 = vadd.f32 0.0, %v6376
        %6378 = vmatmul.bf16.gmra.mxu0 %v5630
        %v6379 = vpop.f32.mrf.mxu0
        %v6380 = vadd.f32 0.0, %v6379
        %v6381 = vpop.f32.mrf.mxu0
        %v6382 = vadd.f32 0.0, %v6381
        %6383 = vmatmul.bf16.gmra.mxu0 %v5631
        %v6384 = vpop.f32.mrf.mxu0
        %v6385 = vadd.f32 0.0, %v6384
        %v6386 = vpop.f32.mrf.mxu0
        %v6387 = vadd.f32 0.0, %v6386
        %6388 = vmatmul.bf16.gmra.mxu0 %v5632
        %v6389 = vpop.f32.mrf.mxu0
        %v6390 = vadd.f32 0.0, %v6389
        %v6391 = vpop.f32.mrf.mxu0
        %v6392 = vadd.f32 0.0, %v6391
        %6393 = vmatmul.bf16.gmra.mxu0 %v5633
        %v6394 = vpop.f32.mrf.mxu0
        %v6395 = vadd.f32 0.0, %v6394
        %v6396 = vpop.f32.mrf.mxu0
        %v6397 = vadd.f32 0.0, %v6396
        %6398 = vmatmul.bf16.gmra.mxu0 %v5634
        %v6399 = vpop.f32.mrf.mxu0
        %v6400 = vadd.f32 0.0, %v6399
        %v6401 = vpop.f32.mrf.mxu0
        %v6402 = vadd.f32 0.0, %v6401
        %6403 = vmatmul.bf16.gmra.mxu0 %v5635
        %v6404 = vpop.f32.mrf.mxu0
        %v6405 = vadd.f32 0.0, %v6404
        %v6406 = vpop.f32.mrf.mxu0
        %v6407 = vadd.f32 0.0, %v6406
        %6408 = vmatmul.bf16.gmra.mxu0 %v5636
        %v6409 = vpop.f32.mrf.mxu0
        %v6410 = vadd.f32 0.0, %v6409
        %v6411 = vpop.f32.mrf.mxu0
        %v6412 = vadd.f32 0.0, %v6411
        %6413 = vmatmul.bf16.gmra.mxu0 %v5637
        %v6414 = vpop.f32.mrf.mxu0
        %v6415 = vadd.f32 0.0, %v6414
        %v6416 = vpop.f32.mrf.mxu0
        %v6417 = vadd.f32 0.0, %v6416
        %6418 = vmatmul.bf16.gmra.mxu0 %v5638
        %v6419 = vpop.f32.mrf.mxu0
        %v6420 = vadd.f32 0.0, %v6419
        %v6421 = vpop.f32.mrf.mxu0
        %v6422 = vadd.f32 0.0, %v6421
        %6423 = vmatmul.bf16.gmra.mxu0 %v5639
        %v6424 = vpop.f32.mrf.mxu0
        %v6425 = vadd.f32 0.0, %v6424
        %v6426 = vpop.f32.mrf.mxu0
        %v6427 = vadd.f32 0.0, %v6426
        %6428 = vmatmul.bf16.gmra.mxu0 %v5640
        %v6429 = vpop.f32.mrf.mxu0
        %v6430 = vadd.f32 0.0, %v6429
        %v6431 = vpop.f32.mrf.mxu0
        %v6432 = vadd.f32 0.0, %v6431
        %6433 = vmatmul.bf16.gmra.mxu0 %v5641
        %v6434 = vpop.f32.mrf.mxu0
        %v6435 = vadd.f32 0.0, %v6434
        %v6436 = vpop.f32.mrf.mxu0
        %v6437 = vadd.f32 0.0, %v6436
        %6438 = vmatmul.bf16.gmra.mxu0 %v5642
        %v6439 = vpop.f32.mrf.mxu0
        %v6440 = vadd.f32 0.0, %v6439
        %v6441 = vpop.f32.mrf.mxu0
        %v6442 = vadd.f32 0.0, %v6441
        %6443 = vmatmul.bf16.gmra.mxu0 %v5643
        %v6444 = vpop.f32.mrf.mxu0
        %v6445 = vadd.f32 0.0, %v6444
        %v6446 = vpop.f32.mrf.mxu0
        %v6447 = vadd.f32 0.0, %v6446
        %6448 = vmatmul.bf16.gmra.mxu0 %v5644
        %v6449 = vpop.f32.mrf.mxu0
        %v6450 = vadd.f32 0.0, %v6449
        %v6451 = vpop.f32.mrf.mxu0
        %v6452 = vadd.f32 0.0, %v6451
        %6453 = vmatmul.bf16.gmra.mxu0 %v5645
        %v6454 = vpop.f32.mrf.mxu0
        %v6455 = vadd.f32 0.0, %v6454
        %v6456 = vpop.f32.mrf.mxu0
        %v6457 = vadd.f32 0.0, %v6456
        %6458 = vmatmul.bf16.gmra.mxu0 %v5646
        %v6459 = vpop.f32.mrf.mxu0
        %v6460 = vadd.f32 0.0, %v6459
        %v6461 = vpop.f32.mrf.mxu0
        %v6462 = vadd.f32 0.0, %v6461
        %6463 = vmatmul.bf16.gmra.mxu0 %v5647
        %v6464 = vpop.f32.mrf.mxu0
        %v6465 = vadd.f32 0.0, %v6464
        %v6466 = vpop.f32.mrf.mxu0
        %v6467 = vadd.f32 0.0, %v6466
        %6468 = vmatmul.bf16.gmra.mxu0 %v5648
        %v6469 = vpop.f32.mrf.mxu0
        %v6470 = vadd.f32 0.0, %v6469
        %v6471 = vpop.f32.mrf.mxu0
        %v6472 = vadd.f32 0.0, %v6471
        %6473 = vdwg.mxu0
        %v6474 = vld [vmem:[#allocation2] sm:$0xff]
        %v6475 = vld [vmem:[#allocation2 + $0x8] sm:$0xff]
        %v6476 = vld [vmem:[#allocation2 + $0x10] sm:$0xff]
        %v6477 = vld [vmem:[#allocation2 + $0x18] sm:$0xff]
        %v6478 = vld [vmem:[#allocation2 + $0x20] sm:$0xff]
        %v6479 = vld [vmem:[#allocation2 + $0x28] sm:$0xff]
        %v6480 = vld [vmem:[#allocation2 + $0x30] sm:$0xff]
        %v6481 = vld [vmem:[#allocation2 + $0x38] sm:$0xff]
        %v6482 = vld [vmem:[#allocation2 + $0x40] sm:$0xff]
        %v6483 = vld [vmem:[#allocation2 + $0x48] sm:$0xff]
        %v6484 = vld [vmem:[#allocation2 + $0x50] sm:$0xff]
        %v6485 = vld [vmem:[#allocation2 + $0x58] sm:$0xff]
        %v6486 = vld [vmem:[#allocation2 + $0x60] sm:$0xff]
        %v6487 = vld [vmem:[#allocation2 + $0x68] sm:$0xff]
        %v6488 = vld [vmem:[#allocation2 + $0x70] sm:$0xff]
        %v6489 = vld [vmem:[#allocation2 + $0x78] sm:$0xff]
        %v6490 = vld [vmem:[#allocation2 + $0x80] sm:$0xff]
        %v6491 = vld [vmem:[#allocation2 + $0x88] sm:$0xff]
        %v6492 = vld [vmem:[#allocation2 + $0x90] sm:$0xff]
        %v6493 = vld [vmem:[#allocation2 + $0x98] sm:$0xff]
        %v6494 = vld [vmem:[#allocation2 + $0xa0] sm:$0xff]
        %v6495 = vld [vmem:[#allocation2 + $0xa8] sm:$0xff]
        %v6496 = vld [vmem:[#allocation2 + $0xb0] sm:$0xff]
        %v6497 = vld [vmem:[#allocation2 + $0xb8] sm:$0xff]
        %v6498 = vld [vmem:[#allocation2 + $0xc0] sm:$0xff]
        %v6499 = vld [vmem:[#allocation2 + $0xc8] sm:$0xff]
        %v6500 = vld [vmem:[#allocation2 + $0xd0] sm:$0xff]
        %v6501 = vld [vmem:[#allocation2 + $0xd8] sm:$0xff]
        %v6502 = vld [vmem:[#allocation2 + $0xe0] sm:$0xff]
        %v6503 = vld [vmem:[#allocation2 + $0xe8] sm:$0xff]
        %v6504 = vld [vmem:[#allocation2 + $0xf0] sm:$0xff]
        %v6505 = vld [vmem:[#allocation2 + $0xf8] sm:$0xff]
        %v6506 = vld [vmem:[#allocation2 + $0x100] sm:$0xff]
        %v6507 = vld [vmem:[#allocation2 + $0x108] sm:$0xff]
        %v6508 = vld [vmem:[#allocation2 + $0x110] sm:$0xff]
        %v6509 = vld [vmem:[#allocation2 + $0x118] sm:$0xff]
        %v6510 = vld [vmem:[#allocation2 + $0x120] sm:$0xff]
        %v6511 = vld [vmem:[#allocation2 + $0x128] sm:$0xff]
        %v6512 = vld [vmem:[#allocation2 + $0x130] sm:$0xff]
        %v6513 = vld [vmem:[#allocation2 + $0x138] sm:$0xff]
        %v6514 = vld [vmem:[#allocation2 + $0x140] sm:$0xff]
        %v6515 = vld [vmem:[#allocation2 + $0x148] sm:$0xff]
        %v6516 = vld [vmem:[#allocation2 + $0x150] sm:$0xff]
        %v6517 = vld [vmem:[#allocation2 + $0x158] sm:$0xff]
        %v6518 = vld [vmem:[#allocation2 + $0x160] sm:$0xff]
        %v6519 = vld [vmem:[#allocation2 + $0x168] sm:$0xff]
        %v6520 = vld [vmem:[#allocation2 + $0x170] sm:$0xff]
        %v6521 = vld [vmem:[#allocation2 + $0x178] sm:$0xff]
        %v6522 = vld [vmem:[#allocation2 + $0x180] sm:$0xff]
        %v6523 = vld [vmem:[#allocation2 + $0x188] sm:$0xff]
        %v6524 = vld [vmem:[#allocation2 + $0x190] sm:$0xff]
        %v6525 = vld [vmem:[#allocation2 + $0x198] sm:$0xff]
        %v6526 = vld [vmem:[#allocation2 + $0x1a0] sm:$0xff]
        %v6527 = vld [vmem:[#allocation2 + $0x1a8] sm:$0xff]
        %v6528 = vld [vmem:[#allocation2 + $0x1b0] sm:$0xff]
        %v6529 = vld [vmem:[#allocation2 + $0x1b8] sm:$0xff]
        %v6530 = vld [vmem:[#allocation2 + $0x1c0] sm:$0xff]
        %v6531 = vld [vmem:[#allocation2 + $0x1c8] sm:$0xff]
        %v6532 = vld [vmem:[#allocation2 + $0x1d0] sm:$0xff]
        %v6533 = vld [vmem:[#allocation2 + $0x1d8] sm:$0xff]
        %v6534 = vld [vmem:[#allocation2 + $0x1e0] sm:$0xff]
        %v6535 = vld [vmem:[#allocation2 + $0x1e8] sm:$0xff]
        %v6536 = vld [vmem:[#allocation2 + $0x1f0] sm:$0xff]
        %v6537 = vld [vmem:[#allocation2 + $0x1f8] sm:$0xff]
        %v6538 = vld [vmem:[#allocation2 + $0x200] sm:$0xff]
        %v6539 = vld [vmem:[#allocation2 + $0x208] sm:$0xff]
        %v6540 = vld [vmem:[#allocation2 + $0x210] sm:$0xff]
        %v6541 = vld [vmem:[#allocation2 + $0x218] sm:$0xff]
        %v6542 = vld [vmem:[#allocation2 + $0x220] sm:$0xff]
        %v6543 = vld [vmem:[#allocation2 + $0x228] sm:$0xff]
        %v6544 = vld [vmem:[#allocation2 + $0x230] sm:$0xff]
        %v6545 = vld [vmem:[#allocation2 + $0x238] sm:$0xff]
        %v6546 = vld [vmem:[#allocation2 + $0x240] sm:$0xff]
        %v6547 = vld [vmem:[#allocation2 + $0x248] sm:$0xff]
        %v6548 = vld [vmem:[#allocation2 + $0x250] sm:$0xff]
        %v6549 = vld [vmem:[#allocation2 + $0x258] sm:$0xff]
        %v6550 = vld [vmem:[#allocation2 + $0x260] sm:$0xff]
        %v6551 = vld [vmem:[#allocation2 + $0x268] sm:$0xff]
        %v6552 = vld [vmem:[#allocation2 + $0x270] sm:$0xff]
        %v6553 = vld [vmem:[#allocation2 + $0x278] sm:$0xff]
        %v6554 = vld [vmem:[#allocation2 + $0x280] sm:$0xff]
        %v6555 = vld [vmem:[#allocation2 + $0x288] sm:$0xff]
        %v6556 = vld [vmem:[#allocation2 + $0x290] sm:$0xff]
        %v6557 = vld [vmem:[#allocation2 + $0x298] sm:$0xff]
        %v6558 = vld [vmem:[#allocation2 + $0x2a0] sm:$0xff]
        %v6559 = vld [vmem:[#allocation2 + $0x2a8] sm:$0xff]
        %v6560 = vld [vmem:[#allocation2 + $0x2b0] sm:$0xff]
        %v6561 = vld [vmem:[#allocation2 + $0x2b8] sm:$0xff]
        %v6562 = vld [vmem:[#allocation2 + $0x2c0] sm:$0xff]
        %v6563 = vld [vmem:[#allocation2 + $0x2c8] sm:$0xff]
        %v6564 = vld [vmem:[#allocation2 + $0x2d0] sm:$0xff]
        %v6565 = vld [vmem:[#allocation2 + $0x2d8] sm:$0xff]
        %v6566 = vld [vmem:[#allocation2 + $0x2e0] sm:$0xff]
        %v6567 = vld [vmem:[#allocation2 + $0x2e8] sm:$0xff]
        %v6568 = vld [vmem:[#allocation2 + $0x2f0] sm:$0xff]
        %v6569 = vld [vmem:[#allocation2 + $0x2f8] sm:$0xff]
        %v6570 = vld [vmem:[#allocation2 + $0x300] sm:$0xff]
        %v6571 = vld [vmem:[#allocation2 + $0x308] sm:$0xff]
        %v6572 = vld [vmem:[#allocation2 + $0x310] sm:$0xff]
        %v6573 = vld [vmem:[#allocation2 + $0x318] sm:$0xff]
        %v6574 = vld [vmem:[#allocation2 + $0x320] sm:$0xff]
        %v6575 = vld [vmem:[#allocation2 + $0x328] sm:$0xff]
        %v6576 = vld [vmem:[#allocation2 + $0x330] sm:$0xff]
        %v6577 = vld [vmem:[#allocation2 + $0x338] sm:$0xff]
        %v6578 = vld [vmem:[#allocation2 + $0x340] sm:$0xff]
        %v6579 = vld [vmem:[#allocation2 + $0x348] sm:$0xff]
        %v6580 = vld [vmem:[#allocation2 + $0x350] sm:$0xff]
        %v6581 = vld [vmem:[#allocation2 + $0x358] sm:$0xff]
        %v6582 = vld [vmem:[#allocation2 + $0x360] sm:$0xff]
        %v6583 = vld [vmem:[#allocation2 + $0x368] sm:$0xff]
        %v6584 = vld [vmem:[#allocation2 + $0x370] sm:$0xff]
        %v6585 = vld [vmem:[#allocation2 + $0x378] sm:$0xff]
        %v6586 = vld [vmem:[#allocation2 + $0x380] sm:$0xff]
        %v6587 = vld [vmem:[#allocation2 + $0x388] sm:$0xff]
        %v6588 = vld [vmem:[#allocation2 + $0x390] sm:$0xff]
        %v6589 = vld [vmem:[#allocation2 + $0x398] sm:$0xff]
        %v6590 = vld [vmem:[#allocation2 + $0x3a0] sm:$0xff]
        %v6591 = vld [vmem:[#allocation2 + $0x3a8] sm:$0xff]
        %v6592 = vld [vmem:[#allocation2 + $0x3b0] sm:$0xff]
        %v6593 = vld [vmem:[#allocation2 + $0x3b8] sm:$0xff]
        %v6594 = vld [vmem:[#allocation2 + $0x3c0] sm:$0xff]
        %v6595 = vld [vmem:[#allocation2 + $0x3c8] sm:$0xff]
        %v6596 = vld [vmem:[#allocation2 + $0x3d0] sm:$0xff]
        %v6597 = vld [vmem:[#allocation2 + $0x3d8] sm:$0xff]
        %v6598 = vld [vmem:[#allocation2 + $0x3e0] sm:$0xff]
        %v6599 = vld [vmem:[#allocation2 + $0x3e8] sm:$0xff]
        %v6600 = vld [vmem:[#allocation2 + $0x3f0] sm:$0xff]
        %v6601 = vld [vmem:[#allocation2 + $0x3f8] sm:$0xff]
        %v6602 = vld [vmem:[#allocation2 + $0x400] sm:$0xff]
        %v6603 = vld [vmem:[#allocation2 + $0x408] sm:$0xff]
        %v6604 = vld [vmem:[#allocation2 + $0x410] sm:$0xff]
        %v6605 = vld [vmem:[#allocation2 + $0x418] sm:$0xff]
        %v6606 = vld [vmem:[#allocation2 + $0x420] sm:$0xff]
        %v6607 = vld [vmem:[#allocation2 + $0x428] sm:$0xff]
        %v6608 = vld [vmem:[#allocation2 + $0x430] sm:$0xff]
        %v6609 = vld [vmem:[#allocation2 + $0x438] sm:$0xff]
        %v6610 = vld [vmem:[#allocation2 + $0x440] sm:$0xff]
        %v6611 = vld [vmem:[#allocation2 + $0x448] sm:$0xff]
        %v6612 = vld [vmem:[#allocation2 + $0x450] sm:$0xff]
        %v6613 = vld [vmem:[#allocation2 + $0x458] sm:$0xff]
        %v6614 = vld [vmem:[#allocation2 + $0x460] sm:$0xff]
        %v6615 = vld [vmem:[#allocation2 + $0x468] sm:$0xff]
        %v6616 = vld [vmem:[#allocation2 + $0x470] sm:$0xff]
        %v6617 = vld [vmem:[#allocation2 + $0x478] sm:$0xff]
        %v6618 = vld [vmem:[#allocation2 + $0x480] sm:$0xff]
        %v6619 = vld [vmem:[#allocation2 + $0x488] sm:$0xff]
        %v6620 = vld [vmem:[#allocation2 + $0x490] sm:$0xff]
        %v6621 = vld [vmem:[#allocation2 + $0x498] sm:$0xff]
        %v6622 = vld [vmem:[#allocation2 + $0x4a0] sm:$0xff]
        %v6623 = vld [vmem:[#allocation2 + $0x4a8] sm:$0xff]
        %v6624 = vld [vmem:[#allocation2 + $0x4b0] sm:$0xff]
        %v6625 = vld [vmem:[#allocation2 + $0x4b8] sm:$0xff]
        %v6626 = vld [vmem:[#allocation2 + $0x4c0] sm:$0xff]
        %v6627 = vld [vmem:[#allocation2 + $0x4c8] sm:$0xff]
        %v6628 = vld [vmem:[#allocation2 + $0x4d0] sm:$0xff]
        %v6629 = vld [vmem:[#allocation2 + $0x4d8] sm:$0xff]
        %v6630 = vld [vmem:[#allocation2 + $0x4e0] sm:$0xff]
        %v6631 = vld [vmem:[#allocation2 + $0x4e8] sm:$0xff]
        %v6632 = vld [vmem:[#allocation2 + $0x4f0] sm:$0xff]
        %v6633 = vld [vmem:[#allocation2 + $0x4f8] sm:$0xff]
        %v6634 = vld [vmem:[#allocation2 + $0x500] sm:$0xff]
        %v6635 = vld [vmem:[#allocation2 + $0x508] sm:$0xff]
        %v6636 = vld [vmem:[#allocation2 + $0x510] sm:$0xff]
        %v6637 = vld [vmem:[#allocation2 + $0x518] sm:$0xff]
        %v6638 = vld [vmem:[#allocation2 + $0x520] sm:$0xff]
        %v6639 = vld [vmem:[#allocation2 + $0x528] sm:$0xff]
        %v6640 = vld [vmem:[#allocation2 + $0x530] sm:$0xff]
        %v6641 = vld [vmem:[#allocation2 + $0x538] sm:$0xff]
        %v6642 = vld [vmem:[#allocation2 + $0x540] sm:$0xff]
        %v6643 = vld [vmem:[#allocation2 + $0x548] sm:$0xff]
        %v6644 = vld [vmem:[#allocation2 + $0x550] sm:$0xff]
        %v6645 = vld [vmem:[#allocation2 + $0x558] sm:$0xff]
        %v6646 = vld [vmem:[#allocation2 + $0x560] sm:$0xff]
        %v6647 = vld [vmem:[#allocation2 + $0x568] sm:$0xff]
        %v6648 = vld [vmem:[#allocation2 + $0x570] sm:$0xff]
        %v6649 = vld [vmem:[#allocation2 + $0x578] sm:$0xff]
        %v6650 = vld [vmem:[#allocation2 + $0x580] sm:$0xff]
        %v6651 = vld [vmem:[#allocation2 + $0x588] sm:$0xff]
        %v6652 = vld [vmem:[#allocation2 + $0x590] sm:$0xff]
        %v6653 = vld [vmem:[#allocation2 + $0x598] sm:$0xff]
        %v6654 = vld [vmem:[#allocation2 + $0x5a0] sm:$0xff]
        %v6655 = vld [vmem:[#allocation2 + $0x5a8] sm:$0xff]
        %v6656 = vld [vmem:[#allocation2 + $0x5b0] sm:$0xff]
        %v6657 = vld [vmem:[#allocation2 + $0x5b8] sm:$0xff]
        %v6658 = vld [vmem:[#allocation2 + $0x5c0] sm:$0xff]
        %v6659 = vld [vmem:[#allocation2 + $0x5c8] sm:$0xff]
        %v6660 = vld [vmem:[#allocation2 + $0x5d0] sm:$0xff]
        %v6661 = vld [vmem:[#allocation2 + $0x5d8] sm:$0xff]
        %v6662 = vld [vmem:[#allocation2 + $0x5e0] sm:$0xff]
        %v6663 = vld [vmem:[#allocation2 + $0x5e8] sm:$0xff]
        %v6664 = vld [vmem:[#allocation2 + $0x5f0] sm:$0xff]
        %v6665 = vld [vmem:[#allocation2 + $0x5f8] sm:$0xff]
        %v6666 = vld [vmem:[#allocation2 + $0x600] sm:$0xff]
        %v6667 = vld [vmem:[#allocation2 + $0x608] sm:$0xff]
        %v6668 = vld [vmem:[#allocation2 + $0x610] sm:$0xff]
        %v6669 = vld [vmem:[#allocation2 + $0x618] sm:$0xff]
        %v6670 = vld [vmem:[#allocation2 + $0x620] sm:$0xff]
        %v6671 = vld [vmem:[#allocation2 + $0x628] sm:$0xff]
        %v6672 = vld [vmem:[#allocation2 + $0x630] sm:$0xff]
        %v6673 = vld [vmem:[#allocation2 + $0x638] sm:$0xff]
        %v6674 = vld [vmem:[#allocation2 + $0x640] sm:$0xff]
        %v6675 = vld [vmem:[#allocation2 + $0x648] sm:$0xff]
        %v6676 = vld [vmem:[#allocation2 + $0x650] sm:$0xff]
        %v6677 = vld [vmem:[#allocation2 + $0x658] sm:$0xff]
        %v6678 = vld [vmem:[#allocation2 + $0x660] sm:$0xff]
        %v6679 = vld [vmem:[#allocation2 + $0x668] sm:$0xff]
        %v6680 = vld [vmem:[#allocation2 + $0x670] sm:$0xff]
        %v6681 = vld [vmem:[#allocation2 + $0x678] sm:$0xff]
        %v6682 = vld [vmem:[#allocation2 + $0x680] sm:$0xff]
        %v6683 = vld [vmem:[#allocation2 + $0x688] sm:$0xff]
        %v6684 = vld [vmem:[#allocation2 + $0x690] sm:$0xff]
        %v6685 = vld [vmem:[#allocation2 + $0x698] sm:$0xff]
        %v6686 = vld [vmem:[#allocation2 + $0x6a0] sm:$0xff]
        %v6687 = vld [vmem:[#allocation2 + $0x6a8] sm:$0xff]
        %v6688 = vld [vmem:[#allocation2 + $0x6b0] sm:$0xff]
        %v6689 = vld [vmem:[#allocation2 + $0x6b8] sm:$0xff]
        %v6690 = vld [vmem:[#allocation2 + $0x6c0] sm:$0xff]
        %v6691 = vld [vmem:[#allocation2 + $0x6c8] sm:$0xff]
        %v6692 = vld [vmem:[#allocation2 + $0x6d0] sm:$0xff]
        %v6693 = vld [vmem:[#allocation2 + $0x6d8] sm:$0xff]
        %v6694 = vld [vmem:[#allocation2 + $0x6e0] sm:$0xff]
        %v6695 = vld [vmem:[#allocation2 + $0x6e8] sm:$0xff]
        %v6696 = vld [vmem:[#allocation2 + $0x6f0] sm:$0xff]
        %v6697 = vld [vmem:[#allocation2 + $0x6f8] sm:$0xff]
        %v6698 = vld [vmem:[#allocation2 + $0x700] sm:$0xff]
        %v6699 = vld [vmem:[#allocation2 + $0x708] sm:$0xff]
        %v6700 = vld [vmem:[#allocation2 + $0x710] sm:$0xff]
        %v6701 = vld [vmem:[#allocation2 + $0x718] sm:$0xff]
        %v6702 = vld [vmem:[#allocation2 + $0x720] sm:$0xff]
        %v6703 = vld [vmem:[#allocation2 + $0x728] sm:$0xff]
        %v6704 = vld [vmem:[#allocation2 + $0x730] sm:$0xff]
        %v6705 = vld [vmem:[#allocation2 + $0x738] sm:$0xff]
        %v6706 = vld [vmem:[#allocation2 + $0x740] sm:$0xff]
        %v6707 = vld [vmem:[#allocation2 + $0x748] sm:$0xff]
        %v6708 = vld [vmem:[#allocation2 + $0x750] sm:$0xff]
        %v6709 = vld [vmem:[#allocation2 + $0x758] sm:$0xff]
        %v6710 = vld [vmem:[#allocation2 + $0x760] sm:$0xff]
        %v6711 = vld [vmem:[#allocation2 + $0x768] sm:$0xff]
        %v6712 = vld [vmem:[#allocation2 + $0x770] sm:$0xff]
        %v6713 = vld [vmem:[#allocation2 + $0x778] sm:$0xff]
        %v6714 = vld [vmem:[#allocation2 + $0x780] sm:$0xff]
        %v6715 = vld [vmem:[#allocation2 + $0x788] sm:$0xff]
        %v6716 = vld [vmem:[#allocation2 + $0x790] sm:$0xff]
        %v6717 = vld [vmem:[#allocation2 + $0x798] sm:$0xff]
        %v6718 = vld [vmem:[#allocation2 + $0x7a0] sm:$0xff]
        %v6719 = vld [vmem:[#allocation2 + $0x7a8] sm:$0xff]
        %v6720 = vld [vmem:[#allocation2 + $0x7b0] sm:$0xff]
        %v6721 = vld [vmem:[#allocation2 + $0x7b8] sm:$0xff]
        %v6722 = vld [vmem:[#allocation2 + $0x7c0] sm:$0xff]
        %v6723 = vld [vmem:[#allocation2 + $0x7c8] sm:$0xff]
        %v6724 = vld [vmem:[#allocation2 + $0x7d0] sm:$0xff]
        %v6725 = vld [vmem:[#allocation2 + $0x7d8] sm:$0xff]
        %v6726 = vld [vmem:[#allocation2 + $0x7e0] sm:$0xff]
        %v6727 = vld [vmem:[#allocation2 + $0x7e8] sm:$0xff]
        %v6728 = vld [vmem:[#allocation2 + $0x7f0] sm:$0xff]
        %v6729 = vld [vmem:[#allocation2 + $0x7f8] sm:$0xff]
        %v6730 = vadd.f32 %v6474, %v5835
        %v6731 = vadd.f32 %v6475, %v5837
        %v6732 = vadd.f32 %v6476, %v5840
        %v6733 = vadd.f32 %v6477, %v5842
        %v6734 = vadd.f32 %v6478, %v5845
        %v6735 = vadd.f32 %v6479, %v5847
        %v6736 = vadd.f32 %v6480, %v5850
        %v6737 = vadd.f32 %v6481, %v5852
        %v6738 = vadd.f32 %v6482, %v5855
        %v6739 = vadd.f32 %v6483, %v5857
        %v6740 = vadd.f32 %v6484, %v5860
        %v6741 = vadd.f32 %v6485, %v5862
        %v6742 = vadd.f32 %v6486, %v5865
        %v6743 = vadd.f32 %v6487, %v5867
        %v6744 = vadd.f32 %v6488, %v5870
        %v6745 = vadd.f32 %v6489, %v5872
        %v6746 = vadd.f32 %v6490, %v5875
        %v6747 = vadd.f32 %v6491, %v5877
        %v6748 = vadd.f32 %v6492, %v5880
        %v6749 = vadd.f32 %v6493, %v5882
        %v6750 = vadd.f32 %v6494, %v5885
        %v6751 = vadd.f32 %v6495, %v5887
        %v6752 = vadd.f32 %v6496, %v5890
        %v6753 = vadd.f32 %v6497, %v5892
        %v6754 = vadd.f32 %v6498, %v5895
        %v6755 = vadd.f32 %v6499, %v5897
        %v6756 = vadd.f32 %v6500, %v5900
        %v6757 = vadd.f32 %v6501, %v5902
        %v6758 = vadd.f32 %v6502, %v5905
        %v6759 = vadd.f32 %v6503, %v5907
        %v6760 = vadd.f32 %v6504, %v5910
        %v6761 = vadd.f32 %v6505, %v5912
        %v6762 = vadd.f32 %v6506, %v5915
        %v6763 = vadd.f32 %v6507, %v5917
        %v6764 = vadd.f32 %v6508, %v5920
        %v6765 = vadd.f32 %v6509, %v5922
        %v6766 = vadd.f32 %v6510, %v5925
        %v6767 = vadd.f32 %v6511, %v5927
        %v6768 = vadd.f32 %v6512, %v5930
        %v6769 = vadd.f32 %v6513, %v5932
        %v6770 = vadd.f32 %v6514, %v5935
        %v6771 = vadd.f32 %v6515, %v5937
        %v6772 = vadd.f32 %v6516, %v5940
        %v6773 = vadd.f32 %v6517, %v5942
        %v6774 = vadd.f32 %v6518, %v5945
        %v6775 = vadd.f32 %v6519, %v5947
        %v6776 = vadd.f32 %v6520, %v5950
        %v6777 = vadd.f32 %v6521, %v5952
        %v6778 = vadd.f32 %v6522, %v5955
        %v6779 = vadd.f32 %v6523, %v5957
        %v6780 = vadd.f32 %v6524, %v5960
        %v6781 = vadd.f32 %v6525, %v5962
        %v6782 = vadd.f32 %v6526, %v5965
        %v6783 = vadd.f32 %v6527, %v5967
        %v6784 = vadd.f32 %v6528, %v5970
        %v6785 = vadd.f32 %v6529, %v5972
        %v6786 = vadd.f32 %v6530, %v5975
        %v6787 = vadd.f32 %v6531, %v5977
        %v6788 = vadd.f32 %v6532, %v5980
        %v6789 = vadd.f32 %v6533, %v5982
        %v6790 = vadd.f32 %v6534, %v5985
        %v6791 = vadd.f32 %v6535, %v5987
        %v6792 = vadd.f32 %v6536, %v5990
        %v6793 = vadd.f32 %v6537, %v5992
        %v6794 = vadd.f32 %v6538, %v5995
        %v6795 = vadd.f32 %v6539, %v5997
        %v6796 = vadd.f32 %v6540, %v6000
        %v6797 = vadd.f32 %v6541, %v6002
        %v6798 = vadd.f32 %v6542, %v6005
        %v6799 = vadd.f32 %v6543, %v6007
        %v6800 = vadd.f32 %v6544, %v6010
        %v6801 = vadd.f32 %v6545, %v6012
        %v6802 = vadd.f32 %v6546, %v6015
        %v6803 = vadd.f32 %v6547, %v6017
        %v6804 = vadd.f32 %v6548, %v6020
        %v6805 = vadd.f32 %v6549, %v6022
        %v6806 = vadd.f32 %v6550, %v6025
        %v6807 = vadd.f32 %v6551, %v6027
        %v6808 = vadd.f32 %v6552, %v6030
        %v6809 = vadd.f32 %v6553, %v6032
        %v6810 = vadd.f32 %v6554, %v6035
        %v6811 = vadd.f32 %v6555, %v6037
        %v6812 = vadd.f32 %v6556, %v6040
        %v6813 = vadd.f32 %v6557, %v6042
        %v6814 = vadd.f32 %v6558, %v6045
        %v6815 = vadd.f32 %v6559, %v6047
        %v6816 = vadd.f32 %v6560, %v6050
        %v6817 = vadd.f32 %v6561, %v6052
        %v6818 = vadd.f32 %v6562, %v6055
        %v6819 = vadd.f32 %v6563, %v6057
        %v6820 = vadd.f32 %v6564, %v6060
        %v6821 = vadd.f32 %v6565, %v6062
        %v6822 = vadd.f32 %v6566, %v6065
        %v6823 = vadd.f32 %v6567, %v6067
        %v6824 = vadd.f32 %v6568, %v6070
        %v6825 = vadd.f32 %v6569, %v6072
        %v6826 = vadd.f32 %v6570, %v6075
        %v6827 = vadd.f32 %v6571, %v6077
        %v6828 = vadd.f32 %v6572, %v6080
        %v6829 = vadd.f32 %v6573, %v6082
        %v6830 = vadd.f32 %v6574, %v6085
        %v6831 = vadd.f32 %v6575, %v6087
        %v6832 = vadd.f32 %v6576, %v6090
        %v6833 = vadd.f32 %v6577, %v6092
        %v6834 = vadd.f32 %v6578, %v6095
        %v6835 = vadd.f32 %v6579, %v6097
        %v6836 = vadd.f32 %v6580, %v6100
        %v6837 = vadd.f32 %v6581, %v6102
        %v6838 = vadd.f32 %v6582, %v6105
        %v6839 = vadd.f32 %v6583, %v6107
        %v6840 = vadd.f32 %v6584, %v6110
        %v6841 = vadd.f32 %v6585, %v6112
        %v6842 = vadd.f32 %v6586, %v6115
        %v6843 = vadd.f32 %v6587, %v6117
        %v6844 = vadd.f32 %v6588, %v6120
        %v6845 = vadd.f32 %v6589, %v6122
        %v6846 = vadd.f32 %v6590, %v6125
        %v6847 = vadd.f32 %v6591, %v6127
        %v6848 = vadd.f32 %v6592, %v6130
        %v6849 = vadd.f32 %v6593, %v6132
        %v6850 = vadd.f32 %v6594, %v6135
        %v6851 = vadd.f32 %v6595, %v6137
        %v6852 = vadd.f32 %v6596, %v6140
        %v6853 = vadd.f32 %v6597, %v6142
        %v6854 = vadd.f32 %v6598, %v6145
        %v6855 = vadd.f32 %v6599, %v6147
        %v6856 = vadd.f32 %v6600, %v6150
        %v6857 = vadd.f32 %v6601, %v6152
        %v6858 = vadd.f32 %v6602, %v6155
        %v6859 = vadd.f32 %v6603, %v6157
        %v6860 = vadd.f32 %v6604, %v6160
        %v6861 = vadd.f32 %v6605, %v6162
        %v6862 = vadd.f32 %v6606, %v6165
        %v6863 = vadd.f32 %v6607, %v6167
        %v6864 = vadd.f32 %v6608, %v6170
        %v6865 = vadd.f32 %v6609, %v6172
        %v6866 = vadd.f32 %v6610, %v6175
        %v6867 = vadd.f32 %v6611, %v6177
        %v6868 = vadd.f32 %v6612, %v6180
        %v6869 = vadd.f32 %v6613, %v6182
        %v6870 = vadd.f32 %v6614, %v6185
        %v6871 = vadd.f32 %v6615, %v6187
        %v6872 = vadd.f32 %v6616, %v6190
        %v6873 = vadd.f32 %v6617, %v6192
        %v6874 = vadd.f32 %v6618, %v6195
        %v6875 = vadd.f32 %v6619, %v6197
        %v6876 = vadd.f32 %v6620, %v6200
        %v6877 = vadd.f32 %v6621, %v6202
        %v6878 = vadd.f32 %v6622, %v6205
        %v6879 = vadd.f32 %v6623, %v6207
        %v6880 = vadd.f32 %v6624, %v6210
        %v6881 = vadd.f32 %v6625, %v6212
        %v6882 = vadd.f32 %v6626, %v6215
        %v6883 = vadd.f32 %v6627, %v6217
        %v6884 = vadd.f32 %v6628, %v6220
        %v6885 = vadd.f32 %v6629, %v6222
        %v6886 = vadd.f32 %v6630, %v6225
        %v6887 = vadd.f32 %v6631, %v6227
        %v6888 = vadd.f32 %v6632, %v6230
        %v6889 = vadd.f32 %v6633, %v6232
        %v6890 = vadd.f32 %v6634, %v6235
        %v6891 = vadd.f32 %v6635, %v6237
        %v6892 = vadd.f32 %v6636, %v6240
        %v6893 = vadd.f32 %v6637, %v6242
        %v6894 = vadd.f32 %v6638, %v6245
        %v6895 = vadd.f32 %v6639, %v6247
        %v6896 = vadd.f32 %v6640, %v6250
        %v6897 = vadd.f32 %v6641, %v6252
        %v6898 = vadd.f32 %v6642, %v6255
        %v6899 = vadd.f32 %v6643, %v6257
        %v6900 = vadd.f32 %v6644, %v6260
        %v6901 = vadd.f32 %v6645, %v6262
        %v6902 = vadd.f32 %v6646, %v6265
        %v6903 = vadd.f32 %v6647, %v6267
        %v6904 = vadd.f32 %v6648, %v6270
        %v6905 = vadd.f32 %v6649, %v6272
        %v6906 = vadd.f32 %v6650, %v6275
        %v6907 = vadd.f32 %v6651, %v6277
        %v6908 = vadd.f32 %v6652, %v6280
        %v6909 = vadd.f32 %v6653, %v6282
        %v6910 = vadd.f32 %v6654, %v6285
        %v6911 = vadd.f32 %v6655, %v6287
        %v6912 = vadd.f32 %v6656, %v6290
        %v6913 = vadd.f32 %v6657, %v6292
        %v6914 = vadd.f32 %v6658, %v6295
        %v6915 = vadd.f32 %v6659, %v6297
        %v6916 = vadd.f32 %v6660, %v6300
        %v6917 = vadd.f32 %v6661, %v6302
        %v6918 = vadd.f32 %v6662, %v6305
        %v6919 = vadd.f32 %v6663, %v6307
        %v6920 = vadd.f32 %v6664, %v6310
        %v6921 = vadd.f32 %v6665, %v6312
        %v6922 = vadd.f32 %v6666, %v6315
        %v6923 = vadd.f32 %v6667, %v6317
        %v6924 = vadd.f32 %v6668, %v6320
        %v6925 = vadd.f32 %v6669, %v6322
        %v6926 = vadd.f32 %v6670, %v6325
        %v6927 = vadd.f32 %v6671, %v6327
        %v6928 = vadd.f32 %v6672, %v6330
        %v6929 = vadd.f32 %v6673, %v6332
        %v6930 = vadd.f32 %v6674, %v6335
        %v6931 = vadd.f32 %v6675, %v6337
        %v6932 = vadd.f32 %v6676, %v6340
        %v6933 = vadd.f32 %v6677, %v6342
        %v6934 = vadd.f32 %v6678, %v6345
        %v6935 = vadd.f32 %v6679, %v6347
        %v6936 = vadd.f32 %v6680, %v6350
        %v6937 = vadd.f32 %v6681, %v6352
        %v6938 = vadd.f32 %v6682, %v6355
        %v6939 = vadd.f32 %v6683, %v6357
        %v6940 = vadd.f32 %v6684, %v6360
        %v6941 = vadd.f32 %v6685, %v6362
        %v6942 = vadd.f32 %v6686, %v6365
        %v6943 = vadd.f32 %v6687, %v6367
        %v6944 = vadd.f32 %v6688, %v6370
        %v6945 = vadd.f32 %v6689, %v6372
        %v6946 = vadd.f32 %v6690, %v6375
        %v6947 = vadd.f32 %v6691, %v6377
        %v6948 = vadd.f32 %v6692, %v6380
        %v6949 = vadd.f32 %v6693, %v6382
        %v6950 = vadd.f32 %v6694, %v6385
        %v6951 = vadd.f32 %v6695, %v6387
        %v6952 = vadd.f32 %v6696, %v6390
        %v6953 = vadd.f32 %v6697, %v6392
        %v6954 = vadd.f32 %v6698, %v6395
        %v6955 = vadd.f32 %v6699, %v6397
        %v6956 = vadd.f32 %v6700, %v6400
        %v6957 = vadd.f32 %v6701, %v6402
        %v6958 = vadd.f32 %v6702, %v6405
        %v6959 = vadd.f32 %v6703, %v6407
        %v6960 = vadd.f32 %v6704, %v6410
        %v6961 = vadd.f32 %v6705, %v6412
        %v6962 = vadd.f32 %v6706, %v6415
        %v6963 = vadd.f32 %v6707, %v6417
        %v6964 = vadd.f32 %v6708, %v6420
        %v6965 = vadd.f32 %v6709, %v6422
        %v6966 = vadd.f32 %v6710, %v6425
        %v6967 = vadd.f32 %v6711, %v6427
        %v6968 = vadd.f32 %v6712, %v6430
        %v6969 = vadd.f32 %v6713, %v6432
        %v6970 = vadd.f32 %v6714, %v6435
        %v6971 = vadd.f32 %v6715, %v6437
        %v6972 = vadd.f32 %v6716, %v6440
        %v6973 = vadd.f32 %v6717, %v6442
        %v6974 = vadd.f32 %v6718, %v6445
        %v6975 = vadd.f32 %v6719, %v6447
        %v6976 = vadd.f32 %v6720, %v6450
        %v6977 = vadd.f32 %v6721, %v6452
        %v6978 = vadd.f32 %v6722, %v6455
        %v6979 = vadd.f32 %v6723, %v6457
        %v6980 = vadd.f32 %v6724, %v6460
        %v6981 = vadd.f32 %v6725, %v6462
        %v6982 = vadd.f32 %v6726, %v6465
        %v6983 = vadd.f32 %v6727, %v6467
        %v6984 = vadd.f32 %v6728, %v6470
        %v6985 = vadd.f32 %v6729, %v6472
        %6986 = vst [vmem:[#allocation2] sm:$0xff] %v6730
        %6987 = vst [vmem:[#allocation2 + $0x8] sm:$0xff] %v6731
        %6988 = vst [vmem:[#allocation2 + $0x10] sm:$0xff] %v6732
        %6989 = vst [vmem:[#allocation2 + $0x18] sm:$0xff] %v6733
        %6990 = vst [vmem:[#allocation2 + $0x20] sm:$0xff] %v6734
        %6991 = vst [vmem:[#allocation2 + $0x28] sm:$0xff] %v6735
        %6992 = vst [vmem:[#allocation2 + $0x30] sm:$0xff] %v6736
        %6993 = vst [vmem:[#allocation2 + $0x38] sm:$0xff] %v6737
        %6994 = vst [vmem:[#allocation2 + $0x40] sm:$0xff] %v6738
        %6995 = vst [vmem:[#allocation2 + $0x48] sm:$0xff] %v6739
        %6996 = vst [vmem:[#allocation2 + $0x50] sm:$0xff] %v6740
        %6997 = vst [vmem:[#allocation2 + $0x58] sm:$0xff] %v6741
        %6998 = vst [vmem:[#allocation2 + $0x60] sm:$0xff] %v6742
        %6999 = vst [vmem:[#allocation2 + $0x68] sm:$0xff] %v6743
        %7000 = vst [vmem:[#allocation2 + $0x70] sm:$0xff] %v6744
        %7001 = vst [vmem:[#allocation2 + $0x78] sm:$0xff] %v6745
        %7002 = vst [vmem:[#allocation2 + $0x80] sm:$0xff] %v6746
        %7003 = vst [vmem:[#allocation2 + $0x88] sm:$0xff] %v6747
        %7004 = vst [vmem:[#allocation2 + $0x90] sm:$0xff] %v6748
        %7005 = vst [vmem:[#allocation2 + $0x98] sm:$0xff] %v6749
        %7006 = vst [vmem:[#allocation2 + $0xa0] sm:$0xff] %v6750
        %7007 = vst [vmem:[#allocation2 + $0xa8] sm:$0xff] %v6751
        %7008 = vst [vmem:[#allocation2 + $0xb0] sm:$0xff] %v6752
        %7009 = vst [vmem:[#allocation2 + $0xb8] sm:$0xff] %v6753
        %7010 = vst [vmem:[#allocation2 + $0xc0] sm:$0xff] %v6754
        %7011 = vst [vmem:[#allocation2 + $0xc8] sm:$0xff] %v6755
        %7012 = vst [vmem:[#allocation2 + $0xd0] sm:$0xff] %v6756
        %7013 = vst [vmem:[#allocation2 + $0xd8] sm:$0xff] %v6757
        %7014 = vst [vmem:[#allocation2 + $0xe0] sm:$0xff] %v6758
        %7015 = vst [vmem:[#allocation2 + $0xe8] sm:$0xff] %v6759
        %7016 = vst [vmem:[#allocation2 + $0xf0] sm:$0xff] %v6760
        %7017 = vst [vmem:[#allocation2 + $0xf8] sm:$0xff] %v6761
        %7018 = vst [vmem:[#allocation2 + $0x100] sm:$0xff] %v6762
        %7019 = vst [vmem:[#allocation2 + $0x108] sm:$0xff] %v6763
        %7020 = vst [vmem:[#allocation2 + $0x110] sm:$0xff] %v6764
        %7021 = vst [vmem:[#allocation2 + $0x118] sm:$0xff] %v6765
        %7022 = vst [vmem:[#allocation2 + $0x120] sm:$0xff] %v6766
        %7023 = vst [vmem:[#allocation2 + $0x128] sm:$0xff] %v6767
        %7024 = vst [vmem:[#allocation2 + $0x130] sm:$0xff] %v6768
        %7025 = vst [vmem:[#allocation2 + $0x138] sm:$0xff] %v6769
        %7026 = vst [vmem:[#allocation2 + $0x140] sm:$0xff] %v6770
        %7027 = vst [vmem:[#allocation2 + $0x148] sm:$0xff] %v6771
        %7028 = vst [vmem:[#allocation2 + $0x150] sm:$0xff] %v6772
        %7029 = vst [vmem:[#allocation2 + $0x158] sm:$0xff] %v6773
        %7030 = vst [vmem:[#allocation2 + $0x160] sm:$0xff] %v6774
        %7031 = vst [vmem:[#allocation2 + $0x168] sm:$0xff] %v6775
        %7032 = vst [vmem:[#allocation2 + $0x170] sm:$0xff] %v6776
        %7033 = vst [vmem:[#allocation2 + $0x178] sm:$0xff] %v6777
        %7034 = vst [vmem:[#allocation2 + $0x180] sm:$0xff] %v6778
        %7035 = vst [vmem:[#allocation2 + $0x188] sm:$0xff] %v6779
        %7036 = vst [vmem:[#allocation2 + $0x190] sm:$0xff] %v6780
        %7037 = vst [vmem:[#allocation2 + $0x198] sm:$0xff] %v6781
        %7038 = vst [vmem:[#allocation2 + $0x1a0] sm:$0xff] %v6782
        %7039 = vst [vmem:[#allocation2 + $0x1a8] sm:$0xff] %v6783
        %7040 = vst [vmem:[#allocation2 + $0x1b0] sm:$0xff] %v6784
        %7041 = vst [vmem:[#allocation2 + $0x1b8] sm:$0xff] %v6785
        %7042 = vst [vmem:[#allocation2 + $0x1c0] sm:$0xff] %v6786
        %7043 = vst [vmem:[#allocation2 + $0x1c8] sm:$0xff] %v6787
        %7044 = vst [vmem:[#allocation2 + $0x1d0] sm:$0xff] %v6788
        %7045 = vst [vmem:[#allocation2 + $0x1d8] sm:$0xff] %v6789
        %7046 = vst [vmem:[#allocation2 + $0x1e0] sm:$0xff] %v6790
        %7047 = vst [vmem:[#allocation2 + $0x1e8] sm:$0xff] %v6791
        %7048 = vst [vmem:[#allocation2 + $0x1f0] sm:$0xff] %v6792
        %7049 = vst [vmem:[#allocation2 + $0x1f8] sm:$0xff] %v6793
        %7050 = vst [vmem:[#allocation2 + $0x200] sm:$0xff] %v6794
        %7051 = vst [vmem:[#allocation2 + $0x208] sm:$0xff] %v6795
        %7052 = vst [vmem:[#allocation2 + $0x210] sm:$0xff] %v6796
        %7053 = vst [vmem:[#allocation2 + $0x218] sm:$0xff] %v6797
        %7054 = vst [vmem:[#allocation2 + $0x220] sm:$0xff] %v6798
        %7055 = vst [vmem:[#allocation2 + $0x228] sm:$0xff] %v6799
        %7056 = vst [vmem:[#allocation2 + $0x230] sm:$0xff] %v6800
        %7057 = vst [vmem:[#allocation2 + $0x238] sm:$0xff] %v6801
        %7058 = vst [vmem:[#allocation2 + $0x240] sm:$0xff] %v6802
        %7059 = vst [vmem:[#allocation2 + $0x248] sm:$0xff] %v6803
        %7060 = vst [vmem:[#allocation2 + $0x250] sm:$0xff] %v6804
        %7061 = vst [vmem:[#allocation2 + $0x258] sm:$0xff] %v6805
        %7062 = vst [vmem:[#allocation2 + $0x260] sm:$0xff] %v6806
        %7063 = vst [vmem:[#allocation2 + $0x268] sm:$0xff] %v6807
        %7064 = vst [vmem:[#allocation2 + $0x270] sm:$0xff] %v6808
        %7065 = vst [vmem:[#allocation2 + $0x278] sm:$0xff] %v6809
        %7066 = vst [vmem:[#allocation2 + $0x280] sm:$0xff] %v6810
        %7067 = vst [vmem:[#allocation2 + $0x288] sm:$0xff] %v6811
        %7068 = vst [vmem:[#allocation2 + $0x290] sm:$0xff] %v6812
        %7069 = vst [vmem:[#allocation2 + $0x298] sm:$0xff] %v6813
        %7070 = vst [vmem:[#allocation2 + $0x2a0] sm:$0xff] %v6814
        %7071 = vst [vmem:[#allocation2 + $0x2a8] sm:$0xff] %v6815
        %7072 = vst [vmem:[#allocation2 + $0x2b0] sm:$0xff] %v6816
        %7073 = vst [vmem:[#allocation2 + $0x2b8] sm:$0xff] %v6817
        %7074 = vst [vmem:[#allocation2 + $0x2c0] sm:$0xff] %v6818
        %7075 = vst [vmem:[#allocation2 + $0x2c8] sm:$0xff] %v6819
        %7076 = vst [vmem:[#allocation2 + $0x2d0] sm:$0xff] %v6820
        %7077 = vst [vmem:[#allocation2 + $0x2d8] sm:$0xff] %v6821
        %7078 = vst [vmem:[#allocation2 + $0x2e0] sm:$0xff] %v6822
        %7079 = vst [vmem:[#allocation2 + $0x2e8] sm:$0xff] %v6823
        %7080 = vst [vmem:[#allocation2 + $0x2f0] sm:$0xff] %v6824
        %7081 = vst [vmem:[#allocation2 + $0x2f8] sm:$0xff] %v6825
        %7082 = vst [vmem:[#allocation2 + $0x300] sm:$0xff] %v6826
        %7083 = vst [vmem:[#allocation2 + $0x308] sm:$0xff] %v6827
        %7084 = vst [vmem:[#allocation2 + $0x310] sm:$0xff] %v6828
        %7085 = vst [vmem:[#allocation2 + $0x318] sm:$0xff] %v6829
        %7086 = vst [vmem:[#allocation2 + $0x320] sm:$0xff] %v6830
        %7087 = vst [vmem:[#allocation2 + $0x328] sm:$0xff] %v6831
        %7088 = vst [vmem:[#allocation2 + $0x330] sm:$0xff] %v6832
        %7089 = vst [vmem:[#allocation2 + $0x338] sm:$0xff] %v6833
        %7090 = vst [vmem:[#allocation2 + $0x340] sm:$0xff] %v6834
        %7091 = vst [vmem:[#allocation2 + $0x348] sm:$0xff] %v6835
        %7092 = vst [vmem:[#allocation2 + $0x350] sm:$0xff] %v6836
        %7093 = vst [vmem:[#allocation2 + $0x358] sm:$0xff] %v6837
        %7094 = vst [vmem:[#allocation2 + $0x360] sm:$0xff] %v6838
        %7095 = vst [vmem:[#allocation2 + $0x368] sm:$0xff] %v6839
        %7096 = vst [vmem:[#allocation2 + $0x370] sm:$0xff] %v6840
        %7097 = vst [vmem:[#allocation2 + $0x378] sm:$0xff] %v6841
        %7098 = vst [vmem:[#allocation2 + $0x380] sm:$0xff] %v6842
        %7099 = vst [vmem:[#allocation2 + $0x388] sm:$0xff] %v6843
        %7100 = vst [vmem:[#allocation2 + $0x390] sm:$0xff] %v6844
        %7101 = vst [vmem:[#allocation2 + $0x398] sm:$0xff] %v6845
        %7102 = vst [vmem:[#allocation2 + $0x3a0] sm:$0xff] %v6846
        %7103 = vst [vmem:[#allocation2 + $0x3a8] sm:$0xff] %v6847
        %7104 = vst [vmem:[#allocation2 + $0x3b0] sm:$0xff] %v6848
        %7105 = vst [vmem:[#allocation2 + $0x3b8] sm:$0xff] %v6849
        %7106 = vst [vmem:[#allocation2 + $0x3c0] sm:$0xff] %v6850
        %7107 = vst [vmem:[#allocation2 + $0x3c8] sm:$0xff] %v6851
        %7108 = vst [vmem:[#allocation2 + $0x3d0] sm:$0xff] %v6852
        %7109 = vst [vmem:[#allocation2 + $0x3d8] sm:$0xff] %v6853
        %7110 = vst [vmem:[#allocation2 + $0x3e0] sm:$0xff] %v6854
        %7111 = vst [vmem:[#allocation2 + $0x3e8] sm:$0xff] %v6855
        %7112 = vst [vmem:[#allocation2 + $0x3f0] sm:$0xff] %v6856
        %7113 = vst [vmem:[#allocation2 + $0x3f8] sm:$0xff] %v6857
        %7114 = vst [vmem:[#allocation2 + $0x400] sm:$0xff] %v6858
        %7115 = vst [vmem:[#allocation2 + $0x408] sm:$0xff] %v6859
        %7116 = vst [vmem:[#allocation2 + $0x410] sm:$0xff] %v6860
        %7117 = vst [vmem:[#allocation2 + $0x418] sm:$0xff] %v6861
        %7118 = vst [vmem:[#allocation2 + $0x420] sm:$0xff] %v6862
        %7119 = vst [vmem:[#allocation2 + $0x428] sm:$0xff] %v6863
        %7120 = vst [vmem:[#allocation2 + $0x430] sm:$0xff] %v6864
        %7121 = vst [vmem:[#allocation2 + $0x438] sm:$0xff] %v6865
        %7122 = vst [vmem:[#allocation2 + $0x440] sm:$0xff] %v6866
        %7123 = vst [vmem:[#allocation2 + $0x448] sm:$0xff] %v6867
        %7124 = vst [vmem:[#allocation2 + $0x450] sm:$0xff] %v6868
        %7125 = vst [vmem:[#allocation2 + $0x458] sm:$0xff] %v6869
        %7126 = vst [vmem:[#allocation2 + $0x460] sm:$0xff] %v6870
        %7127 = vst [vmem:[#allocation2 + $0x468] sm:$0xff] %v6871
        %7128 = vst [vmem:[#allocation2 + $0x470] sm:$0xff] %v6872
        %7129 = vst [vmem:[#allocation2 + $0x478] sm:$0xff] %v6873
        %7130 = vst [vmem:[#allocation2 + $0x480] sm:$0xff] %v6874
        %7131 = vst [vmem:[#allocation2 + $0x488] sm:$0xff] %v6875
        %7132 = vst [vmem:[#allocation2 + $0x490] sm:$0xff] %v6876
        %7133 = vst [vmem:[#allocation2 + $0x498] sm:$0xff] %v6877
        %7134 = vst [vmem:[#allocation2 + $0x4a0] sm:$0xff] %v6878
        %7135 = vst [vmem:[#allocation2 + $0x4a8] sm:$0xff] %v6879
        %7136 = vst [vmem:[#allocation2 + $0x4b0] sm:$0xff] %v6880
        %7137 = vst [vmem:[#allocation2 + $0x4b8] sm:$0xff] %v6881
        %7138 = vst [vmem:[#allocation2 + $0x4c0] sm:$0xff] %v6882
        %7139 = vst [vmem:[#allocation2 + $0x4c8] sm:$0xff] %v6883
        %7140 = vst [vmem:[#allocation2 + $0x4d0] sm:$0xff] %v6884
        %7141 = vst [vmem:[#allocation2 + $0x4d8] sm:$0xff] %v6885
        %7142 = vst [vmem:[#allocation2 + $0x4e0] sm:$0xff] %v6886
        %7143 = vst [vmem:[#allocation2 + $0x4e8] sm:$0xff] %v6887
        %7144 = vst [vmem:[#allocation2 + $0x4f0] sm:$0xff] %v6888
        %7145 = vst [vmem:[#allocation2 + $0x4f8] sm:$0xff] %v6889
        %7146 = vst [vmem:[#allocation2 + $0x500] sm:$0xff] %v6890
        %7147 = vst [vmem:[#allocation2 + $0x508] sm:$0xff] %v6891
        %7148 = vst [vmem:[#allocation2 + $0x510] sm:$0xff] %v6892
        %7149 = vst [vmem:[#allocation2 + $0x518] sm:$0xff] %v6893
        %7150 = vst [vmem:[#allocation2 + $0x520] sm:$0xff] %v6894
        %7151 = vst [vmem:[#allocation2 + $0x528] sm:$0xff] %v6895
        %7152 = vst [vmem:[#allocation2 + $0x530] sm:$0xff] %v6896
        %7153 = vst [vmem:[#allocation2 + $0x538] sm:$0xff] %v6897
        %7154 = vst [vmem:[#allocation2 + $0x540] sm:$0xff] %v6898
        %7155 = vst [vmem:[#allocation2 + $0x548] sm:$0xff] %v6899
        %7156 = vst [vmem:[#allocation2 + $0x550] sm:$0xff] %v6900
        %7157 = vst [vmem:[#allocation2 + $0x558] sm:$0xff] %v6901
        %7158 = vst [vmem:[#allocation2 + $0x560] sm:$0xff] %v6902
        %7159 = vst [vmem:[#allocation2 + $0x568] sm:$0xff] %v6903
        %7160 = vst [vmem:[#allocation2 + $0x570] sm:$0xff] %v6904
        %7161 = vst [vmem:[#allocation2 + $0x578] sm:$0xff] %v6905
        %7162 = vst [vmem:[#allocation2 + $0x580] sm:$0xff] %v6906
        %7163 = vst [vmem:[#allocation2 + $0x588] sm:$0xff] %v6907
        %7164 = vst [vmem:[#allocation2 + $0x590] sm:$0xff] %v6908
        %7165 = vst [vmem:[#allocation2 + $0x598] sm:$0xff] %v6909
        %7166 = vst [vmem:[#allocation2 + $0x5a0] sm:$0xff] %v6910
        %7167 = vst [vmem:[#allocation2 + $0x5a8] sm:$0xff] %v6911
        %7168 = vst [vmem:[#allocation2 + $0x5b0] sm:$0xff] %v6912
        %7169 = vst [vmem:[#allocation2 + $0x5b8] sm:$0xff] %v6913
        %7170 = vst [vmem:[#allocation2 + $0x5c0] sm:$0xff] %v6914
        %7171 = vst [vmem:[#allocation2 + $0x5c8] sm:$0xff] %v6915
        %7172 = vst [vmem:[#allocation2 + $0x5d0] sm:$0xff] %v6916
        %7173 = vst [vmem:[#allocation2 + $0x5d8] sm:$0xff] %v6917
        %7174 = vst [vmem:[#allocation2 + $0x5e0] sm:$0xff] %v6918
        %7175 = vst [vmem:[#allocation2 + $0x5e8] sm:$0xff] %v6919
        %7176 = vst [vmem:[#allocation2 + $0x5f0] sm:$0xff] %v6920
        %7177 = vst [vmem:[#allocation2 + $0x5f8] sm:$0xff] %v6921
        %7178 = vst [vmem:[#allocation2 + $0x600] sm:$0xff] %v6922
        %7179 = vst [vmem:[#allocation2 + $0x608] sm:$0xff] %v6923
        %7180 = vst [vmem:[#allocation2 + $0x610] sm:$0xff] %v6924
        %7181 = vst [vmem:[#allocation2 + $0x618] sm:$0xff] %v6925
        %7182 = vst [vmem:[#allocation2 + $0x620] sm:$0xff] %v6926
        %7183 = vst [vmem:[#allocation2 + $0x628] sm:$0xff] %v6927
        %7184 = vst [vmem:[#allocation2 + $0x630] sm:$0xff] %v6928
        %7185 = vst [vmem:[#allocation2 + $0x638] sm:$0xff] %v6929
        %7186 = vst [vmem:[#allocation2 + $0x640] sm:$0xff] %v6930
        %7187 = vst [vmem:[#allocation2 + $0x648] sm:$0xff] %v6931
        %7188 = vst [vmem:[#allocation2 + $0x650] sm:$0xff] %v6932
        %7189 = vst [vmem:[#allocation2 + $0x658] sm:$0xff] %v6933
        %7190 = vst [vmem:[#allocation2 + $0x660] sm:$0xff] %v6934
        %7191 = vst [vmem:[#allocation2 + $0x668] sm:$0xff] %v6935
        %7192 = vst [vmem:[#allocation2 + $0x670] sm:$0xff] %v6936
        %7193 = vst [vmem:[#allocation2 + $0x678] sm:$0xff] %v6937
        %7194 = vst [vmem:[#allocation2 + $0x680] sm:$0xff] %v6938
        %7195 = vst [vmem:[#allocation2 + $0x688] sm:$0xff] %v6939
        %7196 = vst [vmem:[#allocation2 + $0x690] sm:$0xff] %v6940
        %7197 = vst [vmem:[#allocation2 + $0x698] sm:$0xff] %v6941
        %7198 = vst [vmem:[#allocation2 + $0x6a0] sm:$0xff] %v6942
        %7199 = vst [vmem:[#allocation2 + $0x6a8] sm:$0xff] %v6943
        %7200 = vst [vmem:[#allocation2 + $0x6b0] sm:$0xff] %v6944
        %7201 = vst [vmem:[#allocation2 + $0x6b8] sm:$0xff] %v6945
        %7202 = vst [vmem:[#allocation2 + $0x6c0] sm:$0xff] %v6946
        %7203 = vst [vmem:[#allocation2 + $0x6c8] sm:$0xff] %v6947
        %7204 = vst [vmem:[#allocation2 + $0x6d0] sm:$0xff] %v6948
        %7205 = vst [vmem:[#allocation2 + $0x6d8] sm:$0xff] %v6949
        %7206 = vst [vmem:[#allocation2 + $0x6e0] sm:$0xff] %v6950
        %7207 = vst [vmem:[#allocation2 + $0x6e8] sm:$0xff] %v6951
        %7208 = vst [vmem:[#allocation2 + $0x6f0] sm:$0xff] %v6952
        %7209 = vst [vmem:[#allocation2 + $0x6f8] sm:$0xff] %v6953
        %7210 = vst [vmem:[#allocation2 + $0x700] sm:$0xff] %v6954
        %7211 = vst [vmem:[#allocation2 + $0x708] sm:$0xff] %v6955
        %7212 = vst [vmem:[#allocation2 + $0x710] sm:$0xff] %v6956
        %7213 = vst [vmem:[#allocation2 + $0x718] sm:$0xff] %v6957
        %7214 = vst [vmem:[#allocation2 + $0x720] sm:$0xff] %v6958
        %7215 = vst [vmem:[#allocation2 + $0x728] sm:$0xff] %v6959
        %7216 = vst [vmem:[#allocation2 + $0x730] sm:$0xff] %v6960
        %7217 = vst [vmem:[#allocation2 + $0x738] sm:$0xff] %v6961
        %7218 = vst [vmem:[#allocation2 + $0x740] sm:$0xff] %v6962
        %7219 = vst [vmem:[#allocation2 + $0x748] sm:$0xff] %v6963
        %7220 = vst [vmem:[#allocation2 + $0x750] sm:$0xff] %v6964
        %7221 = vst [vmem:[#allocation2 + $0x758] sm:$0xff] %v6965
        %7222 = vst [vmem:[#allocation2 + $0x760] sm:$0xff] %v6966
        %7223 = vst [vmem:[#allocation2 + $0x768] sm:$0xff] %v6967
        %7224 = vst [vmem:[#allocation2 + $0x770] sm:$0xff] %v6968
        %7225 = vst [vmem:[#allocation2 + $0x778] sm:$0xff] %v6969
        %7226 = vst [vmem:[#allocation2 + $0x780] sm:$0xff] %v6970
        %7227 = vst [vmem:[#allocation2 + $0x788] sm:$0xff] %v6971
        %7228 = vst [vmem:[#allocation2 + $0x790] sm:$0xff] %v6972
        %7229 = vst [vmem:[#allocation2 + $0x798] sm:$0xff] %v6973
        %7230 = vst [vmem:[#allocation2 + $0x7a0] sm:$0xff] %v6974
        %7231 = vst [vmem:[#allocation2 + $0x7a8] sm:$0xff] %v6975
        %7232 = vst [vmem:[#allocation2 + $0x7b0] sm:$0xff] %v6976
        %7233 = vst [vmem:[#allocation2 + $0x7b8] sm:$0xff] %v6977
        %7234 = vst [vmem:[#allocation2 + $0x7c0] sm:$0xff] %v6978
        %7235 = vst [vmem:[#allocation2 + $0x7c8] sm:$0xff] %v6979
        %7236 = vst [vmem:[#allocation2 + $0x7d0] sm:$0xff] %v6980
        %7237 = vst [vmem:[#allocation2 + $0x7d8] sm:$0xff] %v6981
        %7238 = vst [vmem:[#allocation2 + $0x7e0] sm:$0xff] %v6982
        %7239 = vst [vmem:[#allocation2 + $0x7e8] sm:$0xff] %v6983
        %7240 = vst [vmem:[#allocation2 + $0x7f0] sm:$0xff] %v6984
        %7241 = vst [vmem:[#allocation2 + $0x7f8] sm:$0xff] %v6985
        %v7242 = vld [vmem:[#allocation2] sm:$0xff]
        %v7243 = vld [vmem:[#allocation2 + $0x8] sm:$0xff]
        %v7244 = vld [vmem:[#allocation2 + $0x10] sm:$0xff]
        %v7245 = vld [vmem:[#allocation2 + $0x18] sm:$0xff]
        %v7246 = vld [vmem:[#allocation2 + $0x20] sm:$0xff]
        %v7247 = vld [vmem:[#allocation2 + $0x28] sm:$0xff]
        %v7248 = vld [vmem:[#allocation2 + $0x30] sm:$0xff]
        %v7249 = vld [vmem:[#allocation2 + $0x38] sm:$0xff]
        %v7250 = vld [vmem:[#allocation2 + $0x40] sm:$0xff]
        %v7251 = vld [vmem:[#allocation2 + $0x48] sm:$0xff]
        %v7252 = vld [vmem:[#allocation2 + $0x50] sm:$0xff]
        %v7253 = vld [vmem:[#allocation2 + $0x58] sm:$0xff]
        %v7254 = vld [vmem:[#allocation2 + $0x60] sm:$0xff]
        %v7255 = vld [vmem:[#allocation2 + $0x68] sm:$0xff]
        %v7256 = vld [vmem:[#allocation2 + $0x70] sm:$0xff]
        %v7257 = vld [vmem:[#allocation2 + $0x78] sm:$0xff]
        %v7258 = vld [vmem:[#allocation2 + $0x80] sm:$0xff]
        %v7259 = vld [vmem:[#allocation2 + $0x88] sm:$0xff]
        %v7260 = vld [vmem:[#allocation2 + $0x90] sm:$0xff]
        %v7261 = vld [vmem:[#allocation2 + $0x98] sm:$0xff]
        %v7262 = vld [vmem:[#allocation2 + $0xa0] sm:$0xff]
        %v7263 = vld [vmem:[#allocation2 + $0xa8] sm:$0xff]
        %v7264 = vld [vmem:[#allocation2 + $0xb0] sm:$0xff]
        %v7265 = vld [vmem:[#allocation2 + $0xb8] sm:$0xff]
        %v7266 = vld [vmem:[#allocation2 + $0xc0] sm:$0xff]
        %v7267 = vld [vmem:[#allocation2 + $0xc8] sm:$0xff]
        %v7268 = vld [vmem:[#allocation2 + $0xd0] sm:$0xff]
        %v7269 = vld [vmem:[#allocation2 + $0xd8] sm:$0xff]
        %v7270 = vld [vmem:[#allocation2 + $0xe0] sm:$0xff]
        %v7271 = vld [vmem:[#allocation2 + $0xe8] sm:$0xff]
        %v7272 = vld [vmem:[#allocation2 + $0xf0] sm:$0xff]
        %v7273 = vld [vmem:[#allocation2 + $0xf8] sm:$0xff]
        %v7274 = vld [vmem:[#allocation2 + $0x100] sm:$0xff]
        %v7275 = vld [vmem:[#allocation2 + $0x108] sm:$0xff]
        %v7276 = vld [vmem:[#allocation2 + $0x110] sm:$0xff]
        %v7277 = vld [vmem:[#allocation2 + $0x118] sm:$0xff]
        %v7278 = vld [vmem:[#allocation2 + $0x120] sm:$0xff]
        %v7279 = vld [vmem:[#allocation2 + $0x128] sm:$0xff]
        %v7280 = vld [vmem:[#allocation2 + $0x130] sm:$0xff]
        %v7281 = vld [vmem:[#allocation2 + $0x138] sm:$0xff]
        %v7282 = vld [vmem:[#allocation2 + $0x140] sm:$0xff]
        %v7283 = vld [vmem:[#allocation2 + $0x148] sm:$0xff]
        %v7284 = vld [vmem:[#allocation2 + $0x150] sm:$0xff]
        %v7285 = vld [vmem:[#allocation2 + $0x158] sm:$0xff]
        %v7286 = vld [vmem:[#allocation2 + $0x160] sm:$0xff]
        %v7287 = vld [vmem:[#allocation2 + $0x168] sm:$0xff]
        %v7288 = vld [vmem:[#allocation2 + $0x170] sm:$0xff]
        %v7289 = vld [vmem:[#allocation2 + $0x178] sm:$0xff]
        %v7290 = vld [vmem:[#allocation2 + $0x180] sm:$0xff]
        %v7291 = vld [vmem:[#allocation2 + $0x188] sm:$0xff]
        %v7292 = vld [vmem:[#allocation2 + $0x190] sm:$0xff]
        %v7293 = vld [vmem:[#allocation2 + $0x198] sm:$0xff]
        %v7294 = vld [vmem:[#allocation2 + $0x1a0] sm:$0xff]
        %v7295 = vld [vmem:[#allocation2 + $0x1a8] sm:$0xff]
        %v7296 = vld [vmem:[#allocation2 + $0x1b0] sm:$0xff]
        %v7297 = vld [vmem:[#allocation2 + $0x1b8] sm:$0xff]
        %v7298 = vld [vmem:[#allocation2 + $0x1c0] sm:$0xff]
        %v7299 = vld [vmem:[#allocation2 + $0x1c8] sm:$0xff]
        %v7300 = vld [vmem:[#allocation2 + $0x1d0] sm:$0xff]
        %v7301 = vld [vmem:[#allocation2 + $0x1d8] sm:$0xff]
        %v7302 = vld [vmem:[#allocation2 + $0x1e0] sm:$0xff]
        %v7303 = vld [vmem:[#allocation2 + $0x1e8] sm:$0xff]
        %v7304 = vld [vmem:[#allocation2 + $0x1f0] sm:$0xff]
        %v7305 = vld [vmem:[#allocation2 + $0x1f8] sm:$0xff]
        %v7306 = vld [vmem:[#allocation2 + $0x200] sm:$0xff]
        %v7307 = vld [vmem:[#allocation2 + $0x208] sm:$0xff]
        %v7308 = vld [vmem:[#allocation2 + $0x210] sm:$0xff]
        %v7309 = vld [vmem:[#allocation2 + $0x218] sm:$0xff]
        %v7310 = vld [vmem:[#allocation2 + $0x220] sm:$0xff]
        %v7311 = vld [vmem:[#allocation2 + $0x228] sm:$0xff]
        %v7312 = vld [vmem:[#allocation2 + $0x230] sm:$0xff]
        %v7313 = vld [vmem:[#allocation2 + $0x238] sm:$0xff]
        %v7314 = vld [vmem:[#allocation2 + $0x240] sm:$0xff]
        %v7315 = vld [vmem:[#allocation2 + $0x248] sm:$0xff]
        %v7316 = vld [vmem:[#allocation2 + $0x250] sm:$0xff]
        %v7317 = vld [vmem:[#allocation2 + $0x258] sm:$0xff]
        %v7318 = vld [vmem:[#allocation2 + $0x260] sm:$0xff]
        %v7319 = vld [vmem:[#allocation2 + $0x268] sm:$0xff]
        %v7320 = vld [vmem:[#allocation2 + $0x270] sm:$0xff]
        %v7321 = vld [vmem:[#allocation2 + $0x278] sm:$0xff]
        %v7322 = vld [vmem:[#allocation2 + $0x280] sm:$0xff]
        %v7323 = vld [vmem:[#allocation2 + $0x288] sm:$0xff]
        %v7324 = vld [vmem:[#allocation2 + $0x290] sm:$0xff]
        %v7325 = vld [vmem:[#allocation2 + $0x298] sm:$0xff]
        %v7326 = vld [vmem:[#allocation2 + $0x2a0] sm:$0xff]
        %v7327 = vld [vmem:[#allocation2 + $0x2a8] sm:$0xff]
        %v7328 = vld [vmem:[#allocation2 + $0x2b0] sm:$0xff]
        %v7329 = vld [vmem:[#allocation2 + $0x2b8] sm:$0xff]
        %v7330 = vld [vmem:[#allocation2 + $0x2c0] sm:$0xff]
        %v7331 = vld [vmem:[#allocation2 + $0x2c8] sm:$0xff]
        %v7332 = vld [vmem:[#allocation2 + $0x2d0] sm:$0xff]
        %v7333 = vld [vmem:[#allocation2 + $0x2d8] sm:$0xff]
        %v7334 = vld [vmem:[#allocation2 + $0x2e0] sm:$0xff]
        %v7335 = vld [vmem:[#allocation2 + $0x2e8] sm:$0xff]
        %v7336 = vld [vmem:[#allocation2 + $0x2f0] sm:$0xff]
        %v7337 = vld [vmem:[#allocation2 + $0x2f8] sm:$0xff]
        %v7338 = vld [vmem:[#allocation2 + $0x300] sm:$0xff]
        %v7339 = vld [vmem:[#allocation2 + $0x308] sm:$0xff]
        %v7340 = vld [vmem:[#allocation2 + $0x310] sm:$0xff]
        %v7341 = vld [vmem:[#allocation2 + $0x318] sm:$0xff]
        %v7342 = vld [vmem:[#allocation2 + $0x320] sm:$0xff]
        %v7343 = vld [vmem:[#allocation2 + $0x328] sm:$0xff]
        %v7344 = vld [vmem:[#allocation2 + $0x330] sm:$0xff]
        %v7345 = vld [vmem:[#allocation2 + $0x338] sm:$0xff]
        %v7346 = vld [vmem:[#allocation2 + $0x340] sm:$0xff]
        %v7347 = vld [vmem:[#allocation2 + $0x348] sm:$0xff]
        %v7348 = vld [vmem:[#allocation2 + $0x350] sm:$0xff]
        %v7349 = vld [vmem:[#allocation2 + $0x358] sm:$0xff]
        %v7350 = vld [vmem:[#allocation2 + $0x360] sm:$0xff]
        %v7351 = vld [vmem:[#allocation2 + $0x368] sm:$0xff]
        %v7352 = vld [vmem:[#allocation2 + $0x370] sm:$0xff]
        %v7353 = vld [vmem:[#allocation2 + $0x378] sm:$0xff]
        %v7354 = vld [vmem:[#allocation2 + $0x380] sm:$0xff]
        %v7355 = vld [vmem:[#allocation2 + $0x388] sm:$0xff]
        %v7356 = vld [vmem:[#allocation2 + $0x390] sm:$0xff]
        %v7357 = vld [vmem:[#allocation2 + $0x398] sm:$0xff]
        %v7358 = vld [vmem:[#allocation2 + $0x3a0] sm:$0xff]
        %v7359 = vld [vmem:[#allocation2 + $0x3a8] sm:$0xff]
        %v7360 = vld [vmem:[#allocation2 + $0x3b0] sm:$0xff]
        %v7361 = vld [vmem:[#allocation2 + $0x3b8] sm:$0xff]
        %v7362 = vld [vmem:[#allocation2 + $0x3c0] sm:$0xff]
        %v7363 = vld [vmem:[#allocation2 + $0x3c8] sm:$0xff]
        %v7364 = vld [vmem:[#allocation2 + $0x3d0] sm:$0xff]
        %v7365 = vld [vmem:[#allocation2 + $0x3d8] sm:$0xff]
        %v7366 = vld [vmem:[#allocation2 + $0x3e0] sm:$0xff]
        %v7367 = vld [vmem:[#allocation2 + $0x3e8] sm:$0xff]
        %v7368 = vld [vmem:[#allocation2 + $0x3f0] sm:$0xff]
        %v7369 = vld [vmem:[#allocation2 + $0x3f8] sm:$0xff]
        %v7370 = vld [vmem:[#allocation2 + $0x400] sm:$0xff]
        %v7371 = vld [vmem:[#allocation2 + $0x408] sm:$0xff]
        %v7372 = vld [vmem:[#allocation2 + $0x410] sm:$0xff]
        %v7373 = vld [vmem:[#allocation2 + $0x418] sm:$0xff]
        %v7374 = vld [vmem:[#allocation2 + $0x420] sm:$0xff]
        %v7375 = vld [vmem:[#allocation2 + $0x428] sm:$0xff]
        %v7376 = vld [vmem:[#allocation2 + $0x430] sm:$0xff]
        %v7377 = vld [vmem:[#allocation2 + $0x438] sm:$0xff]
        %v7378 = vld [vmem:[#allocation2 + $0x440] sm:$0xff]
        %v7379 = vld [vmem:[#allocation2 + $0x448] sm:$0xff]
        %v7380 = vld [vmem:[#allocation2 + $0x450] sm:$0xff]
        %v7381 = vld [vmem:[#allocation2 + $0x458] sm:$0xff]
        %v7382 = vld [vmem:[#allocation2 + $0x460] sm:$0xff]
        %v7383 = vld [vmem:[#allocation2 + $0x468] sm:$0xff]
        %v7384 = vld [vmem:[#allocation2 + $0x470] sm:$0xff]
        %v7385 = vld [vmem:[#allocation2 + $0x478] sm:$0xff]
        %v7386 = vld [vmem:[#allocation2 + $0x480] sm:$0xff]
        %v7387 = vld [vmem:[#allocation2 + $0x488] sm:$0xff]
        %v7388 = vld [vmem:[#allocation2 + $0x490] sm:$0xff]
        %v7389 = vld [vmem:[#allocation2 + $0x498] sm:$0xff]
        %v7390 = vld [vmem:[#allocation2 + $0x4a0] sm:$0xff]
        %v7391 = vld [vmem:[#allocation2 + $0x4a8] sm:$0xff]
        %v7392 = vld [vmem:[#allocation2 + $0x4b0] sm:$0xff]
        %v7393 = vld [vmem:[#allocation2 + $0x4b8] sm:$0xff]
        %v7394 = vld [vmem:[#allocation2 + $0x4c0] sm:$0xff]
        %v7395 = vld [vmem:[#allocation2 + $0x4c8] sm:$0xff]
        %v7396 = vld [vmem:[#allocation2 + $0x4d0] sm:$0xff]
        %v7397 = vld [vmem:[#allocation2 + $0x4d8] sm:$0xff]
        %v7398 = vld [vmem:[#allocation2 + $0x4e0] sm:$0xff]
        %v7399 = vld [vmem:[#allocation2 + $0x4e8] sm:$0xff]
        %v7400 = vld [vmem:[#allocation2 + $0x4f0] sm:$0xff]
        %v7401 = vld [vmem:[#allocation2 + $0x4f8] sm:$0xff]
        %v7402 = vld [vmem:[#allocation2 + $0x500] sm:$0xff]
        %v7403 = vld [vmem:[#allocation2 + $0x508] sm:$0xff]
        %v7404 = vld [vmem:[#allocation2 + $0x510] sm:$0xff]
        %v7405 = vld [vmem:[#allocation2 + $0x518] sm:$0xff]
        %v7406 = vld [vmem:[#allocation2 + $0x520] sm:$0xff]
        %v7407 = vld [vmem:[#allocation2 + $0x528] sm:$0xff]
        %v7408 = vld [vmem:[#allocation2 + $0x530] sm:$0xff]
        %v7409 = vld [vmem:[#allocation2 + $0x538] sm:$0xff]
        %v7410 = vld [vmem:[#allocation2 + $0x540] sm:$0xff]
        %v7411 = vld [vmem:[#allocation2 + $0x548] sm:$0xff]
        %v7412 = vld [vmem:[#allocation2 + $0x550] sm:$0xff]
        %v7413 = vld [vmem:[#allocation2 + $0x558] sm:$0xff]
        %v7414 = vld [vmem:[#allocation2 + $0x560] sm:$0xff]
        %v7415 = vld [vmem:[#allocation2 + $0x568] sm:$0xff]
        %v7416 = vld [vmem:[#allocation2 + $0x570] sm:$0xff]
        %v7417 = vld [vmem:[#allocation2 + $0x578] sm:$0xff]
        %v7418 = vld [vmem:[#allocation2 + $0x580] sm:$0xff]
        %v7419 = vld [vmem:[#allocation2 + $0x588] sm:$0xff]
        %v7420 = vld [vmem:[#allocation2 + $0x590] sm:$0xff]
        %v7421 = vld [vmem:[#allocation2 + $0x598] sm:$0xff]
        %v7422 = vld [vmem:[#allocation2 + $0x5a0] sm:$0xff]
        %v7423 = vld [vmem:[#allocation2 + $0x5a8] sm:$0xff]
        %v7424 = vld [vmem:[#allocation2 + $0x5b0] sm:$0xff]
        %v7425 = vld [vmem:[#allocation2 + $0x5b8] sm:$0xff]
        %v7426 = vld [vmem:[#allocation2 + $0x5c0] sm:$0xff]
        %v7427 = vld [vmem:[#allocation2 + $0x5c8] sm:$0xff]
        %v7428 = vld [vmem:[#allocation2 + $0x5d0] sm:$0xff]
        %v7429 = vld [vmem:[#allocation2 + $0x5d8] sm:$0xff]
        %v7430 = vld [vmem:[#allocation2 + $0x5e0] sm:$0xff]
        %v7431 = vld [vmem:[#allocation2 + $0x5e8] sm:$0xff]
        %v7432 = vld [vmem:[#allocation2 + $0x5f0] sm:$0xff]
        %v7433 = vld [vmem:[#allocation2 + $0x5f8] sm:$0xff]
        %v7434 = vld [vmem:[#allocation2 + $0x600] sm:$0xff]
        %v7435 = vld [vmem:[#allocation2 + $0x608] sm:$0xff]
        %v7436 = vld [vmem:[#allocation2 + $0x610] sm:$0xff]
        %v7437 = vld [vmem:[#allocation2 + $0x618] sm:$0xff]
        %v7438 = vld [vmem:[#allocation2 + $0x620] sm:$0xff]
        %v7439 = vld [vmem:[#allocation2 + $0x628] sm:$0xff]
        %v7440 = vld [vmem:[#allocation2 + $0x630] sm:$0xff]
        %v7441 = vld [vmem:[#allocation2 + $0x638] sm:$0xff]
        %v7442 = vld [vmem:[#allocation2 + $0x640] sm:$0xff]
        %v7443 = vld [vmem:[#allocation2 + $0x648] sm:$0xff]
        %v7444 = vld [vmem:[#allocation2 + $0x650] sm:$0xff]
        %v7445 = vld [vmem:[#allocation2 + $0x658] sm:$0xff]
        %v7446 = vld [vmem:[#allocation2 + $0x660] sm:$0xff]
        %v7447 = vld [vmem:[#allocation2 + $0x668] sm:$0xff]
        %v7448 = vld [vmem:[#allocation2 + $0x670] sm:$0xff]
        %v7449 = vld [vmem:[#allocation2 + $0x678] sm:$0xff]
        %v7450 = vld [vmem:[#allocation2 + $0x680] sm:$0xff]
        %v7451 = vld [vmem:[#allocation2 + $0x688] sm:$0xff]
        %v7452 = vld [vmem:[#allocation2 + $0x690] sm:$0xff]
        %v7453 = vld [vmem:[#allocation2 + $0x698] sm:$0xff]
        %v7454 = vld [vmem:[#allocation2 + $0x6a0] sm:$0xff]
        %v7455 = vld [vmem:[#allocation2 + $0x6a8] sm:$0xff]
        %v7456 = vld [vmem:[#allocation2 + $0x6b0] sm:$0xff]
        %v7457 = vld [vmem:[#allocation2 + $0x6b8] sm:$0xff]
        %v7458 = vld [vmem:[#allocation2 + $0x6c0] sm:$0xff]
        %v7459 = vld [vmem:[#allocation2 + $0x6c8] sm:$0xff]
        %v7460 = vld [vmem:[#allocation2 + $0x6d0] sm:$0xff]
        %v7461 = vld [vmem:[#allocation2 + $0x6d8] sm:$0xff]
        %v7462 = vld [vmem:[#allocation2 + $0x6e0] sm:$0xff]
        %v7463 = vld [vmem:[#allocation2 + $0x6e8] sm:$0xff]
        %v7464 = vld [vmem:[#allocation2 + $0x6f0] sm:$0xff]
        %v7465 = vld [vmem:[#allocation2 + $0x6f8] sm:$0xff]
        %v7466 = vld [vmem:[#allocation2 + $0x700] sm:$0xff]
        %v7467 = vld [vmem:[#allocation2 + $0x708] sm:$0xff]
        %v7468 = vld [vmem:[#allocation2 + $0x710] sm:$0xff]
        %v7469 = vld [vmem:[#allocation2 + $0x718] sm:$0xff]
        %v7470 = vld [vmem:[#allocation2 + $0x720] sm:$0xff]
        %v7471 = vld [vmem:[#allocation2 + $0x728] sm:$0xff]
        %v7472 = vld [vmem:[#allocation2 + $0x730] sm:$0xff]
        %v7473 = vld [vmem:[#allocation2 + $0x738] sm:$0xff]
        %v7474 = vld [vmem:[#allocation2 + $0x740] sm:$0xff]
        %v7475 = vld [vmem:[#allocation2 + $0x748] sm:$0xff]
        %v7476 = vld [vmem:[#allocation2 + $0x750] sm:$0xff]
        %v7477 = vld [vmem:[#allocation2 + $0x758] sm:$0xff]
        %v7478 = vld [vmem:[#allocation2 + $0x760] sm:$0xff]
        %v7479 = vld [vmem:[#allocation2 + $0x768] sm:$0xff]
        %v7480 = vld [vmem:[#allocation2 + $0x770] sm:$0xff]
        %v7481 = vld [vmem:[#allocation2 + $0x778] sm:$0xff]
        %v7482 = vld [vmem:[#allocation2 + $0x780] sm:$0xff]
        %v7483 = vld [vmem:[#allocation2 + $0x788] sm:$0xff]
        %v7484 = vld [vmem:[#allocation2 + $0x790] sm:$0xff]
        %v7485 = vld [vmem:[#allocation2 + $0x798] sm:$0xff]
        %v7486 = vld [vmem:[#allocation2 + $0x7a0] sm:$0xff]
        %v7487 = vld [vmem:[#allocation2 + $0x7a8] sm:$0xff]
        %v7488 = vld [vmem:[#allocation2 + $0x7b0] sm:$0xff]
        %v7489 = vld [vmem:[#allocation2 + $0x7b8] sm:$0xff]
        %v7490 = vld [vmem:[#allocation2 + $0x7c0] sm:$0xff]
        %v7491 = vld [vmem:[#allocation2 + $0x7c8] sm:$0xff]
        %v7492 = vld [vmem:[#allocation2 + $0x7d0] sm:$0xff]
        %v7493 = vld [vmem:[#allocation2 + $0x7d8] sm:$0xff]
        %v7494 = vld [vmem:[#allocation2 + $0x7e0] sm:$0xff]
        %v7495 = vld [vmem:[#allocation2 + $0x7e8] sm:$0xff]
        %v7496 = vld [vmem:[#allocation2 + $0x7f0] sm:$0xff]
        %v7497 = vld [vmem:[#allocation2 + $0x7f8] sm:$0xff]
        %v7498 = vld [vmem:[#allocation8] sm:$0x1]
        %v7500 = vperm.slane %v7498, 0
        %v7502 = vadd.f32 %v7242, %v7500
        %v7503 = vadd.f32 %v7243, %v7500
        %v7504 = vadd.f32 %v7244, %v7500
        %v7505 = vadd.f32 %v7245, %v7500
        %v7506 = vadd.f32 %v7246, %v7500
        %v7507 = vadd.f32 %v7247, %v7500
        %v7508 = vadd.f32 %v7248, %v7500
        %v7509 = vadd.f32 %v7249, %v7500
        %v7510 = vadd.f32 %v7250, %v7500
        %v7511 = vadd.f32 %v7251, %v7500
        %v7512 = vadd.f32 %v7252, %v7500
        %v7513 = vadd.f32 %v7253, %v7500
        %v7514 = vadd.f32 %v7254, %v7500
        %v7515 = vadd.f32 %v7255, %v7500
        %v7516 = vadd.f32 %v7256, %v7500
        %v7517 = vadd.f32 %v7257, %v7500
        %v7518 = vadd.f32 %v7258, %v7500
        %v7519 = vadd.f32 %v7259, %v7500
        %v7520 = vadd.f32 %v7260, %v7500
        %v7521 = vadd.f32 %v7261, %v7500
        %v7522 = vadd.f32 %v7262, %v7500
        %v7523 = vadd.f32 %v7263, %v7500
        %v7524 = vadd.f32 %v7264, %v7500
        %v7525 = vadd.f32 %v7265, %v7500
        %v7526 = vadd.f32 %v7266, %v7500
        %v7527 = vadd.f32 %v7267, %v7500
        %v7528 = vadd.f32 %v7268, %v7500
        %v7529 = vadd.f32 %v7269, %v7500
        %v7530 = vadd.f32 %v7270, %v7500
        %v7531 = vadd.f32 %v7271, %v7500
        %v7532 = vadd.f32 %v7272, %v7500
        %v7533 = vadd.f32 %v7273, %v7500
        %v7534 = vadd.f32 %v7274, %v7500
        %v7535 = vadd.f32 %v7275, %v7500
        %v7536 = vadd.f32 %v7276, %v7500
        %v7537 = vadd.f32 %v7277, %v7500
        %v7538 = vadd.f32 %v7278, %v7500
        %v7539 = vadd.f32 %v7279, %v7500
        %v7540 = vadd.f32 %v7280, %v7500
        %v7541 = vadd.f32 %v7281, %v7500
        %v7542 = vadd.f32 %v7282, %v7500
        %v7543 = vadd.f32 %v7283, %v7500
        %v7544 = vadd.f32 %v7284, %v7500
        %v7545 = vadd.f32 %v7285, %v7500
        %v7546 = vadd.f32 %v7286, %v7500
        %v7547 = vadd.f32 %v7287, %v7500
        %v7548 = vadd.f32 %v7288, %v7500
        %v7549 = vadd.f32 %v7289, %v7500
        %v7550 = vadd.f32 %v7290, %v7500
        %v7551 = vadd.f32 %v7291, %v7500
        %v7552 = vadd.f32 %v7292, %v7500
        %v7553 = vadd.f32 %v7293, %v7500
        %v7554 = vadd.f32 %v7294, %v7500
        %v7555 = vadd.f32 %v7295, %v7500
        %v7556 = vadd.f32 %v7296, %v7500
        %v7557 = vadd.f32 %v7297, %v7500
        %v7558 = vadd.f32 %v7298, %v7500
        %v7559 = vadd.f32 %v7299, %v7500
        %v7560 = vadd.f32 %v7300, %v7500
        %v7561 = vadd.f32 %v7301, %v7500
        %v7562 = vadd.f32 %v7302, %v7500
        %v7563 = vadd.f32 %v7303, %v7500
        %v7564 = vadd.f32 %v7304, %v7500
        %v7565 = vadd.f32 %v7305, %v7500
        %v7566 = vadd.f32 %v7306, %v7500
        %v7567 = vadd.f32 %v7307, %v7500
        %v7568 = vadd.f32 %v7308, %v7500
        %v7569 = vadd.f32 %v7309, %v7500
        %v7570 = vadd.f32 %v7310, %v7500
        %v7571 = vadd.f32 %v7311, %v7500
        %v7572 = vadd.f32 %v7312, %v7500
        %v7573 = vadd.f32 %v7313, %v7500
        %v7574 = vadd.f32 %v7314, %v7500
        %v7575 = vadd.f32 %v7315, %v7500
        %v7576 = vadd.f32 %v7316, %v7500
        %v7577 = vadd.f32 %v7317, %v7500
        %v7578 = vadd.f32 %v7318, %v7500
        %v7579 = vadd.f32 %v7319, %v7500
        %v7580 = vadd.f32 %v7320, %v7500
        %v7581 = vadd.f32 %v7321, %v7500
        %v7582 = vadd.f32 %v7322, %v7500
        %v7583 = vadd.f32 %v7323, %v7500
        %v7584 = vadd.f32 %v7324, %v7500
        %v7585 = vadd.f32 %v7325, %v7500
        %v7586 = vadd.f32 %v7326, %v7500
        %v7587 = vadd.f32 %v7327, %v7500
        %v7588 = vadd.f32 %v7328, %v7500
        %v7589 = vadd.f32 %v7329, %v7500
        %v7590 = vadd.f32 %v7330, %v7500
        %v7591 = vadd.f32 %v7331, %v7500
        %v7592 = vadd.f32 %v7332, %v7500
        %v7593 = vadd.f32 %v7333, %v7500
        %v7594 = vadd.f32 %v7334, %v7500
        %v7595 = vadd.f32 %v7335, %v7500
        %v7596 = vadd.f32 %v7336, %v7500
        %v7597 = vadd.f32 %v7337, %v7500
        %v7598 = vadd.f32 %v7338, %v7500
        %v7599 = vadd.f32 %v7339, %v7500
        %v7600 = vadd.f32 %v7340, %v7500
        %v7601 = vadd.f32 %v7341, %v7500
        %v7602 = vadd.f32 %v7342, %v7500
        %v7603 = vadd.f32 %v7343, %v7500
        %v7604 = vadd.f32 %v7344, %v7500
        %v7605 = vadd.f32 %v7345, %v7500
        %v7606 = vadd.f32 %v7346, %v7500
        %v7607 = vadd.f32 %v7347, %v7500
        %v7608 = vadd.f32 %v7348, %v7500
        %v7609 = vadd.f32 %v7349, %v7500
        %v7610 = vadd.f32 %v7350, %v7500
        %v7611 = vadd.f32 %v7351, %v7500
        %v7612 = vadd.f32 %v7352, %v7500
        %v7613 = vadd.f32 %v7353, %v7500
        %v7614 = vadd.f32 %v7354, %v7500
        %v7615 = vadd.f32 %v7355, %v7500
        %v7616 = vadd.f32 %v7356, %v7500
        %v7617 = vadd.f32 %v7357, %v7500
        %v7618 = vadd.f32 %v7358, %v7500
        %v7619 = vadd.f32 %v7359, %v7500
        %v7620 = vadd.f32 %v7360, %v7500
        %v7621 = vadd.f32 %v7361, %v7500
        %v7622 = vadd.f32 %v7362, %v7500
        %v7623 = vadd.f32 %v7363, %v7500
        %v7624 = vadd.f32 %v7364, %v7500
        %v7625 = vadd.f32 %v7365, %v7500
        %v7626 = vadd.f32 %v7366, %v7500
        %v7627 = vadd.f32 %v7367, %v7500
        %v7628 = vadd.f32 %v7368, %v7500
        %v7629 = vadd.f32 %v7369, %v7500
        %v7630 = vadd.f32 %v7370, %v7500
        %v7631 = vadd.f32 %v7371, %v7500
        %v7632 = vadd.f32 %v7372, %v7500
        %v7633 = vadd.f32 %v7373, %v7500
        %v7634 = vadd.f32 %v7374, %v7500
        %v7635 = vadd.f32 %v7375, %v7500
        %v7636 = vadd.f32 %v7376, %v7500
        %v7637 = vadd.f32 %v7377, %v7500
        %v7638 = vadd.f32 %v7378, %v7500
        %v7639 = vadd.f32 %v7379, %v7500
        %v7640 = vadd.f32 %v7380, %v7500
        %v7641 = vadd.f32 %v7381, %v7500
        %v7642 = vadd.f32 %v7382, %v7500
        %v7643 = vadd.f32 %v7383, %v7500
        %v7644 = vadd.f32 %v7384, %v7500
        %v7645 = vadd.f32 %v7385, %v7500
        %v7646 = vadd.f32 %v7386, %v7500
        %v7647 = vadd.f32 %v7387, %v7500
        %v7648 = vadd.f32 %v7388, %v7500
        %v7649 = vadd.f32 %v7389, %v7500
        %v7650 = vadd.f32 %v7390, %v7500
        %v7651 = vadd.f32 %v7391, %v7500
        %v7652 = vadd.f32 %v7392, %v7500
        %v7653 = vadd.f32 %v7393, %v7500
        %v7654 = vadd.f32 %v7394, %v7500
        %v7655 = vadd.f32 %v7395, %v7500
        %v7656 = vadd.f32 %v7396, %v7500
        %v7657 = vadd.f32 %v7397, %v7500
        %v7658 = vadd.f32 %v7398, %v7500
        %v7659 = vadd.f32 %v7399, %v7500
        %v7660 = vadd.f32 %v7400, %v7500
        %v7661 = vadd.f32 %v7401, %v7500
        %v7662 = vadd.f32 %v7402, %v7500
        %v7663 = vadd.f32 %v7403, %v7500
        %v7664 = vadd.f32 %v7404, %v7500
        %v7665 = vadd.f32 %v7405, %v7500
        %v7666 = vadd.f32 %v7406, %v7500
        %v7667 = vadd.f32 %v7407, %v7500
        %v7668 = vadd.f32 %v7408, %v7500
        %v7669 = vadd.f32 %v7409, %v7500
        %v7670 = vadd.f32 %v7410, %v7500
        %v7671 = vadd.f32 %v7411, %v7500
        %v7672 = vadd.f32 %v7412, %v7500
        %v7673 = vadd.f32 %v7413, %v7500
        %v7674 = vadd.f32 %v7414, %v7500
        %v7675 = vadd.f32 %v7415, %v7500
        %v7676 = vadd.f32 %v7416, %v7500
        %v7677 = vadd.f32 %v7417, %v7500
        %v7678 = vadd.f32 %v7418, %v7500
        %v7679 = vadd.f32 %v7419, %v7500
        %v7680 = vadd.f32 %v7420, %v7500
        %v7681 = vadd.f32 %v7421, %v7500
        %v7682 = vadd.f32 %v7422, %v7500
        %v7683 = vadd.f32 %v7423, %v7500
        %v7684 = vadd.f32 %v7424, %v7500
        %v7685 = vadd.f32 %v7425, %v7500
        %v7686 = vadd.f32 %v7426, %v7500
        %v7687 = vadd.f32 %v7427, %v7500
        %v7688 = vadd.f32 %v7428, %v7500
        %v7689 = vadd.f32 %v7429, %v7500
        %v7690 = vadd.f32 %v7430, %v7500
        %v7691 = vadd.f32 %v7431, %v7500
        %v7692 = vadd.f32 %v7432, %v7500
        %v7693 = vadd.f32 %v7433, %v7500
        %v7694 = vadd.f32 %v7434, %v7500
        %v7695 = vadd.f32 %v7435, %v7500
        %v7696 = vadd.f32 %v7436, %v7500
        %v7697 = vadd.f32 %v7437, %v7500
        %v7698 = vadd.f32 %v7438, %v7500
        %v7699 = vadd.f32 %v7439, %v7500
        %v7700 = vadd.f32 %v7440, %v7500
        %v7701 = vadd.f32 %v7441, %v7500
        %v7702 = vadd.f32 %v7442, %v7500
        %v7703 = vadd.f32 %v7443, %v7500
        %v7704 = vadd.f32 %v7444, %v7500
        %v7705 = vadd.f32 %v7445, %v7500
        %v7706 = vadd.f32 %v7446, %v7500
        %v7707 = vadd.f32 %v7447, %v7500
        %v7708 = vadd.f32 %v7448, %v7500
        %v7709 = vadd.f32 %v7449, %v7500
        %v7710 = vadd.f32 %v7450, %v7500
        %v7711 = vadd.f32 %v7451, %v7500
        %v7712 = vadd.f32 %v7452, %v7500
        %v7713 = vadd.f32 %v7453, %v7500
        %v7714 = vadd.f32 %v7454, %v7500
        %v7715 = vadd.f32 %v7455, %v7500
        %v7716 = vadd.f32 %v7456, %v7500
        %v7717 = vadd.f32 %v7457, %v7500
        %v7718 = vadd.f32 %v7458, %v7500
        %v7719 = vadd.f32 %v7459, %v7500
        %v7720 = vadd.f32 %v7460, %v7500
        %v7721 = vadd.f32 %v7461, %v7500
        %v7722 = vadd.f32 %v7462, %v7500
        %v7723 = vadd.f32 %v7463, %v7500
        %v7724 = vadd.f32 %v7464, %v7500
        %v7725 = vadd.f32 %v7465, %v7500
        %v7726 = vadd.f32 %v7466, %v7500
        %v7727 = vadd.f32 %v7467, %v7500
        %v7728 = vadd.f32 %v7468, %v7500
        %v7729 = vadd.f32 %v7469, %v7500
        %v7730 = vadd.f32 %v7470, %v7500
        %v7731 = vadd.f32 %v7471, %v7500
        %v7732 = vadd.f32 %v7472, %v7500
        %v7733 = vadd.f32 %v7473, %v7500
        %v7734 = vadd.f32 %v7474, %v7500
        %v7735 = vadd.f32 %v7475, %v7500
        %v7736 = vadd.f32 %v7476, %v7500
        %v7737 = vadd.f32 %v7477, %v7500
        %v7738 = vadd.f32 %v7478, %v7500
        %v7739 = vadd.f32 %v7479, %v7500
        %v7740 = vadd.f32 %v7480, %v7500
        %v7741 = vadd.f32 %v7481, %v7500
        %v7742 = vadd.f32 %v7482, %v7500
        %v7743 = vadd.f32 %v7483, %v7500
        %v7744 = vadd.f32 %v7484, %v7500
        %v7745 = vadd.f32 %v7485, %v7500
        %v7746 = vadd.f32 %v7486, %v7500
        %v7747 = vadd.f32 %v7487, %v7500
        %v7748 = vadd.f32 %v7488, %v7500
        %v7749 = vadd.f32 %v7489, %v7500
        %v7750 = vadd.f32 %v7490, %v7500
        %v7751 = vadd.f32 %v7491, %v7500
        %v7752 = vadd.f32 %v7492, %v7500
        %v7753 = vadd.f32 %v7493, %v7500
        %v7754 = vadd.f32 %v7494, %v7500
        %v7755 = vadd.f32 %v7495, %v7500
        %v7756 = vadd.f32 %v7496, %v7500
        %v7757 = vadd.f32 %v7497, %v7500
        %vm7758 = vcmp.ge.f32.partialorder %v7502, 0.0
        %vm7759 = vcmp.ge.f32.partialorder %v7503, 0.0
        %vm7760 = vcmp.ge.f32.partialorder %v7504, 0.0
        %vm7761 = vcmp.ge.f32.partialorder %v7505, 0.0
        %vm7762 = vcmp.ge.f32.partialorder %v7506, 0.0
        %vm7763 = vcmp.ge.f32.partialorder %v7507, 0.0
        %vm7764 = vcmp.ge.f32.partialorder %v7508, 0.0
        %vm7765 = vcmp.ge.f32.partialorder %v7509, 0.0
        %vm7766 = vcmp.ge.f32.partialorder %v7510, 0.0
        %vm7767 = vcmp.ge.f32.partialorder %v7511, 0.0
        %vm7768 = vcmp.ge.f32.partialorder %v7512, 0.0
        %vm7769 = vcmp.ge.f32.partialorder %v7513, 0.0
        %vm7770 = vcmp.ge.f32.partialorder %v7514, 0.0
        %vm7771 = vcmp.ge.f32.partialorder %v7515, 0.0
        %vm7772 = vcmp.ge.f32.partialorder %v7516, 0.0
        %vm7773 = vcmp.ge.f32.partialorder %v7517, 0.0
        %vm7774 = vcmp.ge.f32.partialorder %v7518, 0.0
        %vm7775 = vcmp.ge.f32.partialorder %v7519, 0.0
        %vm7776 = vcmp.ge.f32.partialorder %v7520, 0.0
        %vm7777 = vcmp.ge.f32.partialorder %v7521, 0.0
        %vm7778 = vcmp.ge.f32.partialorder %v7522, 0.0
        %vm7779 = vcmp.ge.f32.partialorder %v7523, 0.0
        %vm7780 = vcmp.ge.f32.partialorder %v7524, 0.0
        %vm7781 = vcmp.ge.f32.partialorder %v7525, 0.0
        %vm7782 = vcmp.ge.f32.partialorder %v7526, 0.0
        %vm7783 = vcmp.ge.f32.partialorder %v7527, 0.0
        %vm7784 = vcmp.ge.f32.partialorder %v7528, 0.0
        %vm7785 = vcmp.ge.f32.partialorder %v7529, 0.0
        %vm7786 = vcmp.ge.f32.partialorder %v7530, 0.0
        %vm7787 = vcmp.ge.f32.partialorder %v7531, 0.0
        %vm7788 = vcmp.ge.f32.partialorder %v7532, 0.0
        %vm7789 = vcmp.ge.f32.partialorder %v7533, 0.0
        %vm7790 = vcmp.ge.f32.partialorder %v7534, 0.0
        %vm7791 = vcmp.ge.f32.partialorder %v7535, 0.0
        %vm7792 = vcmp.ge.f32.partialorder %v7536, 0.0
        %vm7793 = vcmp.ge.f32.partialorder %v7537, 0.0
        %vm7794 = vcmp.ge.f32.partialorder %v7538, 0.0
        %vm7795 = vcmp.ge.f32.partialorder %v7539, 0.0
        %vm7796 = vcmp.ge.f32.partialorder %v7540, 0.0
        %vm7797 = vcmp.ge.f32.partialorder %v7541, 0.0
        %vm7798 = vcmp.ge.f32.partialorder %v7542, 0.0
        %vm7799 = vcmp.ge.f32.partialorder %v7543, 0.0
        %vm7800 = vcmp.ge.f32.partialorder %v7544, 0.0
        %vm7801 = vcmp.ge.f32.partialorder %v7545, 0.0
        %vm7802 = vcmp.ge.f32.partialorder %v7546, 0.0
        %vm7803 = vcmp.ge.f32.partialorder %v7547, 0.0
        %vm7804 = vcmp.ge.f32.partialorder %v7548, 0.0
        %vm7805 = vcmp.ge.f32.partialorder %v7549, 0.0
        %vm7806 = vcmp.ge.f32.partialorder %v7550, 0.0
        %vm7807 = vcmp.ge.f32.partialorder %v7551, 0.0
        %vm7808 = vcmp.ge.f32.partialorder %v7552, 0.0
        %vm7809 = vcmp.ge.f32.partialorder %v7553, 0.0
        %vm7810 = vcmp.ge.f32.partialorder %v7554, 0.0
        %vm7811 = vcmp.ge.f32.partialorder %v7555, 0.0
        %vm7812 = vcmp.ge.f32.partialorder %v7556, 0.0
        %vm7813 = vcmp.ge.f32.partialorder %v7557, 0.0
        %vm7814 = vcmp.ge.f32.partialorder %v7558, 0.0
        %vm7815 = vcmp.ge.f32.partialorder %v7559, 0.0
        %vm7816 = vcmp.ge.f32.partialorder %v7560, 0.0
        %vm7817 = vcmp.ge.f32.partialorder %v7561, 0.0
        %vm7818 = vcmp.ge.f32.partialorder %v7562, 0.0
        %vm7819 = vcmp.ge.f32.partialorder %v7563, 0.0
        %vm7820 = vcmp.ge.f32.partialorder %v7564, 0.0
        %vm7821 = vcmp.ge.f32.partialorder %v7565, 0.0
        %vm7822 = vcmp.ge.f32.partialorder %v7566, 0.0
        %vm7823 = vcmp.ge.f32.partialorder %v7567, 0.0
        %vm7824 = vcmp.ge.f32.partialorder %v7568, 0.0
        %vm7825 = vcmp.ge.f32.partialorder %v7569, 0.0
        %vm7826 = vcmp.ge.f32.partialorder %v7570, 0.0
        %vm7827 = vcmp.ge.f32.partialorder %v7571, 0.0
        %vm7828 = vcmp.ge.f32.partialorder %v7572, 0.0
        %vm7829 = vcmp.ge.f32.partialorder %v7573, 0.0
        %vm7830 = vcmp.ge.f32.partialorder %v7574, 0.0
        %vm7831 = vcmp.ge.f32.partialorder %v7575, 0.0
        %vm7832 = vcmp.ge.f32.partialorder %v7576, 0.0
        %vm7833 = vcmp.ge.f32.partialorder %v7577, 0.0
        %vm7834 = vcmp.ge.f32.partialorder %v7578, 0.0
        %vm7835 = vcmp.ge.f32.partialorder %v7579, 0.0
        %vm7836 = vcmp.ge.f32.partialorder %v7580, 0.0
        %vm7837 = vcmp.ge.f32.partialorder %v7581, 0.0
        %vm7838 = vcmp.ge.f32.partialorder %v7582, 0.0
        %vm7839 = vcmp.ge.f32.partialorder %v7583, 0.0
        %vm7840 = vcmp.ge.f32.partialorder %v7584, 0.0
        %vm7841 = vcmp.ge.f32.partialorder %v7585, 0.0
        %vm7842 = vcmp.ge.f32.partialorder %v7586, 0.0
        %vm7843 = vcmp.ge.f32.partialorder %v7587, 0.0
        %vm7844 = vcmp.ge.f32.partialorder %v7588, 0.0
        %vm7845 = vcmp.ge.f32.partialorder %v7589, 0.0
        %vm7846 = vcmp.ge.f32.partialorder %v7590, 0.0
        %vm7847 = vcmp.ge.f32.partialorder %v7591, 0.0
        %vm7848 = vcmp.ge.f32.partialorder %v7592, 0.0
        %vm7849 = vcmp.ge.f32.partialorder %v7593, 0.0
        %vm7850 = vcmp.ge.f32.partialorder %v7594, 0.0
        %vm7851 = vcmp.ge.f32.partialorder %v7595, 0.0
        %vm7852 = vcmp.ge.f32.partialorder %v7596, 0.0
        %vm7853 = vcmp.ge.f32.partialorder %v7597, 0.0
        %vm7854 = vcmp.ge.f32.partialorder %v7598, 0.0
        %vm7855 = vcmp.ge.f32.partialorder %v7599, 0.0
        %vm7856 = vcmp.ge.f32.partialorder %v7600, 0.0
        %vm7857 = vcmp.ge.f32.partialorder %v7601, 0.0
        %vm7858 = vcmp.ge.f32.partialorder %v7602, 0.0
        %vm7859 = vcmp.ge.f32.partialorder %v7603, 0.0
        %vm7860 = vcmp.ge.f32.partialorder %v7604, 0.0
        %vm7861 = vcmp.ge.f32.partialorder %v7605, 0.0
        %vm7862 = vcmp.ge.f32.partialorder %v7606, 0.0
        %vm7863 = vcmp.ge.f32.partialorder %v7607, 0.0
        %vm7864 = vcmp.ge.f32.partialorder %v7608, 0.0
        %vm7865 = vcmp.ge.f32.partialorder %v7609, 0.0
        %vm7866 = vcmp.ge.f32.partialorder %v7610, 0.0
        %vm7867 = vcmp.ge.f32.partialorder %v7611, 0.0
        %vm7868 = vcmp.ge.f32.partialorder %v7612, 0.0
        %vm7869 = vcmp.ge.f32.partialorder %v7613, 0.0
        %vm7870 = vcmp.ge.f32.partialorder %v7614, 0.0
        %vm7871 = vcmp.ge.f32.partialorder %v7615, 0.0
        %vm7872 = vcmp.ge.f32.partialorder %v7616, 0.0
        %vm7873 = vcmp.ge.f32.partialorder %v7617, 0.0
        %vm7874 = vcmp.ge.f32.partialorder %v7618, 0.0
        %vm7875 = vcmp.ge.f32.partialorder %v7619, 0.0
        %vm7876 = vcmp.ge.f32.partialorder %v7620, 0.0
        %vm7877 = vcmp.ge.f32.partialorder %v7621, 0.0
        %vm7878 = vcmp.ge.f32.partialorder %v7622, 0.0
        %vm7879 = vcmp.ge.f32.partialorder %v7623, 0.0
        %vm7880 = vcmp.ge.f32.partialorder %v7624, 0.0
        %vm7881 = vcmp.ge.f32.partialorder %v7625, 0.0
        %vm7882 = vcmp.ge.f32.partialorder %v7626, 0.0
        %vm7883 = vcmp.ge.f32.partialorder %v7627, 0.0
        %vm7884 = vcmp.ge.f32.partialorder %v7628, 0.0
        %vm7885 = vcmp.ge.f32.partialorder %v7629, 0.0
        %vm7886 = vcmp.ge.f32.partialorder %v7630, 0.0
        %vm7887 = vcmp.ge.f32.partialorder %v7631, 0.0
        %vm7888 = vcmp.ge.f32.partialorder %v7632, 0.0
        %vm7889 = vcmp.ge.f32.partialorder %v7633, 0.0
        %vm7890 = vcmp.ge.f32.partialorder %v7634, 0.0
        %vm7891 = vcmp.ge.f32.partialorder %v7635, 0.0
        %vm7892 = vcmp.ge.f32.partialorder %v7636, 0.0
        %vm7893 = vcmp.ge.f32.partialorder %v7637, 0.0
        %vm7894 = vcmp.ge.f32.partialorder %v7638, 0.0
        %vm7895 = vcmp.ge.f32.partialorder %v7639, 0.0
        %vm7896 = vcmp.ge.f32.partialorder %v7640, 0.0
        %vm7897 = vcmp.ge.f32.partialorder %v7641, 0.0
        %vm7898 = vcmp.ge.f32.partialorder %v7642, 0.0
        %vm7899 = vcmp.ge.f32.partialorder %v7643, 0.0
        %vm7900 = vcmp.ge.f32.partialorder %v7644, 0.0
        %vm7901 = vcmp.ge.f32.partialorder %v7645, 0.0
        %vm7902 = vcmp.ge.f32.partialorder %v7646, 0.0
        %vm7903 = vcmp.ge.f32.partialorder %v7647, 0.0
        %vm7904 = vcmp.ge.f32.partialorder %v7648, 0.0
        %vm7905 = vcmp.ge.f32.partialorder %v7649, 0.0
        %vm7906 = vcmp.ge.f32.partialorder %v7650, 0.0
        %vm7907 = vcmp.ge.f32.partialorder %v7651, 0.0
        %vm7908 = vcmp.ge.f32.partialorder %v7652, 0.0
        %vm7909 = vcmp.ge.f32.partialorder %v7653, 0.0
        %vm7910 = vcmp.ge.f32.partialorder %v7654, 0.0
        %vm7911 = vcmp.ge.f32.partialorder %v7655, 0.0
        %vm7912 = vcmp.ge.f32.partialorder %v7656, 0.0
        %vm7913 = vcmp.ge.f32.partialorder %v7657, 0.0
        %vm7914 = vcmp.ge.f32.partialorder %v7658, 0.0
        %vm7915 = vcmp.ge.f32.partialorder %v7659, 0.0
        %vm7916 = vcmp.ge.f32.partialorder %v7660, 0.0
        %vm7917 = vcmp.ge.f32.partialorder %v7661, 0.0
        %vm7918 = vcmp.ge.f32.partialorder %v7662, 0.0
        %vm7919 = vcmp.ge.f32.partialorder %v7663, 0.0
        %vm7920 = vcmp.ge.f32.partialorder %v7664, 0.0
        %vm7921 = vcmp.ge.f32.partialorder %v7665, 0.0
        %vm7922 = vcmp.ge.f32.partialorder %v7666, 0.0
        %vm7923 = vcmp.ge.f32.partialorder %v7667, 0.0
        %vm7924 = vcmp.ge.f32.partialorder %v7668, 0.0
        %vm7925 = vcmp.ge.f32.partialorder %v7669, 0.0
        %vm7926 = vcmp.ge.f32.partialorder %v7670, 0.0
        %vm7927 = vcmp.ge.f32.partialorder %v7671, 0.0
        %vm7928 = vcmp.ge.f32.partialorder %v7672, 0.0
        %vm7929 = vcmp.ge.f32.partialorder %v7673, 0.0
        %vm7930 = vcmp.ge.f32.partialorder %v7674, 0.0
        %vm7931 = vcmp.ge.f32.partialorder %v7675, 0.0
        %vm7932 = vcmp.ge.f32.partialorder %v7676, 0.0
        %vm7933 = vcmp.ge.f32.partialorder %v7677, 0.0
        %vm7934 = vcmp.ge.f32.partialorder %v7678, 0.0
        %vm7935 = vcmp.ge.f32.partialorder %v7679, 0.0
        %vm7936 = vcmp.ge.f32.partialorder %v7680, 0.0
        %vm7937 = vcmp.ge.f32.partialorder %v7681, 0.0
        %vm7938 = vcmp.ge.f32.partialorder %v7682, 0.0
        %vm7939 = vcmp.ge.f32.partialorder %v7683, 0.0
        %vm7940 = vcmp.ge.f32.partialorder %v7684, 0.0
        %vm7941 = vcmp.ge.f32.partialorder %v7685, 0.0
        %vm7942 = vcmp.ge.f32.partialorder %v7686, 0.0
        %vm7943 = vcmp.ge.f32.partialorder %v7687, 0.0
        %vm7944 = vcmp.ge.f32.partialorder %v7688, 0.0
        %vm7945 = vcmp.ge.f32.partialorder %v7689, 0.0
        %vm7946 = vcmp.ge.f32.partialorder %v7690, 0.0
        %vm7947 = vcmp.ge.f32.partialorder %v7691, 0.0
        %vm7948 = vcmp.ge.f32.partialorder %v7692, 0.0
        %vm7949 = vcmp.ge.f32.partialorder %v7693, 0.0
        %vm7950 = vcmp.ge.f32.partialorder %v7694, 0.0
        %vm7951 = vcmp.ge.f32.partialorder %v7695, 0.0
        %vm7952 = vcmp.ge.f32.partialorder %v7696, 0.0
        %vm7953 = vcmp.ge.f32.partialorder %v7697, 0.0
        %vm7954 = vcmp.ge.f32.partialorder %v7698, 0.0
        %vm7955 = vcmp.ge.f32.partialorder %v7699, 0.0
        %vm7956 = vcmp.ge.f32.partialorder %v7700, 0.0
        %vm7957 = vcmp.ge.f32.partialorder %v7701, 0.0
        %vm7958 = vcmp.ge.f32.partialorder %v7702, 0.0
        %vm7959 = vcmp.ge.f32.partialorder %v7703, 0.0
        %vm7960 = vcmp.ge.f32.partialorder %v7704, 0.0
        %vm7961 = vcmp.ge.f32.partialorder %v7705, 0.0
        %vm7962 = vcmp.ge.f32.partialorder %v7706, 0.0
        %vm7963 = vcmp.ge.f32.partialorder %v7707, 0.0
        %vm7964 = vcmp.ge.f32.partialorder %v7708, 0.0
        %vm7965 = vcmp.ge.f32.partialorder %v7709, 0.0
        %vm7966 = vcmp.ge.f32.partialorder %v7710, 0.0
        %vm7967 = vcmp.ge.f32.partialorder %v7711, 0.0
        %vm7968 = vcmp.ge.f32.partialorder %v7712, 0.0
        %vm7969 = vcmp.ge.f32.partialorder %v7713, 0.0
        %vm7970 = vcmp.ge.f32.partialorder %v7714, 0.0
        %vm7971 = vcmp.ge.f32.partialorder %v7715, 0.0
        %vm7972 = vcmp.ge.f32.partialorder %v7716, 0.0
        %vm7973 = vcmp.ge.f32.partialorder %v7717, 0.0
        %vm7974 = vcmp.ge.f32.partialorder %v7718, 0.0
        %vm7975 = vcmp.ge.f32.partialorder %v7719, 0.0
        %vm7976 = vcmp.ge.f32.partialorder %v7720, 0.0
        %vm7977 = vcmp.ge.f32.partialorder %v7721, 0.0
        %vm7978 = vcmp.ge.f32.partialorder %v7722, 0.0
        %vm7979 = vcmp.ge.f32.partialorder %v7723, 0.0
        %vm7980 = vcmp.ge.f32.partialorder %v7724, 0.0
        %vm7981 = vcmp.ge.f32.partialorder %v7725, 0.0
        %vm7982 = vcmp.ge.f32.partialorder %v7726, 0.0
        %vm7983 = vcmp.ge.f32.partialorder %v7727, 0.0
        %vm7984 = vcmp.ge.f32.partialorder %v7728, 0.0
        %vm7985 = vcmp.ge.f32.partialorder %v7729, 0.0
        %vm7986 = vcmp.ge.f32.partialorder %v7730, 0.0
        %vm7987 = vcmp.ge.f32.partialorder %v7731, 0.0
        %vm7988 = vcmp.ge.f32.partialorder %v7732, 0.0
        %vm7989 = vcmp.ge.f32.partialorder %v7733, 0.0
        %vm7990 = vcmp.ge.f32.partialorder %v7734, 0.0
        %vm7991 = vcmp.ge.f32.partialorder %v7735, 0.0
        %vm7992 = vcmp.ge.f32.partialorder %v7736, 0.0
        %vm7993 = vcmp.ge.f32.partialorder %v7737, 0.0
        %vm7994 = vcmp.ge.f32.partialorder %v7738, 0.0
        %vm7995 = vcmp.ge.f32.partialorder %v7739, 0.0
        %vm7996 = vcmp.ge.f32.partialorder %v7740, 0.0
        %vm7997 = vcmp.ge.f32.partialorder %v7741, 0.0
        %vm7998 = vcmp.ge.f32.partialorder %v7742, 0.0
        %vm7999 = vcmp.ge.f32.partialorder %v7743, 0.0
        %vm8000 = vcmp.ge.f32.partialorder %v7744, 0.0
        %vm8001 = vcmp.ge.f32.partialorder %v7745, 0.0
        %vm8002 = vcmp.ge.f32.partialorder %v7746, 0.0
        %vm8003 = vcmp.ge.f32.partialorder %v7747, 0.0
        %vm8004 = vcmp.ge.f32.partialorder %v7748, 0.0
        %vm8005 = vcmp.ge.f32.partialorder %v7749, 0.0
        %vm8006 = vcmp.ge.f32.partialorder %v7750, 0.0
        %vm8007 = vcmp.ge.f32.partialorder %v7751, 0.0
        %vm8008 = vcmp.ge.f32.partialorder %v7752, 0.0
        %vm8009 = vcmp.ge.f32.partialorder %v7753, 0.0
        %vm8010 = vcmp.ge.f32.partialorder %v7754, 0.0
        %vm8011 = vcmp.ge.f32.partialorder %v7755, 0.0
        %vm8012 = vcmp.ge.f32.partialorder %v7756, 0.0
        %vm8013 = vcmp.ge.f32.partialorder %v7757, 0.0
        %v8014 = vmul.f32 %v7502, 0.1
        %v8015 = vmul.f32 %v7503, 0.1
        %v8016 = vmul.f32 %v7504, 0.1
        %v8017 = vmul.f32 %v7505, 0.1
        %v8018 = vmul.f32 %v7506, 0.1
        %v8019 = vmul.f32 %v7507, 0.1
        %v8020 = vmul.f32 %v7508, 0.1
        %v8021 = vmul.f32 %v7509, 0.1
        %v8022 = vmul.f32 %v7510, 0.1
        %v8023 = vmul.f32 %v7511, 0.1
        %v8024 = vmul.f32 %v7512, 0.1
        %v8025 = vmul.f32 %v7513, 0.1
        %v8026 = vmul.f32 %v7514, 0.1
        %v8027 = vmul.f32 %v7515, 0.1
        %v8028 = vmul.f32 %v7516, 0.1
        %v8029 = vmul.f32 %v7517, 0.1
        %v8030 = vmul.f32 %v7518, 0.1
        %v8031 = vmul.f32 %v7519, 0.1
        %v8032 = vmul.f32 %v7520, 0.1
        %v8033 = vmul.f32 %v7521, 0.1
        %v8034 = vmul.f32 %v7522, 0.1
        %v8035 = vmul.f32 %v7523, 0.1
        %v8036 = vmul.f32 %v7524, 0.1
        %v8037 = vmul.f32 %v7525, 0.1
        %v8038 = vmul.f32 %v7526, 0.1
        %v8039 = vmul.f32 %v7527, 0.1
        %v8040 = vmul.f32 %v7528, 0.1
        %v8041 = vmul.f32 %v7529, 0.1
        %v8042 = vmul.f32 %v7530, 0.1
        %v8043 = vmul.f32 %v7531, 0.1
        %v8044 = vmul.f32 %v7532, 0.1
        %v8045 = vmul.f32 %v7533, 0.1
        %v8046 = vmul.f32 %v7534, 0.1
        %v8047 = vmul.f32 %v7535, 0.1
        %v8048 = vmul.f32 %v7536, 0.1
        %v8049 = vmul.f32 %v7537, 0.1
        %v8050 = vmul.f32 %v7538, 0.1
        %v8051 = vmul.f32 %v7539, 0.1
        %v8052 = vmul.f32 %v7540, 0.1
        %v8053 = vmul.f32 %v7541, 0.1
        %v8054 = vmul.f32 %v7542, 0.1
        %v8055 = vmul.f32 %v7543, 0.1
        %v8056 = vmul.f32 %v7544, 0.1
        %v8057 = vmul.f32 %v7545, 0.1
        %v8058 = vmul.f32 %v7546, 0.1
        %v8059 = vmul.f32 %v7547, 0.1
        %v8060 = vmul.f32 %v7548, 0.1
        %v8061 = vmul.f32 %v7549, 0.1
        %v8062 = vmul.f32 %v7550, 0.1
        %v8063 = vmul.f32 %v7551, 0.1
        %v8064 = vmul.f32 %v7552, 0.1
        %v8065 = vmul.f32 %v7553, 0.1
        %v8066 = vmul.f32 %v7554, 0.1
        %v8067 = vmul.f32 %v7555, 0.1
        %v8068 = vmul.f32 %v7556, 0.1
        %v8069 = vmul.f32 %v7557, 0.1
        %v8070 = vmul.f32 %v7558, 0.1
        %v8071 = vmul.f32 %v7559, 0.1
        %v8072 = vmul.f32 %v7560, 0.1
        %v8073 = vmul.f32 %v7561, 0.1
        %v8074 = vmul.f32 %v7562, 0.1
        %v8075 = vmul.f32 %v7563, 0.1
        %v8076 = vmul.f32 %v7564, 0.1
        %v8077 = vmul.f32 %v7565, 0.1
        %v8078 = vmul.f32 %v7566, 0.1
        %v8079 = vmul.f32 %v7567, 0.1
        %v8080 = vmul.f32 %v7568, 0.1
        %v8081 = vmul.f32 %v7569, 0.1
        %v8082 = vmul.f32 %v7570, 0.1
        %v8083 = vmul.f32 %v7571, 0.1
        %v8084 = vmul.f32 %v7572, 0.1
        %v8085 = vmul.f32 %v7573, 0.1
        %v8086 = vmul.f32 %v7574, 0.1
        %v8087 = vmul.f32 %v7575, 0.1
        %v8088 = vmul.f32 %v7576, 0.1
        %v8089 = vmul.f32 %v7577, 0.1
        %v8090 = vmul.f32 %v7578, 0.1
        %v8091 = vmul.f32 %v7579, 0.1
        %v8092 = vmul.f32 %v7580, 0.1
        %v8093 = vmul.f32 %v7581, 0.1
        %v8094 = vmul.f32 %v7582, 0.1
        %v8095 = vmul.f32 %v7583, 0.1
        %v8096 = vmul.f32 %v7584, 0.1
        %v8097 = vmul.f32 %v7585, 0.1
        %v8098 = vmul.f32 %v7586, 0.1
        %v8099 = vmul.f32 %v7587, 0.1
        %v8100 = vmul.f32 %v7588, 0.1
        %v8101 = vmul.f32 %v7589, 0.1
        %v8102 = vmul.f32 %v7590, 0.1
        %v8103 = vmul.f32 %v7591, 0.1
        %v8104 = vmul.f32 %v7592, 0.1
        %v8105 = vmul.f32 %v7593, 0.1
        %v8106 = vmul.f32 %v7594, 0.1
        %v8107 = vmul.f32 %v7595, 0.1
        %v8108 = vmul.f32 %v7596, 0.1
        %v8109 = vmul.f32 %v7597, 0.1
        %v8110 = vmul.f32 %v7598, 0.1
        %v8111 = vmul.f32 %v7599, 0.1
        %v8112 = vmul.f32 %v7600, 0.1
        %v8113 = vmul.f32 %v7601, 0.1
        %v8114 = vmul.f32 %v7602, 0.1
        %v8115 = vmul.f32 %v7603, 0.1
        %v8116 = vmul.f32 %v7604, 0.1
        %v8117 = vmul.f32 %v7605, 0.1
        %v8118 = vmul.f32 %v7606, 0.1
        %v8119 = vmul.f32 %v7607, 0.1
        %v8120 = vmul.f32 %v7608, 0.1
        %v8121 = vmul.f32 %v7609, 0.1
        %v8122 = vmul.f32 %v7610, 0.1
        %v8123 = vmul.f32 %v7611, 0.1
        %v8124 = vmul.f32 %v7612, 0.1
        %v8125 = vmul.f32 %v7613, 0.1
        %v8126 = vmul.f32 %v7614, 0.1
        %v8127 = vmul.f32 %v7615, 0.1
        %v8128 = vmul.f32 %v7616, 0.1
        %v8129 = vmul.f32 %v7617, 0.1
        %v8130 = vmul.f32 %v7618, 0.1
        %v8131 = vmul.f32 %v7619, 0.1
        %v8132 = vmul.f32 %v7620, 0.1
        %v8133 = vmul.f32 %v7621, 0.1
        %v8134 = vmul.f32 %v7622, 0.1
        %v8135 = vmul.f32 %v7623, 0.1
        %v8136 = vmul.f32 %v7624, 0.1
        %v8137 = vmul.f32 %v7625, 0.1
        %v8138 = vmul.f32 %v7626, 0.1
        %v8139 = vmul.f32 %v7627, 0.1
        %v8140 = vmul.f32 %v7628, 0.1
        %v8141 = vmul.f32 %v7629, 0.1
        %v8142 = vmul.f32 %v7630, 0.1
        %v8143 = vmul.f32 %v7631, 0.1
        %v8144 = vmul.f32 %v7632, 0.1
        %v8145 = vmul.f32 %v7633, 0.1
        %v8146 = vmul.f32 %v7634, 0.1
        %v8147 = vmul.f32 %v7635, 0.1
        %v8148 = vmul.f32 %v7636, 0.1
        %v8149 = vmul.f32 %v7637, 0.1
        %v8150 = vmul.f32 %v7638, 0.1
        %v8151 = vmul.f32 %v7639, 0.1
        %v8152 = vmul.f32 %v7640, 0.1
        %v8153 = vmul.f32 %v7641, 0.1
        %v8154 = vmul.f32 %v7642, 0.1
        %v8155 = vmul.f32 %v7643, 0.1
        %v8156 = vmul.f32 %v7644, 0.1
        %v8157 = vmul.f32 %v7645, 0.1
        %v8158 = vmul.f32 %v7646, 0.1
        %v8159 = vmul.f32 %v7647, 0.1
        %v8160 = vmul.f32 %v7648, 0.1
        %v8161 = vmul.f32 %v7649, 0.1
        %v8162 = vmul.f32 %v7650, 0.1
        %v8163 = vmul.f32 %v7651, 0.1
        %v8164 = vmul.f32 %v7652, 0.1
        %v8165 = vmul.f32 %v7653, 0.1
        %v8166 = vmul.f32 %v7654, 0.1
        %v8167 = vmul.f32 %v7655, 0.1
        %v8168 = vmul.f32 %v7656, 0.1
        %v8169 = vmul.f32 %v7657, 0.1
        %v8170 = vmul.f32 %v7658, 0.1
        %v8171 = vmul.f32 %v7659, 0.1
        %v8172 = vmul.f32 %v7660, 0.1
        %v8173 = vmul.f32 %v7661, 0.1
        %v8174 = vmul.f32 %v7662, 0.1
        %v8175 = vmul.f32 %v7663, 0.1
        %v8176 = vmul.f32 %v7664, 0.1
        %v8177 = vmul.f32 %v7665, 0.1
        %v8178 = vmul.f32 %v7666, 0.1
        %v8179 = vmul.f32 %v7667, 0.1
        %v8180 = vmul.f32 %v7668, 0.1
        %v8181 = vmul.f32 %v7669, 0.1
        %v8182 = vmul.f32 %v7670, 0.1
        %v8183 = vmul.f32 %v7671, 0.1
        %v8184 = vmul.f32 %v7672, 0.1
        %v8185 = vmul.f32 %v7673, 0.1
        %v8186 = vmul.f32 %v7674, 0.1
        %v8187 = vmul.f32 %v7675, 0.1
        %v8188 = vmul.f32 %v7676, 0.1
        %v8189 = vmul.f32 %v7677, 0.1
        %v8190 = vmul.f32 %v7678, 0.1
        %v8191 = vmul.f32 %v7679, 0.1
        %v8192 = vmul.f32 %v7680, 0.1
        %v8193 = vmul.f32 %v7681, 0.1
        %v8194 = vmul.f32 %v7682, 0.1
        %v8195 = vmul.f32 %v7683, 0.1
        %v8196 = vmul.f32 %v7684, 0.1
        %v8197 = vmul.f32 %v7685, 0.1
        %v8198 = vmul.f32 %v7686, 0.1
        %v8199 = vmul.f32 %v7687, 0.1
        %v8200 = vmul.f32 %v7688, 0.1
        %v8201 = vmul.f32 %v7689, 0.1
        %v8202 = vmul.f32 %v7690, 0.1
        %v8203 = vmul.f32 %v7691, 0.1
        %v8204 = vmul.f32 %v7692, 0.1
        %v8205 = vmul.f32 %v7693, 0.1
        %v8206 = vmul.f32 %v7694, 0.1
        %v8207 = vmul.f32 %v7695, 0.1
        %v8208 = vmul.f32 %v7696, 0.1
        %v8209 = vmul.f32 %v7697, 0.1
        %v8210 = vmul.f32 %v7698, 0.1
        %v8211 = vmul.f32 %v7699, 0.1
        %v8212 = vmul.f32 %v7700, 0.1
        %v8213 = vmul.f32 %v7701, 0.1
        %v8214 = vmul.f32 %v7702, 0.1
        %v8215 = vmul.f32 %v7703, 0.1
        %v8216 = vmul.f32 %v7704, 0.1
        %v8217 = vmul.f32 %v7705, 0.1
        %v8218 = vmul.f32 %v7706, 0.1
        %v8219 = vmul.f32 %v7707, 0.1
        %v8220 = vmul.f32 %v7708, 0.1
        %v8221 = vmul.f32 %v7709, 0.1
        %v8222 = vmul.f32 %v7710, 0.1
        %v8223 = vmul.f32 %v7711, 0.1
        %v8224 = vmul.f32 %v7712, 0.1
        %v8225 = vmul.f32 %v7713, 0.1
        %v8226 = vmul.f32 %v7714, 0.1
        %v8227 = vmul.f32 %v7715, 0.1
        %v8228 = vmul.f32 %v7716, 0.1
        %v8229 = vmul.f32 %v7717, 0.1
        %v8230 = vmul.f32 %v7718, 0.1
        %v8231 = vmul.f32 %v7719, 0.1
        %v8232 = vmul.f32 %v7720, 0.1
        %v8233 = vmul.f32 %v7721, 0.1
        %v8234 = vmul.f32 %v7722, 0.1
        %v8235 = vmul.f32 %v7723, 0.1
        %v8236 = vmul.f32 %v7724, 0.1
        %v8237 = vmul.f32 %v7725, 0.1
        %v8238 = vmul.f32 %v7726, 0.1
        %v8239 = vmul.f32 %v7727, 0.1
        %v8240 = vmul.f32 %v7728, 0.1
        %v8241 = vmul.f32 %v7729, 0.1
        %v8242 = vmul.f32 %v7730, 0.1
        %v8243 = vmul.f32 %v7731, 0.1
        %v8244 = vmul.f32 %v7732, 0.1
        %v8245 = vmul.f32 %v7733, 0.1
        %v8246 = vmul.f32 %v7734, 0.1
        %v8247 = vmul.f32 %v7735, 0.1
        %v8248 = vmul.f32 %v7736, 0.1
        %v8249 = vmul.f32 %v7737, 0.1
        %v8250 = vmul.f32 %v7738, 0.1
        %v8251 = vmul.f32 %v7739, 0.1
        %v8252 = vmul.f32 %v7740, 0.1
        %v8253 = vmul.f32 %v7741, 0.1
        %v8254 = vmul.f32 %v7742, 0.1
        %v8255 = vmul.f32 %v7743, 0.1
        %v8256 = vmul.f32 %v7744, 0.1
        %v8257 = vmul.f32 %v7745, 0.1
        %v8258 = vmul.f32 %v7746, 0.1
        %v8259 = vmul.f32 %v7747, 0.1
        %v8260 = vmul.f32 %v7748, 0.1
        %v8261 = vmul.f32 %v7749, 0.1
        %v8262 = vmul.f32 %v7750, 0.1
        %v8263 = vmul.f32 %v7751, 0.1
        %v8264 = vmul.f32 %v7752, 0.1
        %v8265 = vmul.f32 %v7753, 0.1
        %v8266 = vmul.f32 %v7754, 0.1
        %v8267 = vmul.f32 %v7755, 0.1
        %v8268 = vmul.f32 %v7756, 0.1
        %v8269 = vmul.f32 %v7757, 0.1
        %v8270 = vsel %vm7758, %v7502, %v8014
        %v8271 = vsel %vm7759, %v7503, %v8015
        %v8272 = vsel %vm7760, %v7504, %v8016
        %v8273 = vsel %vm7761, %v7505, %v8017
        %v8274 = vsel %vm7762, %v7506, %v8018
        %v8275 = vsel %vm7763, %v7507, %v8019
        %v8276 = vsel %vm7764, %v7508, %v8020
        %v8277 = vsel %vm7765, %v7509, %v8021
        %v8278 = vsel %vm7766, %v7510, %v8022
        %v8279 = vsel %vm7767, %v7511, %v8023
        %v8280 = vsel %vm7768, %v7512, %v8024
        %v8281 = vsel %vm7769, %v7513, %v8025
        %v8282 = vsel %vm7770, %v7514, %v8026
        %v8283 = vsel %vm7771, %v7515, %v8027
        %v8284 = vsel %vm7772, %v7516, %v8028
        %v8285 = vsel %vm7773, %v7517, %v8029
        %v8286 = vsel %vm7774, %v7518, %v8030
        %v8287 = vsel %vm7775, %v7519, %v8031
        %v8288 = vsel %vm7776, %v7520, %v8032
        %v8289 = vsel %vm7777, %v7521, %v8033
        %v8290 = vsel %vm7778, %v7522, %v8034
        %v8291 = vsel %vm7779, %v7523, %v8035
        %v8292 = vsel %vm7780, %v7524, %v8036
        %v8293 = vsel %vm7781, %v7525, %v8037
        %v8294 = vsel %vm7782, %v7526, %v8038
        %v8295 = vsel %vm7783, %v7527, %v8039
        %v8296 = vsel %vm7784, %v7528, %v8040
        %v8297 = vsel %vm7785, %v7529, %v8041
        %v8298 = vsel %vm7786, %v7530, %v8042
        %v8299 = vsel %vm7787, %v7531, %v8043
        %v8300 = vsel %vm7788, %v7532, %v8044
        %v8301 = vsel %vm7789, %v7533, %v8045
        %v8302 = vsel %vm7790, %v7534, %v8046
        %v8303 = vsel %vm7791, %v7535, %v8047
        %v8304 = vsel %vm7792, %v7536, %v8048
        %v8305 = vsel %vm7793, %v7537, %v8049
        %v8306 = vsel %vm7794, %v7538, %v8050
        %v8307 = vsel %vm7795, %v7539, %v8051
        %v8308 = vsel %vm7796, %v7540, %v8052
        %v8309 = vsel %vm7797, %v7541, %v8053
        %v8310 = vsel %vm7798, %v7542, %v8054
        %v8311 = vsel %vm7799, %v7543, %v8055
        %v8312 = vsel %vm7800, %v7544, %v8056
        %v8313 = vsel %vm7801, %v7545, %v8057
        %v8314 = vsel %vm7802, %v7546, %v8058
        %v8315 = vsel %vm7803, %v7547, %v8059
        %v8316 = vsel %vm7804, %v7548, %v8060
        %v8317 = vsel %vm7805, %v7549, %v8061
        %v8318 = vsel %vm7806, %v7550, %v8062
        %v8319 = vsel %vm7807, %v7551, %v8063
        %v8320 = vsel %vm7808, %v7552, %v8064
        %v8321 = vsel %vm7809, %v7553, %v8065
        %v8322 = vsel %vm7810, %v7554, %v8066
        %v8323 = vsel %vm7811, %v7555, %v8067
        %v8324 = vsel %vm7812, %v7556, %v8068
        %v8325 = vsel %vm7813, %v7557, %v8069
        %v8326 = vsel %vm7814, %v7558, %v8070
        %v8327 = vsel %vm7815, %v7559, %v8071
        %v8328 = vsel %vm7816, %v7560, %v8072
        %v8329 = vsel %vm7817, %v7561, %v8073
        %v8330 = vsel %vm7818, %v7562, %v8074
        %v8331 = vsel %vm7819, %v7563, %v8075
        %v8332 = vsel %vm7820, %v7564, %v8076
        %v8333 = vsel %vm7821, %v7565, %v8077
        %v8334 = vsel %vm7822, %v7566, %v8078
        %v8335 = vsel %vm7823, %v7567, %v8079
        %v8336 = vsel %vm7824, %v7568, %v8080
        %v8337 = vsel %vm7825, %v7569, %v8081
        %v8338 = vsel %vm7826, %v7570, %v8082
        %v8339 = vsel %vm7827, %v7571, %v8083
        %v8340 = vsel %vm7828, %v7572, %v8084
        %v8341 = vsel %vm7829, %v7573, %v8085
        %v8342 = vsel %vm7830, %v7574, %v8086
        %v8343 = vsel %vm7831, %v7575, %v8087
        %v8344 = vsel %vm7832, %v7576, %v8088
        %v8345 = vsel %vm7833, %v7577, %v8089
        %v8346 = vsel %vm7834, %v7578, %v8090
        %v8347 = vsel %vm7835, %v7579, %v8091
        %v8348 = vsel %vm7836, %v7580, %v8092
        %v8349 = vsel %vm7837, %v7581, %v8093
        %v8350 = vsel %vm7838, %v7582, %v8094
        %v8351 = vsel %vm7839, %v7583, %v8095
        %v8352 = vsel %vm7840, %v7584, %v8096
        %v8353 = vsel %vm7841, %v7585, %v8097
        %v8354 = vsel %vm7842, %v7586, %v8098
        %v8355 = vsel %vm7843, %v7587, %v8099
        %v8356 = vsel %vm7844, %v7588, %v8100
        %v8357 = vsel %vm7845, %v7589, %v8101
        %v8358 = vsel %vm7846, %v7590, %v8102
        %v8359 = vsel %vm7847, %v7591, %v8103
        %v8360 = vsel %vm7848, %v7592, %v8104
        %v8361 = vsel %vm7849, %v7593, %v8105
        %v8362 = vsel %vm7850, %v7594, %v8106
        %v8363 = vsel %vm7851, %v7595, %v8107
        %v8364 = vsel %vm7852, %v7596, %v8108
        %v8365 = vsel %vm7853, %v7597, %v8109
        %v8366 = vsel %vm7854, %v7598, %v8110
        %v8367 = vsel %vm7855, %v7599, %v8111
        %v8368 = vsel %vm7856, %v7600, %v8112
        %v8369 = vsel %vm7857, %v7601, %v8113
        %v8370 = vsel %vm7858, %v7602, %v8114
        %v8371 = vsel %vm7859, %v7603, %v8115
        %v8372 = vsel %vm7860, %v7604, %v8116
        %v8373 = vsel %vm7861, %v7605, %v8117
        %v8374 = vsel %vm7862, %v7606, %v8118
        %v8375 = vsel %vm7863, %v7607, %v8119
        %v8376 = vsel %vm7864, %v7608, %v8120
        %v8377 = vsel %vm7865, %v7609, %v8121
        %v8378 = vsel %vm7866, %v7610, %v8122
        %v8379 = vsel %vm7867, %v7611, %v8123
        %v8380 = vsel %vm7868, %v7612, %v8124
        %v8381 = vsel %vm7869, %v7613, %v8125
        %v8382 = vsel %vm7870, %v7614, %v8126
        %v8383 = vsel %vm7871, %v7615, %v8127
        %v8384 = vsel %vm7872, %v7616, %v8128
        %v8385 = vsel %vm7873, %v7617, %v8129
        %v8386 = vsel %vm7874, %v7618, %v8130
        %v8387 = vsel %vm7875, %v7619, %v8131
        %v8388 = vsel %vm7876, %v7620, %v8132
        %v8389 = vsel %vm7877, %v7621, %v8133
        %v8390 = vsel %vm7878, %v7622, %v8134
        %v8391 = vsel %vm7879, %v7623, %v8135
        %v8392 = vsel %vm7880, %v7624, %v8136
        %v8393 = vsel %vm7881, %v7625, %v8137
        %v8394 = vsel %vm7882, %v7626, %v8138
        %v8395 = vsel %vm7883, %v7627, %v8139
        %v8396 = vsel %vm7884, %v7628, %v8140
        %v8397 = vsel %vm7885, %v7629, %v8141
        %v8398 = vsel %vm7886, %v7630, %v8142
        %v8399 = vsel %vm7887, %v7631, %v8143
        %v8400 = vsel %vm7888, %v7632, %v8144
        %v8401 = vsel %vm7889, %v7633, %v8145
        %v8402 = vsel %vm7890, %v7634, %v8146
        %v8403 = vsel %vm7891, %v7635, %v8147
        %v8404 = vsel %vm7892, %v7636, %v8148
        %v8405 = vsel %vm7893, %v7637, %v8149
        %v8406 = vsel %vm7894, %v7638, %v8150
        %v8407 = vsel %vm7895, %v7639, %v8151
        %v8408 = vsel %vm7896, %v7640, %v8152
        %v8409 = vsel %vm7897, %v7641, %v8153
        %v8410 = vsel %vm7898, %v7642, %v8154
        %v8411 = vsel %vm7899, %v7643, %v8155
        %v8412 = vsel %vm7900, %v7644, %v8156
        %v8413 = vsel %vm7901, %v7645, %v8157
        %v8414 = vsel %vm7902, %v7646, %v8158
        %v8415 = vsel %vm7903, %v7647, %v8159
        %v8416 = vsel %vm7904, %v7648, %v8160
        %v8417 = vsel %vm7905, %v7649, %v8161
        %v8418 = vsel %vm7906, %v7650, %v8162
        %v8419 = vsel %vm7907, %v7651, %v8163
        %v8420 = vsel %vm7908, %v7652, %v8164
        %v8421 = vsel %vm7909, %v7653, %v8165
        %v8422 = vsel %vm7910, %v7654, %v8166
        %v8423 = vsel %vm7911, %v7655, %v8167
        %v8424 = vsel %vm7912, %v7656, %v8168
        %v8425 = vsel %vm7913, %v7657, %v8169
        %v8426 = vsel %vm7914, %v7658, %v8170
        %v8427 = vsel %vm7915, %v7659, %v8171
        %v8428 = vsel %vm7916, %v7660, %v8172
        %v8429 = vsel %vm7917, %v7661, %v8173
        %v8430 = vsel %vm7918, %v7662, %v8174
        %v8431 = vsel %vm7919, %v7663, %v8175
        %v8432 = vsel %vm7920, %v7664, %v8176
        %v8433 = vsel %vm7921, %v7665, %v8177
        %v8434 = vsel %vm7922, %v7666, %v8178
        %v8435 = vsel %vm7923, %v7667, %v8179
        %v8436 = vsel %vm7924, %v7668, %v8180
        %v8437 = vsel %vm7925, %v7669, %v8181
        %v8438 = vsel %vm7926, %v7670, %v8182
        %v8439 = vsel %vm7927, %v7671, %v8183
        %v8440 = vsel %vm7928, %v7672, %v8184
        %v8441 = vsel %vm7929, %v7673, %v8185
        %v8442 = vsel %vm7930, %v7674, %v8186
        %v8443 = vsel %vm7931, %v7675, %v8187
        %v8444 = vsel %vm7932, %v7676, %v8188
        %v8445 = vsel %vm7933, %v7677, %v8189
        %v8446 = vsel %vm7934, %v7678, %v8190
        %v8447 = vsel %vm7935, %v7679, %v8191
        %v8448 = vsel %vm7936, %v7680, %v8192
        %v8449 = vsel %vm7937, %v7681, %v8193
        %v8450 = vsel %vm7938, %v7682, %v8194
        %v8451 = vsel %vm7939, %v7683, %v8195
        %v8452 = vsel %vm7940, %v7684, %v8196
        %v8453 = vsel %vm7941, %v7685, %v8197
        %v8454 = vsel %vm7942, %v7686, %v8198
        %v8455 = vsel %vm7943, %v7687, %v8199
        %v8456 = vsel %vm7944, %v7688, %v8200
        %v8457 = vsel %vm7945, %v7689, %v8201
        %v8458 = vsel %vm7946, %v7690, %v8202
        %v8459 = vsel %vm7947, %v7691, %v8203
        %v8460 = vsel %vm7948, %v7692, %v8204
        %v8461 = vsel %vm7949, %v7693, %v8205
        %v8462 = vsel %vm7950, %v7694, %v8206
        %v8463 = vsel %vm7951, %v7695, %v8207
        %v8464 = vsel %vm7952, %v7696, %v8208
        %v8465 = vsel %vm7953, %v7697, %v8209
        %v8466 = vsel %vm7954, %v7698, %v8210
        %v8467 = vsel %vm7955, %v7699, %v8211
        %v8468 = vsel %vm7956, %v7700, %v8212
        %v8469 = vsel %vm7957, %v7701, %v8213
        %v8470 = vsel %vm7958, %v7702, %v8214
        %v8471 = vsel %vm7959, %v7703, %v8215
        %v8472 = vsel %vm7960, %v7704, %v8216
        %v8473 = vsel %vm7961, %v7705, %v8217
        %v8474 = vsel %vm7962, %v7706, %v8218
        %v8475 = vsel %vm7963, %v7707, %v8219
        %v8476 = vsel %vm7964, %v7708, %v8220
        %v8477 = vsel %vm7965, %v7709, %v8221
        %v8478 = vsel %vm7966, %v7710, %v8222
        %v8479 = vsel %vm7967, %v7711, %v8223
        %v8480 = vsel %vm7968, %v7712, %v8224
        %v8481 = vsel %vm7969, %v7713, %v8225
        %v8482 = vsel %vm7970, %v7714, %v8226
        %v8483 = vsel %vm7971, %v7715, %v8227
        %v8484 = vsel %vm7972, %v7716, %v8228
        %v8485 = vsel %vm7973, %v7717, %v8229
        %v8486 = vsel %vm7974, %v7718, %v8230
        %v8487 = vsel %vm7975, %v7719, %v8231
        %v8488 = vsel %vm7976, %v7720, %v8232
        %v8489 = vsel %vm7977, %v7721, %v8233
        %v8490 = vsel %vm7978, %v7722, %v8234
        %v8491 = vsel %vm7979, %v7723, %v8235
        %v8492 = vsel %vm7980, %v7724, %v8236
        %v8493 = vsel %vm7981, %v7725, %v8237
        %v8494 = vsel %vm7982, %v7726, %v8238
        %v8495 = vsel %vm7983, %v7727, %v8239
        %v8496 = vsel %vm7984, %v7728, %v8240
        %v8497 = vsel %vm7985, %v7729, %v8241
        %v8498 = vsel %vm7986, %v7730, %v8242
        %v8499 = vsel %vm7987, %v7731, %v8243
        %v8500 = vsel %vm7988, %v7732, %v8244
        %v8501 = vsel %vm7989, %v7733, %v8245
        %v8502 = vsel %vm7990, %v7734, %v8246
        %v8503 = vsel %vm7991, %v7735, %v8247
        %v8504 = vsel %vm7992, %v7736, %v8248
        %v8505 = vsel %vm7993, %v7737, %v8249
        %v8506 = vsel %vm7994, %v7738, %v8250
        %v8507 = vsel %vm7995, %v7739, %v8251
        %v8508 = vsel %vm7996, %v7740, %v8252
        %v8509 = vsel %vm7997, %v7741, %v8253
        %v8510 = vsel %vm7998, %v7742, %v8254
        %v8511 = vsel %vm7999, %v7743, %v8255
        %v8512 = vsel %vm8000, %v7744, %v8256
        %v8513 = vsel %vm8001, %v7745, %v8257
        %v8514 = vsel %vm8002, %v7746, %v8258
        %v8515 = vsel %vm8003, %v7747, %v8259
        %v8516 = vsel %vm8004, %v7748, %v8260
        %v8517 = vsel %vm8005, %v7749, %v8261
        %v8518 = vsel %vm8006, %v7750, %v8262
        %v8519 = vsel %vm8007, %v7751, %v8263
        %v8520 = vsel %vm8008, %v7752, %v8264
        %v8521 = vsel %vm8009, %v7753, %v8265
        %v8522 = vsel %vm8010, %v7754, %v8266
        %v8523 = vsel %vm8011, %v7755, %v8267
        %v8524 = vsel %vm8012, %v7756, %v8268
        %v8525 = vsel %vm8013, %v7757, %v8269
        %v8526 = vpack.c.bf16 %v8270, %v8270
        %v8527 = vpack.c.bf16 %v8271, %v8271
        %v8528 = vpack.c.bf16 %v8272, %v8272
        %v8529 = vpack.c.bf16 %v8273, %v8273
        %v8530 = vpack.c.bf16 %v8274, %v8274
        %v8531 = vpack.c.bf16 %v8275, %v8275
        %v8532 = vpack.c.bf16 %v8276, %v8276
        %v8533 = vpack.c.bf16 %v8277, %v8277
        %v8534 = vpack.c.bf16 %v8278, %v8278
        %v8535 = vpack.c.bf16 %v8279, %v8279
        %v8536 = vpack.c.bf16 %v8280, %v8280
        %v8537 = vpack.c.bf16 %v8281, %v8281
        %v8538 = vpack.c.bf16 %v8282, %v8282
        %v8539 = vpack.c.bf16 %v8283, %v8283
        %v8540 = vpack.c.bf16 %v8284, %v8284
        %v8541 = vpack.c.bf16 %v8285, %v8285
        %v8542 = vpack.c.bf16 %v8286, %v8286
        %v8543 = vpack.c.bf16 %v8287, %v8287
        %v8544 = vpack.c.bf16 %v8288, %v8288
        %v8545 = vpack.c.bf16 %v8289, %v8289
        %v8546 = vpack.c.bf16 %v8290, %v8290
        %v8547 = vpack.c.bf16 %v8291, %v8291
        %v8548 = vpack.c.bf16 %v8292, %v8292
        %v8549 = vpack.c.bf16 %v8293, %v8293
        %v8550 = vpack.c.bf16 %v8294, %v8294
        %v8551 = vpack.c.bf16 %v8295, %v8295
        %v8552 = vpack.c.bf16 %v8296, %v8296
        %v8553 = vpack.c.bf16 %v8297, %v8297
        %v8554 = vpack.c.bf16 %v8298, %v8298
        %v8555 = vpack.c.bf16 %v8299, %v8299
        %v8556 = vpack.c.bf16 %v8300, %v8300
        %v8557 = vpack.c.bf16 %v8301, %v8301
        %v8558 = vpack.c.bf16 %v8302, %v8302
        %v8559 = vpack.c.bf16 %v8303, %v8303
        %v8560 = vpack.c.bf16 %v8304, %v8304
        %v8561 = vpack.c.bf16 %v8305, %v8305
        %v8562 = vpack.c.bf16 %v8306, %v8306
        %v8563 = vpack.c.bf16 %v8307, %v8307
        %v8564 = vpack.c.bf16 %v8308, %v8308
        %v8565 = vpack.c.bf16 %v8309, %v8309
        %v8566 = vpack.c.bf16 %v8310, %v8310
        %v8567 = vpack.c.bf16 %v8311, %v8311
        %v8568 = vpack.c.bf16 %v8312, %v8312
        %v8569 = vpack.c.bf16 %v8313, %v8313
        %v8570 = vpack.c.bf16 %v8314, %v8314
        %v8571 = vpack.c.bf16 %v8315, %v8315
        %v8572 = vpack.c.bf16 %v8316, %v8316
        %v8573 = vpack.c.bf16 %v8317, %v8317
        %v8574 = vpack.c.bf16 %v8318, %v8318
        %v8575 = vpack.c.bf16 %v8319, %v8319
        %v8576 = vpack.c.bf16 %v8320, %v8320
        %v8577 = vpack.c.bf16 %v8321, %v8321
        %v8578 = vpack.c.bf16 %v8322, %v8322
        %v8579 = vpack.c.bf16 %v8323, %v8323
        %v8580 = vpack.c.bf16 %v8324, %v8324
        %v8581 = vpack.c.bf16 %v8325, %v8325
        %v8582 = vpack.c.bf16 %v8326, %v8326
        %v8583 = vpack.c.bf16 %v8327, %v8327
        %v8584 = vpack.c.bf16 %v8328, %v8328
        %v8585 = vpack.c.bf16 %v8329, %v8329
        %v8586 = vpack.c.bf16 %v8330, %v8330
        %v8587 = vpack.c.bf16 %v8331, %v8331
        %v8588 = vpack.c.bf16 %v8332, %v8332
        %v8589 = vpack.c.bf16 %v8333, %v8333
        %v8590 = vpack.c.bf16 %v8334, %v8334
        %v8591 = vpack.c.bf16 %v8335, %v8335
        %v8592 = vpack.c.bf16 %v8336, %v8336
        %v8593 = vpack.c.bf16 %v8337, %v8337
        %v8594 = vpack.c.bf16 %v8338, %v8338
        %v8595 = vpack.c.bf16 %v8339, %v8339
        %v8596 = vpack.c.bf16 %v8340, %v8340
        %v8597 = vpack.c.bf16 %v8341, %v8341
        %v8598 = vpack.c.bf16 %v8342, %v8342
        %v8599 = vpack.c.bf16 %v8343, %v8343
        %v8600 = vpack.c.bf16 %v8344, %v8344
        %v8601 = vpack.c.bf16 %v8345, %v8345
        %v8602 = vpack.c.bf16 %v8346, %v8346
        %v8603 = vpack.c.bf16 %v8347, %v8347
        %v8604 = vpack.c.bf16 %v8348, %v8348
        %v8605 = vpack.c.bf16 %v8349, %v8349
        %v8606 = vpack.c.bf16 %v8350, %v8350
        %v8607 = vpack.c.bf16 %v8351, %v8351
        %v8608 = vpack.c.bf16 %v8352, %v8352
        %v8609 = vpack.c.bf16 %v8353, %v8353
        %v8610 = vpack.c.bf16 %v8354, %v8354
        %v8611 = vpack.c.bf16 %v8355, %v8355
        %v8612 = vpack.c.bf16 %v8356, %v8356
        %v8613 = vpack.c.bf16 %v8357, %v8357
        %v8614 = vpack.c.bf16 %v8358, %v8358
        %v8615 = vpack.c.bf16 %v8359, %v8359
        %v8616 = vpack.c.bf16 %v8360, %v8360
        %v8617 = vpack.c.bf16 %v8361, %v8361
        %v8618 = vpack.c.bf16 %v8362, %v8362
        %v8619 = vpack.c.bf16 %v8363, %v8363
        %v8620 = vpack.c.bf16 %v8364, %v8364
        %v8621 = vpack.c.bf16 %v8365, %v8365
        %v8622 = vpack.c.bf16 %v8366, %v8366
        %v8623 = vpack.c.bf16 %v8367, %v8367
        %v8624 = vpack.c.bf16 %v8368, %v8368
        %v8625 = vpack.c.bf16 %v8369, %v8369
        %v8626 = vpack.c.bf16 %v8370, %v8370
        %v8627 = vpack.c.bf16 %v8371, %v8371
        %v8628 = vpack.c.bf16 %v8372, %v8372
        %v8629 = vpack.c.bf16 %v8373, %v8373
        %v8630 = vpack.c.bf16 %v8374, %v8374
        %v8631 = vpack.c.bf16 %v8375, %v8375
        %v8632 = vpack.c.bf16 %v8376, %v8376
        %v8633 = vpack.c.bf16 %v8377, %v8377
        %v8634 = vpack.c.bf16 %v8378, %v8378
        %v8635 = vpack.c.bf16 %v8379, %v8379
        %v8636 = vpack.c.bf16 %v8380, %v8380
        %v8637 = vpack.c.bf16 %v8381, %v8381
        %v8638 = vpack.c.bf16 %v8382, %v8382
        %v8639 = vpack.c.bf16 %v8383, %v8383
        %v8640 = vpack.c.bf16 %v8384, %v8384
        %v8641 = vpack.c.bf16 %v8385, %v8385
        %v8642 = vpack.c.bf16 %v8386, %v8386
        %v8643 = vpack.c.bf16 %v8387, %v8387
        %v8644 = vpack.c.bf16 %v8388, %v8388
        %v8645 = vpack.c.bf16 %v8389, %v8389
        %v8646 = vpack.c.bf16 %v8390, %v8390
        %v8647 = vpack.c.bf16 %v8391, %v8391
        %v8648 = vpack.c.bf16 %v8392, %v8392
        %v8649 = vpack.c.bf16 %v8393, %v8393
        %v8650 = vpack.c.bf16 %v8394, %v8394
        %v8651 = vpack.c.bf16 %v8395, %v8395
        %v8652 = vpack.c.bf16 %v8396, %v8396
        %v8653 = vpack.c.bf16 %v8397, %v8397
        %v8654 = vpack.c.bf16 %v8398, %v8398
        %v8655 = vpack.c.bf16 %v8399, %v8399
        %v8656 = vpack.c.bf16 %v8400, %v8400
        %v8657 = vpack.c.bf16 %v8401, %v8401
        %v8658 = vpack.c.bf16 %v8402, %v8402
        %v8659 = vpack.c.bf16 %v8403, %v8403
        %v8660 = vpack.c.bf16 %v8404, %v8404
        %v8661 = vpack.c.bf16 %v8405, %v8405
        %v8662 = vpack.c.bf16 %v8406, %v8406
        %v8663 = vpack.c.bf16 %v8407, %v8407
        %v8664 = vpack.c.bf16 %v8408, %v8408
        %v8665 = vpack.c.bf16 %v8409, %v8409
        %v8666 = vpack.c.bf16 %v8410, %v8410
        %v8667 = vpack.c.bf16 %v8411, %v8411
        %v8668 = vpack.c.bf16 %v8412, %v8412
        %v8669 = vpack.c.bf16 %v8413, %v8413
        %v8670 = vpack.c.bf16 %v8414, %v8414
        %v8671 = vpack.c.bf16 %v8415, %v8415
        %v8672 = vpack.c.bf16 %v8416, %v8416
        %v8673 = vpack.c.bf16 %v8417, %v8417
        %v8674 = vpack.c.bf16 %v8418, %v8418
        %v8675 = vpack.c.bf16 %v8419, %v8419
        %v8676 = vpack.c.bf16 %v8420, %v8420
        %v8677 = vpack.c.bf16 %v8421, %v8421
        %v8678 = vpack.c.bf16 %v8422, %v8422
        %v8679 = vpack.c.bf16 %v8423, %v8423
        %v8680 = vpack.c.bf16 %v8424, %v8424
        %v8681 = vpack.c.bf16 %v8425, %v8425
        %v8682 = vpack.c.bf16 %v8426, %v8426
        %v8683 = vpack.c.bf16 %v8427, %v8427
        %v8684 = vpack.c.bf16 %v8428, %v8428
        %v8685 = vpack.c.bf16 %v8429, %v8429
        %v8686 = vpack.c.bf16 %v8430, %v8430
        %v8687 = vpack.c.bf16 %v8431, %v8431
        %v8688 = vpack.c.bf16 %v8432, %v8432
        %v8689 = vpack.c.bf16 %v8433, %v8433
        %v8690 = vpack.c.bf16 %v8434, %v8434
        %v8691 = vpack.c.bf16 %v8435, %v8435
        %v8692 = vpack.c.bf16 %v8436, %v8436
        %v8693 = vpack.c.bf16 %v8437, %v8437
        %v8694 = vpack.c.bf16 %v8438, %v8438
        %v8695 = vpack.c.bf16 %v8439, %v8439
        %v8696 = vpack.c.bf16 %v8440, %v8440
        %v8697 = vpack.c.bf16 %v8441, %v8441
        %v8698 = vpack.c.bf16 %v8442, %v8442
        %v8699 = vpack.c.bf16 %v8443, %v8443
        %v8700 = vpack.c.bf16 %v8444, %v8444
        %v8701 = vpack.c.bf16 %v8445, %v8445
        %v8702 = vpack.c.bf16 %v8446, %v8446
        %v8703 = vpack.c.bf16 %v8447, %v8447
        %v8704 = vpack.c.bf16 %v8448, %v8448
        %v8705 = vpack.c.bf16 %v8449, %v8449
        %v8706 = vpack.c.bf16 %v8450, %v8450
        %v8707 = vpack.c.bf16 %v8451, %v8451
        %v8708 = vpack.c.bf16 %v8452, %v8452
        %v8709 = vpack.c.bf16 %v8453, %v8453
        %v8710 = vpack.c.bf16 %v8454, %v8454
        %v8711 = vpack.c.bf16 %v8455, %v8455
        %v8712 = vpack.c.bf16 %v8456, %v8456
        %v8713 = vpack.c.bf16 %v8457, %v8457
        %v8714 = vpack.c.bf16 %v8458, %v8458
        %v8715 = vpack.c.bf16 %v8459, %v8459
        %v8716 = vpack.c.bf16 %v8460, %v8460
        %v8717 = vpack.c.bf16 %v8461, %v8461
        %v8718 = vpack.c.bf16 %v8462, %v8462
        %v8719 = vpack.c.bf16 %v8463, %v8463
        %v8720 = vpack.c.bf16 %v8464, %v8464
        %v8721 = vpack.c.bf16 %v8465, %v8465
        %v8722 = vpack.c.bf16 %v8466, %v8466
        %v8723 = vpack.c.bf16 %v8467, %v8467
        %v8724 = vpack.c.bf16 %v8468, %v8468
        %v8725 = vpack.c.bf16 %v8469, %v8469
        %v8726 = vpack.c.bf16 %v8470, %v8470
        %v8727 = vpack.c.bf16 %v8471, %v8471
        %v8728 = vpack.c.bf16 %v8472, %v8472
        %v8729 = vpack.c.bf16 %v8473, %v8473
        %v8730 = vpack.c.bf16 %v8474, %v8474
        %v8731 = vpack.c.bf16 %v8475, %v8475
        %v8732 = vpack.c.bf16 %v8476, %v8476
        %v8733 = vpack.c.bf16 %v8477, %v8477
        %v8734 = vpack.c.bf16 %v8478, %v8478
        %v8735 = vpack.c.bf16 %v8479, %v8479
        %v8736 = vpack.c.bf16 %v8480, %v8480
        %v8737 = vpack.c.bf16 %v8481, %v8481
        %v8738 = vpack.c.bf16 %v8482, %v8482
        %v8739 = vpack.c.bf16 %v8483, %v8483
        %v8740 = vpack.c.bf16 %v8484, %v8484
        %v8741 = vpack.c.bf16 %v8485, %v8485
        %v8742 = vpack.c.bf16 %v8486, %v8486
        %v8743 = vpack.c.bf16 %v8487, %v8487
        %v8744 = vpack.c.bf16 %v8488, %v8488
        %v8745 = vpack.c.bf16 %v8489, %v8489
        %v8746 = vpack.c.bf16 %v8490, %v8490
        %v8747 = vpack.c.bf16 %v8491, %v8491
        %v8748 = vpack.c.bf16 %v8492, %v8492
        %v8749 = vpack.c.bf16 %v8493, %v8493
        %v8750 = vpack.c.bf16 %v8494, %v8494
        %v8751 = vpack.c.bf16 %v8495, %v8495
        %v8752 = vpack.c.bf16 %v8496, %v8496
        %v8753 = vpack.c.bf16 %v8497, %v8497
        %v8754 = vpack.c.bf16 %v8498, %v8498
        %v8755 = vpack.c.bf16 %v8499, %v8499
        %v8756 = vpack.c.bf16 %v8500, %v8500
        %v8757 = vpack.c.bf16 %v8501, %v8501
        %v8758 = vpack.c.bf16 %v8502, %v8502
        %v8759 = vpack.c.bf16 %v8503, %v8503
        %v8760 = vpack.c.bf16 %v8504, %v8504
        %v8761 = vpack.c.bf16 %v8505, %v8505
        %v8762 = vpack.c.bf16 %v8506, %v8506
        %v8763 = vpack.c.bf16 %v8507, %v8507
        %v8764 = vpack.c.bf16 %v8508, %v8508
        %v8765 = vpack.c.bf16 %v8509, %v8509
        %v8766 = vpack.c.bf16 %v8510, %v8510
        %v8767 = vpack.c.bf16 %v8511, %v8511
        %v8768 = vpack.c.bf16 %v8512, %v8512
        %v8769 = vpack.c.bf16 %v8513, %v8513
        %v8770 = vpack.c.bf16 %v8514, %v8514
        %v8771 = vpack.c.bf16 %v8515, %v8515
        %v8772 = vpack.c.bf16 %v8516, %v8516
        %v8773 = vpack.c.bf16 %v8517, %v8517
        %v8774 = vpack.c.bf16 %v8518, %v8518
        %v8775 = vpack.c.bf16 %v8519, %v8519
        %v8776 = vpack.c.bf16 %v8520, %v8520
        %v8777 = vpack.c.bf16 %v8521, %v8521
        %v8778 = vpack.c.bf16 %v8522, %v8522
        %v8779 = vpack.c.bf16 %v8523, %v8523
        %v8780 = vpack.c.bf16 %v8524, %v8524
        %v8781 = vpack.c.bf16 %v8525, %v8525
        %8782 = vst [vmem:[%s235] sm:$0xf] %v8526
        %8783 = vst [vmem:[%s235 + $0x4] sm:$0xf] %v8527
        %8784 = vst [vmem:[%s235 + $0x8] sm:$0xf] %v8528
        %8785 = vst [vmem:[%s235 + $0xc] sm:$0xf] %v8529
        %8786 = vst [vmem:[%s235 + $0x10] sm:$0xf] %v8530
        %8787 = vst [vmem:[%s235 + $0x14] sm:$0xf] %v8531
        %8788 = vst [vmem:[%s235 + $0x18] sm:$0xf] %v8532
        %8789 = vst [vmem:[%s235 + $0x1c] sm:$0xf] %v8533
        %8790 = vst [vmem:[%s235 + $0x20] sm:$0xf] %v8534
        %8791 = vst [vmem:[%s235 + $0x24] sm:$0xf] %v8535
        %8792 = vst [vmem:[%s235 + $0x28] sm:$0xf] %v8536
        %8793 = vst [vmem:[%s235 + $0x2c] sm:$0xf] %v8537
        %8794 = vst [vmem:[%s235 + $0x30] sm:$0xf] %v8538
        %8795 = vst [vmem:[%s235 + $0x34] sm:$0xf] %v8539
        %8796 = vst [vmem:[%s235 + $0x38] sm:$0xf] %v8540
        %8797 = vst [vmem:[%s235 + $0x3c] sm:$0xf] %v8541
        %8798 = vst [vmem:[%s235 + $0x40] sm:$0xf] %v8542
        %8799 = vst [vmem:[%s235 + $0x44] sm:$0xf] %v8543
        %8800 = vst [vmem:[%s235 + $0x48] sm:$0xf] %v8544
        %8801 = vst [vmem:[%s235 + $0x4c] sm:$0xf] %v8545
        %8802 = vst [vmem:[%s235 + $0x50] sm:$0xf] %v8546
        %8803 = vst [vmem:[%s235 + $0x54] sm:$0xf] %v8547
        %8804 = vst [vmem:[%s235 + $0x58] sm:$0xf] %v8548
        %8805 = vst [vmem:[%s235 + $0x5c] sm:$0xf] %v8549
        %8806 = vst [vmem:[%s235 + $0x60] sm:$0xf] %v8550
        %8807 = vst [vmem:[%s235 + $0x64] sm:$0xf] %v8551
        %8808 = vst [vmem:[%s235 + $0x68] sm:$0xf] %v8552
        %8809 = vst [vmem:[%s235 + $0x6c] sm:$0xf] %v8553
        %8810 = vst [vmem:[%s235 + $0x70] sm:$0xf] %v8554
        %8811 = vst [vmem:[%s235 + $0x74] sm:$0xf] %v8555
        %8812 = vst [vmem:[%s235 + $0x78] sm:$0xf] %v8556
        %8813 = vst [vmem:[%s235 + $0x7c] sm:$0xf] %v8557
        %8814 = vst [vmem:[%s235 + $0x80] sm:$0xf] %v8558
        %8815 = vst [vmem:[%s235 + $0x84] sm:$0xf] %v8559
        %8816 = vst [vmem:[%s235 + $0x88] sm:$0xf] %v8560
        %8817 = vst [vmem:[%s235 + $0x8c] sm:$0xf] %v8561
        %8818 = vst [vmem:[%s235 + $0x90] sm:$0xf] %v8562
        %8819 = vst [vmem:[%s235 + $0x94] sm:$0xf] %v8563
        %8820 = vst [vmem:[%s235 + $0x98] sm:$0xf] %v8564
        %8821 = vst [vmem:[%s235 + $0x9c] sm:$0xf] %v8565
        %8822 = vst [vmem:[%s235 + $0xa0] sm:$0xf] %v8566
        %8823 = vst [vmem:[%s235 + $0xa4] sm:$0xf] %v8567
        %8824 = vst [vmem:[%s235 + $0xa8] sm:$0xf] %v8568
        %8825 = vst [vmem:[%s235 + $0xac] sm:$0xf] %v8569
        %8826 = vst [vmem:[%s235 + $0xb0] sm:$0xf] %v8570
        %8827 = vst [vmem:[%s235 + $0xb4] sm:$0xf] %v8571
        %8828 = vst [vmem:[%s235 + $0xb8] sm:$0xf] %v8572
        %8829 = vst [vmem:[%s235 + $0xbc] sm:$0xf] %v8573
        %8830 = vst [vmem:[%s235 + $0xc0] sm:$0xf] %v8574
        %8831 = vst [vmem:[%s235 + $0xc4] sm:$0xf] %v8575
        %8832 = vst [vmem:[%s235 + $0xc8] sm:$0xf] %v8576
        %8833 = vst [vmem:[%s235 + $0xcc] sm:$0xf] %v8577
        %8834 = vst [vmem:[%s235 + $0xd0] sm:$0xf] %v8578
        %8835 = vst [vmem:[%s235 + $0xd4] sm:$0xf] %v8579
        %8836 = vst [vmem:[%s235 + $0xd8] sm:$0xf] %v8580
        %8837 = vst [vmem:[%s235 + $0xdc] sm:$0xf] %v8581
        %8838 = vst [vmem:[%s235 + $0xe0] sm:$0xf] %v8582
        %8839 = vst [vmem:[%s235 + $0xe4] sm:$0xf] %v8583
        %8840 = vst [vmem:[%s235 + $0xe8] sm:$0xf] %v8584
        %8841 = vst [vmem:[%s235 + $0xec] sm:$0xf] %v8585
        %8842 = vst [vmem:[%s235 + $0xf0] sm:$0xf] %v8586
        %8843 = vst [vmem:[%s235 + $0xf4] sm:$0xf] %v8587
        %8844 = vst [vmem:[%s235 + $0xf8] sm:$0xf] %v8588
        %8845 = vst [vmem:[%s235 + $0xfc] sm:$0xf] %v8589
        %8846 = vst [vmem:[%s235 + $0x100] sm:$0xf] %v8590
        %8847 = vst [vmem:[%s235 + $0x104] sm:$0xf] %v8591
        %8848 = vst [vmem:[%s235 + $0x108] sm:$0xf] %v8592
        %8849 = vst [vmem:[%s235 + $0x10c] sm:$0xf] %v8593
        %8850 = vst [vmem:[%s235 + $0x110] sm:$0xf] %v8594
        %8851 = vst [vmem:[%s235 + $0x114] sm:$0xf] %v8595
        %8852 = vst [vmem:[%s235 + $0x118] sm:$0xf] %v8596
        %8853 = vst [vmem:[%s235 + $0x11c] sm:$0xf] %v8597
        %8854 = vst [vmem:[%s235 + $0x120] sm:$0xf] %v8598
        %8855 = vst [vmem:[%s235 + $0x124] sm:$0xf] %v8599
        %8856 = vst [vmem:[%s235 + $0x128] sm:$0xf] %v8600
        %8857 = vst [vmem:[%s235 + $0x12c] sm:$0xf] %v8601
        %8858 = vst [vmem:[%s235 + $0x130] sm:$0xf] %v8602
        %8859 = vst [vmem:[%s235 + $0x134] sm:$0xf] %v8603
        %8860 = vst [vmem:[%s235 + $0x138] sm:$0xf] %v8604
        %8861 = vst [vmem:[%s235 + $0x13c] sm:$0xf] %v8605
        %8862 = vst [vmem:[%s235 + $0x140] sm:$0xf] %v8606
        %8863 = vst [vmem:[%s235 + $0x144] sm:$0xf] %v8607
        %8864 = vst [vmem:[%s235 + $0x148] sm:$0xf] %v8608
        %8865 = vst [vmem:[%s235 + $0x14c] sm:$0xf] %v8609
        %8866 = vst [vmem:[%s235 + $0x150] sm:$0xf] %v8610
        %8867 = vst [vmem:[%s235 + $0x154] sm:$0xf] %v8611
        %8868 = vst [vmem:[%s235 + $0x158] sm:$0xf] %v8612
        %8869 = vst [vmem:[%s235 + $0x15c] sm:$0xf] %v8613
        %8870 = vst [vmem:[%s235 + $0x160] sm:$0xf] %v8614
        %8871 = vst [vmem:[%s235 + $0x164] sm:$0xf] %v8615
        %8872 = vst [vmem:[%s235 + $0x168] sm:$0xf] %v8616
        %8873 = vst [vmem:[%s235 + $0x16c] sm:$0xf] %v8617
        %8874 = vst [vmem:[%s235 + $0x170] sm:$0xf] %v8618
        %8875 = vst [vmem:[%s235 + $0x174] sm:$0xf] %v8619
        %8876 = vst [vmem:[%s235 + $0x178] sm:$0xf] %v8620
        %8877 = vst [vmem:[%s235 + $0x17c] sm:$0xf] %v8621
        %8878 = vst [vmem:[%s235 + $0x180] sm:$0xf] %v8622
        %8879 = vst [vmem:[%s235 + $0x184] sm:$0xf] %v8623
        %8880 = vst [vmem:[%s235 + $0x188] sm:$0xf] %v8624
        %8881 = vst [vmem:[%s235 + $0x18c] sm:$0xf] %v8625
        %8882 = vst [vmem:[%s235 + $0x190] sm:$0xf] %v8626
        %8883 = vst [vmem:[%s235 + $0x194] sm:$0xf] %v8627
        %8884 = vst [vmem:[%s235 + $0x198] sm:$0xf] %v8628
        %8885 = vst [vmem:[%s235 + $0x19c] sm:$0xf] %v8629
        %8886 = vst [vmem:[%s235 + $0x1a0] sm:$0xf] %v8630
        %8887 = vst [vmem:[%s235 + $0x1a4] sm:$0xf] %v8631
        %8888 = vst [vmem:[%s235 + $0x1a8] sm:$0xf] %v8632
        %8889 = vst [vmem:[%s235 + $0x1ac] sm:$0xf] %v8633
        %8890 = vst [vmem:[%s235 + $0x1b0] sm:$0xf] %v8634
        %8891 = vst [vmem:[%s235 + $0x1b4] sm:$0xf] %v8635
        %8892 = vst [vmem:[%s235 + $0x1b8] sm:$0xf] %v8636
        %8893 = vst [vmem:[%s235 + $0x1bc] sm:$0xf] %v8637
        %8894 = vst [vmem:[%s235 + $0x1c0] sm:$0xf] %v8638
        %8895 = vst [vmem:[%s235 + $0x1c4] sm:$0xf] %v8639
        %8896 = vst [vmem:[%s235 + $0x1c8] sm:$0xf] %v8640
        %8897 = vst [vmem:[%s235 + $0x1cc] sm:$0xf] %v8641
        %8898 = vst [vmem:[%s235 + $0x1d0] sm:$0xf] %v8642
        %8899 = vst [vmem:[%s235 + $0x1d4] sm:$0xf] %v8643
        %8900 = vst [vmem:[%s235 + $0x1d8] sm:$0xf] %v8644
        %8901 = vst [vmem:[%s235 + $0x1dc] sm:$0xf] %v8645
        %8902 = vst [vmem:[%s235 + $0x1e0] sm:$0xf] %v8646
        %8903 = vst [vmem:[%s235 + $0x1e4] sm:$0xf] %v8647
        %8904 = vst [vmem:[%s235 + $0x1e8] sm:$0xf] %v8648
        %8905 = vst [vmem:[%s235 + $0x1ec] sm:$0xf] %v8649
        %8906 = vst [vmem:[%s235 + $0x1f0] sm:$0xf] %v8650
        %8907 = vst [vmem:[%s235 + $0x1f4] sm:$0xf] %v8651
        %8908 = vst [vmem:[%s235 + $0x1f8] sm:$0xf] %v8652
        %8909 = vst [vmem:[%s235 + $0x1fc] sm:$0xf] %v8653
        %8910 = vst [vmem:[%s235 + $0x200] sm:$0xf] %v8654
        %8911 = vst [vmem:[%s235 + $0x204] sm:$0xf] %v8655
        %8912 = vst [vmem:[%s235 + $0x208] sm:$0xf] %v8656
        %8913 = vst [vmem:[%s235 + $0x20c] sm:$0xf] %v8657
        %8914 = vst [vmem:[%s235 + $0x210] sm:$0xf] %v8658
        %8915 = vst [vmem:[%s235 + $0x214] sm:$0xf] %v8659
        %8916 = vst [vmem:[%s235 + $0x218] sm:$0xf] %v8660
        %8917 = vst [vmem:[%s235 + $0x21c] sm:$0xf] %v8661
        %8918 = vst [vmem:[%s235 + $0x220] sm:$0xf] %v8662
        %8919 = vst [vmem:[%s235 + $0x224] sm:$0xf] %v8663
        %8920 = vst [vmem:[%s235 + $0x228] sm:$0xf] %v8664
        %8921 = vst [vmem:[%s235 + $0x22c] sm:$0xf] %v8665
        %8922 = vst [vmem:[%s235 + $0x230] sm:$0xf] %v8666
        %8923 = vst [vmem:[%s235 + $0x234] sm:$0xf] %v8667
        %8924 = vst [vmem:[%s235 + $0x238] sm:$0xf] %v8668
        %8925 = vst [vmem:[%s235 + $0x23c] sm:$0xf] %v8669
        %8926 = vst [vmem:[%s235 + $0x240] sm:$0xf] %v8670
        %8927 = vst [vmem:[%s235 + $0x244] sm:$0xf] %v8671
        %8928 = vst [vmem:[%s235 + $0x248] sm:$0xf] %v8672
        %8929 = vst [vmem:[%s235 + $0x24c] sm:$0xf] %v8673
        %8930 = vst [vmem:[%s235 + $0x250] sm:$0xf] %v8674
        %8931 = vst [vmem:[%s235 + $0x254] sm:$0xf] %v8675
        %8932 = vst [vmem:[%s235 + $0x258] sm:$0xf] %v8676
        %8933 = vst [vmem:[%s235 + $0x25c] sm:$0xf] %v8677
        %8934 = vst [vmem:[%s235 + $0x260] sm:$0xf] %v8678
        %8935 = vst [vmem:[%s235 + $0x264] sm:$0xf] %v8679
        %8936 = vst [vmem:[%s235 + $0x268] sm:$0xf] %v8680
        %8937 = vst [vmem:[%s235 + $0x26c] sm:$0xf] %v8681
        %8938 = vst [vmem:[%s235 + $0x270] sm:$0xf] %v8682
        %8939 = vst [vmem:[%s235 + $0x274] sm:$0xf] %v8683
        %8940 = vst [vmem:[%s235 + $0x278] sm:$0xf] %v8684
        %8941 = vst [vmem:[%s235 + $0x27c] sm:$0xf] %v8685
        %8942 = vst [vmem:[%s235 + $0x280] sm:$0xf] %v8686
        %8943 = vst [vmem:[%s235 + $0x284] sm:$0xf] %v8687
        %8944 = vst [vmem:[%s235 + $0x288] sm:$0xf] %v8688
        %8945 = vst [vmem:[%s235 + $0x28c] sm:$0xf] %v8689
        %8946 = vst [vmem:[%s235 + $0x290] sm:$0xf] %v8690
        %8947 = vst [vmem:[%s235 + $0x294] sm:$0xf] %v8691
        %8948 = vst [vmem:[%s235 + $0x298] sm:$0xf] %v8692
        %8949 = vst [vmem:[%s235 + $0x29c] sm:$0xf] %v8693
        %8950 = vst [vmem:[%s235 + $0x2a0] sm:$0xf] %v8694
        %8951 = vst [vmem:[%s235 + $0x2a4] sm:$0xf] %v8695
        %8952 = vst [vmem:[%s235 + $0x2a8] sm:$0xf] %v8696
        %8953 = vst [vmem:[%s235 + $0x2ac] sm:$0xf] %v8697
        %8954 = vst [vmem:[%s235 + $0x2b0] sm:$0xf] %v8698
        %8955 = vst [vmem:[%s235 + $0x2b4] sm:$0xf] %v8699
        %8956 = vst [vmem:[%s235 + $0x2b8] sm:$0xf] %v8700
        %8957 = vst [vmem:[%s235 + $0x2bc] sm:$0xf] %v8701
        %8958 = vst [vmem:[%s235 + $0x2c0] sm:$0xf] %v8702
        %8959 = vst [vmem:[%s235 + $0x2c4] sm:$0xf] %v8703
        %8960 = vst [vmem:[%s235 + $0x2c8] sm:$0xf] %v8704
        %8961 = vst [vmem:[%s235 + $0x2cc] sm:$0xf] %v8705
        %8962 = vst [vmem:[%s235 + $0x2d0] sm:$0xf] %v8706
        %8963 = vst [vmem:[%s235 + $0x2d4] sm:$0xf] %v8707
        %8964 = vst [vmem:[%s235 + $0x2d8] sm:$0xf] %v8708
        %8965 = vst [vmem:[%s235 + $0x2dc] sm:$0xf] %v8709
        %8966 = vst [vmem:[%s235 + $0x2e0] sm:$0xf] %v8710
        %8967 = vst [vmem:[%s235 + $0x2e4] sm:$0xf] %v8711
        %8968 = vst [vmem:[%s235 + $0x2e8] sm:$0xf] %v8712
        %8969 = vst [vmem:[%s235 + $0x2ec] sm:$0xf] %v8713
        %8970 = vst [vmem:[%s235 + $0x2f0] sm:$0xf] %v8714
        %8971 = vst [vmem:[%s235 + $0x2f4] sm:$0xf] %v8715
        %8972 = vst [vmem:[%s235 + $0x2f8] sm:$0xf] %v8716
        %8973 = vst [vmem:[%s235 + $0x2fc] sm:$0xf] %v8717
        %8974 = vst [vmem:[%s235 + $0x300] sm:$0xf] %v8718
        %8975 = vst [vmem:[%s235 + $0x304] sm:$0xf] %v8719
        %8976 = vst [vmem:[%s235 + $0x308] sm:$0xf] %v8720
        %8977 = vst [vmem:[%s235 + $0x30c] sm:$0xf] %v8721
        %8978 = vst [vmem:[%s235 + $0x310] sm:$0xf] %v8722
        %8979 = vst [vmem:[%s235 + $0x314] sm:$0xf] %v8723
        %8980 = vst [vmem:[%s235 + $0x318] sm:$0xf] %v8724
        %8981 = vst [vmem:[%s235 + $0x31c] sm:$0xf] %v8725
        %8982 = vst [vmem:[%s235 + $0x320] sm:$0xf] %v8726
        %8983 = vst [vmem:[%s235 + $0x324] sm:$0xf] %v8727
        %8984 = vst [vmem:[%s235 + $0x328] sm:$0xf] %v8728
        %8985 = vst [vmem:[%s235 + $0x32c] sm:$0xf] %v8729
        %8986 = vst [vmem:[%s235 + $0x330] sm:$0xf] %v8730
        %8987 = vst [vmem:[%s235 + $0x334] sm:$0xf] %v8731
        %8988 = vst [vmem:[%s235 + $0x338] sm:$0xf] %v8732
        %8989 = vst [vmem:[%s235 + $0x33c] sm:$0xf] %v8733
        %8990 = vst [vmem:[%s235 + $0x340] sm:$0xf] %v8734
        %8991 = vst [vmem:[%s235 + $0x344] sm:$0xf] %v8735
        %8992 = vst [vmem:[%s235 + $0x348] sm:$0xf] %v8736
        %8993 = vst [vmem:[%s235 + $0x34c] sm:$0xf] %v8737
        %8994 = vst [vmem:[%s235 + $0x350] sm:$0xf] %v8738
        %8995 = vst [vmem:[%s235 + $0x354] sm:$0xf] %v8739
        %8996 = vst [vmem:[%s235 + $0x358] sm:$0xf] %v8740
        %8997 = vst [vmem:[%s235 + $0x35c] sm:$0xf] %v8741
        %8998 = vst [vmem:[%s235 + $0x360] sm:$0xf] %v8742
        %8999 = vst [vmem:[%s235 + $0x364] sm:$0xf] %v8743
        %9000 = vst [vmem:[%s235 + $0x368] sm:$0xf] %v8744
        %9001 = vst [vmem:[%s235 + $0x36c] sm:$0xf] %v8745
        %9002 = vst [vmem:[%s235 + $0x370] sm:$0xf] %v8746
        %9003 = vst [vmem:[%s235 + $0x374] sm:$0xf] %v8747
        %9004 = vst [vmem:[%s235 + $0x378] sm:$0xf] %v8748
        %9005 = vst [vmem:[%s235 + $0x37c] sm:$0xf] %v8749
        %9006 = vst [vmem:[%s235 + $0x380] sm:$0xf] %v8750
        %9007 = vst [vmem:[%s235 + $0x384] sm:$0xf] %v8751
        %9008 = vst [vmem:[%s235 + $0x388] sm:$0xf] %v8752
        %9009 = vst [vmem:[%s235 + $0x38c] sm:$0xf] %v8753
        %9010 = vst [vmem:[%s235 + $0x390] sm:$0xf] %v8754
        %9011 = vst [vmem:[%s235 + $0x394] sm:$0xf] %v8755
        %9012 = vst [vmem:[%s235 + $0x398] sm:$0xf] %v8756
        %9013 = vst [vmem:[%s235 + $0x39c] sm:$0xf] %v8757
        %9014 = vst [vmem:[%s235 + $0x3a0] sm:$0xf] %v8758
        %9015 = vst [vmem:[%s235 + $0x3a4] sm:$0xf] %v8759
        %9016 = vst [vmem:[%s235 + $0x3a8] sm:$0xf] %v8760
        %9017 = vst [vmem:[%s235 + $0x3ac] sm:$0xf] %v8761
        %9018 = vst [vmem:[%s235 + $0x3b0] sm:$0xf] %v8762
        %9019 = vst [vmem:[%s235 + $0x3b4] sm:$0xf] %v8763
        %9020 = vst [vmem:[%s235 + $0x3b8] sm:$0xf] %v8764
        %9021 = vst [vmem:[%s235 + $0x3bc] sm:$0xf] %v8765
        %9022 = vst [vmem:[%s235 + $0x3c0] sm:$0xf] %v8766
        %9023 = vst [vmem:[%s235 + $0x3c4] sm:$0xf] %v8767
        %9024 = vst [vmem:[%s235 + $0x3c8] sm:$0xf] %v8768
        %9025 = vst [vmem:[%s235 + $0x3cc] sm:$0xf] %v8769
        %9026 = vst [vmem:[%s235 + $0x3d0] sm:$0xf] %v8770
        %9027 = vst [vmem:[%s235 + $0x3d4] sm:$0xf] %v8771
        %9028 = vst [vmem:[%s235 + $0x3d8] sm:$0xf] %v8772
        %9029 = vst [vmem:[%s235 + $0x3dc] sm:$0xf] %v8773
        %9030 = vst [vmem:[%s235 + $0x3e0] sm:$0xf] %v8774
        %9031 = vst [vmem:[%s235 + $0x3e4] sm:$0xf] %v8775
        %9032 = vst [vmem:[%s235 + $0x3e8] sm:$0xf] %v8776
        %9033 = vst [vmem:[%s235 + $0x3ec] sm:$0xf] %v8777
        %9034 = vst [vmem:[%s235 + $0x3f0] sm:$0xf] %v8778
        %9035 = vst [vmem:[%s235 + $0x3f4] sm:$0xf] %v8779
        %9036 = vst [vmem:[%s235 + $0x3f8] sm:$0xf] %v8780
        %9037 = vst [vmem:[%s235 + $0x3fc] sm:$0xf] %v8781
        %s9038 = sand.u32 %s111, 1
        %s9039 = scalar_lea.sflag [#allocation5], %s9038
        %s9040 = sand.u32 %s111, 1
        %s9041 = smul.addr %s9040, 1024
        %s9042 = scalar_lea.vmem [#allocation9], %s9041
        // Predicated region
        $region45: #{tpu_custom_call.1} parent=31 // pred_check
          %p9043 = pneg %p121
        $region46: #{tpu_custom_call.1} parent=31 // pred_check_branch
          %9045 = sbr.rel (%p9043) target = $region48
        $region47: #{tpu_custom_call.1} parent=31 // pred_region
          %s9046 = smul.u32 256, %s26
          %9048 = vsyncadd %s9039, 0
          %s9049 = smul.addr %s25, 256
          %s9050 = sadd.s32 %s9046, %s9049
          %s9051 = smul.addr %s9050, 4
          %s9052 = scalar_lea.hbm %s3, %s9051
          %s9053 = sshll.u32 %s9042, 4
          %s9054 = int_to_ptr.vmem [resolvable:$true] %s9053
          %s9055 = sshll.u32 %s9052, 4
          %s9056 = int_to_ptr.hbm [resolvable:$true] %s9055
          %9061 = dma.vmem_to_hbm [thread:$0]  %s9054, 16384, %s9056, %s9039, 64, 64, 4
        $region48: #{tpu_custom_call.1} parent=31 // pred_fallthru
          _
      $region32: #{tpu_custom_call.1} parent=5 // pred_fallthru
        _
      %p9062 = scmp.le.s32.totalorder 2, %s16
      // Predicated region
      $region49: #{tpu_custom_call.1} parent=5 // pred_check
        %p9063 = pneg %p9062
      $region50: #{tpu_custom_call.1} parent=5 // pred_check_branch
        %9065 = sbr.rel (%p9063) target = $region52
      $region51: #{tpu_custom_call.1} parent=5 // pred_region
        %s9066 = ssub.s32 %s16, 2
        // Predicated region
        $region53: #{tpu_custom_call.1} parent=51 // pred_check
          %p9067 = pneg %p127
        $region54: #{tpu_custom_call.1} parent=51 // pred_check_branch
          %9069 = sbr.rel (%p9067) target = $region56
        $region55: #{tpu_custom_call.1} parent=51 // pred_region
          %s9070 = sand.u32 %s112, 1
          %s9071 = scalar_lea.sflag [#allocation5], %s9070
          %s9072 = sand.u32 %s112, 1
          %s9073 = smul.addr %s9072, 1024
          %s9074 = scalar_lea.vmem [#allocation9], %s9073
          %9076 = dma.done %s9071, 16384
        $region56: #{tpu_custom_call.1} parent=51 // pred_fallthru
          _
      $region52: #{tpu_custom_call.1} parent=5 // pred_fallthru
        _
    $region6: #{tpu_custom_call.1} parent=1 // loop_footer
      %s20 = sadd.s32 1, %s16
    $region7: #{tpu_custom_call.1} parent=1 // loop_footer_branch
      %15 = sbr.rel target = $region3
    $region8: #{tpu_custom_call.1} parent=1 // loop_exit
      _
    %9077 = vsyncpa [#allocation4], 1
    %s9078 = scalar_lea.sflag [#allocation4], 1
    %9079 = vsyncpa %s9078, 1
    %9080 = vsyncpa [#allocation7], 1
    %9081 = vsyncpa [#allocation5], 1
    %s9082 = scalar_lea.sflag [#allocation5], 1
    %9083 = vsyncpa %s9082, 1

</llo_original>
